<compile_context>
chip_gen: v7x
topology: tpu7x:2x2x1
jax: 0.10.0
libtpu: 0.0.40
codegen_flags: <defaults>
</compile_context>

<pallas_src>
import functools

import jax
import jax.numpy as jnp
from jax import lax
from jax.experimental import pallas as pl
from jax.experimental.pallas import tpu as pltpu


# ------------------------- fused conv1+conv2+GAP kernel ----------------------
def _fused_backbone_kernel(x_ref, w1_ref, b1_ref, w2_ref, b2_ref, o_ref,
                           xp_ref, y1_ref):
    # x_ref : (Bt, H, W, Cin)       bf16  batch tile, NHWC
    # w1_ref: (9*Cin, C1)           bf16  conv1 weights, im2col (dy,dx,cin) order
    # b1_ref: (1, C1)               f32
    # w2_ref: (9*C1, C2)            bf16
    # b2_ref: (1, C2)               f32
    # o_ref : (Bt, C2)              f32   global-avg-pooled features
    # xp_ref: VMEM (Bt, H+2, W+2, Cin) bf16  SAME-padded input
    # y1_ref: VMEM (Bt, H+2, W+2, C1)  bf16  SAME-padded conv1 activation
    Bt, H, W, Cin = x_ref.shape
    C1 = w1_ref.shape[1]
    C2 = w2_ref.shape[1]
    bf16 = jnp.bfloat16

    # ---- SAME padding for conv1: pad W in registers (sublane-aligned store),
    #      zero only the two 1-px top/bottom halo rows.
    zc0 = jnp.zeros((Bt, H, 1, Cin), bf16)
    xp_ref[:, 1:H + 1, :, :] = jnp.concatenate([zc0, x_ref[...], zc0], axis=2)
    zr0 = jnp.zeros((Bt, 1, W + 2, Cin), bf16)
    xp_ref[:, 0:1, :, :] = zr0
    xp_ref[:, H + 1:H + 2, :, :] = zr0

    # ---- conv1: im2col -> ONE MXU matmul, bf16 operands, f32 accumulation ---
    xp = xp_ref[...]
    cols1 = [xp[:, dy:dy + H, dx:dx + W, :].reshape(Bt * H * W, Cin)
             for dy in range(3) for dx in range(3)]
    patches1 = jnp.concatenate(cols1, axis=-1)                # (Bt*H*W, 9Cin) bf16
    acc1 = jnp.dot(patches1, w1_ref[...],
                   preferred_element_type=jnp.float32)        # (Bt*H*W, C1) f32
    acc1 = jnp.maximum(acc1 + b1_ref[...], 0.0)               # bias + ReLU (f32)

    # ---- conv1 activation stays in VMEM (bf16, padded for conv2) ------------
    a1 = acc1.reshape(Bt, H, W, C1).astype(bf16)
    zc1 = jnp.zeros((Bt, H, 1, C1), bf16)
    y1_ref[:, 1:H + 1, :, :] = jnp.concatenate([zc1, a1, zc1], axis=2)
    zr1 = jnp.zeros((Bt, 1, W + 2, C1), bf16)
    y1_ref[:, 0:1, :, :] = zr1
    y1_ref[:, H + 1:H + 2, :, :] = zr1

    # ---- conv2: im2col -> ONE MXU matmul (K = 9*C1) --------------------------
    y1 = y1_ref[...]
    cols2 = [y1[:, dy:dy + H, dx:dx + W, :].reshape(Bt * H * W, C1)
             for dy in range(3) for dx in range(3)]
    patches2 = jnp.concatenate(cols2, axis=-1)                # (Bt*H*W, 9C1) bf16
    acc2 = jnp.dot(patches2, w2_ref[...],
                   preferred_element_type=jnp.float32)        # (Bt*H*W, C2) f32
    acc2 = jnp.maximum(acc2 + b2_ref[...], 0.0)

    # ---- fused global average pool: only (Bt, C2) ever hits HBM --------------
    o_ref[...] = (jnp.sum(acc2.reshape(Bt, H * W, C2), axis=1)
                  * (1.0 / float(H * W))).astype(o_ref.dtype)


# ------------------------------ FeatureExtractor -----------------------------
@functools.partial(jax.jit, static_argnames=("batch_tile",))
def feature_extractor(x_nchw, params, *, batch_tile=None):
    # PyTorch input is NCHW; transpose once to NHWC and cast to bf16 (the MXU
    # operand dtype) so the HBM->VMEM DMA and in-kernel copies are half size.
    x = jnp.transpose(x_nchw, (0, 2, 3, 1)).astype(jnp.bfloat16)
    B, H, W, Cin = x.shape
    C1 = params["w1"].shape[-1]
    C2 = params["w2"].shape[-1]

    bt = B if batch_tile is None else batch_tile   # v7x: pass batch_tile=B//2
    assert B % bt == 0

    # conv weights in im2col layout, bf16 for the MXU; biases stay f32.
    w1 = params["w1"].reshape(9 * Cin, C1).astype(jnp.bfloat16)
    w2 = params["w2"].reshape(9 * C1, C2).astype(jnp.bfloat16)
    b1 = params["b1"].reshape(1, C1).astype(jnp.float32)
    b2 = params["b2"].reshape(1, C2).astype(jnp.float32)

    return pl.pallas_call(
        _fused_backbone_kernel,
        out_shape=jax.ShapeDtypeStruct((B, C2), jnp.float32),
        grid=(B // bt,),
        in_specs=[
            pl.BlockSpec((bt, H, W, Cin), lambda b: (b, 0, 0, 0)),
            pl.BlockSpec((9 * Cin, C1), lambda b: (0, 0)),
            pl.BlockSpec((1, C1), lambda b: (0, 0)),
            pl.BlockSpec((9 * C1, C2), lambda b: (0, 0)),
            pl.BlockSpec((1, C2), lambda b: (0, 0)),
        ],
        out_specs=pl.BlockSpec((bt, C2), lambda b: (b, 0)),
        scratch_shapes=[
            pltpu.VMEM((bt, H + 2, W + 2, Cin), jnp.bfloat16),  # padded input
            pltpu.VMEM((bt, H + 2, W + 2, C1), jnp.bfloat16),   # padded conv1 act
        ],
        compiler_params=pltpu.CompilerParams(
            dimension_semantics=("parallel",)),
    )(x, w1, b1, w2, b2)


def make_params(key, cin, c1, c2):
    k1, k2, k3, k4 = jax.random.split(key, 4)
    return {
        "w1": jax.random.normal(k1, (3, 3, cin, c1), jnp.float32) * 0.1,
        "b1": jax.random.normal(k2, (c1,), jnp.float32) * 0.1,
        "w2": jax.random.normal(k3, (3, 3, c1, c2), jnp.float32) * 0.1,
        "b2": jax.random.normal(k4, (c2,), jnp.float32) * 0.1,
    }


def _reference(x_nchw, params):
    # pure-JAX reference mirroring the kernel's dtype policy
    # (bf16 matmul operands, f32 accumulation, f32 bias+ReLU).
    def conv(x_nhwc, w_hwio, b):
        xb = x_nhwc.astype(jnp.bfloat16).astype(jnp.float32)
        wb = w_hwio.astype(jnp.bfloat16).astype(jnp.float32)
        y = lax.conv_general_dilated(
            xb, wb, window_strides=(1, 1), padding="SAME",
            dimension_numbers=("NHWC", "HWIO", "NHWC"))
        return jax.nn.relu(y + b[None, None, None, :])

    x = jnp.transpose(x_nchw, (0, 2, 3, 1)).astype(jnp.float32)
    y = conv(x, params["w1"], params["b1"])
    y = conv(y, params["w2"], params["b2"])
    return jnp.mean(y, axis=(1, 2))      # adaptive avg pool to 1x1 + flatten


if __name__ == "__main__":
    key = jax.random.PRNGKey(0)
    kx, kp = jax.random.split(key)

    B, Cin, H, W = 2, 4, 16, 16
    C1, C2 = 32, 64

    x = jax.random.normal(kx, (B, Cin, H, W), jnp.float32)   # NCHW, like PyTorch
    params = make_params(kp, Cin, C1, C2)

    out = feature_extractor(x, params)
    out = jax.block_until_ready(out)
    assert out.shape == (B, C2), out.shape

    ref = _reference(x, params)
    assert jnp.allclose(out, ref, atol=5e-3, rtol=5e-3), float(
        jnp.max(jnp.abs(out - ref)))

    print("KERNEL_OK")
</pallas_src>

<mosaic_0001>
module attributes {stable_mosaic.version = 11 : i64} {
  func.func @_fused_backbone_kernel(%arg0: i32, %arg1: memref<2x16x16x4xbf16, #tpu.memory_space<vmem>>, %arg2: memref<36x32xbf16, #tpu.memory_space<vmem>>, %arg3: memref<1x32xf32, #tpu.memory_space<vmem>>, %arg4: memref<288x64xbf16, #tpu.memory_space<vmem>>, %arg5: memref<1x64xf32, #tpu.memory_space<vmem>>, %arg6: memref<2x64xf32, #tpu.memory_space<vmem>>, %arg7: memref<2x18x18x4xbf16, #tpu.memory_space<vmem>>, %arg8: memref<2x18x18x32xbf16, #tpu.memory_space<vmem>>) attributes {dimension_semantics = [#tpu.dimension_semantics<parallel>], iteration_bounds = array<i64: 1>, scalar_prefetch = 0 : i64, scratch_operands = 2 : i64, tpu.core_type = #tpu.core_type<tc>, window_params = [{transform_indices = @transform_0, window_bounds = array<i64: 2, 16, 16, 4>}, {pipeline_mode = #tpu.pipeline_mode<synchronous>, transform_indices = @transform_1, window_bounds = array<i64: 36, 32>}, {pipeline_mode = #tpu.pipeline_mode<synchronous>, transform_indices = @transform_2, window_bounds = array<i64: 1, 32>}, {pipeline_mode = #tpu.pipeline_mode<synchronous>, transform_indices = @transform_3, window_bounds = array<i64: 288, 64>}, {pipeline_mode = #tpu.pipeline_mode<synchronous>, transform_indices = @transform_4, window_bounds = array<i64: 1, 64>}, {transform_indices = @transform_5, window_bounds = array<i64: 2, 64>}]} {
    %cst = arith.constant 0.000000e+00 : bf16
    %0 = vector.broadcast %cst : bf16 to vector<2x16x1x4xbf16>
    %c0 = arith.constant 0 : index
    %c0_0 = arith.constant 0 : index
    %c0_1 = arith.constant 0 : index
    %c0_2 = arith.constant 0 : index
    %1 = vector.load %arg1[%c0, %c0_0, %c0_1, %c0_2] : memref<2x16x16x4xbf16, #tpu.memory_space<vmem>>, vector<2x16x16x4xbf16>
    %2 = tpu.concatenate %0, %1, %0 in 2 : vector<2x16x1x4xbf16>, vector<2x16x16x4xbf16>, vector<2x16x1x4xbf16> -> vector<2x16x18x4xbf16>
    %c0_3 = arith.constant 0 : index
    %c1 = arith.constant 1 : index
    %c0_4 = arith.constant 0 : index
    %c0_5 = arith.constant 0 : index
    %3 = vector.load %arg7[%c0_3, %c1, %c0_4, %c0_5] : memref<2x18x18x4xbf16, #tpu.memory_space<vmem>>, vector<2x16x18x4xbf16>
    tpu.vector_store %arg7[%c0_3, %c1, %c0_4, %c0_5], %2 {strides = array<i32>} : memref<2x18x18x4xbf16, #tpu.memory_space<vmem>>, vector<2x16x18x4xbf16>,
    %cst_6 = arith.constant 0.000000e+00 : bf16
    %4 = vector.broadcast %cst_6 : bf16 to vector<2x1x18x4xbf16>
    %c0_7 = arith.constant 0 : index
    %c0_8 = arith.constant 0 : index
    %c0_9 = arith.constant 0 : index
    %c0_10 = arith.constant 0 : index
    %5 = vector.load %arg7[%c0_7, %c0_8, %c0_9, %c0_10] : memref<2x18x18x4xbf16, #tpu.memory_space<vmem>>, vector<2x1x18x4xbf16>
    tpu.vector_store %arg7[%c0_7, %c0_8, %c0_9, %c0_10], %4 {strides = array<i32>} : memref<2x18x18x4xbf16, #tpu.memory_space<vmem>>, vector<2x1x18x4xbf16>,
    %c0_11 = arith.constant 0 : index
    %c17 = arith.constant 17 : index
    %c0_12 = arith.constant 0 : index
    %c0_13 = arith.constant 0 : index
    %6 = vector.load %arg7[%c0_11, %c17, %c0_12, %c0_13] : memref<2x18x18x4xbf16, #tpu.memory_space<vmem>>, vector<2x1x18x4xbf16>
    tpu.vector_store %arg7[%c0_11, %c17, %c0_12, %c0_13], %4 {strides = array<i32>} : memref<2x18x18x4xbf16, #tpu.memory_space<vmem>>, vector<2x1x18x4xbf16>,
    %c0_14 = arith.constant 0 : index
    %c0_15 = arith.constant 0 : index
    %c0_16 = arith.constant 0 : index
    %c0_17 = arith.constant 0 : index
    %7 = vector.load %arg7[%c0_14, %c0_15, %c0_16, %c0_17] : memref<2x18x18x4xbf16, #tpu.memory_space<vmem>>, vector<2x18x18x4xbf16>
    %8 = vector.extract_strided_slice %7 {offsets = [0, 0, 0, 0], sizes = [2, 16, 16, 4], strides = [1, 1, 1, 1]} : vector<2x18x18x4xbf16> to vector<2x16x16x4xbf16>
    %9 = vector.shape_cast %8 : vector<2x16x16x4xbf16> to vector<512x4xbf16>
    %10 = vector.extract_strided_slice %7 {offsets = [0, 0, 1, 0], sizes = [2, 16, 16, 4], strides = [1, 1, 1, 1]} : vector<2x18x18x4xbf16> to vector<2x16x16x4xbf16>
    %11 = vector.shape_cast %10 : vector<2x16x16x4xbf16> to vector<512x4xbf16>
    %12 = vector.extract_strided_slice %7 {offsets = [0, 0, 2, 0], sizes = [2, 16, 16, 4], strides = [1, 1, 1, 1]} : vector<2x18x18x4xbf16> to vector<2x16x16x4xbf16>
    %13 = vector.shape_cast %12 : vector<2x16x16x4xbf16> to vector<512x4xbf16>
    %14 = vector.extract_strided_slice %7 {offsets = [0, 1, 0, 0], sizes = [2, 16, 16, 4], strides = [1, 1, 1, 1]} : vector<2x18x18x4xbf16> to vector<2x16x16x4xbf16>
    %15 = vector.shape_cast %14 : vector<2x16x16x4xbf16> to vector<512x4xbf16>
    %16 = vector.extract_strided_slice %7 {offsets = [0, 1, 1, 0], sizes = [2, 16, 16, 4], strides = [1, 1, 1, 1]} : vector<2x18x18x4xbf16> to vector<2x16x16x4xbf16>
    %17 = vector.shape_cast %16 : vector<2x16x16x4xbf16> to vector<512x4xbf16>
    %18 = vector.extract_strided_slice %7 {offsets = [0, 1, 2, 0], sizes = [2, 16, 16, 4], strides = [1, 1, 1, 1]} : vector<2x18x18x4xbf16> to vector<2x16x16x4xbf16>
    %19 = vector.shape_cast %18 : vector<2x16x16x4xbf16> to vector<512x4xbf16>
    %20 = vector.extract_strided_slice %7 {offsets = [0, 2, 0, 0], sizes = [2, 16, 16, 4], strides = [1, 1, 1, 1]} : vector<2x18x18x4xbf16> to vector<2x16x16x4xbf16>
    %21 = vector.shape_cast %20 : vector<2x16x16x4xbf16> to vector<512x4xbf16>
    %22 = vector.extract_strided_slice %7 {offsets = [0, 2, 1, 0], sizes = [2, 16, 16, 4], strides = [1, 1, 1, 1]} : vector<2x18x18x4xbf16> to vector<2x16x16x4xbf16>
    %23 = vector.shape_cast %22 : vector<2x16x16x4xbf16> to vector<512x4xbf16>
    %24 = vector.extract_strided_slice %7 {offsets = [0, 2, 2, 0], sizes = [2, 16, 16, 4], strides = [1, 1, 1, 1]} : vector<2x18x18x4xbf16> to vector<2x16x16x4xbf16>
    %25 = vector.shape_cast %24 : vector<2x16x16x4xbf16> to vector<512x4xbf16>
    %26 = tpu.concatenate %9, %11, %13, %15, %17, %19, %21, %23, %25 in 1 : vector<512x4xbf16>, vector<512x4xbf16>, vector<512x4xbf16>, vector<512x4xbf16>, vector<512x4xbf16>, vector<512x4xbf16>, vector<512x4xbf16>, vector<512x4xbf16>, vector<512x4xbf16> -> vector<512x36xbf16>
    %c0_18 = arith.constant 0 : index
    %c0_19 = arith.constant 0 : index
    %27 = vector.load %arg2[%c0_18, %c0_19] : memref<36x32xbf16, #tpu.memory_space<vmem>>, vector<36x32xbf16>
    %cst_20 = arith.constant dense<0.000000e+00> : vector<512x32xf32>
    %28 = tpu.matmul %26, %27, %cst_20 {dimension_numbers = #tpu.dot_dimension_numbers<[1], [0], [0], [1], [0, 0, 1, 1], [], []>} : vector<512x36xbf16>, vector<36x32xbf16>, vector<512x32xf32> -> vector<512x32xf32>
    %c0_21 = arith.constant 0 : index
    %c0_22 = arith.constant 0 : index
    %29 = vector.load %arg3[%c0_21, %c0_22] : memref<1x32xf32, #tpu.memory_space<vmem>>, vector<1x32xf32>
    %30 = vector.broadcast %29 : vector<1x32xf32> to vector<512x32xf32>
    %31 = arith.addf %28, %30 : vector<512x32xf32>
    %cst_23 = arith.constant 0.000000e+00 : f32
    %32 = vector.broadcast %cst_23 : f32 to vector<512x32xf32>
    %33 = arith.maximumf %31, %32 : vector<512x32xf32>
    %34 = vector.shape_cast %33 : vector<512x32xf32> to vector<2x16x16x32xf32>
    %35 = arith.truncf %34 : vector<2x16x16x32xf32> to vector<2x16x16x32xbf16>
    %cst_24 = arith.constant 0.000000e+00 : bf16
    %36 = vector.broadcast %cst_24 : bf16 to vector<2x16x1x32xbf16>
    %37 = tpu.concatenate %36, %35, %36 in 2 : vector<2x16x1x32xbf16>, vector<2x16x16x32xbf16>, vector<2x16x1x32xbf16> -> vector<2x16x18x32xbf16>
    %c0_25 = arith.constant 0 : index
    %c1_26 = arith.constant 1 : index
    %c0_27 = arith.constant 0 : index
    %c0_28 = arith.constant 0 : index
    %38 = vector.load %arg8[%c0_25, %c1_26, %c0_27, %c0_28] : memref<2x18x18x32xbf16, #tpu.memory_space<vmem>>, vector<2x16x18x32xbf16>
    tpu.vector_store %arg8[%c0_25, %c1_26, %c0_27, %c0_28], %37 {strides = array<i32>} : memref<2x18x18x32xbf16, #tpu.memory_space<vmem>>, vector<2x16x18x32xbf16>,
    %cst_29 = arith.constant 0.000000e+00 : bf16
    %39 = vector.broadcast %cst_29 : bf16 to vector<2x1x18x32xbf16>
    %c0_30 = arith.constant 0 : index
    %c0_31 = arith.constant 0 : index
    %c0_32 = arith.constant 0 : index
    %c0_33 = arith.constant 0 : index
    %40 = vector.load %arg8[%c0_30, %c0_31, %c0_32, %c0_33] : memref<2x18x18x32xbf16, #tpu.memory_space<vmem>>, vector<2x1x18x32xbf16>
    tpu.vector_store %arg8[%c0_30, %c0_31, %c0_32, %c0_33], %39 {strides = array<i32>} : memref<2x18x18x32xbf16, #tpu.memory_space<vmem>>, vector<2x1x18x32xbf16>,
    %c0_34 = arith.constant 0 : index
    %c17_35 = arith.constant 17 : index
    %c0_36 = arith.constant 0 : index
    %c0_37 = arith.constant 0 : index
    %41 = vector.load %arg8[%c0_34, %c17_35, %c0_36, %c0_37] : memref<2x18x18x32xbf16, #tpu.memory_space<vmem>>, vector<2x1x18x32xbf16>
    tpu.vector_store %arg8[%c0_34, %c17_35, %c0_36, %c0_37], %39 {strides = array<i32>} : memref<2x18x18x32xbf16, #tpu.memory_space<vmem>>, vector<2x1x18x32xbf16>,
    %c0_38 = arith.constant 0 : index
    %c0_39 = arith.constant 0 : index
    %c0_40 = arith.constant 0 : index
    %c0_41 = arith.constant 0 : index
    %42 = vector.load %arg8[%c0_38, %c0_39, %c0_40, %c0_41] : memref<2x18x18x32xbf16, #tpu.memory_space<vmem>>, vector<2x18x18x32xbf16>
    %43 = vector.extract_strided_slice %42 {offsets = [0, 0, 0, 0], sizes = [2, 16, 16, 32], strides = [1, 1, 1, 1]} : vector<2x18x18x32xbf16> to vector<2x16x16x32xbf16>
    %44 = vector.shape_cast %43 : vector<2x16x16x32xbf16> to vector<512x32xbf16>
    %45 = vector.extract_strided_slice %42 {offsets = [0, 0, 1, 0], sizes = [2, 16, 16, 32], strides = [1, 1, 1, 1]} : vector<2x18x18x32xbf16> to vector<2x16x16x32xbf16>
    %46 = vector.shape_cast %45 : vector<2x16x16x32xbf16> to vector<512x32xbf16>
    %47 = vector.extract_strided_slice %42 {offsets = [0, 0, 2, 0], sizes = [2, 16, 16, 32], strides = [1, 1, 1, 1]} : vector<2x18x18x32xbf16> to vector<2x16x16x32xbf16>
    %48 = vector.shape_cast %47 : vector<2x16x16x32xbf16> to vector<512x32xbf16>
    %49 = vector.extract_strided_slice %42 {offsets = [0, 1, 0, 0], sizes = [2, 16, 16, 32], strides = [1, 1, 1, 1]} : vector<2x18x18x32xbf16> to vector<2x16x16x32xbf16>
    %50 = vector.shape_cast %49 : vector<2x16x16x32xbf16> to vector<512x32xbf16>
    %51 = vector.extract_strided_slice %42 {offsets = [0, 1, 1, 0], sizes = [2, 16, 16, 32], strides = [1, 1, 1, 1]} : vector<2x18x18x32xbf16> to vector<2x16x16x32xbf16>
    %52 = vector.shape_cast %51 : vector<2x16x16x32xbf16> to vector<512x32xbf16>
    %53 = vector.extract_strided_slice %42 {offsets = [0, 1, 2, 0], sizes = [2, 16, 16, 32], strides = [1, 1, 1, 1]} : vector<2x18x18x32xbf16> to vector<2x16x16x32xbf16>
    %54 = vector.shape_cast %53 : vector<2x16x16x32xbf16> to vector<512x32xbf16>
    %55 = vector.extract_strided_slice %42 {offsets = [0, 2, 0, 0], sizes = [2, 16, 16, 32], strides = [1, 1, 1, 1]} : vector<2x18x18x32xbf16> to vector<2x16x16x32xbf16>
    %56 = vector.shape_cast %55 : vector<2x16x16x32xbf16> to vector<512x32xbf16>
    %57 = vector.extract_strided_slice %42 {offsets = [0, 2, 1, 0], sizes = [2, 16, 16, 32], strides = [1, 1, 1, 1]} : vector<2x18x18x32xbf16> to vector<2x16x16x32xbf16>
    %58 = vector.shape_cast %57 : vector<2x16x16x32xbf16> to vector<512x32xbf16>
    %59 = vector.extract_strided_slice %42 {offsets = [0, 2, 2, 0], sizes = [2, 16, 16, 32], strides = [1, 1, 1, 1]} : vector<2x18x18x32xbf16> to vector<2x16x16x32xbf16>
    %60 = vector.shape_cast %59 : vector<2x16x16x32xbf16> to vector<512x32xbf16>
    %61 = tpu.concatenate %44, %46, %48, %50, %52, %54, %56, %58, %60 in 1 : vector<512x32xbf16>, vector<512x32xbf16>, vector<512x32xbf16>, vector<512x32xbf16>, vector<512x32xbf16>, vector<512x32xbf16>, vector<512x32xbf16>, vector<512x32xbf16>, vector<512x32xbf16> -> vector<512x288xbf16>
    %c0_42 = arith.constant 0 : index
    %c0_43 = arith.constant 0 : index
    %62 = vector.load %arg4[%c0_42, %c0_43] : memref<288x64xbf16, #tpu.memory_space<vmem>>, vector<288x64xbf16>
    %cst_44 = arith.constant dense<0.000000e+00> : vector<512x64xf32>
    %63 = tpu.matmul %61, %62, %cst_44 {dimension_numbers = #tpu.dot_dimension_numbers<[1], [0], [0], [1], [0, 0, 1, 1], [], []>} : vector<512x288xbf16>, vector<288x64xbf16>, vector<512x64xf32> -> vector<512x64xf32>
    %c0_45 = arith.constant 0 : index
    %c0_46 = arith.constant 0 : index
    %64 = vector.load %arg5[%c0_45, %c0_46] : memref<1x64xf32, #tpu.memory_space<vmem>>, vector<1x64xf32>
    %65 = vector.broadcast %64 : vector<1x64xf32> to vector<512x64xf32>
    %66 = arith.addf %63, %65 : vector<512x64xf32>
    %cst_47 = arith.constant 0.000000e+00 : f32
    %67 = vector.broadcast %cst_47 : f32 to vector<512x64xf32>
    %68 = arith.maximumf %66, %67 : vector<512x64xf32>
    %69 = vector.shape_cast %68 : vector<512x64xf32> to vector<2x256x64xf32>
    %cst_48 = arith.constant dense<0.000000e+00> : vector<2x64xf32>
    %70 = vector.multi_reduction <add>, %69, %cst_48 [1] : vector<2x256x64xf32> to vector<2x64xf32>
    %cst_49 = arith.constant 3.906250e-03 : f32
    %71 = vector.broadcast %cst_49 : f32 to vector<2x64xf32>
    %72 = arith.mulf %70, %71 : vector<2x64xf32>
    %c0_50 = arith.constant 0 : index
    %c0_51 = arith.constant 0 : index
    %73 = vector.load %arg6[%c0_50, %c0_51] : memref<2x64xf32, #tpu.memory_space<vmem>>, vector<2x64xf32>
    tpu.vector_store %arg6[%c0_50, %c0_51], %72 {strides = array<i32>} : memref<2x64xf32, #tpu.memory_space<vmem>>, vector<2x64xf32>,
    return
  }
  func.func @transform_0(%arg0: i32) -> (i32, i32, i32, i32) {
    %c0_i32 = arith.constant 0 : i32
    %c0_i32_0 = arith.constant 0 : i32
    %c0_i32_1 = arith.constant 0 : i32
    %c0_i32_2 = arith.constant 0 : i32
    return %arg0, %c0_i32, %c0_i32_0, %c0_i32_1 : i32, i32, i32, i32
  }
  func.func @transform_1(%arg0: i32) -> (i32, i32) {
    %c0_i32 = arith.constant 0 : i32
    %c0_i32_0 = arith.constant 0 : i32
    %c0_i32_1 = arith.constant 0 : i32
    return %c0_i32, %c0_i32_0 : i32, i32
  }
  func.func @transform_2(%arg0: i32) -> (i32, i32) {
    %c0_i32 = arith.constant 0 : i32
    %c0_i32_0 = arith.constant 0 : i32
    %c0_i32_1 = arith.constant 0 : i32
    return %c0_i32, %c0_i32_0 : i32, i32
  }
  func.func @transform_3(%arg0: i32) -> (i32, i32) {
    %c0_i32 = arith.constant 0 : i32
    %c0_i32_0 = arith.constant 0 : i32
    %c0_i32_1 = arith.constant 0 : i32
    return %c0_i32, %c0_i32_0 : i32, i32
  }
  func.func @transform_4(%arg0: i32) -> (i32, i32) {
    %c0_i32 = arith.constant 0 : i32
    %c0_i32_0 = arith.constant 0 : i32
    %c0_i32_1 = arith.constant 0 : i32
    return %c0_i32, %c0_i32_0 : i32, i32
  }
  func.func @transform_5(%arg0: i32) -> (i32, i32) {
    %c0_i32 = arith.constant 0 : i32
    %c0_i32_0 = arith.constant 0 : i32
    return %arg0, %c0_i32 : i32, i32
  }
}

</mosaic_0001>

<llo_original>
// kernel: feature_extractor.1
$region0: #{feature_extractor.1}
  #allocation0 [shape = 'u32[]', space=smem, size = 0x4, offset = 0x4, fixed_abs, tag = 'smem constant byte address 0x4 - core index']
  #allocation1 [shape = 'u32[144,128]{1,0:T(1,128)}', space=vmem, size = 0x12000, scoped, tag = 'internal scratch']
  #allocation2 [shape = 'bf16[2,18,18,4]{3,2,1,0:T(8,128)(2,1)}', space=vmem, size = 0x36000, scoped, tag = 'scratch operand']
  #allocation3 [shape = 'bf16[2,18,18,32]{3,2,1,0:T(8,128)(2,1)}', space=vmem, size = 0x36000, scoped, tag = 'scratch operand']
  %s0 = inlined_call_operand.vmem [shape: bf16[2,16,16,4], index: 0, kind: input, shape index: {}]
  %s1 = inlined_call_operand.vmem [shape: bf16[36,32], index: 1, kind: input, shape index: {}]
  %s2 = inlined_call_operand.vmem [shape: f32[1,32], index: 2, kind: input, shape index: {}]
  %s3 = inlined_call_operand.vmem [shape: bf16[288,64], index: 3, kind: input, shape index: {}]
  %s4 = inlined_call_operand.vmem [shape: f32[1,64], index: 4, kind: input, shape index: {}]
  %s5 = inlined_call_operand.hbm [shape: f32[2,64], index: 5, kind: output, shape index: {}]
  %s6 = sld [smem:[#allocation0]]
  $region30: #{feature_extractor.1} parent=0
    _
  %s8 = ssub.s32 1, %s6
  %s9 = scalar_select 0, %s8, %s6
  $region1: #{feature_extractor.1} parent=0
    #allocation4 [shape = 'u8[1024]{0}', space=vmem, size = 0x400, scoped, tag = 'output window, operand 0, single buffered']
    #allocation5 [shape = 's32[1]{0}', space=sflag, size = 0x4, scoped, tag = 'scoped memory for feature_extractor.1']
    %10 = vsyncpa [#allocation5], 0
    // Predicated region
    $region2: #{feature_extractor.1} parent=1 // pred_check
      _
    $region3: #{feature_extractor.1} parent=1 // pred_check_branch
      %12 = sbr.rel (0) target = $region5
    $region4: #{feature_extractor.1} parent=1 // pred_region
      _
    $region5: #{feature_extractor.1} parent=1 // pred_fallthru
      _
    // Predicated region
    $region6: #{feature_extractor.1} parent=1 // pred_check
      _
    $region7: #{feature_extractor.1} parent=1 // pred_check_branch
      %14 = sbr.rel (0) target = $region9
    $region8: #{feature_extractor.1} parent=1 // pred_region
      _
    $region9: #{feature_extractor.1} parent=1 // pred_fallthru
      _
    // Predicated region
    $region10: #{feature_extractor.1} parent=1 // pred_check
      _
    $region11: #{feature_extractor.1} parent=1 // pred_check_branch
      %16 = sbr.rel (0) target = $region13
    $region12: #{feature_extractor.1} parent=1 // pred_region
      _
    $region13: #{feature_extractor.1} parent=1 // pred_fallthru
      _
    // Predicated region
    $region14: #{feature_extractor.1} parent=1 // pred_check
      _
    $region15: #{feature_extractor.1} parent=1 // pred_check_branch
      %18 = sbr.rel (0) target = $region17
    $region16: #{feature_extractor.1} parent=1 // pred_region
      _
    $region17: #{feature_extractor.1} parent=1 // pred_fallthru
      _
    // Predicated region
    $region18: #{feature_extractor.1} parent=1 // pred_check
      _
    $region19: #{feature_extractor.1} parent=1 // pred_check_branch
      %20 = sbr.rel (0) target = $region21
    $region20: #{feature_extractor.1} parent=1 // pred_region
      _
    $region21: #{feature_extractor.1} parent=1 // pred_fallthru
      _
    %v22 = vld [vmem:[%s0] sm:$0xf]
    %v23 = vld [vmem:[%s0 + $0x4] sm:$0xf]
    %v24 = vld [vmem:[%s0 + $0x8] sm:$0xf]
    %v25 = vld [vmem:[%s0 + $0xc] sm:$0xf]
    %v26 = vld [vmem:[%s0 + $0x10] sm:$0xf]
    %v27 = vld [vmem:[%s0 + $0x14] sm:$0xf]
    %v28 = vld [vmem:[%s0 + $0x18] sm:$0xf]
    %v29 = vld [vmem:[%s0 + $0x1c] sm:$0xf]
    %v30 = vld [vmem:[%s0 + $0x20] sm:$0xf]
    %v31 = vld [vmem:[%s0 + $0x24] sm:$0xf]
    %v32 = vld [vmem:[%s0 + $0x28] sm:$0xf]
    %v33 = vld [vmem:[%s0 + $0x2c] sm:$0xf]
    %v34 = vld [vmem:[%s0 + $0x30] sm:$0xf]
    %v35 = vld [vmem:[%s0 + $0x34] sm:$0xf]
    %v36 = vld [vmem:[%s0 + $0x38] sm:$0xf]
    %v37 = vld [vmem:[%s0 + $0x3c] sm:$0xf]
    %v38 = vld [vmem:[%s0 + $0x40] sm:$0xf]
    %v39 = vld [vmem:[%s0 + $0x44] sm:$0xf]
    %v40 = vld [vmem:[%s0 + $0x48] sm:$0xf]
    %v41 = vld [vmem:[%s0 + $0x4c] sm:$0xf]
    %v42 = vld [vmem:[%s0 + $0x50] sm:$0xf]
    %v43 = vld [vmem:[%s0 + $0x54] sm:$0xf]
    %v44 = vld [vmem:[%s0 + $0x58] sm:$0xf]
    %v45 = vld [vmem:[%s0 + $0x5c] sm:$0xf]
    %v46 = vld [vmem:[%s0 + $0x60] sm:$0xf]
    %v47 = vld [vmem:[%s0 + $0x64] sm:$0xf]
    %v48 = vld [vmem:[%s0 + $0x68] sm:$0xf]
    %v49 = vld [vmem:[%s0 + $0x6c] sm:$0xf]
    %v50 = vld [vmem:[%s0 + $0x70] sm:$0xf]
    %v51 = vld [vmem:[%s0 + $0x74] sm:$0xf]
    %v52 = vld [vmem:[%s0 + $0x78] sm:$0xf]
    %v53 = vld [vmem:[%s0 + $0x7c] sm:$0xf]
    %v54 = vld [vmem:[%s0 + $0x80] sm:$0xf]
    %v55 = vld [vmem:[%s0 + $0x84] sm:$0xf]
    %v56 = vld [vmem:[%s0 + $0x88] sm:$0xf]
    %v57 = vld [vmem:[%s0 + $0x8c] sm:$0xf]
    %v58 = vld [vmem:[%s0 + $0x90] sm:$0xf]
    %v59 = vld [vmem:[%s0 + $0x94] sm:$0xf]
    %v60 = vld [vmem:[%s0 + $0x98] sm:$0xf]
    %v61 = vld [vmem:[%s0 + $0x9c] sm:$0xf]
    %v62 = vld [vmem:[%s0 + $0xa0] sm:$0xf]
    %v63 = vld [vmem:[%s0 + $0xa4] sm:$0xf]
    %v64 = vld [vmem:[%s0 + $0xa8] sm:$0xf]
    %v65 = vld [vmem:[%s0 + $0xac] sm:$0xf]
    %v66 = vld [vmem:[%s0 + $0xb0] sm:$0xf]
    %v67 = vld [vmem:[%s0 + $0xb4] sm:$0xf]
    %v68 = vld [vmem:[%s0 + $0xb8] sm:$0xf]
    %v69 = vld [vmem:[%s0 + $0xbc] sm:$0xf]
    %v70 = vld [vmem:[%s0 + $0xc0] sm:$0xf]
    %v71 = vld [vmem:[%s0 + $0xc4] sm:$0xf]
    %v72 = vld [vmem:[%s0 + $0xc8] sm:$0xf]
    %v73 = vld [vmem:[%s0 + $0xcc] sm:$0xf]
    %v74 = vld [vmem:[%s0 + $0xd0] sm:$0xf]
    %v75 = vld [vmem:[%s0 + $0xd4] sm:$0xf]
    %v76 = vld [vmem:[%s0 + $0xd8] sm:$0xf]
    %v77 = vld [vmem:[%s0 + $0xdc] sm:$0xf]
    %v78 = vld [vmem:[%s0 + $0xe0] sm:$0xf]
    %v79 = vld [vmem:[%s0 + $0xe4] sm:$0xf]
    %v80 = vld [vmem:[%s0 + $0xe8] sm:$0xf]
    %v81 = vld [vmem:[%s0 + $0xec] sm:$0xf]
    %v82 = vld [vmem:[%s0 + $0xf0] sm:$0xf]
    %v83 = vld [vmem:[%s0 + $0xf4] sm:$0xf]
    %v84 = vld [vmem:[%s0 + $0xf8] sm:$0xf]
    %v85 = vld [vmem:[%s0 + $0xfc] sm:$0xf]
    %v150 = vunpack.c.l.b16 %v22
    %v151 = vunpack.c.l.b16 %v23
    %v152 = vunpack.c.l.b16 %v24
    %v153 = vunpack.c.l.b16 %v25
    %v154 = vunpack.c.l.b16 %v26
    %v155 = vunpack.c.l.b16 %v27
    %v156 = vunpack.c.l.b16 %v28
    %v157 = vunpack.c.l.b16 %v29
    %v158 = vunpack.c.l.b16 %v30
    %v159 = vunpack.c.l.b16 %v31
    %v160 = vunpack.c.l.b16 %v32
    %v161 = vunpack.c.l.b16 %v33
    %v162 = vunpack.c.l.b16 %v34
    %v163 = vunpack.c.l.b16 %v35
    %v164 = vunpack.c.l.b16 %v36
    %v165 = vunpack.c.l.b16 %v37
    %v166 = vunpack.c.l.b16 %v38
    %v167 = vunpack.c.l.b16 %v39
    %v168 = vunpack.c.l.b16 %v40
    %v169 = vunpack.c.l.b16 %v41
    %v170 = vunpack.c.l.b16 %v42
    %v171 = vunpack.c.l.b16 %v43
    %v172 = vunpack.c.l.b16 %v44
    %v173 = vunpack.c.l.b16 %v45
    %v174 = vunpack.c.l.b16 %v46
    %v175 = vunpack.c.l.b16 %v47
    %v176 = vunpack.c.l.b16 %v48
    %v177 = vunpack.c.l.b16 %v49
    %v178 = vunpack.c.l.b16 %v50
    %v179 = vunpack.c.l.b16 %v51
    %v180 = vunpack.c.l.b16 %v52
    %v181 = vunpack.c.l.b16 %v53
    %v182 = vunpack.c.l.b16 %v54
    %v183 = vunpack.c.l.b16 %v55
    %v184 = vunpack.c.l.b16 %v56
    %v185 = vunpack.c.l.b16 %v57
    %v186 = vunpack.c.l.b16 %v58
    %v187 = vunpack.c.l.b16 %v59
    %v188 = vunpack.c.l.b16 %v60
    %v189 = vunpack.c.l.b16 %v61
    %v190 = vunpack.c.l.b16 %v62
    %v191 = vunpack.c.l.b16 %v63
    %v192 = vunpack.c.l.b16 %v64
    %v193 = vunpack.c.l.b16 %v65
    %v194 = vunpack.c.l.b16 %v66
    %v195 = vunpack.c.l.b16 %v67
    %v196 = vunpack.c.l.b16 %v68
    %v197 = vunpack.c.l.b16 %v69
    %v198 = vunpack.c.l.b16 %v70
    %v199 = vunpack.c.l.b16 %v71
    %v200 = vunpack.c.l.b16 %v72
    %v201 = vunpack.c.l.b16 %v73
    %v202 = vunpack.c.l.b16 %v74
    %v203 = vunpack.c.l.b16 %v75
    %v204 = vunpack.c.l.b16 %v76
    %v205 = vunpack.c.l.b16 %v77
    %v206 = vunpack.c.l.b16 %v78
    %v207 = vunpack.c.l.b16 %v79
    %v208 = vunpack.c.l.b16 %v80
    %v209 = vunpack.c.l.b16 %v81
    %v210 = vunpack.c.l.b16 %v82
    %v211 = vunpack.c.l.b16 %v83
    %v212 = vunpack.c.l.b16 %v84
    %v213 = vunpack.c.l.b16 %v85
    %v214 = vpack.c.b16 %v151, %v150
    %v215 = vpack.c.b16 %v153, %v152
    %v216 = vpack.c.b16 %v155, %v154
    %v217 = vpack.c.b16 %v157, %v156
    %v218 = vpack.c.b16 %v159, %v158
    %v219 = vpack.c.b16 %v161, %v160
    %v220 = vpack.c.b16 %v163, %v162
    %v221 = vpack.c.b16 %v165, %v164
    %v222 = vpack.c.b16 %v167, %v166
    %v223 = vpack.c.b16 %v169, %v168
    %v224 = vpack.c.b16 %v171, %v170
    %v225 = vpack.c.b16 %v173, %v172
    %v226 = vpack.c.b16 %v175, %v174
    %v227 = vpack.c.b16 %v177, %v176
    %v228 = vpack.c.b16 %v179, %v178
    %v229 = vpack.c.b16 %v181, %v180
    %v230 = vpack.c.b16 %v183, %v182
    %v231 = vpack.c.b16 %v185, %v184
    %v232 = vpack.c.b16 %v187, %v186
    %v233 = vpack.c.b16 %v189, %v188
    %v234 = vpack.c.b16 %v191, %v190
    %v235 = vpack.c.b16 %v193, %v192
    %v236 = vpack.c.b16 %v195, %v194
    %v237 = vpack.c.b16 %v197, %v196
    %v238 = vpack.c.b16 %v199, %v198
    %v239 = vpack.c.b16 %v201, %v200
    %v240 = vpack.c.b16 %v203, %v202
    %v241 = vpack.c.b16 %v205, %v204
    %v242 = vpack.c.b16 %v207, %v206
    %v243 = vpack.c.b16 %v209, %v208
    %v244 = vpack.c.b16 %v211, %v210
    %v245 = vpack.c.b16 %v213, %v212
    %v247 = vshrl.u32 %v214, 16
    %v249 = vrot.slane %v247, 7
    %v250 = vshll.u32 %v214, 16
    %v252 = vor.u32 %v249, %v250
    %v254 = vshrl.u32 %v215, 16
    %v256 = vrot.slane %v254, 7
    %v257 = vshll.u32 %v215, 16
    %v259 = vor.u32 %v256, %v257
    %v261 = vshrl.u32 %v216, 16
    %v263 = vrot.slane %v261, 7
    %v264 = vshll.u32 %v216, 16
    %v266 = vor.u32 %v263, %v264
    %v268 = vshrl.u32 %v217, 16
    %v270 = vrot.slane %v268, 7
    %v271 = vshll.u32 %v217, 16
    %v273 = vor.u32 %v270, %v271
    %v275 = vshrl.u32 %v218, 16
    %v277 = vrot.slane %v275, 7
    %v278 = vshll.u32 %v218, 16
    %v280 = vor.u32 %v277, %v278
    %v282 = vshrl.u32 %v219, 16
    %v284 = vrot.slane %v282, 7
    %v285 = vshll.u32 %v219, 16
    %v287 = vor.u32 %v284, %v285
    %v289 = vshrl.u32 %v220, 16
    %v291 = vrot.slane %v289, 7
    %v292 = vshll.u32 %v220, 16
    %v294 = vor.u32 %v291, %v292
    %v296 = vshrl.u32 %v221, 16
    %v298 = vrot.slane %v296, 7
    %v299 = vshll.u32 %v221, 16
    %v301 = vor.u32 %v298, %v299
    %v303 = vshrl.u32 %v222, 16
    %v305 = vrot.slane %v303, 7
    %v306 = vshll.u32 %v222, 16
    %v308 = vor.u32 %v305, %v306
    %v310 = vshrl.u32 %v223, 16
    %v312 = vrot.slane %v310, 7
    %v313 = vshll.u32 %v223, 16
    %v315 = vor.u32 %v312, %v313
    %v317 = vshrl.u32 %v224, 16
    %v319 = vrot.slane %v317, 7
    %v320 = vshll.u32 %v224, 16
    %v322 = vor.u32 %v319, %v320
    %v324 = vshrl.u32 %v225, 16
    %v326 = vrot.slane %v324, 7
    %v327 = vshll.u32 %v225, 16
    %v329 = vor.u32 %v326, %v327
    %v331 = vshrl.u32 %v226, 16
    %v333 = vrot.slane %v331, 7
    %v334 = vshll.u32 %v226, 16
    %v336 = vor.u32 %v333, %v334
    %v338 = vshrl.u32 %v227, 16
    %v340 = vrot.slane %v338, 7
    %v341 = vshll.u32 %v227, 16
    %v343 = vor.u32 %v340, %v341
    %v345 = vshrl.u32 %v228, 16
    %v347 = vrot.slane %v345, 7
    %v348 = vshll.u32 %v228, 16
    %v350 = vor.u32 %v347, %v348
    %v352 = vshrl.u32 %v229, 16
    %v354 = vrot.slane %v352, 7
    %v355 = vshll.u32 %v229, 16
    %v357 = vor.u32 %v354, %v355
    %v359 = vshrl.u32 %v230, 16
    %v361 = vrot.slane %v359, 7
    %v362 = vshll.u32 %v230, 16
    %v364 = vor.u32 %v361, %v362
    %v366 = vshrl.u32 %v231, 16
    %v368 = vrot.slane %v366, 7
    %v369 = vshll.u32 %v231, 16
    %v371 = vor.u32 %v368, %v369
    %v373 = vshrl.u32 %v232, 16
    %v375 = vrot.slane %v373, 7
    %v376 = vshll.u32 %v232, 16
    %v378 = vor.u32 %v375, %v376
    %v380 = vshrl.u32 %v233, 16
    %v382 = vrot.slane %v380, 7
    %v383 = vshll.u32 %v233, 16
    %v385 = vor.u32 %v382, %v383
    %v387 = vshrl.u32 %v234, 16
    %v389 = vrot.slane %v387, 7
    %v390 = vshll.u32 %v234, 16
    %v392 = vor.u32 %v389, %v390
    %v394 = vshrl.u32 %v235, 16
    %v396 = vrot.slane %v394, 7
    %v397 = vshll.u32 %v235, 16
    %v399 = vor.u32 %v396, %v397
    %v401 = vshrl.u32 %v236, 16
    %v403 = vrot.slane %v401, 7
    %v404 = vshll.u32 %v236, 16
    %v406 = vor.u32 %v403, %v404
    %v408 = vshrl.u32 %v237, 16
    %v410 = vrot.slane %v408, 7
    %v411 = vshll.u32 %v237, 16
    %v413 = vor.u32 %v410, %v411
    %v415 = vshrl.u32 %v238, 16
    %v417 = vrot.slane %v415, 7
    %v418 = vshll.u32 %v238, 16
    %v420 = vor.u32 %v417, %v418
    %v422 = vshrl.u32 %v239, 16
    %v424 = vrot.slane %v422, 7
    %v425 = vshll.u32 %v239, 16
    %v427 = vor.u32 %v424, %v425
    %v429 = vshrl.u32 %v240, 16
    %v431 = vrot.slane %v429, 7
    %v432 = vshll.u32 %v240, 16
    %v434 = vor.u32 %v431, %v432
    %v436 = vshrl.u32 %v241, 16
    %v438 = vrot.slane %v436, 7
    %v439 = vshll.u32 %v241, 16
    %v441 = vor.u32 %v438, %v439
    %v443 = vshrl.u32 %v242, 16
    %v445 = vrot.slane %v443, 7
    %v446 = vshll.u32 %v242, 16
    %v448 = vor.u32 %v445, %v446
    %v450 = vshrl.u32 %v243, 16
    %v452 = vrot.slane %v450, 7
    %v453 = vshll.u32 %v243, 16
    %v455 = vor.u32 %v452, %v453
    %v457 = vshrl.u32 %v244, 16
    %v459 = vrot.slane %v457, 7
    %v460 = vshll.u32 %v244, 16
    %v462 = vor.u32 %v459, %v460
    %v464 = vshrl.u32 %v245, 16
    %v466 = vrot.slane %v464, 7
    %v467 = vshll.u32 %v245, 16
    %v469 = vor.u32 %v466, %v467
    %vm534 = vcmask 1040384
    %vm535 = vsmask.f32 256
    %vm536 = vmand %vm534, %vm535
    %v537 = vsel %vm536, 0, %v252
    %v538 = vsel %vm536, 0, %v259
    %v539 = vsel %vm536, 0, %v266
    %v540 = vsel %vm536, 0, %v273
    %v541 = vsel %vm536, 0, %v280
    %v542 = vsel %vm536, 0, %v287
    %v543 = vsel %vm536, 0, %v294
    %v544 = vsel %vm536, 0, %v301
    %v545 = vsel %vm536, 0, %v308
    %v546 = vsel %vm536, 0, %v315
    %v547 = vsel %vm536, 0, %v322
    %v548 = vsel %vm536, 0, %v329
    %v549 = vsel %vm536, 0, %v336
    %v550 = vsel %vm536, 0, %v343
    %v551 = vsel %vm536, 0, %v350
    %v552 = vsel %vm536, 0, %v357
    %v553 = vsel %vm536, 0, %v364
    %v554 = vsel %vm536, 0, %v371
    %v555 = vsel %vm536, 0, %v378
    %v556 = vsel %vm536, 0, %v385
    %v557 = vsel %vm536, 0, %v392
    %v558 = vsel %vm536, 0, %v399
    %v559 = vsel %vm536, 0, %v406
    %v560 = vsel %vm536, 0, %v413
    %v561 = vsel %vm536, 0, %v420
    %v562 = vsel %vm536, 0, %v427
    %v563 = vsel %vm536, 0, %v434
    %v564 = vsel %vm536, 0, %v441
    %v565 = vsel %vm536, 0, %v448
    %v566 = vsel %vm536, 0, %v455
    %v567 = vsel %vm536, 0, %v462
    %v568 = vsel %vm536, 0, %v469
    %v569 = vsel %vm536, %v249, 0
    %v570 = vsel %vm536, %v256, 0
    %v571 = vsel %vm536, %v263, 0
    %v572 = vsel %vm536, %v270, 0
    %v573 = vsel %vm536, %v277, 0
    %v574 = vsel %vm536, %v284, 0
    %v575 = vsel %vm536, %v291, 0
    %v576 = vsel %vm536, %v298, 0
    %v577 = vsel %vm536, %v305, 0
    %v578 = vsel %vm536, %v312, 0
    %v579 = vsel %vm536, %v319, 0
    %v580 = vsel %vm536, %v326, 0
    %v581 = vsel %vm536, %v333, 0
    %v582 = vsel %vm536, %v340, 0
    %v583 = vsel %vm536, %v347, 0
    %v584 = vsel %vm536, %v354, 0
    %v585 = vsel %vm536, %v361, 0
    %v586 = vsel %vm536, %v368, 0
    %v587 = vsel %vm536, %v375, 0
    %v588 = vsel %vm536, %v382, 0
    %v589 = vsel %vm536, %v389, 0
    %v590 = vsel %vm536, %v396, 0
    %v591 = vsel %vm536, %v403, 0
    %v592 = vsel %vm536, %v410, 0
    %v593 = vsel %vm536, %v417, 0
    %v594 = vsel %vm536, %v424, 0
    %v595 = vsel %vm536, %v431, 0
    %v596 = vsel %vm536, %v438, 0
    %v597 = vsel %vm536, %v445, 0
    %v598 = vsel %vm536, %v452, 0
    %v599 = vsel %vm536, %v459, 0
    %v600 = vsel %vm536, %v466, 0
    %v665 = vunpack.c.l.b16 %v537
    %v666 = vunpack.c.h.b16 %v537
    %v667 = vunpack.c.l.b16 %v569
    %v668 = vunpack.c.l.b16 %v538
    %v669 = vunpack.c.h.b16 %v538
    %v670 = vunpack.c.l.b16 %v570
    %v671 = vunpack.c.l.b16 %v539
    %v672 = vunpack.c.h.b16 %v539
    %v673 = vunpack.c.l.b16 %v571
    %v674 = vunpack.c.l.b16 %v540
    %v675 = vunpack.c.h.b16 %v540
    %v676 = vunpack.c.l.b16 %v572
    %v677 = vunpack.c.l.b16 %v541
    %v678 = vunpack.c.h.b16 %v541
    %v679 = vunpack.c.l.b16 %v573
    %v680 = vunpack.c.l.b16 %v542
    %v681 = vunpack.c.h.b16 %v542
    %v682 = vunpack.c.l.b16 %v574
    %v683 = vunpack.c.l.b16 %v543
    %v684 = vunpack.c.h.b16 %v543
    %v685 = vunpack.c.l.b16 %v575
    %v686 = vunpack.c.l.b16 %v544
    %v687 = vunpack.c.h.b16 %v544
    %v688 = vunpack.c.l.b16 %v576
    %v689 = vunpack.c.l.b16 %v545
    %v690 = vunpack.c.h.b16 %v545
    %v691 = vunpack.c.l.b16 %v577
    %v692 = vunpack.c.l.b16 %v546
    %v693 = vunpack.c.h.b16 %v546
    %v694 = vunpack.c.l.b16 %v578
    %v695 = vunpack.c.l.b16 %v547
    %v696 = vunpack.c.h.b16 %v547
    %v697 = vunpack.c.l.b16 %v579
    %v698 = vunpack.c.l.b16 %v548
    %v699 = vunpack.c.h.b16 %v548
    %v700 = vunpack.c.l.b16 %v580
    %v701 = vunpack.c.l.b16 %v549
    %v702 = vunpack.c.h.b16 %v549
    %v703 = vunpack.c.l.b16 %v581
    %v704 = vunpack.c.l.b16 %v550
    %v705 = vunpack.c.h.b16 %v550
    %v706 = vunpack.c.l.b16 %v582
    %v707 = vunpack.c.l.b16 %v551
    %v708 = vunpack.c.h.b16 %v551
    %v709 = vunpack.c.l.b16 %v583
    %v710 = vunpack.c.l.b16 %v552
    %v711 = vunpack.c.h.b16 %v552
    %v712 = vunpack.c.l.b16 %v584
    %v713 = vunpack.c.l.b16 %v553
    %v714 = vunpack.c.h.b16 %v553
    %v715 = vunpack.c.l.b16 %v585
    %v716 = vunpack.c.l.b16 %v554
    %v717 = vunpack.c.h.b16 %v554
    %v718 = vunpack.c.l.b16 %v586
    %v719 = vunpack.c.l.b16 %v555
    %v720 = vunpack.c.h.b16 %v555
    %v721 = vunpack.c.l.b16 %v587
    %v722 = vunpack.c.l.b16 %v556
    %v723 = vunpack.c.h.b16 %v556
    %v724 = vunpack.c.l.b16 %v588
    %v725 = vunpack.c.l.b16 %v557
    %v726 = vunpack.c.h.b16 %v557
    %v727 = vunpack.c.l.b16 %v589
    %v728 = vunpack.c.l.b16 %v558
    %v729 = vunpack.c.h.b16 %v558
    %v730 = vunpack.c.l.b16 %v590
    %v731 = vunpack.c.l.b16 %v559
    %v732 = vunpack.c.h.b16 %v559
    %v733 = vunpack.c.l.b16 %v591
    %v734 = vunpack.c.l.b16 %v560
    %v735 = vunpack.c.h.b16 %v560
    %v736 = vunpack.c.l.b16 %v592
    %v737 = vunpack.c.l.b16 %v561
    %v738 = vunpack.c.h.b16 %v561
    %v739 = vunpack.c.l.b16 %v593
    %v740 = vunpack.c.l.b16 %v562
    %v741 = vunpack.c.h.b16 %v562
    %v742 = vunpack.c.l.b16 %v594
    %v743 = vunpack.c.l.b16 %v563
    %v744 = vunpack.c.h.b16 %v563
    %v745 = vunpack.c.l.b16 %v595
    %v746 = vunpack.c.l.b16 %v564
    %v747 = vunpack.c.h.b16 %v564
    %v748 = vunpack.c.l.b16 %v596
    %v749 = vunpack.c.l.b16 %v565
    %v750 = vunpack.c.h.b16 %v565
    %v751 = vunpack.c.l.b16 %v597
    %v752 = vunpack.c.l.b16 %v566
    %v753 = vunpack.c.h.b16 %v566
    %v754 = vunpack.c.l.b16 %v598
    %v755 = vunpack.c.l.b16 %v567
    %v756 = vunpack.c.h.b16 %v567
    %v757 = vunpack.c.l.b16 %v599
    %v758 = vunpack.c.l.b16 %v568
    %v759 = vunpack.c.h.b16 %v568
    %v760 = vunpack.c.l.b16 %v600
    %v761 = vpack.c.b16 %v665, %v665
    %v762 = vpack.c.b16 %v666, %v666
    %v763 = vpack.c.b16 %v667, %v667
    %v764 = vpack.c.b16 %v668, %v668
    %v765 = vpack.c.b16 %v669, %v669
    %v766 = vpack.c.b16 %v670, %v670
    %v767 = vpack.c.b16 %v671, %v671
    %v768 = vpack.c.b16 %v672, %v672
    %v769 = vpack.c.b16 %v673, %v673
    %v770 = vpack.c.b16 %v674, %v674
    %v771 = vpack.c.b16 %v675, %v675
    %v772 = vpack.c.b16 %v676, %v676
    %v773 = vpack.c.b16 %v677, %v677
    %v774 = vpack.c.b16 %v678, %v678
    %v775 = vpack.c.b16 %v679, %v679
    %v776 = vpack.c.b16 %v680, %v680
    %v777 = vpack.c.b16 %v681, %v681
    %v778 = vpack.c.b16 %v682, %v682
    %v779 = vpack.c.b16 %v683, %v683
    %v780 = vpack.c.b16 %v684, %v684
    %v781 = vpack.c.b16 %v685, %v685
    %v782 = vpack.c.b16 %v686, %v686
    %v783 = vpack.c.b16 %v687, %v687
    %v784 = vpack.c.b16 %v688, %v688
    %v785 = vpack.c.b16 %v689, %v689
    %v786 = vpack.c.b16 %v690, %v690
    %v787 = vpack.c.b16 %v691, %v691
    %v788 = vpack.c.b16 %v692, %v692
    %v789 = vpack.c.b16 %v693, %v693
    %v790 = vpack.c.b16 %v694, %v694
    %v791 = vpack.c.b16 %v695, %v695
    %v792 = vpack.c.b16 %v696, %v696
    %v793 = vpack.c.b16 %v697, %v697
    %v794 = vpack.c.b16 %v698, %v698
    %v795 = vpack.c.b16 %v699, %v699
    %v796 = vpack.c.b16 %v700, %v700
    %v797 = vpack.c.b16 %v701, %v701
    %v798 = vpack.c.b16 %v702, %v702
    %v799 = vpack.c.b16 %v703, %v703
    %v800 = vpack.c.b16 %v704, %v704
    %v801 = vpack.c.b16 %v705, %v705
    %v802 = vpack.c.b16 %v706, %v706
    %v803 = vpack.c.b16 %v707, %v707
    %v804 = vpack.c.b16 %v708, %v708
    %v805 = vpack.c.b16 %v709, %v709
    %v806 = vpack.c.b16 %v710, %v710
    %v807 = vpack.c.b16 %v711, %v711
    %v808 = vpack.c.b16 %v712, %v712
    %v809 = vpack.c.b16 %v713, %v713
    %v810 = vpack.c.b16 %v714, %v714
    %v811 = vpack.c.b16 %v715, %v715
    %v812 = vpack.c.b16 %v716, %v716
    %v813 = vpack.c.b16 %v717, %v717
    %v814 = vpack.c.b16 %v718, %v718
    %v815 = vpack.c.b16 %v719, %v719
    %v816 = vpack.c.b16 %v720, %v720
    %v817 = vpack.c.b16 %v721, %v721
    %v818 = vpack.c.b16 %v722, %v722
    %v819 = vpack.c.b16 %v723, %v723
    %v820 = vpack.c.b16 %v724, %v724
    %v821 = vpack.c.b16 %v725, %v725
    %v822 = vpack.c.b16 %v726, %v726
    %v823 = vpack.c.b16 %v727, %v727
    %v824 = vpack.c.b16 %v728, %v728
    %v825 = vpack.c.b16 %v729, %v729
    %v826 = vpack.c.b16 %v730, %v730
    %v827 = vpack.c.b16 %v731, %v731
    %v828 = vpack.c.b16 %v732, %v732
    %v829 = vpack.c.b16 %v733, %v733
    %v830 = vpack.c.b16 %v734, %v734
    %v831 = vpack.c.b16 %v735, %v735
    %v832 = vpack.c.b16 %v736, %v736
    %v833 = vpack.c.b16 %v737, %v737
    %v834 = vpack.c.b16 %v738, %v738
    %v835 = vpack.c.b16 %v739, %v739
    %v836 = vpack.c.b16 %v740, %v740
    %v837 = vpack.c.b16 %v741, %v741
    %v838 = vpack.c.b16 %v742, %v742
    %v839 = vpack.c.b16 %v743, %v743
    %v840 = vpack.c.b16 %v744, %v744
    %v841 = vpack.c.b16 %v745, %v745
    %v842 = vpack.c.b16 %v746, %v746
    %v843 = vpack.c.b16 %v747, %v747
    %v844 = vpack.c.b16 %v748, %v748
    %v845 = vpack.c.b16 %v749, %v749
    %v846 = vpack.c.b16 %v750, %v750
    %v847 = vpack.c.b16 %v751, %v751
    %v848 = vpack.c.b16 %v752, %v752
    %v849 = vpack.c.b16 %v753, %v753
    %v850 = vpack.c.b16 %v754, %v754
    %v851 = vpack.c.b16 %v755, %v755
    %v852 = vpack.c.b16 %v756, %v756
    %v853 = vpack.c.b16 %v757, %v757
    %v854 = vpack.c.b16 %v758, %v758
    %v855 = vpack.c.b16 %v759, %v759
    %v856 = vpack.c.b16 %v760, %v760
    %s953 = scalar_lea.vmem [#allocation2], 12
    %vm954 = vcmask 27648
    %955 = vst.msk [vmem:[%s953] sm:$0xf] %vm954, %v761
    %956 = vst.msk [vmem:[%s953 + $0x4] sm:$0xf] %vm954, %v762
    %vm957 = vcmask 24576
    %958 = vst.msk [vmem:[%s953 + $0x8] sm:$0x1] %vm957, %v763
    %959 = vst.msk [vmem:[%s953 + $0xc] sm:$0xf] %vm954, %v764
    %960 = vst.msk [vmem:[%s953 + $0x10] sm:$0xf] %vm954, %v765
    %961 = vst.msk [vmem:[%s953 + $0x14] sm:$0x1] %vm957, %v766
    %962 = vst.msk [vmem:[%s953 + $0x18] sm:$0xf] %vm954, %v767
    %963 = vst.msk [vmem:[%s953 + $0x1c] sm:$0xf] %vm954, %v768
    %964 = vst.msk [vmem:[%s953 + $0x20] sm:$0x1] %vm957, %v769
    %965 = vst.msk [vmem:[%s953 + $0x24] sm:$0xf] %vm954, %v770
    %966 = vst.msk [vmem:[%s953 + $0x28] sm:$0xf] %vm954, %v771
    %967 = vst.msk [vmem:[%s953 + $0x2c] sm:$0x1] %vm957, %v772
    %968 = vst.msk [vmem:[%s953 + $0x30] sm:$0xf] %vm954, %v773
    %969 = vst.msk [vmem:[%s953 + $0x34] sm:$0xf] %vm954, %v774
    %970 = vst.msk [vmem:[%s953 + $0x38] sm:$0x1] %vm957, %v775
    %971 = vst.msk [vmem:[%s953 + $0x3c] sm:$0xf] %vm954, %v776
    %972 = vst.msk [vmem:[%s953 + $0x40] sm:$0xf] %vm954, %v777
    %973 = vst.msk [vmem:[%s953 + $0x44] sm:$0x1] %vm957, %v778
    %974 = vst.msk [vmem:[%s953 + $0x48] sm:$0xf] %vm954, %v779
    %975 = vst.msk [vmem:[%s953 + $0x4c] sm:$0xf] %vm954, %v780
    %976 = vst.msk [vmem:[%s953 + $0x50] sm:$0x1] %vm957, %v781
    %977 = vst.msk [vmem:[%s953 + $0x54] sm:$0xf] %vm954, %v782
    %978 = vst.msk [vmem:[%s953 + $0x58] sm:$0xf] %vm954, %v783
    %979 = vst.msk [vmem:[%s953 + $0x5c] sm:$0x1] %vm957, %v784
    %980 = vst.msk [vmem:[%s953 + $0x60] sm:$0xf] %vm954, %v785
    %981 = vst.msk [vmem:[%s953 + $0x64] sm:$0xf] %vm954, %v786
    %982 = vst.msk [vmem:[%s953 + $0x68] sm:$0x1] %vm957, %v787
    %983 = vst.msk [vmem:[%s953 + $0x6c] sm:$0xf] %vm954, %v788
    %984 = vst.msk [vmem:[%s953 + $0x70] sm:$0xf] %vm954, %v789
    %985 = vst.msk [vmem:[%s953 + $0x74] sm:$0x1] %vm957, %v790
    %986 = vst.msk [vmem:[%s953 + $0x78] sm:$0xf] %vm954, %v791
    %987 = vst.msk [vmem:[%s953 + $0x7c] sm:$0xf] %vm954, %v792
    %988 = vst.msk [vmem:[%s953 + $0x80] sm:$0x1] %vm957, %v793
    %989 = vst.msk [vmem:[%s953 + $0x84] sm:$0xf] %vm954, %v794
    %990 = vst.msk [vmem:[%s953 + $0x88] sm:$0xf] %vm954, %v795
    %991 = vst.msk [vmem:[%s953 + $0x8c] sm:$0x1] %vm957, %v796
    %992 = vst.msk [vmem:[%s953 + $0x90] sm:$0xf] %vm954, %v797
    %993 = vst.msk [vmem:[%s953 + $0x94] sm:$0xf] %vm954, %v798
    %994 = vst.msk [vmem:[%s953 + $0x98] sm:$0x1] %vm957, %v799
    %995 = vst.msk [vmem:[%s953 + $0x9c] sm:$0xf] %vm954, %v800
    %996 = vst.msk [vmem:[%s953 + $0xa0] sm:$0xf] %vm954, %v801
    %997 = vst.msk [vmem:[%s953 + $0xa4] sm:$0x1] %vm957, %v802
    %998 = vst.msk [vmem:[%s953 + $0xa8] sm:$0xf] %vm954, %v803
    %999 = vst.msk [vmem:[%s953 + $0xac] sm:$0xf] %vm954, %v804
    %1000 = vst.msk [vmem:[%s953 + $0xb0] sm:$0x1] %vm957, %v805
    %1001 = vst.msk [vmem:[%s953 + $0xb4] sm:$0xf] %vm954, %v806
    %1002 = vst.msk [vmem:[%s953 + $0xb8] sm:$0xf] %vm954, %v807
    %1003 = vst.msk [vmem:[%s953 + $0xbc] sm:$0x1] %vm957, %v808
    %1004 = vst.msk [vmem:[%s953 + $0xd8] sm:$0xf] %vm954, %v809
    %1005 = vst.msk [vmem:[%s953 + $0xdc] sm:$0xf] %vm954, %v810
    %1006 = vst.msk [vmem:[%s953 + $0xe0] sm:$0x1] %vm957, %v811
    %1007 = vst.msk [vmem:[%s953 + $0xe4] sm:$0xf] %vm954, %v812
    %1008 = vst.msk [vmem:[%s953 + $0xe8] sm:$0xf] %vm954, %v813
    %1009 = vst.msk [vmem:[%s953 + $0xec] sm:$0x1] %vm957, %v814
    %1010 = vst.msk [vmem:[%s953 + $0xf0] sm:$0xf] %vm954, %v815
    %1011 = vst.msk [vmem:[%s953 + $0xf4] sm:$0xf] %vm954, %v816
    %1012 = vst.msk [vmem:[%s953 + $0xf8] sm:$0x1] %vm957, %v817
    %1013 = vst.msk [vmem:[%s953 + $0xfc] sm:$0xf] %vm954, %v818
    %1014 = vst.msk [vmem:[%s953 + $0x100] sm:$0xf] %vm954, %v819
    %1015 = vst.msk [vmem:[%s953 + $0x104] sm:$0x1] %vm957, %v820
    %1016 = vst.msk [vmem:[%s953 + $0x108] sm:$0xf] %vm954, %v821
    %1017 = vst.msk [vmem:[%s953 + $0x10c] sm:$0xf] %vm954, %v822
    %1018 = vst.msk [vmem:[%s953 + $0x110] sm:$0x1] %vm957, %v823
    %1019 = vst.msk [vmem:[%s953 + $0x114] sm:$0xf] %vm954, %v824
    %1020 = vst.msk [vmem:[%s953 + $0x118] sm:$0xf] %vm954, %v825
    %1021 = vst.msk [vmem:[%s953 + $0x11c] sm:$0x1] %vm957, %v826
    %1022 = vst.msk [vmem:[%s953 + $0x120] sm:$0xf] %vm954, %v827
    %1023 = vst.msk [vmem:[%s953 + $0x124] sm:$0xf] %vm954, %v828
    %1024 = vst.msk [vmem:[%s953 + $0x128] sm:$0x1] %vm957, %v829
    %1025 = vst.msk [vmem:[%s953 + $0x12c] sm:$0xf] %vm954, %v830
    %1026 = vst.msk [vmem:[%s953 + $0x130] sm:$0xf] %vm954, %v831
    %1027 = vst.msk [vmem:[%s953 + $0x134] sm:$0x1] %vm957, %v832
    %1028 = vst.msk [vmem:[%s953 + $0x138] sm:$0xf] %vm954, %v833
    %1029 = vst.msk [vmem:[%s953 + $0x13c] sm:$0xf] %vm954, %v834
    %1030 = vst.msk [vmem:[%s953 + $0x140] sm:$0x1] %vm957, %v835
    %1031 = vst.msk [vmem:[%s953 + $0x144] sm:$0xf] %vm954, %v836
    %1032 = vst.msk [vmem:[%s953 + $0x148] sm:$0xf] %vm954, %v837
    %1033 = vst.msk [vmem:[%s953 + $0x14c] sm:$0x1] %vm957, %v838
    %1034 = vst.msk [vmem:[%s953 + $0x150] sm:$0xf] %vm954, %v839
    %1035 = vst.msk [vmem:[%s953 + $0x154] sm:$0xf] %vm954, %v840
    %1036 = vst.msk [vmem:[%s953 + $0x158] sm:$0x1] %vm957, %v841
    %1037 = vst.msk [vmem:[%s953 + $0x15c] sm:$0xf] %vm954, %v842
    %1038 = vst.msk [vmem:[%s953 + $0x160] sm:$0xf] %vm954, %v843
    %1039 = vst.msk [vmem:[%s953 + $0x164] sm:$0x1] %vm957, %v844
    %1040 = vst.msk [vmem:[%s953 + $0x168] sm:$0xf] %vm954, %v845
    %1041 = vst.msk [vmem:[%s953 + $0x16c] sm:$0xf] %vm954, %v846
    %1042 = vst.msk [vmem:[%s953 + $0x170] sm:$0x1] %vm957, %v847
    %1043 = vst.msk [vmem:[%s953 + $0x174] sm:$0xf] %vm954, %v848
    %1044 = vst.msk [vmem:[%s953 + $0x178] sm:$0xf] %vm954, %v849
    %1045 = vst.msk [vmem:[%s953 + $0x17c] sm:$0x1] %vm957, %v850
    %1046 = vst.msk [vmem:[%s953 + $0x180] sm:$0xf] %vm954, %v851
    %1047 = vst.msk [vmem:[%s953 + $0x184] sm:$0xf] %vm954, %v852
    %1048 = vst.msk [vmem:[%s953 + $0x188] sm:$0x1] %vm957, %v853
    %1049 = vst.msk [vmem:[%s953 + $0x18c] sm:$0xf] %vm954, %v854
    %1050 = vst.msk [vmem:[%s953 + $0x190] sm:$0xf] %vm954, %v855
    %1051 = vst.msk [vmem:[%s953 + $0x194] sm:$0x1] %vm957, %v856
    %1052 = vst.msk [vmem:[#allocation2] sm:$0xf] %vm954, 0
    %1053 = vst.msk [vmem:[#allocation2 + $0x4] sm:$0xf] %vm954, 0
    %1054 = vst.msk [vmem:[#allocation2 + $0x8] sm:$0x1] %vm957, 0
    %1055 = vst.msk [vmem:[#allocation2 + $0xd8] sm:$0xf] %vm954, 0
    %1056 = vst.msk [vmem:[#allocation2 + $0xdc] sm:$0xf] %vm954, 0
    %1057 = vst.msk [vmem:[#allocation2 + $0xe0] sm:$0x1] %vm957, 0
    %s1058 = scalar_lea.vmem [#allocation2], 204
    %1059 = vst.msk [vmem:[%s1058] sm:$0xf] %vm954, 0
    %1060 = vst.msk [vmem:[%s1058 + $0x4] sm:$0xf] %vm954, 0
    %1061 = vst.msk [vmem:[%s1058 + $0x8] sm:$0x1] %vm957, 0
    %1062 = vst.msk [vmem:[%s1058 + $0xd8] sm:$0xf] %vm954, 0
    %1063 = vst.msk [vmem:[%s1058 + $0xdc] sm:$0xf] %vm954, 0
    %1064 = vst.msk [vmem:[%s1058 + $0xe0] sm:$0x1] %vm957, 0
    %v1065 = vld [vmem:[#allocation2] sm:$0xf]
    %v1066 = vld [vmem:[#allocation2 + $0x4] sm:$0xf]
    %v1067 = vld [vmem:[#allocation2 + $0x8] sm:$0x1]
    %v1068 = vld [vmem:[#allocation2 + $0xc] sm:$0xf]
    %v1069 = vld [vmem:[#allocation2 + $0x10] sm:$0xf]
    %v1070 = vld [vmem:[#allocation2 + $0x14] sm:$0x1]
    %v1071 = vld [vmem:[#allocation2 + $0x18] sm:$0xf]
    %v1072 = vld [vmem:[#allocation2 + $0x1c] sm:$0xf]
    %v1073 = vld [vmem:[#allocation2 + $0x20] sm:$0x1]
    %v1074 = vld [vmem:[#allocation2 + $0x24] sm:$0xf]
    %v1075 = vld [vmem:[#allocation2 + $0x28] sm:$0xf]
    %v1076 = vld [vmem:[#allocation2 + $0x2c] sm:$0x1]
    %v1077 = vld [vmem:[#allocation2 + $0x30] sm:$0xf]
    %v1078 = vld [vmem:[#allocation2 + $0x34] sm:$0xf]
    %v1079 = vld [vmem:[#allocation2 + $0x38] sm:$0x1]
    %v1080 = vld [vmem:[#allocation2 + $0x3c] sm:$0xf]
    %v1081 = vld [vmem:[#allocation2 + $0x40] sm:$0xf]
    %v1082 = vld [vmem:[#allocation2 + $0x44] sm:$0x1]
    %v1083 = vld [vmem:[#allocation2 + $0x48] sm:$0xf]
    %v1084 = vld [vmem:[#allocation2 + $0x4c] sm:$0xf]
    %v1085 = vld [vmem:[#allocation2 + $0x50] sm:$0x1]
    %v1086 = vld [vmem:[#allocation2 + $0x54] sm:$0xf]
    %v1087 = vld [vmem:[#allocation2 + $0x58] sm:$0xf]
    %v1088 = vld [vmem:[#allocation2 + $0x5c] sm:$0x1]
    %v1089 = vld [vmem:[#allocation2 + $0x60] sm:$0xf]
    %v1090 = vld [vmem:[#allocation2 + $0x64] sm:$0xf]
    %v1091 = vld [vmem:[#allocation2 + $0x68] sm:$0x1]
    %v1092 = vld [vmem:[#allocation2 + $0x6c] sm:$0xf]
    %v1093 = vld [vmem:[#allocation2 + $0x70] sm:$0xf]
    %v1094 = vld [vmem:[#allocation2 + $0x74] sm:$0x1]
    %v1095 = vld [vmem:[#allocation2 + $0x78] sm:$0xf]
    %v1096 = vld [vmem:[#allocation2 + $0x7c] sm:$0xf]
    %v1097 = vld [vmem:[#allocation2 + $0x80] sm:$0x1]
    %v1098 = vld [vmem:[#allocation2 + $0x84] sm:$0xf]
    %v1099 = vld [vmem:[#allocation2 + $0x88] sm:$0xf]
    %v1100 = vld [vmem:[#allocation2 + $0x8c] sm:$0x1]
    %v1101 = vld [vmem:[#allocation2 + $0x90] sm:$0xf]
    %v1102 = vld [vmem:[#allocation2 + $0x94] sm:$0xf]
    %v1103 = vld [vmem:[#allocation2 + $0x98] sm:$0x1]
    %v1104 = vld [vmem:[#allocation2 + $0x9c] sm:$0xf]
    %v1105 = vld [vmem:[#allocation2 + $0xa0] sm:$0xf]
    %v1106 = vld [vmem:[#allocation2 + $0xa4] sm:$0x1]
    %v1107 = vld [vmem:[#allocation2 + $0xa8] sm:$0xf]
    %v1108 = vld [vmem:[#allocation2 + $0xac] sm:$0xf]
    %v1109 = vld [vmem:[#allocation2 + $0xb0] sm:$0x1]
    %v1110 = vld [vmem:[#allocation2 + $0xb4] sm:$0xf]
    %v1111 = vld [vmem:[#allocation2 + $0xb8] sm:$0xf]
    %v1112 = vld [vmem:[#allocation2 + $0xbc] sm:$0x1]
    %v1113 = vld [vmem:[#allocation2 + $0xc0] sm:$0xf]
    %v1114 = vld [vmem:[#allocation2 + $0xc4] sm:$0xf]
    %v1115 = vld [vmem:[#allocation2 + $0xc8] sm:$0x1]
    %v1116 = vld [vmem:[#allocation2 + $0xcc] sm:$0xf]
    %v1117 = vld [vmem:[#allocation2 + $0xd0] sm:$0xf]
    %v1118 = vld [vmem:[#allocation2 + $0xd4] sm:$0x1]
    %v1119 = vld [vmem:[#allocation2 + $0xd8] sm:$0xf]
    %v1120 = vld [vmem:[#allocation2 + $0xdc] sm:$0xf]
    %v1121 = vld [vmem:[#allocation2 + $0xe0] sm:$0x1]
    %v1122 = vld [vmem:[#allocation2 + $0xe4] sm:$0xf]
    %v1123 = vld [vmem:[#allocation2 + $0xe8] sm:$0xf]
    %v1124 = vld [vmem:[#allocation2 + $0xec] sm:$0x1]
    %v1125 = vld [vmem:[#allocation2 + $0xf0] sm:$0xf]
    %v1126 = vld [vmem:[#allocation2 + $0xf4] sm:$0xf]
    %v1127 = vld [vmem:[#allocation2 + $0xf8] sm:$0x1]
    %v1128 = vld [vmem:[#allocation2 + $0xfc] sm:$0xf]
    %v1129 = vld [vmem:[#allocation2 + $0x100] sm:$0xf]
    %v1130 = vld [vmem:[#allocation2 + $0x104] sm:$0x1]
    %v1131 = vld [vmem:[#allocation2 + $0x108] sm:$0xf]
    %v1132 = vld [vmem:[#allocation2 + $0x10c] sm:$0xf]
    %v1133 = vld [vmem:[#allocation2 + $0x110] sm:$0x1]
    %v1134 = vld [vmem:[#allocation2 + $0x114] sm:$0xf]
    %v1135 = vld [vmem:[#allocation2 + $0x118] sm:$0xf]
    %v1136 = vld [vmem:[#allocation2 + $0x11c] sm:$0x1]
    %v1137 = vld [vmem:[#allocation2 + $0x120] sm:$0xf]
    %v1138 = vld [vmem:[#allocation2 + $0x124] sm:$0xf]
    %v1139 = vld [vmem:[#allocation2 + $0x128] sm:$0x1]
    %v1140 = vld [vmem:[#allocation2 + $0x12c] sm:$0xf]
    %v1141 = vld [vmem:[#allocation2 + $0x130] sm:$0xf]
    %v1142 = vld [vmem:[#allocation2 + $0x134] sm:$0x1]
    %v1143 = vld [vmem:[#allocation2 + $0x138] sm:$0xf]
    %v1144 = vld [vmem:[#allocation2 + $0x13c] sm:$0xf]
    %v1145 = vld [vmem:[#allocation2 + $0x140] sm:$0x1]
    %v1146 = vld [vmem:[#allocation2 + $0x144] sm:$0xf]
    %v1147 = vld [vmem:[#allocation2 + $0x148] sm:$0xf]
    %v1148 = vld [vmem:[#allocation2 + $0x14c] sm:$0x1]
    %v1149 = vld [vmem:[#allocation2 + $0x150] sm:$0xf]
    %v1150 = vld [vmem:[#allocation2 + $0x154] sm:$0xf]
    %v1151 = vld [vmem:[#allocation2 + $0x158] sm:$0x1]
    %v1152 = vld [vmem:[#allocation2 + $0x15c] sm:$0xf]
    %v1153 = vld [vmem:[#allocation2 + $0x160] sm:$0xf]
    %v1154 = vld [vmem:[#allocation2 + $0x164] sm:$0x1]
    %v1155 = vld [vmem:[#allocation2 + $0x168] sm:$0xf]
    %v1156 = vld [vmem:[#allocation2 + $0x16c] sm:$0xf]
    %v1157 = vld [vmem:[#allocation2 + $0x170] sm:$0x1]
    %v1158 = vld [vmem:[#allocation2 + $0x174] sm:$0xf]
    %v1159 = vld [vmem:[#allocation2 + $0x178] sm:$0xf]
    %v1160 = vld [vmem:[#allocation2 + $0x17c] sm:$0x1]
    %v1161 = vld [vmem:[#allocation2 + $0x180] sm:$0xf]
    %v1162 = vld [vmem:[#allocation2 + $0x184] sm:$0xf]
    %v1163 = vld [vmem:[#allocation2 + $0x188] sm:$0x1]
    %v1164 = vld [vmem:[#allocation2 + $0x18c] sm:$0xf]
    %v1165 = vld [vmem:[#allocation2 + $0x190] sm:$0xf]
    %v1166 = vld [vmem:[#allocation2 + $0x194] sm:$0x1]
    %v1167 = vld [vmem:[#allocation2 + $0x198] sm:$0xf]
    %v1168 = vld [vmem:[#allocation2 + $0x19c] sm:$0xf]
    %v1169 = vld [vmem:[#allocation2 + $0x1a0] sm:$0x1]
    %v1170 = vld [vmem:[#allocation2 + $0x1a4] sm:$0xf]
    %v1171 = vld [vmem:[#allocation2 + $0x1a8] sm:$0xf]
    %v1172 = vld [vmem:[#allocation2 + $0x1ac] sm:$0x1]
    %vm1173 = vsmask.f32 3328
    %vm1174 = vsmask.f32 7440
    %vm1175 = vmor %vm1173, %vm1174
    %v1177 = vshrl.u32 %v1065, 16
    %v1179 = vrot.slane %v1177, 4
    %v1180 = vshll.u32 %v1065, 16
    %v1182 = vrot.slane %v1180, 5
    %v1183 = vor.u32 %v1179, %v1182
    %v1184 = vrot.slane %v1183, 4
    %v1186 = vshll.u32 %v1066, 16
    %v1188 = vrot.slane %v1186, 5
    %v1189 = vsel %vm1175, %v1184, %v1188
    %v1190 = vshrl.u32 %v1066, 16
    %v1192 = vrot.slane %v1190, 4
    %v1193 = vor.u32 %v1192, %v1188
    %v1194 = vrot.slane %v1193, 4
    %v1196 = vshll.u32 %v1067, 16
    %v1198 = vrot.slane %v1196, 5
    %v1199 = vsel %vm1175, %v1194, %v1198
    %v1201 = vshrl.u32 %v1068, 16
    %v1203 = vrot.slane %v1201, 4
    %v1204 = vshll.u32 %v1068, 16
    %v1206 = vrot.slane %v1204, 5
    %v1207 = vor.u32 %v1203, %v1206
    %v1208 = vrot.slane %v1207, 4
    %v1210 = vshll.u32 %v1069, 16
    %v1212 = vrot.slane %v1210, 5
    %v1213 = vsel %vm1175, %v1208, %v1212
    %v1214 = vshrl.u32 %v1069, 16
    %v1216 = vrot.slane %v1214, 4
    %v1217 = vor.u32 %v1216, %v1212
    %v1218 = vrot.slane %v1217, 4
    %v1220 = vshll.u32 %v1070, 16
    %v1222 = vrot.slane %v1220, 5
    %v1223 = vsel %vm1175, %v1218, %v1222
    %v1225 = vshrl.u32 %v1071, 16
    %v1227 = vrot.slane %v1225, 4
    %v1228 = vshll.u32 %v1071, 16
    %v1230 = vrot.slane %v1228, 5
    %v1231 = vor.u32 %v1227, %v1230
    %v1232 = vrot.slane %v1231, 4
    %v1234 = vshll.u32 %v1072, 16
    %v1236 = vrot.slane %v1234, 5
    %v1237 = vsel %vm1175, %v1232, %v1236
    %v1238 = vshrl.u32 %v1072, 16
    %v1240 = vrot.slane %v1238, 4
    %v1241 = vor.u32 %v1240, %v1236
    %v1242 = vrot.slane %v1241, 4
    %v1244 = vshll.u32 %v1073, 16
    %v1246 = vrot.slane %v1244, 5
    %v1247 = vsel %vm1175, %v1242, %v1246
    %v1249 = vshrl.u32 %v1074, 16
    %v1251 = vrot.slane %v1249, 4
    %v1252 = vshll.u32 %v1074, 16
    %v1254 = vrot.slane %v1252, 5
    %v1255 = vor.u32 %v1251, %v1254
    %v1256 = vrot.slane %v1255, 4
    %v1258 = vshll.u32 %v1075, 16
    %v1260 = vrot.slane %v1258, 5
    %v1261 = vsel %vm1175, %v1256, %v1260
    %v1262 = vshrl.u32 %v1075, 16
    %v1264 = vrot.slane %v1262, 4
    %v1265 = vor.u32 %v1264, %v1260
    %v1266 = vrot.slane %v1265, 4
    %v1268 = vshll.u32 %v1076, 16
    %v1270 = vrot.slane %v1268, 5
    %v1271 = vsel %vm1175, %v1266, %v1270
    %v1273 = vshrl.u32 %v1077, 16
    %v1275 = vrot.slane %v1273, 4
    %v1276 = vshll.u32 %v1077, 16
    %v1278 = vrot.slane %v1276, 5
    %v1279 = vor.u32 %v1275, %v1278
    %v1280 = vrot.slane %v1279, 4
    %v1282 = vshll.u32 %v1078, 16
    %v1284 = vrot.slane %v1282, 5
    %v1285 = vsel %vm1175, %v1280, %v1284
    %v1286 = vshrl.u32 %v1078, 16
    %v1288 = vrot.slane %v1286, 4
    %v1289 = vor.u32 %v1288, %v1284
    %v1290 = vrot.slane %v1289, 4
    %v1292 = vshll.u32 %v1079, 16
    %v1294 = vrot.slane %v1292, 5
    %v1295 = vsel %vm1175, %v1290, %v1294
    %v1297 = vshrl.u32 %v1080, 16
    %v1299 = vrot.slane %v1297, 4
    %v1300 = vshll.u32 %v1080, 16
    %v1302 = vrot.slane %v1300, 5
    %v1303 = vor.u32 %v1299, %v1302
    %v1304 = vrot.slane %v1303, 4
    %v1306 = vshll.u32 %v1081, 16
    %v1308 = vrot.slane %v1306, 5
    %v1309 = vsel %vm1175, %v1304, %v1308
    %v1310 = vshrl.u32 %v1081, 16
    %v1312 = vrot.slane %v1310, 4
    %v1313 = vor.u32 %v1312, %v1308
    %v1314 = vrot.slane %v1313, 4
    %v1316 = vshll.u32 %v1082, 16
    %v1318 = vrot.slane %v1316, 5
    %v1319 = vsel %vm1175, %v1314, %v1318
    %v1321 = vshrl.u32 %v1083, 16
    %v1323 = vrot.slane %v1321, 4
    %v1324 = vshll.u32 %v1083, 16
    %v1326 = vrot.slane %v1324, 5
    %v1327 = vor.u32 %v1323, %v1326
    %v1328 = vrot.slane %v1327, 4
    %v1330 = vshll.u32 %v1084, 16
    %v1332 = vrot.slane %v1330, 5
    %v1333 = vsel %vm1175, %v1328, %v1332
    %v1334 = vshrl.u32 %v1084, 16
    %v1336 = vrot.slane %v1334, 4
    %v1337 = vor.u32 %v1336, %v1332
    %v1338 = vrot.slane %v1337, 4
    %v1340 = vshll.u32 %v1085, 16
    %v1342 = vrot.slane %v1340, 5
    %v1343 = vsel %vm1175, %v1338, %v1342
    %v1345 = vshrl.u32 %v1086, 16
    %v1347 = vrot.slane %v1345, 4
    %v1348 = vshll.u32 %v1086, 16
    %v1350 = vrot.slane %v1348, 5
    %v1351 = vor.u32 %v1347, %v1350
    %v1352 = vrot.slane %v1351, 4
    %v1354 = vshll.u32 %v1087, 16
    %v1356 = vrot.slane %v1354, 5
    %v1357 = vsel %vm1175, %v1352, %v1356
    %v1358 = vshrl.u32 %v1087, 16
    %v1360 = vrot.slane %v1358, 4
    %v1361 = vor.u32 %v1360, %v1356
    %v1362 = vrot.slane %v1361, 4
    %v1364 = vshll.u32 %v1088, 16
    %v1366 = vrot.slane %v1364, 5
    %v1367 = vsel %vm1175, %v1362, %v1366
    %v1369 = vshrl.u32 %v1089, 16
    %v1371 = vrot.slane %v1369, 4
    %v1372 = vshll.u32 %v1089, 16
    %v1374 = vrot.slane %v1372, 5
    %v1375 = vor.u32 %v1371, %v1374
    %v1376 = vrot.slane %v1375, 4
    %v1378 = vshll.u32 %v1090, 16
    %v1380 = vrot.slane %v1378, 5
    %v1381 = vsel %vm1175, %v1376, %v1380
    %v1382 = vshrl.u32 %v1090, 16
    %v1384 = vrot.slane %v1382, 4
    %v1385 = vor.u32 %v1384, %v1380
    %v1386 = vrot.slane %v1385, 4
    %v1388 = vshll.u32 %v1091, 16
    %v1390 = vrot.slane %v1388, 5
    %v1391 = vsel %vm1175, %v1386, %v1390
    %v1393 = vshrl.u32 %v1092, 16
    %v1395 = vrot.slane %v1393, 4
    %v1396 = vshll.u32 %v1092, 16
    %v1398 = vrot.slane %v1396, 5
    %v1399 = vor.u32 %v1395, %v1398
    %v1400 = vrot.slane %v1399, 4
    %v1402 = vshll.u32 %v1093, 16
    %v1404 = vrot.slane %v1402, 5
    %v1405 = vsel %vm1175, %v1400, %v1404
    %v1406 = vshrl.u32 %v1093, 16
    %v1408 = vrot.slane %v1406, 4
    %v1409 = vor.u32 %v1408, %v1404
    %v1410 = vrot.slane %v1409, 4
    %v1412 = vshll.u32 %v1094, 16
    %v1414 = vrot.slane %v1412, 5
    %v1415 = vsel %vm1175, %v1410, %v1414
    %v1417 = vshrl.u32 %v1095, 16
    %v1419 = vrot.slane %v1417, 4
    %v1420 = vshll.u32 %v1095, 16
    %v1422 = vrot.slane %v1420, 5
    %v1423 = vor.u32 %v1419, %v1422
    %v1424 = vrot.slane %v1423, 4
    %v1426 = vshll.u32 %v1096, 16
    %v1428 = vrot.slane %v1426, 5
    %v1429 = vsel %vm1175, %v1424, %v1428
    %v1430 = vshrl.u32 %v1096, 16
    %v1432 = vrot.slane %v1430, 4
    %v1433 = vor.u32 %v1432, %v1428
    %v1434 = vrot.slane %v1433, 4
    %v1436 = vshll.u32 %v1097, 16
    %v1438 = vrot.slane %v1436, 5
    %v1439 = vsel %vm1175, %v1434, %v1438
    %v1441 = vshrl.u32 %v1098, 16
    %v1443 = vrot.slane %v1441, 4
    %v1444 = vshll.u32 %v1098, 16
    %v1446 = vrot.slane %v1444, 5
    %v1447 = vor.u32 %v1443, %v1446
    %v1448 = vrot.slane %v1447, 4
    %v1450 = vshll.u32 %v1099, 16
    %v1452 = vrot.slane %v1450, 5
    %v1453 = vsel %vm1175, %v1448, %v1452
    %v1454 = vshrl.u32 %v1099, 16
    %v1456 = vrot.slane %v1454, 4
    %v1457 = vor.u32 %v1456, %v1452
    %v1458 = vrot.slane %v1457, 4
    %v1460 = vshll.u32 %v1100, 16
    %v1462 = vrot.slane %v1460, 5
    %v1463 = vsel %vm1175, %v1458, %v1462
    %v1465 = vshrl.u32 %v1101, 16
    %v1467 = vrot.slane %v1465, 4
    %v1468 = vshll.u32 %v1101, 16
    %v1470 = vrot.slane %v1468, 5
    %v1471 = vor.u32 %v1467, %v1470
    %v1472 = vrot.slane %v1471, 4
    %v1474 = vshll.u32 %v1102, 16
    %v1476 = vrot.slane %v1474, 5
    %v1477 = vsel %vm1175, %v1472, %v1476
    %v1478 = vshrl.u32 %v1102, 16
    %v1480 = vrot.slane %v1478, 4
    %v1481 = vor.u32 %v1480, %v1476
    %v1482 = vrot.slane %v1481, 4
    %v1484 = vshll.u32 %v1103, 16
    %v1486 = vrot.slane %v1484, 5
    %v1487 = vsel %vm1175, %v1482, %v1486
    %v1489 = vshrl.u32 %v1104, 16
    %v1491 = vrot.slane %v1489, 4
    %v1492 = vshll.u32 %v1104, 16
    %v1494 = vrot.slane %v1492, 5
    %v1495 = vor.u32 %v1491, %v1494
    %v1496 = vrot.slane %v1495, 4
    %v1498 = vshll.u32 %v1105, 16
    %v1500 = vrot.slane %v1498, 5
    %v1501 = vsel %vm1175, %v1496, %v1500
    %v1502 = vshrl.u32 %v1105, 16
    %v1504 = vrot.slane %v1502, 4
    %v1505 = vor.u32 %v1504, %v1500
    %v1506 = vrot.slane %v1505, 4
    %v1508 = vshll.u32 %v1106, 16
    %v1510 = vrot.slane %v1508, 5
    %v1511 = vsel %vm1175, %v1506, %v1510
    %v1513 = vshrl.u32 %v1107, 16
    %v1515 = vrot.slane %v1513, 4
    %v1516 = vshll.u32 %v1107, 16
    %v1518 = vrot.slane %v1516, 5
    %v1519 = vor.u32 %v1515, %v1518
    %v1520 = vrot.slane %v1519, 4
    %v1522 = vshll.u32 %v1108, 16
    %v1524 = vrot.slane %v1522, 5
    %v1525 = vsel %vm1175, %v1520, %v1524
    %v1526 = vshrl.u32 %v1108, 16
    %v1528 = vrot.slane %v1526, 4
    %v1529 = vor.u32 %v1528, %v1524
    %v1530 = vrot.slane %v1529, 4
    %v1532 = vshll.u32 %v1109, 16
    %v1534 = vrot.slane %v1532, 5
    %v1535 = vsel %vm1175, %v1530, %v1534
    %v1537 = vshrl.u32 %v1110, 16
    %v1539 = vrot.slane %v1537, 4
    %v1540 = vshll.u32 %v1110, 16
    %v1542 = vrot.slane %v1540, 5
    %v1543 = vor.u32 %v1539, %v1542
    %v1544 = vrot.slane %v1543, 4
    %v1546 = vshll.u32 %v1111, 16
    %v1548 = vrot.slane %v1546, 5
    %v1549 = vsel %vm1175, %v1544, %v1548
    %v1550 = vshrl.u32 %v1111, 16
    %v1552 = vrot.slane %v1550, 4
    %v1553 = vor.u32 %v1552, %v1548
    %v1554 = vrot.slane %v1553, 4
    %v1556 = vshll.u32 %v1112, 16
    %v1558 = vrot.slane %v1556, 5
    %v1559 = vsel %vm1175, %v1554, %v1558
    %v1561 = vshrl.u32 %v1119, 16
    %v1563 = vrot.slane %v1561, 4
    %v1564 = vshll.u32 %v1119, 16
    %v1566 = vrot.slane %v1564, 5
    %v1567 = vor.u32 %v1563, %v1566
    %v1568 = vrot.slane %v1567, 4
    %v1570 = vshll.u32 %v1120, 16
    %v1572 = vrot.slane %v1570, 5
    %v1573 = vsel %vm1175, %v1568, %v1572
    %v1574 = vshrl.u32 %v1120, 16
    %v1576 = vrot.slane %v1574, 4
    %v1577 = vor.u32 %v1576, %v1572
    %v1578 = vrot.slane %v1577, 4
    %v1580 = vshll.u32 %v1121, 16
    %v1582 = vrot.slane %v1580, 5
    %v1583 = vsel %vm1175, %v1578, %v1582
    %v1585 = vshrl.u32 %v1122, 16
    %v1587 = vrot.slane %v1585, 4
    %v1588 = vshll.u32 %v1122, 16
    %v1590 = vrot.slane %v1588, 5
    %v1591 = vor.u32 %v1587, %v1590
    %v1592 = vrot.slane %v1591, 4
    %v1594 = vshll.u32 %v1123, 16
    %v1596 = vrot.slane %v1594, 5
    %v1597 = vsel %vm1175, %v1592, %v1596
    %v1598 = vshrl.u32 %v1123, 16
    %v1600 = vrot.slane %v1598, 4
    %v1601 = vor.u32 %v1600, %v1596
    %v1602 = vrot.slane %v1601, 4
    %v1604 = vshll.u32 %v1124, 16
    %v1606 = vrot.slane %v1604, 5
    %v1607 = vsel %vm1175, %v1602, %v1606
    %v1609 = vshrl.u32 %v1125, 16
    %v1611 = vrot.slane %v1609, 4
    %v1612 = vshll.u32 %v1125, 16
    %v1614 = vrot.slane %v1612, 5
    %v1615 = vor.u32 %v1611, %v1614
    %v1616 = vrot.slane %v1615, 4
    %v1618 = vshll.u32 %v1126, 16
    %v1620 = vrot.slane %v1618, 5
    %v1621 = vsel %vm1175, %v1616, %v1620
    %v1622 = vshrl.u32 %v1126, 16
    %v1624 = vrot.slane %v1622, 4
    %v1625 = vor.u32 %v1624, %v1620
    %v1626 = vrot.slane %v1625, 4
    %v1628 = vshll.u32 %v1127, 16
    %v1630 = vrot.slane %v1628, 5
    %v1631 = vsel %vm1175, %v1626, %v1630
    %v1633 = vshrl.u32 %v1128, 16
    %v1635 = vrot.slane %v1633, 4
    %v1636 = vshll.u32 %v1128, 16
    %v1638 = vrot.slane %v1636, 5
    %v1639 = vor.u32 %v1635, %v1638
    %v1640 = vrot.slane %v1639, 4
    %v1642 = vshll.u32 %v1129, 16
    %v1644 = vrot.slane %v1642, 5
    %v1645 = vsel %vm1175, %v1640, %v1644
    %v1646 = vshrl.u32 %v1129, 16
    %v1648 = vrot.slane %v1646, 4
    %v1649 = vor.u32 %v1648, %v1644
    %v1650 = vrot.slane %v1649, 4
    %v1652 = vshll.u32 %v1130, 16
    %v1654 = vrot.slane %v1652, 5
    %v1655 = vsel %vm1175, %v1650, %v1654
    %v1657 = vshrl.u32 %v1131, 16
    %v1659 = vrot.slane %v1657, 4
    %v1660 = vshll.u32 %v1131, 16
    %v1662 = vrot.slane %v1660, 5
    %v1663 = vor.u32 %v1659, %v1662
    %v1664 = vrot.slane %v1663, 4
    %v1666 = vshll.u32 %v1132, 16
    %v1668 = vrot.slane %v1666, 5
    %v1669 = vsel %vm1175, %v1664, %v1668
    %v1670 = vshrl.u32 %v1132, 16
    %v1672 = vrot.slane %v1670, 4
    %v1673 = vor.u32 %v1672, %v1668
    %v1674 = vrot.slane %v1673, 4
    %v1676 = vshll.u32 %v1133, 16
    %v1678 = vrot.slane %v1676, 5
    %v1679 = vsel %vm1175, %v1674, %v1678
    %v1681 = vshrl.u32 %v1134, 16
    %v1683 = vrot.slane %v1681, 4
    %v1684 = vshll.u32 %v1134, 16
    %v1686 = vrot.slane %v1684, 5
    %v1687 = vor.u32 %v1683, %v1686
    %v1688 = vrot.slane %v1687, 4
    %v1690 = vshll.u32 %v1135, 16
    %v1692 = vrot.slane %v1690, 5
    %v1693 = vsel %vm1175, %v1688, %v1692
    %v1694 = vshrl.u32 %v1135, 16
    %v1696 = vrot.slane %v1694, 4
    %v1697 = vor.u32 %v1696, %v1692
    %v1698 = vrot.slane %v1697, 4
    %v1700 = vshll.u32 %v1136, 16
    %v1702 = vrot.slane %v1700, 5
    %v1703 = vsel %vm1175, %v1698, %v1702
    %v1705 = vshrl.u32 %v1137, 16
    %v1707 = vrot.slane %v1705, 4
    %v1708 = vshll.u32 %v1137, 16
    %v1710 = vrot.slane %v1708, 5
    %v1711 = vor.u32 %v1707, %v1710
    %v1712 = vrot.slane %v1711, 4
    %v1714 = vshll.u32 %v1138, 16
    %v1716 = vrot.slane %v1714, 5
    %v1717 = vsel %vm1175, %v1712, %v1716
    %v1718 = vshrl.u32 %v1138, 16
    %v1720 = vrot.slane %v1718, 4
    %v1721 = vor.u32 %v1720, %v1716
    %v1722 = vrot.slane %v1721, 4
    %v1724 = vshll.u32 %v1139, 16
    %v1726 = vrot.slane %v1724, 5
    %v1727 = vsel %vm1175, %v1722, %v1726
    %v1729 = vshrl.u32 %v1140, 16
    %v1731 = vrot.slane %v1729, 4
    %v1732 = vshll.u32 %v1140, 16
    %v1734 = vrot.slane %v1732, 5
    %v1735 = vor.u32 %v1731, %v1734
    %v1736 = vrot.slane %v1735, 4
    %v1738 = vshll.u32 %v1141, 16
    %v1740 = vrot.slane %v1738, 5
    %v1741 = vsel %vm1175, %v1736, %v1740
    %v1742 = vshrl.u32 %v1141, 16
    %v1744 = vrot.slane %v1742, 4
    %v1745 = vor.u32 %v1744, %v1740
    %v1746 = vrot.slane %v1745, 4
    %v1748 = vshll.u32 %v1142, 16
    %v1750 = vrot.slane %v1748, 5
    %v1751 = vsel %vm1175, %v1746, %v1750
    %v1753 = vshrl.u32 %v1143, 16
    %v1755 = vrot.slane %v1753, 4
    %v1756 = vshll.u32 %v1143, 16
    %v1758 = vrot.slane %v1756, 5
    %v1759 = vor.u32 %v1755, %v1758
    %v1760 = vrot.slane %v1759, 4
    %v1762 = vshll.u32 %v1144, 16
    %v1764 = vrot.slane %v1762, 5
    %v1765 = vsel %vm1175, %v1760, %v1764
    %v1766 = vshrl.u32 %v1144, 16
    %v1768 = vrot.slane %v1766, 4
    %v1769 = vor.u32 %v1768, %v1764
    %v1770 = vrot.slane %v1769, 4
    %v1772 = vshll.u32 %v1145, 16
    %v1774 = vrot.slane %v1772, 5
    %v1775 = vsel %vm1175, %v1770, %v1774
    %v1777 = vshrl.u32 %v1146, 16
    %v1779 = vrot.slane %v1777, 4
    %v1780 = vshll.u32 %v1146, 16
    %v1782 = vrot.slane %v1780, 5
    %v1783 = vor.u32 %v1779, %v1782
    %v1784 = vrot.slane %v1783, 4
    %v1786 = vshll.u32 %v1147, 16
    %v1788 = vrot.slane %v1786, 5
    %v1789 = vsel %vm1175, %v1784, %v1788
    %v1790 = vshrl.u32 %v1147, 16
    %v1792 = vrot.slane %v1790, 4
    %v1793 = vor.u32 %v1792, %v1788
    %v1794 = vrot.slane %v1793, 4
    %v1796 = vshll.u32 %v1148, 16
    %v1798 = vrot.slane %v1796, 5
    %v1799 = vsel %vm1175, %v1794, %v1798
    %v1801 = vshrl.u32 %v1149, 16
    %v1803 = vrot.slane %v1801, 4
    %v1804 = vshll.u32 %v1149, 16
    %v1806 = vrot.slane %v1804, 5
    %v1807 = vor.u32 %v1803, %v1806
    %v1808 = vrot.slane %v1807, 4
    %v1810 = vshll.u32 %v1150, 16
    %v1812 = vrot.slane %v1810, 5
    %v1813 = vsel %vm1175, %v1808, %v1812
    %v1814 = vshrl.u32 %v1150, 16
    %v1816 = vrot.slane %v1814, 4
    %v1817 = vor.u32 %v1816, %v1812
    %v1818 = vrot.slane %v1817, 4
    %v1820 = vshll.u32 %v1151, 16
    %v1822 = vrot.slane %v1820, 5
    %v1823 = vsel %vm1175, %v1818, %v1822
    %v1825 = vshrl.u32 %v1152, 16
    %v1827 = vrot.slane %v1825, 4
    %v1828 = vshll.u32 %v1152, 16
    %v1830 = vrot.slane %v1828, 5
    %v1831 = vor.u32 %v1827, %v1830
    %v1832 = vrot.slane %v1831, 4
    %v1834 = vshll.u32 %v1153, 16
    %v1836 = vrot.slane %v1834, 5
    %v1837 = vsel %vm1175, %v1832, %v1836
    %v1838 = vshrl.u32 %v1153, 16
    %v1840 = vrot.slane %v1838, 4
    %v1841 = vor.u32 %v1840, %v1836
    %v1842 = vrot.slane %v1841, 4
    %v1844 = vshll.u32 %v1154, 16
    %v1846 = vrot.slane %v1844, 5
    %v1847 = vsel %vm1175, %v1842, %v1846
    %v1849 = vshrl.u32 %v1155, 16
    %v1851 = vrot.slane %v1849, 4
    %v1852 = vshll.u32 %v1155, 16
    %v1854 = vrot.slane %v1852, 5
    %v1855 = vor.u32 %v1851, %v1854
    %v1856 = vrot.slane %v1855, 4
    %v1858 = vshll.u32 %v1156, 16
    %v1860 = vrot.slane %v1858, 5
    %v1861 = vsel %vm1175, %v1856, %v1860
    %v1862 = vshrl.u32 %v1156, 16
    %v1864 = vrot.slane %v1862, 4
    %v1865 = vor.u32 %v1864, %v1860
    %v1866 = vrot.slane %v1865, 4
    %v1868 = vshll.u32 %v1157, 16
    %v1870 = vrot.slane %v1868, 5
    %v1871 = vsel %vm1175, %v1866, %v1870
    %v1873 = vshrl.u32 %v1158, 16
    %v1875 = vrot.slane %v1873, 4
    %v1876 = vshll.u32 %v1158, 16
    %v1878 = vrot.slane %v1876, 5
    %v1879 = vor.u32 %v1875, %v1878
    %v1880 = vrot.slane %v1879, 4
    %v1882 = vshll.u32 %v1159, 16
    %v1884 = vrot.slane %v1882, 5
    %v1885 = vsel %vm1175, %v1880, %v1884
    %v1886 = vshrl.u32 %v1159, 16
    %v1888 = vrot.slane %v1886, 4
    %v1889 = vor.u32 %v1888, %v1884
    %v1890 = vrot.slane %v1889, 4
    %v1892 = vshll.u32 %v1160, 16
    %v1894 = vrot.slane %v1892, 5
    %v1895 = vsel %vm1175, %v1890, %v1894
    %v1897 = vshrl.u32 %v1161, 16
    %v1899 = vrot.slane %v1897, 4
    %v1900 = vshll.u32 %v1161, 16
    %v1902 = vrot.slane %v1900, 5
    %v1903 = vor.u32 %v1899, %v1902
    %v1904 = vrot.slane %v1903, 4
    %v1906 = vshll.u32 %v1162, 16
    %v1908 = vrot.slane %v1906, 5
    %v1909 = vsel %vm1175, %v1904, %v1908
    %v1910 = vshrl.u32 %v1162, 16
    %v1912 = vrot.slane %v1910, 4
    %v1913 = vor.u32 %v1912, %v1908
    %v1914 = vrot.slane %v1913, 4
    %v1916 = vshll.u32 %v1163, 16
    %v1918 = vrot.slane %v1916, 5
    %v1919 = vsel %vm1175, %v1914, %v1918
    %v1921 = vshrl.u32 %v1164, 16
    %v1923 = vrot.slane %v1921, 4
    %v1924 = vshll.u32 %v1164, 16
    %v1926 = vrot.slane %v1924, 5
    %v1927 = vor.u32 %v1923, %v1926
    %v1928 = vrot.slane %v1927, 4
    %v1930 = vshll.u32 %v1165, 16
    %v1932 = vrot.slane %v1930, 5
    %v1933 = vsel %vm1175, %v1928, %v1932
    %v1934 = vshrl.u32 %v1165, 16
    %v1936 = vrot.slane %v1934, 4
    %v1937 = vor.u32 %v1936, %v1932
    %v1938 = vrot.slane %v1937, 4
    %v1940 = vshll.u32 %v1166, 16
    %v1942 = vrot.slane %v1940, 5
    %v1943 = vsel %vm1175, %v1938, %v1942
    %vm2040 = vcmask 1042432
    %vm2041 = vcmask 1046532
    %vm2042 = vmor %vm2040, %vm2041
    %v2043 = vrot.slane %v1065, 5
    %v2044 = vrot.slane %v2043, 4
    %v2045 = vrot.slane %v1066, 5
    %v2046 = vsel %vm2042, %v2044, %v2045
    %v2047 = vrot.slane %v2045, 4
    %v2048 = vrot.slane %v1067, 5
    %v2049 = vsel %vm2042, %v2047, %v2048
    %v2050 = vrot.slane %v1068, 5
    %v2051 = vrot.slane %v2050, 4
    %v2052 = vrot.slane %v1069, 5
    %v2053 = vsel %vm2042, %v2051, %v2052
    %v2054 = vrot.slane %v2052, 4
    %v2055 = vrot.slane %v1070, 5
    %v2056 = vsel %vm2042, %v2054, %v2055
    %v2057 = vrot.slane %v1071, 5
    %v2058 = vrot.slane %v2057, 4
    %v2059 = vrot.slane %v1072, 5
    %v2060 = vsel %vm2042, %v2058, %v2059
    %v2061 = vrot.slane %v2059, 4
    %v2062 = vrot.slane %v1073, 5
    %v2063 = vsel %vm2042, %v2061, %v2062
    %v2064 = vrot.slane %v1074, 5
    %v2065 = vrot.slane %v2064, 4
    %v2066 = vrot.slane %v1075, 5
    %v2067 = vsel %vm2042, %v2065, %v2066
    %v2068 = vrot.slane %v2066, 4
    %v2069 = vrot.slane %v1076, 5
    %v2070 = vsel %vm2042, %v2068, %v2069
    %v2071 = vrot.slane %v1077, 5
    %v2072 = vrot.slane %v2071, 4
    %v2073 = vrot.slane %v1078, 5
    %v2074 = vsel %vm2042, %v2072, %v2073
    %v2075 = vrot.slane %v2073, 4
    %v2076 = vrot.slane %v1079, 5
    %v2077 = vsel %vm2042, %v2075, %v2076
    %v2078 = vrot.slane %v1080, 5
    %v2079 = vrot.slane %v2078, 4
    %v2080 = vrot.slane %v1081, 5
    %v2081 = vsel %vm2042, %v2079, %v2080
    %v2082 = vrot.slane %v2080, 4
    %v2083 = vrot.slane %v1082, 5
    %v2084 = vsel %vm2042, %v2082, %v2083
    %v2085 = vrot.slane %v1083, 5
    %v2086 = vrot.slane %v2085, 4
    %v2087 = vrot.slane %v1084, 5
    %v2088 = vsel %vm2042, %v2086, %v2087
    %v2089 = vrot.slane %v2087, 4
    %v2090 = vrot.slane %v1085, 5
    %v2091 = vsel %vm2042, %v2089, %v2090
    %v2092 = vrot.slane %v1086, 5
    %v2093 = vrot.slane %v2092, 4
    %v2094 = vrot.slane %v1087, 5
    %v2095 = vsel %vm2042, %v2093, %v2094
    %v2096 = vrot.slane %v2094, 4
    %v2097 = vrot.slane %v1088, 5
    %v2098 = vsel %vm2042, %v2096, %v2097
    %v2099 = vrot.slane %v1089, 5
    %v2100 = vrot.slane %v2099, 4
    %v2101 = vrot.slane %v1090, 5
    %v2102 = vsel %vm2042, %v2100, %v2101
    %v2103 = vrot.slane %v2101, 4
    %v2104 = vrot.slane %v1091, 5
    %v2105 = vsel %vm2042, %v2103, %v2104
    %v2106 = vrot.slane %v1092, 5
    %v2107 = vrot.slane %v2106, 4
    %v2108 = vrot.slane %v1093, 5
    %v2109 = vsel %vm2042, %v2107, %v2108
    %v2110 = vrot.slane %v2108, 4
    %v2111 = vrot.slane %v1094, 5
    %v2112 = vsel %vm2042, %v2110, %v2111
    %v2113 = vrot.slane %v1095, 5
    %v2114 = vrot.slane %v2113, 4
    %v2115 = vrot.slane %v1096, 5
    %v2116 = vsel %vm2042, %v2114, %v2115
    %v2117 = vrot.slane %v2115, 4
    %v2118 = vrot.slane %v1097, 5
    %v2119 = vsel %vm2042, %v2117, %v2118
    %v2120 = vrot.slane %v1098, 5
    %v2121 = vrot.slane %v2120, 4
    %v2122 = vrot.slane %v1099, 5
    %v2123 = vsel %vm2042, %v2121, %v2122
    %v2124 = vrot.slane %v2122, 4
    %v2125 = vrot.slane %v1100, 5
    %v2126 = vsel %vm2042, %v2124, %v2125
    %v2127 = vrot.slane %v1101, 5
    %v2128 = vrot.slane %v2127, 4
    %v2129 = vrot.slane %v1102, 5
    %v2130 = vsel %vm2042, %v2128, %v2129
    %v2131 = vrot.slane %v2129, 4
    %v2132 = vrot.slane %v1103, 5
    %v2133 = vsel %vm2042, %v2131, %v2132
    %v2134 = vrot.slane %v1104, 5
    %v2135 = vrot.slane %v2134, 4
    %v2136 = vrot.slane %v1105, 5
    %v2137 = vsel %vm2042, %v2135, %v2136
    %v2138 = vrot.slane %v2136, 4
    %v2139 = vrot.slane %v1106, 5
    %v2140 = vsel %vm2042, %v2138, %v2139
    %v2141 = vrot.slane %v1107, 5
    %v2142 = vrot.slane %v2141, 4
    %v2143 = vrot.slane %v1108, 5
    %v2144 = vsel %vm2042, %v2142, %v2143
    %v2145 = vrot.slane %v2143, 4
    %v2146 = vrot.slane %v1109, 5
    %v2147 = vsel %vm2042, %v2145, %v2146
    %v2148 = vrot.slane %v1110, 5
    %v2149 = vrot.slane %v2148, 4
    %v2150 = vrot.slane %v1111, 5
    %v2151 = vsel %vm2042, %v2149, %v2150
    %v2152 = vrot.slane %v2150, 4
    %v2153 = vrot.slane %v1112, 5
    %v2154 = vsel %vm2042, %v2152, %v2153
    %v2155 = vrot.slane %v1119, 5
    %v2156 = vrot.slane %v2155, 4
    %v2157 = vrot.slane %v1120, 5
    %v2158 = vsel %vm2042, %v2156, %v2157
    %v2159 = vrot.slane %v2157, 4
    %v2160 = vrot.slane %v1121, 5
    %v2161 = vsel %vm2042, %v2159, %v2160
    %v2162 = vrot.slane %v1122, 5
    %v2163 = vrot.slane %v2162, 4
    %v2164 = vrot.slane %v1123, 5
    %v2165 = vsel %vm2042, %v2163, %v2164
    %v2166 = vrot.slane %v2164, 4
    %v2167 = vrot.slane %v1124, 5
    %v2168 = vsel %vm2042, %v2166, %v2167
    %v2169 = vrot.slane %v1125, 5
    %v2170 = vrot.slane %v2169, 4
    %v2171 = vrot.slane %v1126, 5
    %v2172 = vsel %vm2042, %v2170, %v2171
    %v2173 = vrot.slane %v2171, 4
    %v2174 = vrot.slane %v1127, 5
    %v2175 = vsel %vm2042, %v2173, %v2174
    %v2176 = vrot.slane %v1128, 5
    %v2177 = vrot.slane %v2176, 4
    %v2178 = vrot.slane %v1129, 5
    %v2179 = vsel %vm2042, %v2177, %v2178
    %v2180 = vrot.slane %v2178, 4
    %v2181 = vrot.slane %v1130, 5
    %v2182 = vsel %vm2042, %v2180, %v2181
    %v2183 = vrot.slane %v1131, 5
    %v2184 = vrot.slane %v2183, 4
    %v2185 = vrot.slane %v1132, 5
    %v2186 = vsel %vm2042, %v2184, %v2185
    %v2187 = vrot.slane %v2185, 4
    %v2188 = vrot.slane %v1133, 5
    %v2189 = vsel %vm2042, %v2187, %v2188
    %v2190 = vrot.slane %v1134, 5
    %v2191 = vrot.slane %v2190, 4
    %v2192 = vrot.slane %v1135, 5
    %v2193 = vsel %vm2042, %v2191, %v2192
    %v2194 = vrot.slane %v2192, 4
    %v2195 = vrot.slane %v1136, 5
    %v2196 = vsel %vm2042, %v2194, %v2195
    %v2197 = vrot.slane %v1137, 5
    %v2198 = vrot.slane %v2197, 4
    %v2199 = vrot.slane %v1138, 5
    %v2200 = vsel %vm2042, %v2198, %v2199
    %v2201 = vrot.slane %v2199, 4
    %v2202 = vrot.slane %v1139, 5
    %v2203 = vsel %vm2042, %v2201, %v2202
    %v2204 = vrot.slane %v1140, 5
    %v2205 = vrot.slane %v2204, 4
    %v2206 = vrot.slane %v1141, 5
    %v2207 = vsel %vm2042, %v2205, %v2206
    %v2208 = vrot.slane %v2206, 4
    %v2209 = vrot.slane %v1142, 5
    %v2210 = vsel %vm2042, %v2208, %v2209
    %v2211 = vrot.slane %v1143, 5
    %v2212 = vrot.slane %v2211, 4
    %v2213 = vrot.slane %v1144, 5
    %v2214 = vsel %vm2042, %v2212, %v2213
    %v2215 = vrot.slane %v2213, 4
    %v2216 = vrot.slane %v1145, 5
    %v2217 = vsel %vm2042, %v2215, %v2216
    %v2218 = vrot.slane %v1146, 5
    %v2219 = vrot.slane %v2218, 4
    %v2220 = vrot.slane %v1147, 5
    %v2221 = vsel %vm2042, %v2219, %v2220
    %v2222 = vrot.slane %v2220, 4
    %v2223 = vrot.slane %v1148, 5
    %v2224 = vsel %vm2042, %v2222, %v2223
    %v2225 = vrot.slane %v1149, 5
    %v2226 = vrot.slane %v2225, 4
    %v2227 = vrot.slane %v1150, 5
    %v2228 = vsel %vm2042, %v2226, %v2227
    %v2229 = vrot.slane %v2227, 4
    %v2230 = vrot.slane %v1151, 5
    %v2231 = vsel %vm2042, %v2229, %v2230
    %v2232 = vrot.slane %v1152, 5
    %v2233 = vrot.slane %v2232, 4
    %v2234 = vrot.slane %v1153, 5
    %v2235 = vsel %vm2042, %v2233, %v2234
    %v2236 = vrot.slane %v2234, 4
    %v2237 = vrot.slane %v1154, 5
    %v2238 = vsel %vm2042, %v2236, %v2237
    %v2239 = vrot.slane %v1155, 5
    %v2240 = vrot.slane %v2239, 4
    %v2241 = vrot.slane %v1156, 5
    %v2242 = vsel %vm2042, %v2240, %v2241
    %v2243 = vrot.slane %v2241, 4
    %v2244 = vrot.slane %v1157, 5
    %v2245 = vsel %vm2042, %v2243, %v2244
    %v2246 = vrot.slane %v1158, 5
    %v2247 = vrot.slane %v2246, 4
    %v2248 = vrot.slane %v1159, 5
    %v2249 = vsel %vm2042, %v2247, %v2248
    %v2250 = vrot.slane %v2248, 4
    %v2251 = vrot.slane %v1160, 5
    %v2252 = vsel %vm2042, %v2250, %v2251
    %v2253 = vrot.slane %v1161, 5
    %v2254 = vrot.slane %v2253, 4
    %v2255 = vrot.slane %v1162, 5
    %v2256 = vsel %vm2042, %v2254, %v2255
    %v2257 = vrot.slane %v2255, 4
    %v2258 = vrot.slane %v1163, 5
    %v2259 = vsel %vm2042, %v2257, %v2258
    %v2260 = vrot.slane %v1164, 5
    %v2261 = vrot.slane %v2260, 4
    %v2262 = vrot.slane %v1165, 5
    %v2263 = vsel %vm2042, %v2261, %v2262
    %v2264 = vrot.slane %v2262, 4
    %v2265 = vrot.slane %v1166, 5
    %v2266 = vsel %vm2042, %v2264, %v2265
    %v2268 = vshrl.u32 %v1113, 16
    %v2270 = vrot.slane %v2268, 4
    %v2271 = vshll.u32 %v1113, 16
    %v2273 = vrot.slane %v2271, 5
    %v2274 = vor.u32 %v2270, %v2273
    %v2275 = vrot.slane %v2274, 4
    %v2277 = vshll.u32 %v1114, 16
    %v2279 = vrot.slane %v2277, 5
    %v2280 = vsel %vm1175, %v2275, %v2279
    %v2281 = vshrl.u32 %v1114, 16
    %v2283 = vrot.slane %v2281, 4
    %v2284 = vor.u32 %v2283, %v2279
    %v2285 = vrot.slane %v2284, 4
    %v2287 = vshll.u32 %v1115, 16
    %v2289 = vrot.slane %v2287, 5
    %v2290 = vsel %vm1175, %v2285, %v2289
    %v2292 = vshrl.u32 %v1167, 16
    %v2294 = vrot.slane %v2292, 4
    %v2295 = vshll.u32 %v1167, 16
    %v2297 = vrot.slane %v2295, 5
    %v2298 = vor.u32 %v2294, %v2297
    %v2299 = vrot.slane %v2298, 4
    %v2301 = vshll.u32 %v1168, 16
    %v2303 = vrot.slane %v2301, 5
    %v2304 = vsel %vm1175, %v2299, %v2303
    %v2305 = vshrl.u32 %v1168, 16
    %v2307 = vrot.slane %v2305, 4
    %v2308 = vor.u32 %v2307, %v2303
    %v2309 = vrot.slane %v2308, 4
    %v2311 = vshll.u32 %v1169, 16
    %v2313 = vrot.slane %v2311, 5
    %v2314 = vsel %vm1175, %v2309, %v2313
    %v2321 = vrot.slane %v1113, 5
    %v2322 = vrot.slane %v2321, 4
    %v2323 = vrot.slane %v1114, 5
    %v2324 = vsel %vm2042, %v2322, %v2323
    %v2325 = vrot.slane %v2323, 4
    %v2326 = vrot.slane %v1115, 5
    %v2327 = vsel %vm2042, %v2325, %v2326
    %v2328 = vrot.slane %v1167, 5
    %v2329 = vrot.slane %v2328, 4
    %v2330 = vrot.slane %v1168, 5
    %v2331 = vsel %vm2042, %v2329, %v2330
    %v2332 = vrot.slane %v2330, 4
    %v2333 = vrot.slane %v1169, 5
    %v2334 = vsel %vm2042, %v2332, %v2333
    %v2336 = vshrl.u32 %v1116, 16
    %v2338 = vrot.slane %v2336, 4
    %v2339 = vshll.u32 %v1116, 16
    %v2341 = vrot.slane %v2339, 5
    %v2342 = vor.u32 %v2338, %v2341
    %v2343 = vrot.slane %v2342, 4
    %v2345 = vshll.u32 %v1117, 16
    %v2347 = vrot.slane %v2345, 5
    %v2348 = vsel %vm1175, %v2343, %v2347
    %v2349 = vshrl.u32 %v1117, 16
    %v2351 = vrot.slane %v2349, 4
    %v2352 = vor.u32 %v2351, %v2347
    %v2353 = vrot.slane %v2352, 4
    %v2355 = vshll.u32 %v1118, 16
    %v2357 = vrot.slane %v2355, 5
    %v2358 = vsel %vm1175, %v2353, %v2357
    %v2360 = vshrl.u32 %v1170, 16
    %v2362 = vrot.slane %v2360, 4
    %v2363 = vshll.u32 %v1170, 16
    %v2365 = vrot.slane %v2363, 5
    %v2366 = vor.u32 %v2362, %v2365
    %v2367 = vrot.slane %v2366, 4
    %v2369 = vshll.u32 %v1171, 16
    %v2371 = vrot.slane %v2369, 5
    %v2372 = vsel %vm1175, %v2367, %v2371
    %v2373 = vshrl.u32 %v1171, 16
    %v2375 = vrot.slane %v2373, 4
    %v2376 = vor.u32 %v2375, %v2371
    %v2377 = vrot.slane %v2376, 4
    %v2379 = vshll.u32 %v1172, 16
    %v2381 = vrot.slane %v2379, 5
    %v2382 = vsel %vm1175, %v2377, %v2381
    %v2389 = vrot.slane %v1116, 5
    %v2390 = vrot.slane %v2389, 4
    %v2391 = vrot.slane %v1117, 5
    %v2392 = vsel %vm2042, %v2390, %v2391
    %v2393 = vrot.slane %v2391, 4
    %v2394 = vrot.slane %v1118, 5
    %v2395 = vsel %vm2042, %v2393, %v2394
    %v2396 = vrot.slane %v1170, 5
    %v2397 = vrot.slane %v2396, 4
    %v2398 = vrot.slane %v1171, 5
    %v2399 = vsel %vm2042, %v2397, %v2398
    %v2400 = vrot.slane %v2398, 4
    %v2401 = vrot.slane %v1172, 5
    %v2402 = vsel %vm2042, %v2400, %v2401
    %v2403 = vunpack.c.l.b16 %v1065
    %v2404 = vunpack.c.l.b16 %v1066
    %v2405 = vunpack.c.l.b16 %v1068
    %v2406 = vunpack.c.l.b16 %v1069
    %v2407 = vunpack.c.l.b16 %v1071
    %v2408 = vunpack.c.l.b16 %v1072
    %v2409 = vunpack.c.l.b16 %v1074
    %v2410 = vunpack.c.l.b16 %v1075
    %v2411 = vunpack.c.l.b16 %v1077
    %v2412 = vunpack.c.l.b16 %v1078
    %v2413 = vunpack.c.l.b16 %v1080
    %v2414 = vunpack.c.l.b16 %v1081
    %v2415 = vunpack.c.l.b16 %v1083
    %v2416 = vunpack.c.l.b16 %v1084
    %v2417 = vunpack.c.l.b16 %v1086
    %v2418 = vunpack.c.l.b16 %v1087
    %v2419 = vunpack.c.l.b16 %v1089
    %v2420 = vunpack.c.l.b16 %v1090
    %v2421 = vunpack.c.l.b16 %v1092
    %v2422 = vunpack.c.l.b16 %v1093
    %v2423 = vunpack.c.l.b16 %v1095
    %v2424 = vunpack.c.l.b16 %v1096
    %v2425 = vunpack.c.l.b16 %v1098
    %v2426 = vunpack.c.l.b16 %v1099
    %v2427 = vunpack.c.l.b16 %v1101
    %v2428 = vunpack.c.l.b16 %v1102
    %v2429 = vunpack.c.l.b16 %v1104
    %v2430 = vunpack.c.l.b16 %v1105
    %v2431 = vunpack.c.l.b16 %v1107
    %v2432 = vunpack.c.l.b16 %v1108
    %v2433 = vunpack.c.l.b16 %v1110
    %v2434 = vunpack.c.l.b16 %v1111
    %v2435 = vunpack.c.l.b16 %v1119
    %v2436 = vunpack.c.l.b16 %v1120
    %v2437 = vunpack.c.l.b16 %v1122
    %v2438 = vunpack.c.l.b16 %v1123
    %v2439 = vunpack.c.l.b16 %v1125
    %v2440 = vunpack.c.l.b16 %v1126
    %v2441 = vunpack.c.l.b16 %v1128
    %v2442 = vunpack.c.l.b16 %v1129
    %v2443 = vunpack.c.l.b16 %v1131
    %v2444 = vunpack.c.l.b16 %v1132
    %v2445 = vunpack.c.l.b16 %v1134
    %v2446 = vunpack.c.l.b16 %v1135
    %v2447 = vunpack.c.l.b16 %v1137
    %v2448 = vunpack.c.l.b16 %v1138
    %v2449 = vunpack.c.l.b16 %v1140
    %v2450 = vunpack.c.l.b16 %v1141
    %v2451 = vunpack.c.l.b16 %v1143
    %v2452 = vunpack.c.l.b16 %v1144
    %v2453 = vunpack.c.l.b16 %v1146
    %v2454 = vunpack.c.l.b16 %v1147
    %v2455 = vunpack.c.l.b16 %v1149
    %v2456 = vunpack.c.l.b16 %v1150
    %v2457 = vunpack.c.l.b16 %v1152
    %v2458 = vunpack.c.l.b16 %v1153
    %v2459 = vunpack.c.l.b16 %v1155
    %v2460 = vunpack.c.l.b16 %v1156
    %v2461 = vunpack.c.l.b16 %v1158
    %v2462 = vunpack.c.l.b16 %v1159
    %v2463 = vunpack.c.l.b16 %v1161
    %v2464 = vunpack.c.l.b16 %v1162
    %v2465 = vunpack.c.l.b16 %v1164
    %v2466 = vunpack.c.l.b16 %v1165
    %v2467 = vpack.c.b16 %v2404, %v2403
    %v2468 = vpack.c.b16 %v2406, %v2405
    %v2469 = vpack.c.b16 %v2408, %v2407
    %v2470 = vpack.c.b16 %v2410, %v2409
    %v2471 = vpack.c.b16 %v2412, %v2411
    %v2472 = vpack.c.b16 %v2414, %v2413
    %v2473 = vpack.c.b16 %v2416, %v2415
    %v2474 = vpack.c.b16 %v2418, %v2417
    %v2475 = vpack.c.b16 %v2420, %v2419
    %v2476 = vpack.c.b16 %v2422, %v2421
    %v2477 = vpack.c.b16 %v2424, %v2423
    %v2478 = vpack.c.b16 %v2426, %v2425
    %v2479 = vpack.c.b16 %v2428, %v2427
    %v2480 = vpack.c.b16 %v2430, %v2429
    %v2481 = vpack.c.b16 %v2432, %v2431
    %v2482 = vpack.c.b16 %v2434, %v2433
    %v2483 = vpack.c.b16 %v2436, %v2435
    %v2484 = vpack.c.b16 %v2438, %v2437
    %v2485 = vpack.c.b16 %v2440, %v2439
    %v2486 = vpack.c.b16 %v2442, %v2441
    %v2487 = vpack.c.b16 %v2444, %v2443
    %v2488 = vpack.c.b16 %v2446, %v2445
    %v2489 = vpack.c.b16 %v2448, %v2447
    %v2490 = vpack.c.b16 %v2450, %v2449
    %v2491 = vpack.c.b16 %v2452, %v2451
    %v2492 = vpack.c.b16 %v2454, %v2453
    %v2493 = vpack.c.b16 %v2456, %v2455
    %v2494 = vpack.c.b16 %v2458, %v2457
    %v2495 = vpack.c.b16 %v2460, %v2459
    %v2496 = vpack.c.b16 %v2462, %v2461
    %v2497 = vpack.c.b16 %v2464, %v2463
    %v2498 = vpack.c.b16 %v2466, %v2465
    %v2499 = vunpack.c.l.b16 %v1189
    %v2500 = vunpack.c.l.b16 %v1199
    %v2501 = vunpack.c.l.b16 %v1213
    %v2502 = vunpack.c.l.b16 %v1223
    %v2503 = vunpack.c.l.b16 %v1237
    %v2504 = vunpack.c.l.b16 %v1247
    %v2505 = vunpack.c.l.b16 %v1261
    %v2506 = vunpack.c.l.b16 %v1271
    %v2507 = vunpack.c.l.b16 %v1285
    %v2508 = vunpack.c.l.b16 %v1295
    %v2509 = vunpack.c.l.b16 %v1309
    %v2510 = vunpack.c.l.b16 %v1319
    %v2511 = vunpack.c.l.b16 %v1333
    %v2512 = vunpack.c.l.b16 %v1343
    %v2513 = vunpack.c.l.b16 %v1357
    %v2514 = vunpack.c.l.b16 %v1367
    %v2515 = vunpack.c.l.b16 %v1381
    %v2516 = vunpack.c.l.b16 %v1391
    %v2517 = vunpack.c.l.b16 %v1405
    %v2518 = vunpack.c.l.b16 %v1415
    %v2519 = vunpack.c.l.b16 %v1429
    %v2520 = vunpack.c.l.b16 %v1439
    %v2521 = vunpack.c.l.b16 %v1453
    %v2522 = vunpack.c.l.b16 %v1463
    %v2523 = vunpack.c.l.b16 %v1477
    %v2524 = vunpack.c.l.b16 %v1487
    %v2525 = vunpack.c.l.b16 %v1501
    %v2526 = vunpack.c.l.b16 %v1511
    %v2527 = vunpack.c.l.b16 %v1525
    %v2528 = vunpack.c.l.b16 %v1535
    %v2529 = vunpack.c.l.b16 %v1549
    %v2530 = vunpack.c.l.b16 %v1559
    %v2531 = vunpack.c.l.b16 %v1573
    %v2532 = vunpack.c.l.b16 %v1583
    %v2533 = vunpack.c.l.b16 %v1597
    %v2534 = vunpack.c.l.b16 %v1607
    %v2535 = vunpack.c.l.b16 %v1621
    %v2536 = vunpack.c.l.b16 %v1631
    %v2537 = vunpack.c.l.b16 %v1645
    %v2538 = vunpack.c.l.b16 %v1655
    %v2539 = vunpack.c.l.b16 %v1669
    %v2540 = vunpack.c.l.b16 %v1679
    %v2541 = vunpack.c.l.b16 %v1693
    %v2542 = vunpack.c.l.b16 %v1703
    %v2543 = vunpack.c.l.b16 %v1717
    %v2544 = vunpack.c.l.b16 %v1727
    %v2545 = vunpack.c.l.b16 %v1741
    %v2546 = vunpack.c.l.b16 %v1751
    %v2547 = vunpack.c.l.b16 %v1765
    %v2548 = vunpack.c.l.b16 %v1775
    %v2549 = vunpack.c.l.b16 %v1789
    %v2550 = vunpack.c.l.b16 %v1799
    %v2551 = vunpack.c.l.b16 %v1813
    %v2552 = vunpack.c.l.b16 %v1823
    %v2553 = vunpack.c.l.b16 %v1837
    %v2554 = vunpack.c.l.b16 %v1847
    %v2555 = vunpack.c.l.b16 %v1861
    %v2556 = vunpack.c.l.b16 %v1871
    %v2557 = vunpack.c.l.b16 %v1885
    %v2558 = vunpack.c.l.b16 %v1895
    %v2559 = vunpack.c.l.b16 %v1909
    %v2560 = vunpack.c.l.b16 %v1919
    %v2561 = vunpack.c.l.b16 %v1933
    %v2562 = vunpack.c.l.b16 %v1943
    %v2563 = vpack.c.b16 %v2500, %v2499
    %v2564 = vpack.c.b16 %v2502, %v2501
    %v2565 = vpack.c.b16 %v2504, %v2503
    %v2566 = vpack.c.b16 %v2506, %v2505
    %v2567 = vpack.c.b16 %v2508, %v2507
    %v2568 = vpack.c.b16 %v2510, %v2509
    %v2569 = vpack.c.b16 %v2512, %v2511
    %v2570 = vpack.c.b16 %v2514, %v2513
    %v2571 = vpack.c.b16 %v2516, %v2515
    %v2572 = vpack.c.b16 %v2518, %v2517
    %v2573 = vpack.c.b16 %v2520, %v2519
    %v2574 = vpack.c.b16 %v2522, %v2521
    %v2575 = vpack.c.b16 %v2524, %v2523
    %v2576 = vpack.c.b16 %v2526, %v2525
    %v2577 = vpack.c.b16 %v2528, %v2527
    %v2578 = vpack.c.b16 %v2530, %v2529
    %v2579 = vpack.c.b16 %v2532, %v2531
    %v2580 = vpack.c.b16 %v2534, %v2533
    %v2581 = vpack.c.b16 %v2536, %v2535
    %v2582 = vpack.c.b16 %v2538, %v2537
    %v2583 = vpack.c.b16 %v2540, %v2539
    %v2584 = vpack.c.b16 %v2542, %v2541
    %v2585 = vpack.c.b16 %v2544, %v2543
    %v2586 = vpack.c.b16 %v2546, %v2545
    %v2587 = vpack.c.b16 %v2548, %v2547
    %v2588 = vpack.c.b16 %v2550, %v2549
    %v2589 = vpack.c.b16 %v2552, %v2551
    %v2590 = vpack.c.b16 %v2554, %v2553
    %v2591 = vpack.c.b16 %v2556, %v2555
    %v2592 = vpack.c.b16 %v2558, %v2557
    %v2593 = vpack.c.b16 %v2560, %v2559
    %v2594 = vpack.c.b16 %v2562, %v2561
    %2595 = vrot.lane.b32.xlu0 %v2563, 4
    %v2596 = vpop.permute.xlu0 %2595
    %2597 = vrot.lane.b32.xlu0 %v2564, 4
    %v2598 = vpop.permute.xlu0 %2597
    %2599 = vrot.lane.b32.xlu0 %v2565, 4
    %v2600 = vpop.permute.xlu0 %2599
    %2601 = vrot.lane.b32.xlu0 %v2566, 4
    %v2602 = vpop.permute.xlu0 %2601
    %2603 = vrot.lane.b32.xlu0 %v2567, 4
    %v2604 = vpop.permute.xlu0 %2603
    %2605 = vrot.lane.b32.xlu0 %v2568, 4
    %v2606 = vpop.permute.xlu0 %2605
    %2607 = vrot.lane.b32.xlu0 %v2569, 4
    %v2608 = vpop.permute.xlu0 %2607
    %2609 = vrot.lane.b32.xlu0 %v2570, 4
    %v2610 = vpop.permute.xlu0 %2609
    %2611 = vrot.lane.b32.xlu0 %v2571, 4
    %v2612 = vpop.permute.xlu0 %2611
    %2613 = vrot.lane.b32.xlu0 %v2572, 4
    %v2614 = vpop.permute.xlu0 %2613
    %2615 = vrot.lane.b32.xlu0 %v2573, 4
    %v2616 = vpop.permute.xlu0 %2615
    %2617 = vrot.lane.b32.xlu0 %v2574, 4
    %v2618 = vpop.permute.xlu0 %2617
    %2619 = vrot.lane.b32.xlu0 %v2575, 4
    %v2620 = vpop.permute.xlu0 %2619
    %2621 = vrot.lane.b32.xlu0 %v2576, 4
    %v2622 = vpop.permute.xlu0 %2621
    %2623 = vrot.lane.b32.xlu0 %v2577, 4
    %v2624 = vpop.permute.xlu0 %2623
    %2625 = vrot.lane.b32.xlu0 %v2578, 4
    %v2626 = vpop.permute.xlu0 %2625
    %2627 = vrot.lane.b32.xlu0 %v2579, 4
    %v2628 = vpop.permute.xlu0 %2627
    %2629 = vrot.lane.b32.xlu0 %v2580, 4
    %v2630 = vpop.permute.xlu0 %2629
    %2631 = vrot.lane.b32.xlu0 %v2581, 4
    %v2632 = vpop.permute.xlu0 %2631
    %2633 = vrot.lane.b32.xlu0 %v2582, 4
    %v2634 = vpop.permute.xlu0 %2633
    %2635 = vrot.lane.b32.xlu0 %v2583, 4
    %v2636 = vpop.permute.xlu0 %2635
    %2637 = vrot.lane.b32.xlu0 %v2584, 4
    %v2638 = vpop.permute.xlu0 %2637
    %2639 = vrot.lane.b32.xlu0 %v2585, 4
    %v2640 = vpop.permute.xlu0 %2639
    %2641 = vrot.lane.b32.xlu0 %v2586, 4
    %v2642 = vpop.permute.xlu0 %2641
    %2643 = vrot.lane.b32.xlu0 %v2587, 4
    %v2644 = vpop.permute.xlu0 %2643
    %2645 = vrot.lane.b32.xlu0 %v2588, 4
    %v2646 = vpop.permute.xlu0 %2645
    %2647 = vrot.lane.b32.xlu0 %v2589, 4
    %v2648 = vpop.permute.xlu0 %2647
    %2649 = vrot.lane.b32.xlu0 %v2590, 4
    %v2650 = vpop.permute.xlu0 %2649
    %2651 = vrot.lane.b32.xlu0 %v2591, 4
    %v2652 = vpop.permute.xlu0 %2651
    %2653 = vrot.lane.b32.xlu0 %v2592, 4
    %v2654 = vpop.permute.xlu0 %2653
    %2655 = vrot.lane.b32.xlu0 %v2593, 4
    %v2656 = vpop.permute.xlu0 %2655
    %2657 = vrot.lane.b32.xlu0 %v2594, 4
    %v2658 = vpop.permute.xlu0 %2657
    %v2659 = vunpack.c.l.b16 %v2046
    %v2660 = vunpack.c.l.b16 %v2049
    %v2661 = vunpack.c.l.b16 %v2053
    %v2662 = vunpack.c.l.b16 %v2056
    %v2663 = vunpack.c.l.b16 %v2060
    %v2664 = vunpack.c.l.b16 %v2063
    %v2665 = vunpack.c.l.b16 %v2067
    %v2666 = vunpack.c.l.b16 %v2070
    %v2667 = vunpack.c.l.b16 %v2074
    %v2668 = vunpack.c.l.b16 %v2077
    %v2669 = vunpack.c.l.b16 %v2081
    %v2670 = vunpack.c.l.b16 %v2084
    %v2671 = vunpack.c.l.b16 %v2088
    %v2672 = vunpack.c.l.b16 %v2091
    %v2673 = vunpack.c.l.b16 %v2095
    %v2674 = vunpack.c.l.b16 %v2098
    %v2675 = vunpack.c.l.b16 %v2102
    %v2676 = vunpack.c.l.b16 %v2105
    %v2677 = vunpack.c.l.b16 %v2109
    %v2678 = vunpack.c.l.b16 %v2112
    %v2679 = vunpack.c.l.b16 %v2116
    %v2680 = vunpack.c.l.b16 %v2119
    %v2681 = vunpack.c.l.b16 %v2123
    %v2682 = vunpack.c.l.b16 %v2126
    %v2683 = vunpack.c.l.b16 %v2130
    %v2684 = vunpack.c.l.b16 %v2133
    %v2685 = vunpack.c.l.b16 %v2137
    %v2686 = vunpack.c.l.b16 %v2140
    %v2687 = vunpack.c.l.b16 %v2144
    %v2688 = vunpack.c.l.b16 %v2147
    %v2689 = vunpack.c.l.b16 %v2151
    %v2690 = vunpack.c.l.b16 %v2154
    %v2691 = vunpack.c.l.b16 %v2158
    %v2692 = vunpack.c.l.b16 %v2161
    %v2693 = vunpack.c.l.b16 %v2165
    %v2694 = vunpack.c.l.b16 %v2168
    %v2695 = vunpack.c.l.b16 %v2172
    %v2696 = vunpack.c.l.b16 %v2175
    %v2697 = vunpack.c.l.b16 %v2179
    %v2698 = vunpack.c.l.b16 %v2182
    %v2699 = vunpack.c.l.b16 %v2186
    %v2700 = vunpack.c.l.b16 %v2189
    %v2701 = vunpack.c.l.b16 %v2193
    %v2702 = vunpack.c.l.b16 %v2196
    %v2703 = vunpack.c.l.b16 %v2200
    %v2704 = vunpack.c.l.b16 %v2203
    %v2705 = vunpack.c.l.b16 %v2207
    %v2706 = vunpack.c.l.b16 %v2210
    %v2707 = vunpack.c.l.b16 %v2214
    %v2708 = vunpack.c.l.b16 %v2217
    %v2709 = vunpack.c.l.b16 %v2221
    %v2710 = vunpack.c.l.b16 %v2224
    %v2711 = vunpack.c.l.b16 %v2228
    %v2712 = vunpack.c.l.b16 %v2231
    %v2713 = vunpack.c.l.b16 %v2235
    %v2714 = vunpack.c.l.b16 %v2238
    %v2715 = vunpack.c.l.b16 %v2242
    %v2716 = vunpack.c.l.b16 %v2245
    %v2717 = vunpack.c.l.b16 %v2249
    %v2718 = vunpack.c.l.b16 %v2252
    %v2719 = vunpack.c.l.b16 %v2256
    %v2720 = vunpack.c.l.b16 %v2259
    %v2721 = vunpack.c.l.b16 %v2263
    %v2722 = vunpack.c.l.b16 %v2266
    %v2723 = vpack.c.b16 %v2660, %v2659
    %v2724 = vpack.c.b16 %v2662, %v2661
    %v2725 = vpack.c.b16 %v2664, %v2663
    %v2726 = vpack.c.b16 %v2666, %v2665
    %v2727 = vpack.c.b16 %v2668, %v2667
    %v2728 = vpack.c.b16 %v2670, %v2669
    %v2729 = vpack.c.b16 %v2672, %v2671
    %v2730 = vpack.c.b16 %v2674, %v2673
    %v2731 = vpack.c.b16 %v2676, %v2675
    %v2732 = vpack.c.b16 %v2678, %v2677
    %v2733 = vpack.c.b16 %v2680, %v2679
    %v2734 = vpack.c.b16 %v2682, %v2681
    %v2735 = vpack.c.b16 %v2684, %v2683
    %v2736 = vpack.c.b16 %v2686, %v2685
    %v2737 = vpack.c.b16 %v2688, %v2687
    %v2738 = vpack.c.b16 %v2690, %v2689
    %v2739 = vpack.c.b16 %v2692, %v2691
    %v2740 = vpack.c.b16 %v2694, %v2693
    %v2741 = vpack.c.b16 %v2696, %v2695
    %v2742 = vpack.c.b16 %v2698, %v2697
    %v2743 = vpack.c.b16 %v2700, %v2699
    %v2744 = vpack.c.b16 %v2702, %v2701
    %v2745 = vpack.c.b16 %v2704, %v2703
    %v2746 = vpack.c.b16 %v2706, %v2705
    %v2747 = vpack.c.b16 %v2708, %v2707
    %v2748 = vpack.c.b16 %v2710, %v2709
    %v2749 = vpack.c.b16 %v2712, %v2711
    %v2750 = vpack.c.b16 %v2714, %v2713
    %v2751 = vpack.c.b16 %v2716, %v2715
    %v2752 = vpack.c.b16 %v2718, %v2717
    %v2753 = vpack.c.b16 %v2720, %v2719
    %v2754 = vpack.c.b16 %v2722, %v2721
    %2755 = vrot.lane.b32.xlu0 %v2723, 8
    %v2756 = vpop.permute.xlu0 %2755
    %2757 = vrot.lane.b32.xlu0 %v2724, 8
    %v2758 = vpop.permute.xlu0 %2757
    %2759 = vrot.lane.b32.xlu0 %v2725, 8
    %v2760 = vpop.permute.xlu0 %2759
    %2761 = vrot.lane.b32.xlu0 %v2726, 8
    %v2762 = vpop.permute.xlu0 %2761
    %2763 = vrot.lane.b32.xlu0 %v2727, 8
    %v2764 = vpop.permute.xlu0 %2763
    %2765 = vrot.lane.b32.xlu0 %v2728, 8
    %v2766 = vpop.permute.xlu0 %2765
    %2767 = vrot.lane.b32.xlu0 %v2729, 8
    %v2768 = vpop.permute.xlu0 %2767
    %2769 = vrot.lane.b32.xlu0 %v2730, 8
    %v2770 = vpop.permute.xlu0 %2769
    %2771 = vrot.lane.b32.xlu0 %v2731, 8
    %v2772 = vpop.permute.xlu0 %2771
    %2773 = vrot.lane.b32.xlu0 %v2732, 8
    %v2774 = vpop.permute.xlu0 %2773
    %2775 = vrot.lane.b32.xlu0 %v2733, 8
    %v2776 = vpop.permute.xlu0 %2775
    %2777 = vrot.lane.b32.xlu0 %v2734, 8
    %v2778 = vpop.permute.xlu0 %2777
    %2779 = vrot.lane.b32.xlu0 %v2735, 8
    %v2780 = vpop.permute.xlu0 %2779
    %2781 = vrot.lane.b32.xlu0 %v2736, 8
    %v2782 = vpop.permute.xlu0 %2781
    %2783 = vrot.lane.b32.xlu0 %v2737, 8
    %v2784 = vpop.permute.xlu0 %2783
    %2785 = vrot.lane.b32.xlu0 %v2738, 8
    %v2786 = vpop.permute.xlu0 %2785
    %2787 = vrot.lane.b32.xlu0 %v2739, 8
    %v2788 = vpop.permute.xlu0 %2787
    %2789 = vrot.lane.b32.xlu0 %v2740, 8
    %v2790 = vpop.permute.xlu0 %2789
    %2791 = vrot.lane.b32.xlu0 %v2741, 8
    %v2792 = vpop.permute.xlu0 %2791
    %2793 = vrot.lane.b32.xlu0 %v2742, 8
    %v2794 = vpop.permute.xlu0 %2793
    %2795 = vrot.lane.b32.xlu0 %v2743, 8
    %v2796 = vpop.permute.xlu0 %2795
    %2797 = vrot.lane.b32.xlu0 %v2744, 8
    %v2798 = vpop.permute.xlu0 %2797
    %2799 = vrot.lane.b32.xlu0 %v2745, 8
    %v2800 = vpop.permute.xlu0 %2799
    %2801 = vrot.lane.b32.xlu0 %v2746, 8
    %v2802 = vpop.permute.xlu0 %2801
    %2803 = vrot.lane.b32.xlu0 %v2747, 8
    %v2804 = vpop.permute.xlu0 %2803
    %2805 = vrot.lane.b32.xlu0 %v2748, 8
    %v2806 = vpop.permute.xlu0 %2805
    %2807 = vrot.lane.b32.xlu0 %v2749, 8
    %v2808 = vpop.permute.xlu0 %2807
    %2809 = vrot.lane.b32.xlu0 %v2750, 8
    %v2810 = vpop.permute.xlu0 %2809
    %2811 = vrot.lane.b32.xlu0 %v2751, 8
    %v2812 = vpop.permute.xlu0 %2811
    %2813 = vrot.lane.b32.xlu0 %v2752, 8
    %v2814 = vpop.permute.xlu0 %2813
    %2815 = vrot.lane.b32.xlu0 %v2753, 8
    %v2816 = vpop.permute.xlu0 %2815
    %2817 = vrot.lane.b32.xlu0 %v2754, 8
    %v2818 = vpop.permute.xlu0 %2817
    %v2819 = vunpack.c.l.b16 %v1113
    %v2820 = vunpack.c.l.b16 %v1114
    %v2821 = vunpack.c.l.b16 %v1167
    %v2822 = vunpack.c.l.b16 %v1168
    %v2823 = vpack.c.b16 %v2820, %v2819
    %v2824 = vpack.c.b16 %v2822, %v2821
    %2825 = vrot.lane.b32.xlu0 %v2468, 12
    %v2826 = vpop.permute.xlu0 %2825
    %2827 = vrot.lane.b32.xlu0 %v2469, 12
    %v2828 = vpop.permute.xlu0 %2827
    %2829 = vrot.lane.b32.xlu0 %v2470, 12
    %v2830 = vpop.permute.xlu0 %2829
    %2831 = vrot.lane.b32.xlu0 %v2471, 12
    %v2832 = vpop.permute.xlu0 %2831
    %2833 = vrot.lane.b32.xlu0 %v2472, 12
    %v2834 = vpop.permute.xlu0 %2833
    %2835 = vrot.lane.b32.xlu0 %v2473, 12
    %v2836 = vpop.permute.xlu0 %2835
    %2837 = vrot.lane.b32.xlu0 %v2474, 12
    %v2838 = vpop.permute.xlu0 %2837
    %2839 = vrot.lane.b32.xlu0 %v2475, 12
    %v2840 = vpop.permute.xlu0 %2839
    %2841 = vrot.lane.b32.xlu0 %v2476, 12
    %v2842 = vpop.permute.xlu0 %2841
    %2843 = vrot.lane.b32.xlu0 %v2477, 12
    %v2844 = vpop.permute.xlu0 %2843
    %2845 = vrot.lane.b32.xlu0 %v2478, 12
    %v2846 = vpop.permute.xlu0 %2845
    %2847 = vrot.lane.b32.xlu0 %v2479, 12
    %v2848 = vpop.permute.xlu0 %2847
    %2849 = vrot.lane.b32.xlu0 %v2480, 12
    %v2850 = vpop.permute.xlu0 %2849
    %2851 = vrot.lane.b32.xlu0 %v2481, 12
    %v2852 = vpop.permute.xlu0 %2851
    %2853 = vrot.lane.b32.xlu0 %v2482, 12
    %v2854 = vpop.permute.xlu0 %2853
    %2855 = vrot.lane.b32.xlu0 %v2823, 12
    %v2856 = vpop.permute.xlu0 %2855
    %2857 = vrot.lane.b32.xlu0 %v2484, 12
    %v2858 = vpop.permute.xlu0 %2857
    %2859 = vrot.lane.b32.xlu0 %v2485, 12
    %v2860 = vpop.permute.xlu0 %2859
    %2861 = vrot.lane.b32.xlu0 %v2486, 12
    %v2862 = vpop.permute.xlu0 %2861
    %2863 = vrot.lane.b32.xlu0 %v2487, 12
    %v2864 = vpop.permute.xlu0 %2863
    %2865 = vrot.lane.b32.xlu0 %v2488, 12
    %v2866 = vpop.permute.xlu0 %2865
    %2867 = vrot.lane.b32.xlu0 %v2489, 12
    %v2868 = vpop.permute.xlu0 %2867
    %2869 = vrot.lane.b32.xlu0 %v2490, 12
    %v2870 = vpop.permute.xlu0 %2869
    %2871 = vrot.lane.b32.xlu0 %v2491, 12
    %v2872 = vpop.permute.xlu0 %2871
    %2873 = vrot.lane.b32.xlu0 %v2492, 12
    %v2874 = vpop.permute.xlu0 %2873
    %2875 = vrot.lane.b32.xlu0 %v2493, 12
    %v2876 = vpop.permute.xlu0 %2875
    %2877 = vrot.lane.b32.xlu0 %v2494, 12
    %v2878 = vpop.permute.xlu0 %2877
    %2879 = vrot.lane.b32.xlu0 %v2495, 12
    %v2880 = vpop.permute.xlu0 %2879
    %2881 = vrot.lane.b32.xlu0 %v2496, 12
    %v2882 = vpop.permute.xlu0 %2881
    %2883 = vrot.lane.b32.xlu0 %v2497, 12
    %v2884 = vpop.permute.xlu0 %2883
    %2885 = vrot.lane.b32.xlu0 %v2498, 12
    %v2886 = vpop.permute.xlu0 %2885
    %2887 = vrot.lane.b32.xlu0 %v2824, 12
    %v2888 = vpop.permute.xlu0 %2887
    %v2889 = vunpack.c.l.b16 %v2280
    %v2890 = vunpack.c.l.b16 %v2290
    %v2891 = vunpack.c.l.b16 %v2304
    %v2892 = vunpack.c.l.b16 %v2314
    %v2893 = vpack.c.b16 %v2890, %v2889
    %v2894 = vpack.c.b16 %v2892, %v2891
    %2895 = vrot.lane.b32.xlu0 %v2564, 16
    %v2896 = vpop.permute.xlu0 %2895
    %2897 = vrot.lane.b32.xlu0 %v2565, 16
    %v2898 = vpop.permute.xlu0 %2897
    %2899 = vrot.lane.b32.xlu0 %v2566, 16
    %v2900 = vpop.permute.xlu0 %2899
    %2901 = vrot.lane.b32.xlu0 %v2567, 16
    %v2902 = vpop.permute.xlu0 %2901
    %2903 = vrot.lane.b32.xlu0 %v2568, 16
    %v2904 = vpop.permute.xlu0 %2903
    %2905 = vrot.lane.b32.xlu0 %v2569, 16
    %v2906 = vpop.permute.xlu0 %2905
    %2907 = vrot.lane.b32.xlu0 %v2570, 16
    %v2908 = vpop.permute.xlu0 %2907
    %2909 = vrot.lane.b32.xlu0 %v2571, 16
    %v2910 = vpop.permute.xlu0 %2909
    %2911 = vrot.lane.b32.xlu0 %v2572, 16
    %v2912 = vpop.permute.xlu0 %2911
    %2913 = vrot.lane.b32.xlu0 %v2573, 16
    %v2914 = vpop.permute.xlu0 %2913
    %2915 = vrot.lane.b32.xlu0 %v2574, 16
    %v2916 = vpop.permute.xlu0 %2915
    %2917 = vrot.lane.b32.xlu0 %v2575, 16
    %v2918 = vpop.permute.xlu0 %2917
    %2919 = vrot.lane.b32.xlu0 %v2576, 16
    %v2920 = vpop.permute.xlu0 %2919
    %2921 = vrot.lane.b32.xlu0 %v2577, 16
    %v2922 = vpop.permute.xlu0 %2921
    %2923 = vrot.lane.b32.xlu0 %v2578, 16
    %v2924 = vpop.permute.xlu0 %2923
    %2925 = vrot.lane.b32.xlu0 %v2893, 16
    %v2926 = vpop.permute.xlu0 %2925
    %2927 = vrot.lane.b32.xlu0 %v2580, 16
    %v2928 = vpop.permute.xlu0 %2927
    %2929 = vrot.lane.b32.xlu0 %v2581, 16
    %v2930 = vpop.permute.xlu0 %2929
    %2931 = vrot.lane.b32.xlu0 %v2582, 16
    %v2932 = vpop.permute.xlu0 %2931
    %2933 = vrot.lane.b32.xlu0 %v2583, 16
    %v2934 = vpop.permute.xlu0 %2933
    %2935 = vrot.lane.b32.xlu0 %v2584, 16
    %v2936 = vpop.permute.xlu0 %2935
    %2937 = vrot.lane.b32.xlu0 %v2585, 16
    %v2938 = vpop.permute.xlu0 %2937
    %2939 = vrot.lane.b32.xlu0 %v2586, 16
    %v2940 = vpop.permute.xlu0 %2939
    %2941 = vrot.lane.b32.xlu0 %v2587, 16
    %v2942 = vpop.permute.xlu0 %2941
    %2943 = vrot.lane.b32.xlu0 %v2588, 16
    %v2944 = vpop.permute.xlu0 %2943
    %2945 = vrot.lane.b32.xlu0 %v2589, 16
    %v2946 = vpop.permute.xlu0 %2945
    %2947 = vrot.lane.b32.xlu0 %v2590, 16
    %v2948 = vpop.permute.xlu0 %2947
    %2949 = vrot.lane.b32.xlu0 %v2591, 16
    %v2950 = vpop.permute.xlu0 %2949
    %2951 = vrot.lane.b32.xlu0 %v2592, 16
    %v2952 = vpop.permute.xlu0 %2951
    %2953 = vrot.lane.b32.xlu0 %v2593, 16
    %v2954 = vpop.permute.xlu0 %2953
    %2955 = vrot.lane.b32.xlu0 %v2594, 16
    %v2956 = vpop.permute.xlu0 %2955
    %2957 = vrot.lane.b32.xlu0 %v2894, 16
    %v2958 = vpop.permute.xlu0 %2957
    %v2959 = vunpack.c.l.b16 %v2324
    %v2960 = vunpack.c.l.b16 %v2327
    %v2961 = vunpack.c.l.b16 %v2331
    %v2962 = vunpack.c.l.b16 %v2334
    %v2963 = vpack.c.b16 %v2960, %v2959
    %v2964 = vpack.c.b16 %v2962, %v2961
    %2965 = vrot.lane.b32.xlu0 %v2724, 20
    %v2966 = vpop.permute.xlu0 %2965
    %2967 = vrot.lane.b32.xlu0 %v2725, 20
    %v2968 = vpop.permute.xlu0 %2967
    %2969 = vrot.lane.b32.xlu0 %v2726, 20
    %v2970 = vpop.permute.xlu0 %2969
    %2971 = vrot.lane.b32.xlu0 %v2727, 20
    %v2972 = vpop.permute.xlu0 %2971
    %2973 = vrot.lane.b32.xlu0 %v2728, 20
    %v2974 = vpop.permute.xlu0 %2973
    %2975 = vrot.lane.b32.xlu0 %v2729, 20
    %v2976 = vpop.permute.xlu0 %2975
    %2977 = vrot.lane.b32.xlu0 %v2730, 20
    %v2978 = vpop.permute.xlu0 %2977
    %2979 = vrot.lane.b32.xlu0 %v2731, 20
    %v2980 = vpop.permute.xlu0 %2979
    %2981 = vrot.lane.b32.xlu0 %v2732, 20
    %v2982 = vpop.permute.xlu0 %2981
    %2983 = vrot.lane.b32.xlu0 %v2733, 20
    %v2984 = vpop.permute.xlu0 %2983
    %2985 = vrot.lane.b32.xlu0 %v2734, 20
    %v2986 = vpop.permute.xlu0 %2985
    %2987 = vrot.lane.b32.xlu0 %v2735, 20
    %v2988 = vpop.permute.xlu0 %2987
    %2989 = vrot.lane.b32.xlu0 %v2736, 20
    %v2990 = vpop.permute.xlu0 %2989
    %2991 = vrot.lane.b32.xlu0 %v2737, 20
    %v2992 = vpop.permute.xlu0 %2991
    %2993 = vrot.lane.b32.xlu0 %v2738, 20
    %v2994 = vpop.permute.xlu0 %2993
    %2995 = vrot.lane.b32.xlu0 %v2963, 20
    %v2996 = vpop.permute.xlu0 %2995
    %2997 = vrot.lane.b32.xlu0 %v2740, 20
    %v2998 = vpop.permute.xlu0 %2997
    %2999 = vrot.lane.b32.xlu0 %v2741, 20
    %v3000 = vpop.permute.xlu0 %2999
    %3001 = vrot.lane.b32.xlu0 %v2742, 20
    %v3002 = vpop.permute.xlu0 %3001
    %3003 = vrot.lane.b32.xlu0 %v2743, 20
    %v3004 = vpop.permute.xlu0 %3003
    %3005 = vrot.lane.b32.xlu0 %v2744, 20
    %v3006 = vpop.permute.xlu0 %3005
    %3007 = vrot.lane.b32.xlu0 %v2745, 20
    %v3008 = vpop.permute.xlu0 %3007
    %3009 = vrot.lane.b32.xlu0 %v2746, 20
    %v3010 = vpop.permute.xlu0 %3009
    %3011 = vrot.lane.b32.xlu0 %v2747, 20
    %v3012 = vpop.permute.xlu0 %3011
    %3013 = vrot.lane.b32.xlu0 %v2748, 20
    %v3014 = vpop.permute.xlu0 %3013
    %3015 = vrot.lane.b32.xlu0 %v2749, 20
    %v3016 = vpop.permute.xlu0 %3015
    %3017 = vrot.lane.b32.xlu0 %v2750, 20
    %v3018 = vpop.permute.xlu0 %3017
    %3019 = vrot.lane.b32.xlu0 %v2751, 20
    %v3020 = vpop.permute.xlu0 %3019
    %3021 = vrot.lane.b32.xlu0 %v2752, 20
    %v3022 = vpop.permute.xlu0 %3021
    %3023 = vrot.lane.b32.xlu0 %v2753, 20
    %v3024 = vpop.permute.xlu0 %3023
    %3025 = vrot.lane.b32.xlu0 %v2754, 20
    %v3026 = vpop.permute.xlu0 %3025
    %3027 = vrot.lane.b32.xlu0 %v2964, 20
    %v3028 = vpop.permute.xlu0 %3027
    %v3029 = vunpack.c.l.b16 %v1116
    %v3030 = vunpack.c.l.b16 %v1117
    %v3031 = vunpack.c.l.b16 %v1170
    %v3032 = vunpack.c.l.b16 %v1171
    %v3033 = vpack.c.b16 %v3030, %v3029
    %v3034 = vpack.c.b16 %v3032, %v3031
    %3035 = vrot.lane.b32.xlu0 %v2469, 24
    %v3036 = vpop.permute.xlu0 %3035
    %3037 = vrot.lane.b32.xlu0 %v2470, 24
    %v3038 = vpop.permute.xlu0 %3037
    %3039 = vrot.lane.b32.xlu0 %v2471, 24
    %v3040 = vpop.permute.xlu0 %3039
    %3041 = vrot.lane.b32.xlu0 %v2472, 24
    %v3042 = vpop.permute.xlu0 %3041
    %3043 = vrot.lane.b32.xlu0 %v2473, 24
    %v3044 = vpop.permute.xlu0 %3043
    %3045 = vrot.lane.b32.xlu0 %v2474, 24
    %v3046 = vpop.permute.xlu0 %3045
    %3047 = vrot.lane.b32.xlu0 %v2475, 24
    %v3048 = vpop.permute.xlu0 %3047
    %3049 = vrot.lane.b32.xlu0 %v2476, 24
    %v3050 = vpop.permute.xlu0 %3049
    %3051 = vrot.lane.b32.xlu0 %v2477, 24
    %v3052 = vpop.permute.xlu0 %3051
    %3053 = vrot.lane.b32.xlu0 %v2478, 24
    %v3054 = vpop.permute.xlu0 %3053
    %3055 = vrot.lane.b32.xlu0 %v2479, 24
    %v3056 = vpop.permute.xlu0 %3055
    %3057 = vrot.lane.b32.xlu0 %v2480, 24
    %v3058 = vpop.permute.xlu0 %3057
    %3059 = vrot.lane.b32.xlu0 %v2481, 24
    %v3060 = vpop.permute.xlu0 %3059
    %3061 = vrot.lane.b32.xlu0 %v2482, 24
    %v3062 = vpop.permute.xlu0 %3061
    %3063 = vrot.lane.b32.xlu0 %v2823, 24
    %v3064 = vpop.permute.xlu0 %3063
    %3065 = vrot.lane.b32.xlu0 %v3033, 24
    %v3066 = vpop.permute.xlu0 %3065
    %3067 = vrot.lane.b32.xlu0 %v2485, 24
    %v3068 = vpop.permute.xlu0 %3067
    %3069 = vrot.lane.b32.xlu0 %v2486, 24
    %v3070 = vpop.permute.xlu0 %3069
    %3071 = vrot.lane.b32.xlu0 %v2487, 24
    %v3072 = vpop.permute.xlu0 %3071
    %3073 = vrot.lane.b32.xlu0 %v2488, 24
    %v3074 = vpop.permute.xlu0 %3073
    %3075 = vrot.lane.b32.xlu0 %v2489, 24
    %v3076 = vpop.permute.xlu0 %3075
    %3077 = vrot.lane.b32.xlu0 %v2490, 24
    %v3078 = vpop.permute.xlu0 %3077
    %3079 = vrot.lane.b32.xlu0 %v2491, 24
    %v3080 = vpop.permute.xlu0 %3079
    %3081 = vrot.lane.b32.xlu0 %v2492, 24
    %v3082 = vpop.permute.xlu0 %3081
    %3083 = vrot.lane.b32.xlu0 %v2493, 24
    %v3084 = vpop.permute.xlu0 %3083
    %3085 = vrot.lane.b32.xlu0 %v2494, 24
    %v3086 = vpop.permute.xlu0 %3085
    %3087 = vrot.lane.b32.xlu0 %v2495, 24
    %v3088 = vpop.permute.xlu0 %3087
    %3089 = vrot.lane.b32.xlu0 %v2496, 24
    %v3090 = vpop.permute.xlu0 %3089
    %3091 = vrot.lane.b32.xlu0 %v2497, 24
    %v3092 = vpop.permute.xlu0 %3091
    %3093 = vrot.lane.b32.xlu0 %v2498, 24
    %v3094 = vpop.permute.xlu0 %3093
    %3095 = vrot.lane.b32.xlu0 %v2824, 24
    %v3096 = vpop.permute.xlu0 %3095
    %3097 = vrot.lane.b32.xlu0 %v3034, 24
    %v3098 = vpop.permute.xlu0 %3097
    %v3099 = vunpack.c.l.b16 %v2348
    %v3100 = vunpack.c.l.b16 %v2358
    %v3101 = vunpack.c.l.b16 %v2372
    %v3102 = vunpack.c.l.b16 %v2382
    %v3103 = vpack.c.b16 %v3100, %v3099
    %v3104 = vpack.c.b16 %v3102, %v3101
    %3105 = vrot.lane.b32.xlu0 %v2565, 28
    %v3106 = vpop.permute.xlu0 %3105
    %3107 = vrot.lane.b32.xlu0 %v2566, 28
    %v3108 = vpop.permute.xlu0 %3107
    %3109 = vrot.lane.b32.xlu0 %v2567, 28
    %v3110 = vpop.permute.xlu0 %3109
    %3111 = vrot.lane.b32.xlu0 %v2568, 28
    %v3112 = vpop.permute.xlu0 %3111
    %3113 = vrot.lane.b32.xlu0 %v2569, 28
    %v3114 = vpop.permute.xlu0 %3113
    %3115 = vrot.lane.b32.xlu0 %v2570, 28
    %v3116 = vpop.permute.xlu0 %3115
    %3117 = vrot.lane.b32.xlu0 %v2571, 28
    %v3118 = vpop.permute.xlu0 %3117
    %3119 = vrot.lane.b32.xlu0 %v2572, 28
    %v3120 = vpop.permute.xlu0 %3119
    %3121 = vrot.lane.b32.xlu0 %v2573, 28
    %v3122 = vpop.permute.xlu0 %3121
    %3123 = vrot.lane.b32.xlu0 %v2574, 28
    %v3124 = vpop.permute.xlu0 %3123
    %3125 = vrot.lane.b32.xlu0 %v2575, 28
    %v3126 = vpop.permute.xlu0 %3125
    %3127 = vrot.lane.b32.xlu0 %v2576, 28
    %v3128 = vpop.permute.xlu0 %3127
    %3129 = vrot.lane.b32.xlu0 %v2577, 28
    %v3130 = vpop.permute.xlu0 %3129
    %3131 = vrot.lane.b32.xlu0 %v2578, 28
    %v3132 = vpop.permute.xlu0 %3131
    %3133 = vrot.lane.b32.xlu0 %v2893, 28
    %v3134 = vpop.permute.xlu0 %3133
    %3135 = vrot.lane.b32.xlu0 %v3103, 28
    %v3136 = vpop.permute.xlu0 %3135
    %3137 = vrot.lane.b32.xlu0 %v2581, 28
    %v3138 = vpop.permute.xlu0 %3137
    %3139 = vrot.lane.b32.xlu0 %v2582, 28
    %v3140 = vpop.permute.xlu0 %3139
    %3141 = vrot.lane.b32.xlu0 %v2583, 28
    %v3142 = vpop.permute.xlu0 %3141
    %3143 = vrot.lane.b32.xlu0 %v2584, 28
    %v3144 = vpop.permute.xlu0 %3143
    %3145 = vrot.lane.b32.xlu0 %v2585, 28
    %v3146 = vpop.permute.xlu0 %3145
    %3147 = vrot.lane.b32.xlu0 %v2586, 28
    %v3148 = vpop.permute.xlu0 %3147
    %3149 = vrot.lane.b32.xlu0 %v2587, 28
    %v3150 = vpop.permute.xlu0 %3149
    %3151 = vrot.lane.b32.xlu0 %v2588, 28
    %v3152 = vpop.permute.xlu0 %3151
    %3153 = vrot.lane.b32.xlu0 %v2589, 28
    %v3154 = vpop.permute.xlu0 %3153
    %3155 = vrot.lane.b32.xlu0 %v2590, 28
    %v3156 = vpop.permute.xlu0 %3155
    %3157 = vrot.lane.b32.xlu0 %v2591, 28
    %v3158 = vpop.permute.xlu0 %3157
    %3159 = vrot.lane.b32.xlu0 %v2592, 28
    %v3160 = vpop.permute.xlu0 %3159
    %3161 = vrot.lane.b32.xlu0 %v2593, 28
    %v3162 = vpop.permute.xlu0 %3161
    %3163 = vrot.lane.b32.xlu0 %v2594, 28
    %v3164 = vpop.permute.xlu0 %3163
    %3165 = vrot.lane.b32.xlu0 %v2894, 28
    %v3166 = vpop.permute.xlu0 %3165
    %3167 = vrot.lane.b32.xlu0 %v3104, 28
    %v3168 = vpop.permute.xlu0 %3167
    %v3169 = vunpack.c.l.b16 %v2392
    %v3170 = vunpack.c.l.b16 %v2395
    %v3171 = vunpack.c.l.b16 %v2399
    %v3172 = vunpack.c.l.b16 %v2402
    %v3173 = vpack.c.b16 %v3170, %v3169
    %v3174 = vpack.c.b16 %v3172, %v3171
    %3175 = vrot.lane.b32.xlu0 %v2725, 32
    %v3176 = vpop.permute.xlu0 %3175
    %3177 = vrot.lane.b32.xlu0 %v2726, 32
    %v3178 = vpop.permute.xlu0 %3177
    %3179 = vrot.lane.b32.xlu0 %v2727, 32
    %v3180 = vpop.permute.xlu0 %3179
    %3181 = vrot.lane.b32.xlu0 %v2728, 32
    %v3182 = vpop.permute.xlu0 %3181
    %3183 = vrot.lane.b32.xlu0 %v2729, 32
    %v3184 = vpop.permute.xlu0 %3183
    %3185 = vrot.lane.b32.xlu0 %v2730, 32
    %v3186 = vpop.permute.xlu0 %3185
    %3187 = vrot.lane.b32.xlu0 %v2731, 32
    %v3188 = vpop.permute.xlu0 %3187
    %3189 = vrot.lane.b32.xlu0 %v2732, 32
    %v3190 = vpop.permute.xlu0 %3189
    %3191 = vrot.lane.b32.xlu0 %v2733, 32
    %v3192 = vpop.permute.xlu0 %3191
    %3193 = vrot.lane.b32.xlu0 %v2734, 32
    %v3194 = vpop.permute.xlu0 %3193
    %3195 = vrot.lane.b32.xlu0 %v2735, 32
    %v3196 = vpop.permute.xlu0 %3195
    %3197 = vrot.lane.b32.xlu0 %v2736, 32
    %v3198 = vpop.permute.xlu0 %3197
    %3199 = vrot.lane.b32.xlu0 %v2737, 32
    %v3200 = vpop.permute.xlu0 %3199
    %3201 = vrot.lane.b32.xlu0 %v2738, 32
    %v3202 = vpop.permute.xlu0 %3201
    %3203 = vrot.lane.b32.xlu0 %v2963, 32
    %v3204 = vpop.permute.xlu0 %3203
    %3205 = vrot.lane.b32.xlu0 %v3173, 32
    %v3206 = vpop.permute.xlu0 %3205
    %3207 = vrot.lane.b32.xlu0 %v2741, 32
    %v3208 = vpop.permute.xlu0 %3207
    %3209 = vrot.lane.b32.xlu0 %v2742, 32
    %v3210 = vpop.permute.xlu0 %3209
    %3211 = vrot.lane.b32.xlu0 %v2743, 32
    %v3212 = vpop.permute.xlu0 %3211
    %3213 = vrot.lane.b32.xlu0 %v2744, 32
    %v3214 = vpop.permute.xlu0 %3213
    %3215 = vrot.lane.b32.xlu0 %v2745, 32
    %v3216 = vpop.permute.xlu0 %3215
    %3217 = vrot.lane.b32.xlu0 %v2746, 32
    %v3218 = vpop.permute.xlu0 %3217
    %3219 = vrot.lane.b32.xlu0 %v2747, 32
    %v3220 = vpop.permute.xlu0 %3219
    %3221 = vrot.lane.b32.xlu0 %v2748, 32
    %v3222 = vpop.permute.xlu0 %3221
    %3223 = vrot.lane.b32.xlu0 %v2749, 32
    %v3224 = vpop.permute.xlu0 %3223
    %3225 = vrot.lane.b32.xlu0 %v2750, 32
    %v3226 = vpop.permute.xlu0 %3225
    %3227 = vrot.lane.b32.xlu0 %v2751, 32
    %v3228 = vpop.permute.xlu0 %3227
    %3229 = vrot.lane.b32.xlu0 %v2752, 32
    %v3230 = vpop.permute.xlu0 %3229
    %3231 = vrot.lane.b32.xlu0 %v2753, 32
    %v3232 = vpop.permute.xlu0 %3231
    %3233 = vrot.lane.b32.xlu0 %v2754, 32
    %v3234 = vpop.permute.xlu0 %3233
    %3235 = vrot.lane.b32.xlu0 %v2964, 32
    %v3236 = vpop.permute.xlu0 %3235
    %3237 = vrot.lane.b32.xlu0 %v3174, 32
    %v3238 = vpop.permute.xlu0 %3237
    %vm3239 = vcmask 31744
    %v3242 = vsel %vm3239, %v2467, %v2596
    %v3245 = vsel %vm3239, %v2468, %v2598
    %v3248 = vsel %vm3239, %v2469, %v2600
    %v3251 = vsel %vm3239, %v2470, %v2602
    %v3254 = vsel %vm3239, %v2471, %v2604
    %v3257 = vsel %vm3239, %v2472, %v2606
    %v3260 = vsel %vm3239, %v2473, %v2608
    %v3263 = vsel %vm3239, %v2474, %v2610
    %v3266 = vsel %vm3239, %v2475, %v2612
    %v3269 = vsel %vm3239, %v2476, %v2614
    %v3272 = vsel %vm3239, %v2477, %v2616
    %v3275 = vsel %vm3239, %v2478, %v2618
    %v3278 = vsel %vm3239, %v2479, %v2620
    %v3281 = vsel %vm3239, %v2480, %v2622
    %v3284 = vsel %vm3239, %v2481, %v2624
    %v3287 = vsel %vm3239, %v2482, %v2626
    %v3290 = vsel %vm3239, %v2483, %v2628
    %v3293 = vsel %vm3239, %v2484, %v2630
    %v3296 = vsel %vm3239, %v2485, %v2632
    %v3299 = vsel %vm3239, %v2486, %v2634
    %v3302 = vsel %vm3239, %v2487, %v2636
    %v3305 = vsel %vm3239, %v2488, %v2638
    %v3308 = vsel %vm3239, %v2489, %v2640
    %v3311 = vsel %vm3239, %v2490, %v2642
    %v3314 = vsel %vm3239, %v2491, %v2644
    %v3317 = vsel %vm3239, %v2492, %v2646
    %v3320 = vsel %vm3239, %v2493, %v2648
    %v3323 = vsel %vm3239, %v2494, %v2650
    %v3326 = vsel %vm3239, %v2495, %v2652
    %v3329 = vsel %vm3239, %v2496, %v2654
    %v3332 = vsel %vm3239, %v2497, %v2656
    %v3335 = vsel %vm3239, %v2498, %v2658
    %vm3336 = vcmask 64512
    %v3338 = vsel %vm3336, %v3242, %v2756
    %v3340 = vsel %vm3336, %v3245, %v2758
    %v3342 = vsel %vm3336, %v3248, %v2760
    %v3344 = vsel %vm3336, %v3251, %v2762
    %v3346 = vsel %vm3336, %v3254, %v2764
    %v3348 = vsel %vm3336, %v3257, %v2766
    %v3350 = vsel %vm3336, %v3260, %v2768
    %v3352 = vsel %vm3336, %v3263, %v2770
    %v3354 = vsel %vm3336, %v3266, %v2772
    %v3356 = vsel %vm3336, %v3269, %v2774
    %v3358 = vsel %vm3336, %v3272, %v2776
    %v3360 = vsel %vm3336, %v3275, %v2778
    %v3362 = vsel %vm3336, %v3278, %v2780
    %v3364 = vsel %vm3336, %v3281, %v2782
    %v3366 = vsel %vm3336, %v3284, %v2784
    %v3368 = vsel %vm3336, %v3287, %v2786
    %v3370 = vsel %vm3336, %v3290, %v2788
    %v3372 = vsel %vm3336, %v3293, %v2790
    %v3374 = vsel %vm3336, %v3296, %v2792
    %v3376 = vsel %vm3336, %v3299, %v2794
    %v3378 = vsel %vm3336, %v3302, %v2796
    %v3380 = vsel %vm3336, %v3305, %v2798
    %v3382 = vsel %vm3336, %v3308, %v2800
    %v3384 = vsel %vm3336, %v3311, %v2802
    %v3386 = vsel %vm3336, %v3314, %v2804
    %v3388 = vsel %vm3336, %v3317, %v2806
    %v3390 = vsel %vm3336, %v3320, %v2808
    %v3392 = vsel %vm3336, %v3323, %v2810
    %v3394 = vsel %vm3336, %v3326, %v2812
    %v3396 = vsel %vm3336, %v3329, %v2814
    %v3398 = vsel %vm3336, %v3332, %v2816
    %v3400 = vsel %vm3336, %v3335, %v2818
    %vm3401 = vcmask 97280
    %v3403 = vsel %vm3401, %v3338, %v2826
    %v3405 = vsel %vm3401, %v3340, %v2828
    %v3407 = vsel %vm3401, %v3342, %v2830
    %v3409 = vsel %vm3401, %v3344, %v2832
    %v3411 = vsel %vm3401, %v3346, %v2834
    %v3413 = vsel %vm3401, %v3348, %v2836
    %v3415 = vsel %vm3401, %v3350, %v2838
    %v3417 = vsel %vm3401, %v3352, %v2840
    %v3419 = vsel %vm3401, %v3354, %v2842
    %v3421 = vsel %vm3401, %v3356, %v2844
    %v3423 = vsel %vm3401, %v3358, %v2846
    %v3425 = vsel %vm3401, %v3360, %v2848
    %v3427 = vsel %vm3401, %v3362, %v2850
    %v3429 = vsel %vm3401, %v3364, %v2852
    %v3431 = vsel %vm3401, %v3366, %v2854
    %v3433 = vsel %vm3401, %v3368, %v2856
    %v3435 = vsel %vm3401, %v3370, %v2858
    %v3437 = vsel %vm3401, %v3372, %v2860
    %v3439 = vsel %vm3401, %v3374, %v2862
    %v3441 = vsel %vm3401, %v3376, %v2864
    %v3443 = vsel %vm3401, %v3378, %v2866
    %v3445 = vsel %vm3401, %v3380, %v2868
    %v3447 = vsel %vm3401, %v3382, %v2870
    %v3449 = vsel %vm3401, %v3384, %v2872
    %v3451 = vsel %vm3401, %v3386, %v2874
    %v3453 = vsel %vm3401, %v3388, %v2876
    %v3455 = vsel %vm3401, %v3390, %v2878
    %v3457 = vsel %vm3401, %v3392, %v2880
    %v3459 = vsel %vm3401, %v3394, %v2882
    %v3461 = vsel %vm3401, %v3396, %v2884
    %v3463 = vsel %vm3401, %v3398, %v2886
    %v3465 = vsel %vm3401, %v3400, %v2888
    %vm3466 = vcmask 130048
    %v3468 = vsel %vm3466, %v3403, %v2896
    %v3470 = vsel %vm3466, %v3405, %v2898
    %v3472 = vsel %vm3466, %v3407, %v2900
    %v3474 = vsel %vm3466, %v3409, %v2902
    %v3476 = vsel %vm3466, %v3411, %v2904
    %v3478 = vsel %vm3466, %v3413, %v2906
    %v3480 = vsel %vm3466, %v3415, %v2908
    %v3482 = vsel %vm3466, %v3417, %v2910
    %v3484 = vsel %vm3466, %v3419, %v2912
    %v3486 = vsel %vm3466, %v3421, %v2914
    %v3488 = vsel %vm3466, %v3423, %v2916
    %v3490 = vsel %vm3466, %v3425, %v2918
    %v3492 = vsel %vm3466, %v3427, %v2920
    %v3494 = vsel %vm3466, %v3429, %v2922
    %v3496 = vsel %vm3466, %v3431, %v2924
    %v3498 = vsel %vm3466, %v3433, %v2926
    %v3500 = vsel %vm3466, %v3435, %v2928
    %v3502 = vsel %vm3466, %v3437, %v2930
    %v3504 = vsel %vm3466, %v3439, %v2932
    %v3506 = vsel %vm3466, %v3441, %v2934
    %v3508 = vsel %vm3466, %v3443, %v2936
    %v3510 = vsel %vm3466, %v3445, %v2938
    %v3512 = vsel %vm3466, %v3447, %v2940
    %v3514 = vsel %vm3466, %v3449, %v2942
    %v3516 = vsel %vm3466, %v3451, %v2944
    %v3518 = vsel %vm3466, %v3453, %v2946
    %v3520 = vsel %vm3466, %v3455, %v2948
    %v3522 = vsel %vm3466, %v3457, %v2950
    %v3524 = vsel %vm3466, %v3459, %v2952
    %v3526 = vsel %vm3466, %v3461, %v2954
    %v3528 = vsel %vm3466, %v3463, %v2956
    %v3530 = vsel %vm3466, %v3465, %v2958
    %vm3531 = vcmask 162816
    %v3533 = vsel %vm3531, %v3468, %v2966
    %v3535 = vsel %vm3531, %v3470, %v2968
    %v3537 = vsel %vm3531, %v3472, %v2970
    %v3539 = vsel %vm3531, %v3474, %v2972
    %v3541 = vsel %vm3531, %v3476, %v2974
    %v3543 = vsel %vm3531, %v3478, %v2976
    %v3545 = vsel %vm3531, %v3480, %v2978
    %v3547 = vsel %vm3531, %v3482, %v2980
    %v3549 = vsel %vm3531, %v3484, %v2982
    %v3551 = vsel %vm3531, %v3486, %v2984
    %v3553 = vsel %vm3531, %v3488, %v2986
    %v3555 = vsel %vm3531, %v3490, %v2988
    %v3557 = vsel %vm3531, %v3492, %v2990
    %v3559 = vsel %vm3531, %v3494, %v2992
    %v3561 = vsel %vm3531, %v3496, %v2994
    %v3563 = vsel %vm3531, %v3498, %v2996
    %v3565 = vsel %vm3531, %v3500, %v2998
    %v3567 = vsel %vm3531, %v3502, %v3000
    %v3569 = vsel %vm3531, %v3504, %v3002
    %v3571 = vsel %vm3531, %v3506, %v3004
    %v3573 = vsel %vm3531, %v3508, %v3006
    %v3575 = vsel %vm3531, %v3510, %v3008
    %v3577 = vsel %vm3531, %v3512, %v3010
    %v3579 = vsel %vm3531, %v3514, %v3012
    %v3581 = vsel %vm3531, %v3516, %v3014
    %v3583 = vsel %vm3531, %v3518, %v3016
    %v3585 = vsel %vm3531, %v3520, %v3018
    %v3587 = vsel %vm3531, %v3522, %v3020
    %v3589 = vsel %vm3531, %v3524, %v3022
    %v3591 = vsel %vm3531, %v3526, %v3024
    %v3593 = vsel %vm3531, %v3528, %v3026
    %v3595 = vsel %vm3531, %v3530, %v3028
    %vm3596 = vcmask 195584
    %v3598 = vsel %vm3596, %v3533, %v3036
    %v3600 = vsel %vm3596, %v3535, %v3038
    %v3602 = vsel %vm3596, %v3537, %v3040
    %v3604 = vsel %vm3596, %v3539, %v3042
    %v3606 = vsel %vm3596, %v3541, %v3044
    %v3608 = vsel %vm3596, %v3543, %v3046
    %v3610 = vsel %vm3596, %v3545, %v3048
    %v3612 = vsel %vm3596, %v3547, %v3050
    %v3614 = vsel %vm3596, %v3549, %v3052
    %v3616 = vsel %vm3596, %v3551, %v3054
    %v3618 = vsel %vm3596, %v3553, %v3056
    %v3620 = vsel %vm3596, %v3555, %v3058
    %v3622 = vsel %vm3596, %v3557, %v3060
    %v3624 = vsel %vm3596, %v3559, %v3062
    %v3626 = vsel %vm3596, %v3561, %v3064
    %v3628 = vsel %vm3596, %v3563, %v3066
    %v3630 = vsel %vm3596, %v3565, %v3068
    %v3632 = vsel %vm3596, %v3567, %v3070
    %v3634 = vsel %vm3596, %v3569, %v3072
    %v3636 = vsel %vm3596, %v3571, %v3074
    %v3638 = vsel %vm3596, %v3573, %v3076
    %v3640 = vsel %vm3596, %v3575, %v3078
    %v3642 = vsel %vm3596, %v3577, %v3080
    %v3644 = vsel %vm3596, %v3579, %v3082
    %v3646 = vsel %vm3596, %v3581, %v3084
    %v3648 = vsel %vm3596, %v3583, %v3086
    %v3650 = vsel %vm3596, %v3585, %v3088
    %v3652 = vsel %vm3596, %v3587, %v3090
    %v3654 = vsel %vm3596, %v3589, %v3092
    %v3656 = vsel %vm3596, %v3591, %v3094
    %v3658 = vsel %vm3596, %v3593, %v3096
    %v3660 = vsel %vm3596, %v3595, %v3098
    %vm3661 = vcmask 228352
    %v3663 = vsel %vm3661, %v3598, %v3106
    %v3665 = vsel %vm3661, %v3600, %v3108
    %v3667 = vsel %vm3661, %v3602, %v3110
    %v3669 = vsel %vm3661, %v3604, %v3112
    %v3671 = vsel %vm3661, %v3606, %v3114
    %v3673 = vsel %vm3661, %v3608, %v3116
    %v3675 = vsel %vm3661, %v3610, %v3118
    %v3677 = vsel %vm3661, %v3612, %v3120
    %v3679 = vsel %vm3661, %v3614, %v3122
    %v3681 = vsel %vm3661, %v3616, %v3124
    %v3683 = vsel %vm3661, %v3618, %v3126
    %v3685 = vsel %vm3661, %v3620, %v3128
    %v3687 = vsel %vm3661, %v3622, %v3130
    %v3689 = vsel %vm3661, %v3624, %v3132
    %v3691 = vsel %vm3661, %v3626, %v3134
    %v3693 = vsel %vm3661, %v3628, %v3136
    %v3695 = vsel %vm3661, %v3630, %v3138
    %v3697 = vsel %vm3661, %v3632, %v3140
    %v3699 = vsel %vm3661, %v3634, %v3142
    %v3701 = vsel %vm3661, %v3636, %v3144
    %v3703 = vsel %vm3661, %v3638, %v3146
    %v3705 = vsel %vm3661, %v3640, %v3148
    %v3707 = vsel %vm3661, %v3642, %v3150
    %v3709 = vsel %vm3661, %v3644, %v3152
    %v3711 = vsel %vm3661, %v3646, %v3154
    %v3713 = vsel %vm3661, %v3648, %v3156
    %v3715 = vsel %vm3661, %v3650, %v3158
    %v3717 = vsel %vm3661, %v3652, %v3160
    %v3719 = vsel %vm3661, %v3654, %v3162
    %v3721 = vsel %vm3661, %v3656, %v3164
    %v3723 = vsel %vm3661, %v3658, %v3166
    %v3725 = vsel %vm3661, %v3660, %v3168
    %vm3726 = vcmask 261120
    %v3728 = vsel %vm3726, %v3663, %v3176
    %v3730 = vsel %vm3726, %v3665, %v3178
    %v3732 = vsel %vm3726, %v3667, %v3180
    %v3734 = vsel %vm3726, %v3669, %v3182
    %v3736 = vsel %vm3726, %v3671, %v3184
    %v3738 = vsel %vm3726, %v3673, %v3186
    %v3740 = vsel %vm3726, %v3675, %v3188
    %v3742 = vsel %vm3726, %v3677, %v3190
    %v3744 = vsel %vm3726, %v3679, %v3192
    %v3746 = vsel %vm3726, %v3681, %v3194
    %v3748 = vsel %vm3726, %v3683, %v3196
    %v3750 = vsel %vm3726, %v3685, %v3198
    %v3752 = vsel %vm3726, %v3687, %v3200
    %v3754 = vsel %vm3726, %v3689, %v3202
    %v3756 = vsel %vm3726, %v3691, %v3204
    %v3758 = vsel %vm3726, %v3693, %v3206
    %v3760 = vsel %vm3726, %v3695, %v3208
    %v3762 = vsel %vm3726, %v3697, %v3210
    %v3764 = vsel %vm3726, %v3699, %v3212
    %v3766 = vsel %vm3726, %v3701, %v3214
    %v3768 = vsel %vm3726, %v3703, %v3216
    %v3770 = vsel %vm3726, %v3705, %v3218
    %v3772 = vsel %vm3726, %v3707, %v3220
    %v3774 = vsel %vm3726, %v3709, %v3222
    %v3776 = vsel %vm3726, %v3711, %v3224
    %v3778 = vsel %vm3726, %v3713, %v3226
    %v3780 = vsel %vm3726, %v3715, %v3228
    %v3782 = vsel %vm3726, %v3717, %v3230
    %v3784 = vsel %vm3726, %v3719, %v3232
    %v3786 = vsel %vm3726, %v3721, %v3234
    %v3788 = vsel %vm3726, %v3723, %v3236
    %v3790 = vsel %vm3726, %v3725, %v3238
    %v3791 = vld [vmem:[%s1] sm:$0xf]
    %v3792 = vld [vmem:[%s1 + $0x4] sm:$0xf]
    %v3793 = vld [vmem:[%s1 + $0x8] sm:$0xf]
    %v3794 = vld [vmem:[%s1 + $0xc] sm:$0xf]
    %v3795 = vld [vmem:[%s1 + $0x10] sm:$0x3]
    %v3796 = vld [vmem:[%s2] sm:$0x1]
    %v3798 = vlaneseq
    %v3799 = vshrl.u32 %v3798, 7
    %v3800 = vsub.s32 0, %v3799
    %v3801 = vrot.slane %v3796, %v3800
    %v3808 = vunpack.c.l.b16 %v3791
    %v3809 = vunpack.c.l.b16 %v3792
    %v3810 = vunpack.c.l.b16 %v3793
    %v3811 = vunpack.c.l.b16 %v3794
    %v3812 = vunpack.c.l.b16 %v3795
    %v3813 = vpack.c.b16 %v3809, %v3808
    %v3814 = vpack.c.b16 %v3811, %v3810
    %v3815 = vpack.c.b16 %v3812, %v3812
    %vm3818 = vcmask 293888
    %v3819 = vsel %vm3818, %v3728, 0
    %v3821 = vsel %vm3818, %v3730, 0
    %v3823 = vsel %vm3818, %v3732, 0
    %v3825 = vsel %vm3818, %v3734, 0
    %v3827 = vsel %vm3818, %v3736, 0
    %v3829 = vsel %vm3818, %v3738, 0
    %v3831 = vsel %vm3818, %v3740, 0
    %v3833 = vsel %vm3818, %v3742, 0
    %v3835 = vsel %vm3818, %v3744, 0
    %v3837 = vsel %vm3818, %v3746, 0
    %v3839 = vsel %vm3818, %v3748, 0
    %v3841 = vsel %vm3818, %v3750, 0
    %v3843 = vsel %vm3818, %v3752, 0
    %v3845 = vsel %vm3818, %v3754, 0
    %v3847 = vsel %vm3818, %v3756, 0
    %v3849 = vsel %vm3818, %v3758, 0
    %v3851 = vsel %vm3818, %v3760, 0
    %v3853 = vsel %vm3818, %v3762, 0
    %v3855 = vsel %vm3818, %v3764, 0
    %v3857 = vsel %vm3818, %v3766, 0
    %v3859 = vsel %vm3818, %v3768, 0
    %v3861 = vsel %vm3818, %v3770, 0
    %v3863 = vsel %vm3818, %v3772, 0
    %v3865 = vsel %vm3818, %v3774, 0
    %v3867 = vsel %vm3818, %v3776, 0
    %v3869 = vsel %vm3818, %v3778, 0
    %v3871 = vsel %vm3818, %v3780, 0
    %v3873 = vsel %vm3818, %v3782, 0
    %v3875 = vsel %vm3818, %v3784, 0
    %v3877 = vsel %vm3818, %v3786, 0
    %v3879 = vsel %vm3818, %v3788, 0
    %v3881 = vsel %vm3818, %v3790, 0
    %vm3883 = vcmask 1041408
    %v3885 = vsel %vm3883, %v3815, 0
    %3887 = vmatprep.subr.bf16.mxu0 0
    %3888 = vmatpush1.bf16.msra.mxu0 %v3813
    %3889 = vmatprep.subr.bf16.mxu0 0
    %3890 = vmatpush1.bf16.msra.mxu0 %v3814
    %3891 = vmatprep.subr.bf16.mxu0 0
    %3892 = vmatpush1.bf16.msra.mxu0 %v3885
    %3893 = vmatprep.subr.bf16.mxu0 0
    %3894 = vmatpush1.bf16.msra.mxu0 0
    %3895 = vmatprep.subr.bf16.mxu0 0
    %3896 = vmatpush1.bf16.msra.mxu0 0
    %3897 = vmatprep.subr.bf16.mxu0 0
    %3898 = vmatpush1.bf16.msra.mxu0 0
    %3899 = vmatprep.subr.bf16.mxu0 0
    %3900 = vmatpush1.bf16.msra.mxu0 0
    %3901 = vmatprep.subr.bf16.mxu0 0
    %3902 = vmatpush1.bf16.msra.mxu0 0
    %3903 = vmatprep.subr.bf16.mxu0 0
    %3904 = vmatpush1.bf16.msra.mxu0 0
    %3905 = vmatprep.subr.bf16.mxu0 0
    %3906 = vmatpush1.bf16.msra.mxu0 0
    %3907 = vmatprep.subr.bf16.mxu0 0
    %3908 = vmatpush1.bf16.msra.mxu0 0
    %3909 = vmatprep.subr.bf16.mxu0 0
    %3910 = vmatpush1.bf16.msra.mxu0 0
    %3911 = vmatprep.subr.bf16.mxu0 0
    %3912 = vmatpush1.bf16.msra.mxu0 0
    %3913 = vmatprep.subr.bf16.mxu0 0
    %3914 = vmatpush1.bf16.msra.mxu0 0
    %3915 = vmatprep.subr.bf16.mxu0 0
    %3916 = vmatpush1.bf16.msra.mxu0 0
    %3917 = vmatprep.subr.bf16.mxu0 0
    %3918 = vmatpush1.bf16.msra.mxu0 0
    %3919 = vmatprep.mubr.bf16.mxu0 0
    %3920 = vmatmul.mubr.bf16.gmra.mrb[0].mxu0 %v3819
    %v3921 = vpop.f32.mrb[0].mxu0
    %v3922 = vadd.f32 %v3801, %v3921
    %v3923 = vpop.f32.mrb[0].mxu0
    %v3924 = vpop.f32.mrb[0].mxu0
    %v3925 = vadd.f32 %v3801, %v3924
    %v3926 = vpop.f32.mrb[0].mxu0
    %3927 = vmatprep.mubr.bf16.mxu0 0
    %3928 = vmatmul.mubr.bf16.gmra.mrb[0].mxu0 %v3821
    %v3929 = vpop.f32.mrb[0].mxu0
    %v3930 = vadd.f32 %v3801, %v3929
    %v3931 = vpop.f32.mrb[0].mxu0
    %v3932 = vpop.f32.mrb[0].mxu0
    %v3933 = vadd.f32 %v3801, %v3932
    %v3934 = vpop.f32.mrb[0].mxu0
    %3935 = vmatprep.mubr.bf16.mxu0 0
    %3936 = vmatmul.mubr.bf16.gmra.mrb[0].mxu0 %v3823
    %v3937 = vpop.f32.mrb[0].mxu0
    %v3938 = vadd.f32 %v3801, %v3937
    %v3939 = vpop.f32.mrb[0].mxu0
    %v3940 = vpop.f32.mrb[0].mxu0
    %v3941 = vadd.f32 %v3801, %v3940
    %v3942 = vpop.f32.mrb[0].mxu0
    %3943 = vmatprep.mubr.bf16.mxu0 0
    %3944 = vmatmul.mubr.bf16.gmra.mrb[0].mxu0 %v3825
    %v3945 = vpop.f32.mrb[0].mxu0
    %v3946 = vadd.f32 %v3801, %v3945
    %v3947 = vpop.f32.mrb[0].mxu0
    %v3948 = vpop.f32.mrb[0].mxu0
    %v3949 = vadd.f32 %v3801, %v3948
    %v3950 = vpop.f32.mrb[0].mxu0
    %3951 = vmatprep.mubr.bf16.mxu0 0
    %3952 = vmatmul.mubr.bf16.gmra.mrb[0].mxu0 %v3827
    %v3953 = vpop.f32.mrb[0].mxu0
    %v3954 = vadd.f32 %v3801, %v3953
    %v3955 = vpop.f32.mrb[0].mxu0
    %v3956 = vpop.f32.mrb[0].mxu0
    %v3957 = vadd.f32 %v3801, %v3956
    %v3958 = vpop.f32.mrb[0].mxu0
    %3959 = vmatprep.mubr.bf16.mxu0 0
    %3960 = vmatmul.mubr.bf16.gmra.mrb[0].mxu0 %v3829
    %v3961 = vpop.f32.mrb[0].mxu0
    %v3962 = vadd.f32 %v3801, %v3961
    %v3963 = vpop.f32.mrb[0].mxu0
    %v3964 = vpop.f32.mrb[0].mxu0
    %v3965 = vadd.f32 %v3801, %v3964
    %v3966 = vpop.f32.mrb[0].mxu0
    %3967 = vmatprep.mubr.bf16.mxu0 0
    %3968 = vmatmul.mubr.bf16.gmra.mrb[0].mxu0 %v3831
    %v3969 = vpop.f32.mrb[0].mxu0
    %v3970 = vadd.f32 %v3801, %v3969
    %v3971 = vpop.f32.mrb[0].mxu0
    %v3972 = vpop.f32.mrb[0].mxu0
    %v3973 = vadd.f32 %v3801, %v3972
    %v3974 = vpop.f32.mrb[0].mxu0
    %3975 = vmatprep.mubr.bf16.mxu0 0
    %3976 = vmatmul.mubr.bf16.gmra.mrb[0].mxu0 %v3833
    %v3977 = vpop.f32.mrb[0].mxu0
    %v3978 = vadd.f32 %v3801, %v3977
    %v3979 = vpop.f32.mrb[0].mxu0
    %v3980 = vpop.f32.mrb[0].mxu0
    %v3981 = vadd.f32 %v3801, %v3980
    %v3982 = vpop.f32.mrb[0].mxu0
    %3983 = vmatprep.mubr.bf16.mxu0 0
    %3984 = vmatmul.mubr.bf16.gmra.mrb[0].mxu0 %v3835
    %v3985 = vpop.f32.mrb[0].mxu0
    %v3986 = vadd.f32 %v3801, %v3985
    %v3987 = vpop.f32.mrb[0].mxu0
    %v3988 = vpop.f32.mrb[0].mxu0
    %v3989 = vadd.f32 %v3801, %v3988
    %v3990 = vpop.f32.mrb[0].mxu0
    %3991 = vmatprep.mubr.bf16.mxu0 0
    %3992 = vmatmul.mubr.bf16.gmra.mrb[0].mxu0 %v3837
    %v3993 = vpop.f32.mrb[0].mxu0
    %v3994 = vadd.f32 %v3801, %v3993
    %v3995 = vpop.f32.mrb[0].mxu0
    %v3996 = vpop.f32.mrb[0].mxu0
    %v3997 = vadd.f32 %v3801, %v3996
    %v3998 = vpop.f32.mrb[0].mxu0
    %3999 = vmatprep.mubr.bf16.mxu0 0
    %4000 = vmatmul.mubr.bf16.gmra.mrb[0].mxu0 %v3839
    %v4001 = vpop.f32.mrb[0].mxu0
    %v4002 = vadd.f32 %v3801, %v4001
    %v4003 = vpop.f32.mrb[0].mxu0
    %v4004 = vpop.f32.mrb[0].mxu0
    %v4005 = vadd.f32 %v3801, %v4004
    %v4006 = vpop.f32.mrb[0].mxu0
    %4007 = vmatprep.mubr.bf16.mxu0 0
    %4008 = vmatmul.mubr.bf16.gmra.mrb[0].mxu0 %v3841
    %v4009 = vpop.f32.mrb[0].mxu0
    %v4010 = vadd.f32 %v3801, %v4009
    %v4011 = vpop.f32.mrb[0].mxu0
    %v4012 = vpop.f32.mrb[0].mxu0
    %v4013 = vadd.f32 %v3801, %v4012
    %v4014 = vpop.f32.mrb[0].mxu0
    %4015 = vmatprep.mubr.bf16.mxu0 0
    %4016 = vmatmul.mubr.bf16.gmra.mrb[0].mxu0 %v3843
    %v4017 = vpop.f32.mrb[0].mxu0
    %v4018 = vadd.f32 %v3801, %v4017
    %v4019 = vpop.f32.mrb[0].mxu0
    %v4020 = vpop.f32.mrb[0].mxu0
    %v4021 = vadd.f32 %v3801, %v4020
    %v4022 = vpop.f32.mrb[0].mxu0
    %4023 = vmatprep.mubr.bf16.mxu0 0
    %4024 = vmatmul.mubr.bf16.gmra.mrb[0].mxu0 %v3845
    %v4025 = vpop.f32.mrb[0].mxu0
    %v4026 = vadd.f32 %v3801, %v4025
    %v4027 = vpop.f32.mrb[0].mxu0
    %v4028 = vpop.f32.mrb[0].mxu0
    %v4029 = vadd.f32 %v3801, %v4028
    %v4030 = vpop.f32.mrb[0].mxu0
    %4031 = vmatprep.mubr.bf16.mxu0 0
    %4032 = vmatmul.mubr.bf16.gmra.mrb[0].mxu0 %v3847
    %v4033 = vpop.f32.mrb[0].mxu0
    %v4034 = vadd.f32 %v3801, %v4033
    %v4035 = vpop.f32.mrb[0].mxu0
    %v4036 = vpop.f32.mrb[0].mxu0
    %v4037 = vadd.f32 %v3801, %v4036
    %v4038 = vpop.f32.mrb[0].mxu0
    %4039 = vmatprep.mubr.bf16.mxu0 0
    %4040 = vmatmul.mubr.bf16.gmra.mrb[0].mxu0 %v3849
    %v4041 = vpop.f32.mrb[0].mxu0
    %v4042 = vadd.f32 %v3801, %v4041
    %v4043 = vpop.f32.mrb[0].mxu0
    %v4044 = vpop.f32.mrb[0].mxu0
    %v4045 = vadd.f32 %v3801, %v4044
    %v4046 = vpop.f32.mrb[0].mxu0
    %4047 = vmatprep.mubr.bf16.mxu0 0
    %4048 = vmatmul.mubr.bf16.gmra.mrb[0].mxu0 %v3851
    %v4049 = vpop.f32.mrb[0].mxu0
    %v4050 = vadd.f32 %v3801, %v4049
    %v4051 = vpop.f32.mrb[0].mxu0
    %v4052 = vpop.f32.mrb[0].mxu0
    %v4053 = vadd.f32 %v3801, %v4052
    %v4054 = vpop.f32.mrb[0].mxu0
    %4055 = vmatprep.mubr.bf16.mxu0 0
    %4056 = vmatmul.mubr.bf16.gmra.mrb[0].mxu0 %v3853
    %v4057 = vpop.f32.mrb[0].mxu0
    %v4058 = vadd.f32 %v3801, %v4057
    %v4059 = vpop.f32.mrb[0].mxu0
    %v4060 = vpop.f32.mrb[0].mxu0
    %v4061 = vadd.f32 %v3801, %v4060
    %v4062 = vpop.f32.mrb[0].mxu0
    %4063 = vmatprep.mubr.bf16.mxu0 0
    %4064 = vmatmul.mubr.bf16.gmra.mrb[0].mxu0 %v3855
    %v4065 = vpop.f32.mrb[0].mxu0
    %v4066 = vadd.f32 %v3801, %v4065
    %v4067 = vpop.f32.mrb[0].mxu0
    %v4068 = vpop.f32.mrb[0].mxu0
    %v4069 = vadd.f32 %v3801, %v4068
    %v4070 = vpop.f32.mrb[0].mxu0
    %4071 = vmatprep.mubr.bf16.mxu0 0
    %4072 = vmatmul.mubr.bf16.gmra.mrb[0].mxu0 %v3857
    %v4073 = vpop.f32.mrb[0].mxu0
    %v4074 = vadd.f32 %v3801, %v4073
    %v4075 = vpop.f32.mrb[0].mxu0
    %v4076 = vpop.f32.mrb[0].mxu0
    %v4077 = vadd.f32 %v3801, %v4076
    %v4078 = vpop.f32.mrb[0].mxu0
    %4079 = vmatprep.mubr.bf16.mxu0 0
    %4080 = vmatmul.mubr.bf16.gmra.mrb[0].mxu0 %v3859
    %v4081 = vpop.f32.mrb[0].mxu0
    %v4082 = vadd.f32 %v3801, %v4081
    %v4083 = vpop.f32.mrb[0].mxu0
    %v4084 = vpop.f32.mrb[0].mxu0
    %v4085 = vadd.f32 %v3801, %v4084
    %v4086 = vpop.f32.mrb[0].mxu0
    %4087 = vmatprep.mubr.bf16.mxu0 0
    %4088 = vmatmul.mubr.bf16.gmra.mrb[0].mxu0 %v3861
    %v4089 = vpop.f32.mrb[0].mxu0
    %v4090 = vadd.f32 %v3801, %v4089
    %v4091 = vpop.f32.mrb[0].mxu0
    %v4092 = vpop.f32.mrb[0].mxu0
    %v4093 = vadd.f32 %v3801, %v4092
    %v4094 = vpop.f32.mrb[0].mxu0
    %4095 = vmatprep.mubr.bf16.mxu0 0
    %4096 = vmatmul.mubr.bf16.gmra.mrb[0].mxu0 %v3863
    %v4097 = vpop.f32.mrb[0].mxu0
    %v4098 = vadd.f32 %v3801, %v4097
    %v4099 = vpop.f32.mrb[0].mxu0
    %v4100 = vpop.f32.mrb[0].mxu0
    %v4101 = vadd.f32 %v3801, %v4100
    %v4102 = vpop.f32.mrb[0].mxu0
    %4103 = vmatprep.mubr.bf16.mxu0 0
    %4104 = vmatmul.mubr.bf16.gmra.mrb[0].mxu0 %v3865
    %v4105 = vpop.f32.mrb[0].mxu0
    %v4106 = vadd.f32 %v3801, %v4105
    %v4107 = vpop.f32.mrb[0].mxu0
    %v4108 = vpop.f32.mrb[0].mxu0
    %v4109 = vadd.f32 %v3801, %v4108
    %v4110 = vpop.f32.mrb[0].mxu0
    %4111 = vmatprep.mubr.bf16.mxu0 0
    %4112 = vmatmul.mubr.bf16.gmra.mrb[0].mxu0 %v3867
    %v4113 = vpop.f32.mrb[0].mxu0
    %v4114 = vadd.f32 %v3801, %v4113
    %v4115 = vpop.f32.mrb[0].mxu0
    %v4116 = vpop.f32.mrb[0].mxu0
    %v4117 = vadd.f32 %v3801, %v4116
    %v4118 = vpop.f32.mrb[0].mxu0
    %4119 = vmatprep.mubr.bf16.mxu0 0
    %4120 = vmatmul.mubr.bf16.gmra.mrb[0].mxu0 %v3869
    %v4121 = vpop.f32.mrb[0].mxu0
    %v4122 = vadd.f32 %v3801, %v4121
    %v4123 = vpop.f32.mrb[0].mxu0
    %v4124 = vpop.f32.mrb[0].mxu0
    %v4125 = vadd.f32 %v3801, %v4124
    %v4126 = vpop.f32.mrb[0].mxu0
    %4127 = vmatprep.mubr.bf16.mxu0 0
    %4128 = vmatmul.mubr.bf16.gmra.mrb[0].mxu0 %v3871
    %v4129 = vpop.f32.mrb[0].mxu0
    %v4130 = vadd.f32 %v3801, %v4129
    %v4131 = vpop.f32.mrb[0].mxu0
    %v4132 = vpop.f32.mrb[0].mxu0
    %v4133 = vadd.f32 %v3801, %v4132
    %v4134 = vpop.f32.mrb[0].mxu0
    %4135 = vmatprep.mubr.bf16.mxu0 0
    %4136 = vmatmul.mubr.bf16.gmra.mrb[0].mxu0 %v3873
    %v4137 = vpop.f32.mrb[0].mxu0
    %v4138 = vadd.f32 %v3801, %v4137
    %v4139 = vpop.f32.mrb[0].mxu0
    %v4140 = vpop.f32.mrb[0].mxu0
    %v4141 = vadd.f32 %v3801, %v4140
    %v4142 = vpop.f32.mrb[0].mxu0
    %4143 = vmatprep.mubr.bf16.mxu0 0
    %4144 = vmatmul.mubr.bf16.gmra.mrb[0].mxu0 %v3875
    %v4145 = vpop.f32.mrb[0].mxu0
    %v4146 = vadd.f32 %v3801, %v4145
    %v4147 = vpop.f32.mrb[0].mxu0
    %v4148 = vpop.f32.mrb[0].mxu0
    %v4149 = vadd.f32 %v3801, %v4148
    %v4150 = vpop.f32.mrb[0].mxu0
    %4151 = vmatprep.mubr.bf16.mxu0 0
    %4152 = vmatmul.mubr.bf16.gmra.mrb[0].mxu0 %v3877
    %v4153 = vpop.f32.mrb[0].mxu0
    %v4154 = vadd.f32 %v3801, %v4153
    %v4155 = vpop.f32.mrb[0].mxu0
    %v4156 = vpop.f32.mrb[0].mxu0
    %v4157 = vadd.f32 %v3801, %v4156
    %v4158 = vpop.f32.mrb[0].mxu0
    %4159 = vmatprep.mubr.bf16.mxu0 0
    %4160 = vmatmul.mubr.bf16.gmra.mrb[0].mxu0 %v3879
    %v4161 = vpop.f32.mrb[0].mxu0
    %v4162 = vadd.f32 %v3801, %v4161
    %v4163 = vpop.f32.mrb[0].mxu0
    %v4164 = vpop.f32.mrb[0].mxu0
    %v4165 = vadd.f32 %v3801, %v4164
    %v4166 = vpop.f32.mrb[0].mxu0
    %4167 = vmatprep.mubr.bf16.mxu0 0
    %4168 = vmatmul.mubr.bf16.gmra.mrb[0].mxu0 %v3881
    %v4169 = vpop.f32.mrb[0].mxu0
    %v4170 = vadd.f32 %v3801, %v4169
    %v4171 = vpop.f32.mrb[0].mxu0
    %v4172 = vpop.f32.mrb[0].mxu0
    %v4173 = vadd.f32 %v3801, %v4172
    %v4174 = vpop.f32.mrb[0].mxu0
    %4175 = vdwg.mxu0
    %v4176 = vmax.f32 %v3922, 0.0
    %v4177 = vmax.f32 %v3925, 0.0
    %v4178 = vmax.f32 %v3930, 0.0
    %v4179 = vmax.f32 %v3933, 0.0
    %v4180 = vmax.f32 %v3938, 0.0
    %v4181 = vmax.f32 %v3941, 0.0
    %v4182 = vmax.f32 %v3946, 0.0
    %v4183 = vmax.f32 %v3949, 0.0
    %v4184 = vmax.f32 %v3954, 0.0
    %v4185 = vmax.f32 %v3957, 0.0
    %v4186 = vmax.f32 %v3962, 0.0
    %v4187 = vmax.f32 %v3965, 0.0
    %v4188 = vmax.f32 %v3970, 0.0
    %v4189 = vmax.f32 %v3973, 0.0
    %v4190 = vmax.f32 %v3978, 0.0
    %v4191 = vmax.f32 %v3981, 0.0
    %v4192 = vmax.f32 %v3986, 0.0
    %v4193 = vmax.f32 %v3989, 0.0
    %v4194 = vmax.f32 %v3994, 0.0
    %v4195 = vmax.f32 %v3997, 0.0
    %v4196 = vmax.f32 %v4002, 0.0
    %v4197 = vmax.f32 %v4005, 0.0
    %v4198 = vmax.f32 %v4010, 0.0
    %v4199 = vmax.f32 %v4013, 0.0
    %v4200 = vmax.f32 %v4018, 0.0
    %v4201 = vmax.f32 %v4021, 0.0
    %v4202 = vmax.f32 %v4026, 0.0
    %v4203 = vmax.f32 %v4029, 0.0
    %v4204 = vmax.f32 %v4034, 0.0
    %v4205 = vmax.f32 %v4037, 0.0
    %v4206 = vmax.f32 %v4042, 0.0
    %v4207 = vmax.f32 %v4045, 0.0
    %v4208 = vmax.f32 %v4050, 0.0
    %v4209 = vmax.f32 %v4053, 0.0
    %v4210 = vmax.f32 %v4058, 0.0
    %v4211 = vmax.f32 %v4061, 0.0
    %v4212 = vmax.f32 %v4066, 0.0
    %v4213 = vmax.f32 %v4069, 0.0
    %v4214 = vmax.f32 %v4074, 0.0
    %v4215 = vmax.f32 %v4077, 0.0
    %v4216 = vmax.f32 %v4082, 0.0
    %v4217 = vmax.f32 %v4085, 0.0
    %v4218 = vmax.f32 %v4090, 0.0
    %v4219 = vmax.f32 %v4093, 0.0
    %v4220 = vmax.f32 %v4098, 0.0
    %v4221 = vmax.f32 %v4101, 0.0
    %v4222 = vmax.f32 %v4106, 0.0
    %v4223 = vmax.f32 %v4109, 0.0
    %v4224 = vmax.f32 %v4114, 0.0
    %v4225 = vmax.f32 %v4117, 0.0
    %v4226 = vmax.f32 %v4122, 0.0
    %v4227 = vmax.f32 %v4125, 0.0
    %v4228 = vmax.f32 %v4130, 0.0
    %v4229 = vmax.f32 %v4133, 0.0
    %v4230 = vmax.f32 %v4138, 0.0
    %v4231 = vmax.f32 %v4141, 0.0
    %v4232 = vmax.f32 %v4146, 0.0
    %v4233 = vmax.f32 %v4149, 0.0
    %v4234 = vmax.f32 %v4154, 0.0
    %v4235 = vmax.f32 %v4157, 0.0
    %v4236 = vmax.f32 %v4162, 0.0
    %v4237 = vmax.f32 %v4165, 0.0
    %v4238 = vmax.f32 %v4170, 0.0
    %v4239 = vmax.f32 %v4173, 0.0
    %v4240 = vpack.c.bf16 %v4177, %v4176
    %v4241 = vpack.c.bf16 %v4179, %v4178
    %v4242 = vpack.c.bf16 %v4181, %v4180
    %v4243 = vpack.c.bf16 %v4183, %v4182
    %v4244 = vpack.c.bf16 %v4185, %v4184
    %v4245 = vpack.c.bf16 %v4187, %v4186
    %v4246 = vpack.c.bf16 %v4189, %v4188
    %v4247 = vpack.c.bf16 %v4191, %v4190
    %v4248 = vpack.c.bf16 %v4193, %v4192
    %v4249 = vpack.c.bf16 %v4195, %v4194
    %v4250 = vpack.c.bf16 %v4197, %v4196
    %v4251 = vpack.c.bf16 %v4199, %v4198
    %v4252 = vpack.c.bf16 %v4201, %v4200
    %v4253 = vpack.c.bf16 %v4203, %v4202
    %v4254 = vpack.c.bf16 %v4205, %v4204
    %v4255 = vpack.c.bf16 %v4207, %v4206
    %v4256 = vpack.c.bf16 %v4209, %v4208
    %v4257 = vpack.c.bf16 %v4211, %v4210
    %v4258 = vpack.c.bf16 %v4213, %v4212
    %v4259 = vpack.c.bf16 %v4215, %v4214
    %v4260 = vpack.c.bf16 %v4217, %v4216
    %v4261 = vpack.c.bf16 %v4219, %v4218
    %v4262 = vpack.c.bf16 %v4221, %v4220
    %v4263 = vpack.c.bf16 %v4223, %v4222
    %v4264 = vpack.c.bf16 %v4225, %v4224
    %v4265 = vpack.c.bf16 %v4227, %v4226
    %v4266 = vpack.c.bf16 %v4229, %v4228
    %v4267 = vpack.c.bf16 %v4231, %v4230
    %v4268 = vpack.c.bf16 %v4233, %v4232
    %v4269 = vpack.c.bf16 %v4235, %v4234
    %v4270 = vpack.c.bf16 %v4237, %v4236
    %v4271 = vpack.c.bf16 %v4239, %v4238
    %v4273 = vshrl.u32 %v4240, 16
    %v4275 = vrot.slane %v4273, 7
    %v4276 = vshll.u32 %v4240, 16
    %v4278 = vor.u32 %v4275, %v4276
    %v4280 = vshrl.u32 %v4241, 16
    %v4282 = vrot.slane %v4280, 7
    %v4283 = vshll.u32 %v4241, 16
    %v4285 = vor.u32 %v4282, %v4283
    %v4287 = vshrl.u32 %v4242, 16
    %v4289 = vrot.slane %v4287, 7
    %v4290 = vshll.u32 %v4242, 16
    %v4292 = vor.u32 %v4289, %v4290
    %v4294 = vshrl.u32 %v4243, 16
    %v4296 = vrot.slane %v4294, 7
    %v4297 = vshll.u32 %v4243, 16
    %v4299 = vor.u32 %v4296, %v4297
    %v4301 = vshrl.u32 %v4244, 16
    %v4303 = vrot.slane %v4301, 7
    %v4304 = vshll.u32 %v4244, 16
    %v4306 = vor.u32 %v4303, %v4304
    %v4308 = vshrl.u32 %v4245, 16
    %v4310 = vrot.slane %v4308, 7
    %v4311 = vshll.u32 %v4245, 16
    %v4313 = vor.u32 %v4310, %v4311
    %v4315 = vshrl.u32 %v4246, 16
    %v4317 = vrot.slane %v4315, 7
    %v4318 = vshll.u32 %v4246, 16
    %v4320 = vor.u32 %v4317, %v4318
    %v4322 = vshrl.u32 %v4247, 16
    %v4324 = vrot.slane %v4322, 7
    %v4325 = vshll.u32 %v4247, 16
    %v4327 = vor.u32 %v4324, %v4325
    %v4329 = vshrl.u32 %v4248, 16
    %v4331 = vrot.slane %v4329, 7
    %v4332 = vshll.u32 %v4248, 16
    %v4334 = vor.u32 %v4331, %v4332
    %v4336 = vshrl.u32 %v4249, 16
    %v4338 = vrot.slane %v4336, 7
    %v4339 = vshll.u32 %v4249, 16
    %v4341 = vor.u32 %v4338, %v4339
    %v4343 = vshrl.u32 %v4250, 16
    %v4345 = vrot.slane %v4343, 7
    %v4346 = vshll.u32 %v4250, 16
    %v4348 = vor.u32 %v4345, %v4346
    %v4350 = vshrl.u32 %v4251, 16
    %v4352 = vrot.slane %v4350, 7
    %v4353 = vshll.u32 %v4251, 16
    %v4355 = vor.u32 %v4352, %v4353
    %v4357 = vshrl.u32 %v4252, 16
    %v4359 = vrot.slane %v4357, 7
    %v4360 = vshll.u32 %v4252, 16
    %v4362 = vor.u32 %v4359, %v4360
    %v4364 = vshrl.u32 %v4253, 16
    %v4366 = vrot.slane %v4364, 7
    %v4367 = vshll.u32 %v4253, 16
    %v4369 = vor.u32 %v4366, %v4367
    %v4371 = vshrl.u32 %v4254, 16
    %v4373 = vrot.slane %v4371, 7
    %v4374 = vshll.u32 %v4254, 16
    %v4376 = vor.u32 %v4373, %v4374
    %v4378 = vshrl.u32 %v4255, 16
    %v4380 = vrot.slane %v4378, 7
    %v4381 = vshll.u32 %v4255, 16
    %v4383 = vor.u32 %v4380, %v4381
    %v4385 = vshrl.u32 %v4256, 16
    %v4387 = vrot.slane %v4385, 7
    %v4388 = vshll.u32 %v4256, 16
    %v4390 = vor.u32 %v4387, %v4388
    %v4392 = vshrl.u32 %v4257, 16
    %v4394 = vrot.slane %v4392, 7
    %v4395 = vshll.u32 %v4257, 16
    %v4397 = vor.u32 %v4394, %v4395
    %v4399 = vshrl.u32 %v4258, 16
    %v4401 = vrot.slane %v4399, 7
    %v4402 = vshll.u32 %v4258, 16
    %v4404 = vor.u32 %v4401, %v4402
    %v4406 = vshrl.u32 %v4259, 16
    %v4408 = vrot.slane %v4406, 7
    %v4409 = vshll.u32 %v4259, 16
    %v4411 = vor.u32 %v4408, %v4409
    %v4413 = vshrl.u32 %v4260, 16
    %v4415 = vrot.slane %v4413, 7
    %v4416 = vshll.u32 %v4260, 16
    %v4418 = vor.u32 %v4415, %v4416
    %v4420 = vshrl.u32 %v4261, 16
    %v4422 = vrot.slane %v4420, 7
    %v4423 = vshll.u32 %v4261, 16
    %v4425 = vor.u32 %v4422, %v4423
    %v4427 = vshrl.u32 %v4262, 16
    %v4429 = vrot.slane %v4427, 7
    %v4430 = vshll.u32 %v4262, 16
    %v4432 = vor.u32 %v4429, %v4430
    %v4434 = vshrl.u32 %v4263, 16
    %v4436 = vrot.slane %v4434, 7
    %v4437 = vshll.u32 %v4263, 16
    %v4439 = vor.u32 %v4436, %v4437
    %v4441 = vshrl.u32 %v4264, 16
    %v4443 = vrot.slane %v4441, 7
    %v4444 = vshll.u32 %v4264, 16
    %v4446 = vor.u32 %v4443, %v4444
    %v4448 = vshrl.u32 %v4265, 16
    %v4450 = vrot.slane %v4448, 7
    %v4451 = vshll.u32 %v4265, 16
    %v4453 = vor.u32 %v4450, %v4451
    %v4455 = vshrl.u32 %v4266, 16
    %v4457 = vrot.slane %v4455, 7
    %v4458 = vshll.u32 %v4266, 16
    %v4460 = vor.u32 %v4457, %v4458
    %v4462 = vshrl.u32 %v4267, 16
    %v4464 = vrot.slane %v4462, 7
    %v4465 = vshll.u32 %v4267, 16
    %v4467 = vor.u32 %v4464, %v4465
    %v4469 = vshrl.u32 %v4268, 16
    %v4471 = vrot.slane %v4469, 7
    %v4472 = vshll.u32 %v4268, 16
    %v4474 = vor.u32 %v4471, %v4472
    %v4476 = vshrl.u32 %v4269, 16
    %v4478 = vrot.slane %v4476, 7
    %v4479 = vshll.u32 %v4269, 16
    %v4481 = vor.u32 %v4478, %v4479
    %v4483 = vshrl.u32 %v4270, 16
    %v4485 = vrot.slane %v4483, 7
    %v4486 = vshll.u32 %v4270, 16
    %v4488 = vor.u32 %v4485, %v4486
    %v4490 = vshrl.u32 %v4271, 16
    %v4492 = vrot.slane %v4490, 7
    %v4493 = vshll.u32 %v4271, 16
    %v4495 = vor.u32 %v4492, %v4493
    %v4560 = vsel %vm536, 0, %v4278
    %v4561 = vsel %vm536, 0, %v4285
    %v4562 = vsel %vm536, 0, %v4292
    %v4563 = vsel %vm536, 0, %v4299
    %v4564 = vsel %vm536, 0, %v4306
    %v4565 = vsel %vm536, 0, %v4313
    %v4566 = vsel %vm536, 0, %v4320
    %v4567 = vsel %vm536, 0, %v4327
    %v4568 = vsel %vm536, 0, %v4334
    %v4569 = vsel %vm536, 0, %v4341
    %v4570 = vsel %vm536, 0, %v4348
    %v4571 = vsel %vm536, 0, %v4355
    %v4572 = vsel %vm536, 0, %v4362
    %v4573 = vsel %vm536, 0, %v4369
    %v4574 = vsel %vm536, 0, %v4376
    %v4575 = vsel %vm536, 0, %v4383
    %v4576 = vsel %vm536, 0, %v4390
    %v4577 = vsel %vm536, 0, %v4397
    %v4578 = vsel %vm536, 0, %v4404
    %v4579 = vsel %vm536, 0, %v4411
    %v4580 = vsel %vm536, 0, %v4418
    %v4581 = vsel %vm536, 0, %v4425
    %v4582 = vsel %vm536, 0, %v4432
    %v4583 = vsel %vm536, 0, %v4439
    %v4584 = vsel %vm536, 0, %v4446
    %v4585 = vsel %vm536, 0, %v4453
    %v4586 = vsel %vm536, 0, %v4460
    %v4587 = vsel %vm536, 0, %v4467
    %v4588 = vsel %vm536, 0, %v4474
    %v4589 = vsel %vm536, 0, %v4481
    %v4590 = vsel %vm536, 0, %v4488
    %v4591 = vsel %vm536, 0, %v4495
    %v4592 = vsel %vm536, %v4275, 0
    %v4593 = vsel %vm536, %v4282, 0
    %v4594 = vsel %vm536, %v4289, 0
    %v4595 = vsel %vm536, %v4296, 0
    %v4596 = vsel %vm536, %v4303, 0
    %v4597 = vsel %vm536, %v4310, 0
    %v4598 = vsel %vm536, %v4317, 0
    %v4599 = vsel %vm536, %v4324, 0
    %v4600 = vsel %vm536, %v4331, 0
    %v4601 = vsel %vm536, %v4338, 0
    %v4602 = vsel %vm536, %v4345, 0
    %v4603 = vsel %vm536, %v4352, 0
    %v4604 = vsel %vm536, %v4359, 0
    %v4605 = vsel %vm536, %v4366, 0
    %v4606 = vsel %vm536, %v4373, 0
    %v4607 = vsel %vm536, %v4380, 0
    %v4608 = vsel %vm536, %v4387, 0
    %v4609 = vsel %vm536, %v4394, 0
    %v4610 = vsel %vm536, %v4401, 0
    %v4611 = vsel %vm536, %v4408, 0
    %v4612 = vsel %vm536, %v4415, 0
    %v4613 = vsel %vm536, %v4422, 0
    %v4614 = vsel %vm536, %v4429, 0
    %v4615 = vsel %vm536, %v4436, 0
    %v4616 = vsel %vm536, %v4443, 0
    %v4617 = vsel %vm536, %v4450, 0
    %v4618 = vsel %vm536, %v4457, 0
    %v4619 = vsel %vm536, %v4464, 0
    %v4620 = vsel %vm536, %v4471, 0
    %v4621 = vsel %vm536, %v4478, 0
    %v4622 = vsel %vm536, %v4485, 0
    %v4623 = vsel %vm536, %v4492, 0
    %v4688 = vunpack.c.l.b16 %v4560
    %v4689 = vunpack.c.h.b16 %v4560
    %v4690 = vunpack.c.l.b16 %v4592
    %v4691 = vunpack.c.l.b16 %v4561
    %v4692 = vunpack.c.h.b16 %v4561
    %v4693 = vunpack.c.l.b16 %v4593
    %v4694 = vunpack.c.l.b16 %v4562
    %v4695 = vunpack.c.h.b16 %v4562
    %v4696 = vunpack.c.l.b16 %v4594
    %v4697 = vunpack.c.l.b16 %v4563
    %v4698 = vunpack.c.h.b16 %v4563
    %v4699 = vunpack.c.l.b16 %v4595
    %v4700 = vunpack.c.l.b16 %v4564
    %v4701 = vunpack.c.h.b16 %v4564
    %v4702 = vunpack.c.l.b16 %v4596
    %v4703 = vunpack.c.l.b16 %v4565
    %v4704 = vunpack.c.h.b16 %v4565
    %v4705 = vunpack.c.l.b16 %v4597
    %v4706 = vunpack.c.l.b16 %v4566
    %v4707 = vunpack.c.h.b16 %v4566
    %v4708 = vunpack.c.l.b16 %v4598
    %v4709 = vunpack.c.l.b16 %v4567
    %v4710 = vunpack.c.h.b16 %v4567
    %v4711 = vunpack.c.l.b16 %v4599
    %v4712 = vunpack.c.l.b16 %v4568
    %v4713 = vunpack.c.h.b16 %v4568
    %v4714 = vunpack.c.l.b16 %v4600
    %v4715 = vunpack.c.l.b16 %v4569
    %v4716 = vunpack.c.h.b16 %v4569
    %v4717 = vunpack.c.l.b16 %v4601
    %v4718 = vunpack.c.l.b16 %v4570
    %v4719 = vunpack.c.h.b16 %v4570
    %v4720 = vunpack.c.l.b16 %v4602
    %v4721 = vunpack.c.l.b16 %v4571
    %v4722 = vunpack.c.h.b16 %v4571
    %v4723 = vunpack.c.l.b16 %v4603
    %v4724 = vunpack.c.l.b16 %v4572
    %v4725 = vunpack.c.h.b16 %v4572
    %v4726 = vunpack.c.l.b16 %v4604
    %v4727 = vunpack.c.l.b16 %v4573
    %v4728 = vunpack.c.h.b16 %v4573
    %v4729 = vunpack.c.l.b16 %v4605
    %v4730 = vunpack.c.l.b16 %v4574
    %v4731 = vunpack.c.h.b16 %v4574
    %v4732 = vunpack.c.l.b16 %v4606
    %v4733 = vunpack.c.l.b16 %v4575
    %v4734 = vunpack.c.h.b16 %v4575
    %v4735 = vunpack.c.l.b16 %v4607
    %v4736 = vunpack.c.l.b16 %v4576
    %v4737 = vunpack.c.h.b16 %v4576
    %v4738 = vunpack.c.l.b16 %v4608
    %v4739 = vunpack.c.l.b16 %v4577
    %v4740 = vunpack.c.h.b16 %v4577
    %v4741 = vunpack.c.l.b16 %v4609
    %v4742 = vunpack.c.l.b16 %v4578
    %v4743 = vunpack.c.h.b16 %v4578
    %v4744 = vunpack.c.l.b16 %v4610
    %v4745 = vunpack.c.l.b16 %v4579
    %v4746 = vunpack.c.h.b16 %v4579
    %v4747 = vunpack.c.l.b16 %v4611
    %v4748 = vunpack.c.l.b16 %v4580
    %v4749 = vunpack.c.h.b16 %v4580
    %v4750 = vunpack.c.l.b16 %v4612
    %v4751 = vunpack.c.l.b16 %v4581
    %v4752 = vunpack.c.h.b16 %v4581
    %v4753 = vunpack.c.l.b16 %v4613
    %v4754 = vunpack.c.l.b16 %v4582
    %v4755 = vunpack.c.h.b16 %v4582
    %v4756 = vunpack.c.l.b16 %v4614
    %v4757 = vunpack.c.l.b16 %v4583
    %v4758 = vunpack.c.h.b16 %v4583
    %v4759 = vunpack.c.l.b16 %v4615
    %v4760 = vunpack.c.l.b16 %v4584
    %v4761 = vunpack.c.h.b16 %v4584
    %v4762 = vunpack.c.l.b16 %v4616
    %v4763 = vunpack.c.l.b16 %v4585
    %v4764 = vunpack.c.h.b16 %v4585
    %v4765 = vunpack.c.l.b16 %v4617
    %v4766 = vunpack.c.l.b16 %v4586
    %v4767 = vunpack.c.h.b16 %v4586
    %v4768 = vunpack.c.l.b16 %v4618
    %v4769 = vunpack.c.l.b16 %v4587
    %v4770 = vunpack.c.h.b16 %v4587
    %v4771 = vunpack.c.l.b16 %v4619
    %v4772 = vunpack.c.l.b16 %v4588
    %v4773 = vunpack.c.h.b16 %v4588
    %v4774 = vunpack.c.l.b16 %v4620
    %v4775 = vunpack.c.l.b16 %v4589
    %v4776 = vunpack.c.h.b16 %v4589
    %v4777 = vunpack.c.l.b16 %v4621
    %v4778 = vunpack.c.l.b16 %v4590
    %v4779 = vunpack.c.h.b16 %v4590
    %v4780 = vunpack.c.l.b16 %v4622
    %v4781 = vunpack.c.l.b16 %v4591
    %v4782 = vunpack.c.h.b16 %v4591
    %v4783 = vunpack.c.l.b16 %v4623
    %v4784 = vpack.c.b16 %v4688, %v4688
    %v4785 = vpack.c.b16 %v4689, %v4689
    %v4786 = vpack.c.b16 %v4690, %v4690
    %v4787 = vpack.c.b16 %v4691, %v4691
    %v4788 = vpack.c.b16 %v4692, %v4692
    %v4789 = vpack.c.b16 %v4693, %v4693
    %v4790 = vpack.c.b16 %v4694, %v4694
    %v4791 = vpack.c.b16 %v4695, %v4695
    %v4792 = vpack.c.b16 %v4696, %v4696
    %v4793 = vpack.c.b16 %v4697, %v4697
    %v4794 = vpack.c.b16 %v4698, %v4698
    %v4795 = vpack.c.b16 %v4699, %v4699
    %v4796 = vpack.c.b16 %v4700, %v4700
    %v4797 = vpack.c.b16 %v4701, %v4701
    %v4798 = vpack.c.b16 %v4702, %v4702
    %v4799 = vpack.c.b16 %v4703, %v4703
    %v4800 = vpack.c.b16 %v4704, %v4704
    %v4801 = vpack.c.b16 %v4705, %v4705
    %v4802 = vpack.c.b16 %v4706, %v4706
    %v4803 = vpack.c.b16 %v4707, %v4707
    %v4804 = vpack.c.b16 %v4708, %v4708
    %v4805 = vpack.c.b16 %v4709, %v4709
    %v4806 = vpack.c.b16 %v4710, %v4710
    %v4807 = vpack.c.b16 %v4711, %v4711
    %v4808 = vpack.c.b16 %v4712, %v4712
    %v4809 = vpack.c.b16 %v4713, %v4713
    %v4810 = vpack.c.b16 %v4714, %v4714
    %v4811 = vpack.c.b16 %v4715, %v4715
    %v4812 = vpack.c.b16 %v4716, %v4716
    %v4813 = vpack.c.b16 %v4717, %v4717
    %v4814 = vpack.c.b16 %v4718, %v4718
    %v4815 = vpack.c.b16 %v4719, %v4719
    %v4816 = vpack.c.b16 %v4720, %v4720
    %v4817 = vpack.c.b16 %v4721, %v4721
    %v4818 = vpack.c.b16 %v4722, %v4722
    %v4819 = vpack.c.b16 %v4723, %v4723
    %v4820 = vpack.c.b16 %v4724, %v4724
    %v4821 = vpack.c.b16 %v4725, %v4725
    %v4822 = vpack.c.b16 %v4726, %v4726
    %v4823 = vpack.c.b16 %v4727, %v4727
    %v4824 = vpack.c.b16 %v4728, %v4728
    %v4825 = vpack.c.b16 %v4729, %v4729
    %v4826 = vpack.c.b16 %v4730, %v4730
    %v4827 = vpack.c.b16 %v4731, %v4731
    %v4828 = vpack.c.b16 %v4732, %v4732
    %v4829 = vpack.c.b16 %v4733, %v4733
    %v4830 = vpack.c.b16 %v4734, %v4734
    %v4831 = vpack.c.b16 %v4735, %v4735
    %v4832 = vpack.c.b16 %v4736, %v4736
    %v4833 = vpack.c.b16 %v4737, %v4737
    %v4834 = vpack.c.b16 %v4738, %v4738
    %v4835 = vpack.c.b16 %v4739, %v4739
    %v4836 = vpack.c.b16 %v4740, %v4740
    %v4837 = vpack.c.b16 %v4741, %v4741
    %v4838 = vpack.c.b16 %v4742, %v4742
    %v4839 = vpack.c.b16 %v4743, %v4743
    %v4840 = vpack.c.b16 %v4744, %v4744
    %v4841 = vpack.c.b16 %v4745, %v4745
    %v4842 = vpack.c.b16 %v4746, %v4746
    %v4843 = vpack.c.b16 %v4747, %v4747
    %v4844 = vpack.c.b16 %v4748, %v4748
    %v4845 = vpack.c.b16 %v4749, %v4749
    %v4846 = vpack.c.b16 %v4750, %v4750
    %v4847 = vpack.c.b16 %v4751, %v4751
    %v4848 = vpack.c.b16 %v4752, %v4752
    %v4849 = vpack.c.b16 %v4753, %v4753
    %v4850 = vpack.c.b16 %v4754, %v4754
    %v4851 = vpack.c.b16 %v4755, %v4755
    %v4852 = vpack.c.b16 %v4756, %v4756
    %v4853 = vpack.c.b16 %v4757, %v4757
    %v4854 = vpack.c.b16 %v4758, %v4758
    %v4855 = vpack.c.b16 %v4759, %v4759
    %v4856 = vpack.c.b16 %v4760, %v4760
    %v4857 = vpack.c.b16 %v4761, %v4761
    %v4858 = vpack.c.b16 %v4762, %v4762
    %v4859 = vpack.c.b16 %v4763, %v4763
    %v4860 = vpack.c.b16 %v4764, %v4764
    %v4861 = vpack.c.b16 %v4765, %v4765
    %v4862 = vpack.c.b16 %v4766, %v4766
    %v4863 = vpack.c.b16 %v4767, %v4767
    %v4864 = vpack.c.b16 %v4768, %v4768
    %v4865 = vpack.c.b16 %v4769, %v4769
    %v4866 = vpack.c.b16 %v4770, %v4770
    %v4867 = vpack.c.b16 %v4771, %v4771
    %v4868 = vpack.c.b16 %v4772, %v4772
    %v4869 = vpack.c.b16 %v4773, %v4773
    %v4870 = vpack.c.b16 %v4774, %v4774
    %v4871 = vpack.c.b16 %v4775, %v4775
    %v4872 = vpack.c.b16 %v4776, %v4776
    %v4873 = vpack.c.b16 %v4777, %v4777
    %v4874 = vpack.c.b16 %v4778, %v4778
    %v4875 = vpack.c.b16 %v4779, %v4779
    %v4876 = vpack.c.b16 %v4780, %v4780
    %v4877 = vpack.c.b16 %v4781, %v4781
    %v4878 = vpack.c.b16 %v4782, %v4782
    %v4879 = vpack.c.b16 %v4783, %v4783
    %s4976 = scalar_lea.vmem [#allocation3], 12
    %vm4977 = vcmask 257024
    %4978 = vst.msk [vmem:[%s4976] sm:$0xf] %vm4977, %v4784
    %4979 = vst.msk [vmem:[%s4976 + $0x4] sm:$0xf] %vm4977, %v4785
    %vm4980 = vcmask 253952
    %4981 = vst.msk [vmem:[%s4976 + $0x8] sm:$0x1] %vm4980, %v4786
    %4982 = vst.msk [vmem:[%s4976 + $0xc] sm:$0xf] %vm4977, %v4787
    %4983 = vst.msk [vmem:[%s4976 + $0x10] sm:$0xf] %vm4977, %v4788
    %4984 = vst.msk [vmem:[%s4976 + $0x14] sm:$0x1] %vm4980, %v4789
    %4985 = vst.msk [vmem:[%s4976 + $0x18] sm:$0xf] %vm4977, %v4790
    %4986 = vst.msk [vmem:[%s4976 + $0x1c] sm:$0xf] %vm4977, %v4791
    %4987 = vst.msk [vmem:[%s4976 + $0x20] sm:$0x1] %vm4980, %v4792
    %4988 = vst.msk [vmem:[%s4976 + $0x24] sm:$0xf] %vm4977, %v4793
    %4989 = vst.msk [vmem:[%s4976 + $0x28] sm:$0xf] %vm4977, %v4794
    %4990 = vst.msk [vmem:[%s4976 + $0x2c] sm:$0x1] %vm4980, %v4795
    %4991 = vst.msk [vmem:[%s4976 + $0x30] sm:$0xf] %vm4977, %v4796
    %4992 = vst.msk [vmem:[%s4976 + $0x34] sm:$0xf] %vm4977, %v4797
    %4993 = vst.msk [vmem:[%s4976 + $0x38] sm:$0x1] %vm4980, %v4798
    %4994 = vst.msk [vmem:[%s4976 + $0x3c] sm:$0xf] %vm4977, %v4799
    %4995 = vst.msk [vmem:[%s4976 + $0x40] sm:$0xf] %vm4977, %v4800
    %4996 = vst.msk [vmem:[%s4976 + $0x44] sm:$0x1] %vm4980, %v4801
    %4997 = vst.msk [vmem:[%s4976 + $0x48] sm:$0xf] %vm4977, %v4802
    %4998 = vst.msk [vmem:[%s4976 + $0x4c] sm:$0xf] %vm4977, %v4803
    %4999 = vst.msk [vmem:[%s4976 + $0x50] sm:$0x1] %vm4980, %v4804
    %5000 = vst.msk [vmem:[%s4976 + $0x54] sm:$0xf] %vm4977, %v4805
    %5001 = vst.msk [vmem:[%s4976 + $0x58] sm:$0xf] %vm4977, %v4806
    %5002 = vst.msk [vmem:[%s4976 + $0x5c] sm:$0x1] %vm4980, %v4807
    %5003 = vst.msk [vmem:[%s4976 + $0x60] sm:$0xf] %vm4977, %v4808
    %5004 = vst.msk [vmem:[%s4976 + $0x64] sm:$0xf] %vm4977, %v4809
    %5005 = vst.msk [vmem:[%s4976 + $0x68] sm:$0x1] %vm4980, %v4810
    %5006 = vst.msk [vmem:[%s4976 + $0x6c] sm:$0xf] %vm4977, %v4811
    %5007 = vst.msk [vmem:[%s4976 + $0x70] sm:$0xf] %vm4977, %v4812
    %5008 = vst.msk [vmem:[%s4976 + $0x74] sm:$0x1] %vm4980, %v4813
    %5009 = vst.msk [vmem:[%s4976 + $0x78] sm:$0xf] %vm4977, %v4814
    %5010 = vst.msk [vmem:[%s4976 + $0x7c] sm:$0xf] %vm4977, %v4815
    %5011 = vst.msk [vmem:[%s4976 + $0x80] sm:$0x1] %vm4980, %v4816
    %5012 = vst.msk [vmem:[%s4976 + $0x84] sm:$0xf] %vm4977, %v4817
    %5013 = vst.msk [vmem:[%s4976 + $0x88] sm:$0xf] %vm4977, %v4818
    %5014 = vst.msk [vmem:[%s4976 + $0x8c] sm:$0x1] %vm4980, %v4819
    %5015 = vst.msk [vmem:[%s4976 + $0x90] sm:$0xf] %vm4977, %v4820
    %5016 = vst.msk [vmem:[%s4976 + $0x94] sm:$0xf] %vm4977, %v4821
    %5017 = vst.msk [vmem:[%s4976 + $0x98] sm:$0x1] %vm4980, %v4822
    %5018 = vst.msk [vmem:[%s4976 + $0x9c] sm:$0xf] %vm4977, %v4823
    %5019 = vst.msk [vmem:[%s4976 + $0xa0] sm:$0xf] %vm4977, %v4824
    %5020 = vst.msk [vmem:[%s4976 + $0xa4] sm:$0x1] %vm4980, %v4825
    %5021 = vst.msk [vmem:[%s4976 + $0xa8] sm:$0xf] %vm4977, %v4826
    %5022 = vst.msk [vmem:[%s4976 + $0xac] sm:$0xf] %vm4977, %v4827
    %5023 = vst.msk [vmem:[%s4976 + $0xb0] sm:$0x1] %vm4980, %v4828
    %5024 = vst.msk [vmem:[%s4976 + $0xb4] sm:$0xf] %vm4977, %v4829
    %5025 = vst.msk [vmem:[%s4976 + $0xb8] sm:$0xf] %vm4977, %v4830
    %5026 = vst.msk [vmem:[%s4976 + $0xbc] sm:$0x1] %vm4980, %v4831
    %5027 = vst.msk [vmem:[%s4976 + $0xd8] sm:$0xf] %vm4977, %v4832
    %5028 = vst.msk [vmem:[%s4976 + $0xdc] sm:$0xf] %vm4977, %v4833
    %5029 = vst.msk [vmem:[%s4976 + $0xe0] sm:$0x1] %vm4980, %v4834
    %5030 = vst.msk [vmem:[%s4976 + $0xe4] sm:$0xf] %vm4977, %v4835
    %5031 = vst.msk [vmem:[%s4976 + $0xe8] sm:$0xf] %vm4977, %v4836
    %5032 = vst.msk [vmem:[%s4976 + $0xec] sm:$0x1] %vm4980, %v4837
    %5033 = vst.msk [vmem:[%s4976 + $0xf0] sm:$0xf] %vm4977, %v4838
    %5034 = vst.msk [vmem:[%s4976 + $0xf4] sm:$0xf] %vm4977, %v4839
    %5035 = vst.msk [vmem:[%s4976 + $0xf8] sm:$0x1] %vm4980, %v4840
    %5036 = vst.msk [vmem:[%s4976 + $0xfc] sm:$0xf] %vm4977, %v4841
    %5037 = vst.msk [vmem:[%s4976 + $0x100] sm:$0xf] %vm4977, %v4842
    %5038 = vst.msk [vmem:[%s4976 + $0x104] sm:$0x1] %vm4980, %v4843
    %5039 = vst.msk [vmem:[%s4976 + $0x108] sm:$0xf] %vm4977, %v4844
    %5040 = vst.msk [vmem:[%s4976 + $0x10c] sm:$0xf] %vm4977, %v4845
    %5041 = vst.msk [vmem:[%s4976 + $0x110] sm:$0x1] %vm4980, %v4846
    %5042 = vst.msk [vmem:[%s4976 + $0x114] sm:$0xf] %vm4977, %v4847
    %5043 = vst.msk [vmem:[%s4976 + $0x118] sm:$0xf] %vm4977, %v4848
    %5044 = vst.msk [vmem:[%s4976 + $0x11c] sm:$0x1] %vm4980, %v4849
    %5045 = vst.msk [vmem:[%s4976 + $0x120] sm:$0xf] %vm4977, %v4850
    %5046 = vst.msk [vmem:[%s4976 + $0x124] sm:$0xf] %vm4977, %v4851
    %5047 = vst.msk [vmem:[%s4976 + $0x128] sm:$0x1] %vm4980, %v4852
    %5048 = vst.msk [vmem:[%s4976 + $0x12c] sm:$0xf] %vm4977, %v4853
    %5049 = vst.msk [vmem:[%s4976 + $0x130] sm:$0xf] %vm4977, %v4854
    %5050 = vst.msk [vmem:[%s4976 + $0x134] sm:$0x1] %vm4980, %v4855
    %5051 = vst.msk [vmem:[%s4976 + $0x138] sm:$0xf] %vm4977, %v4856
    %5052 = vst.msk [vmem:[%s4976 + $0x13c] sm:$0xf] %vm4977, %v4857
    %5053 = vst.msk [vmem:[%s4976 + $0x140] sm:$0x1] %vm4980, %v4858
    %5054 = vst.msk [vmem:[%s4976 + $0x144] sm:$0xf] %vm4977, %v4859
    %5055 = vst.msk [vmem:[%s4976 + $0x148] sm:$0xf] %vm4977, %v4860
    %5056 = vst.msk [vmem:[%s4976 + $0x14c] sm:$0x1] %vm4980, %v4861
    %5057 = vst.msk [vmem:[%s4976 + $0x150] sm:$0xf] %vm4977, %v4862
    %5058 = vst.msk [vmem:[%s4976 + $0x154] sm:$0xf] %vm4977, %v4863
    %5059 = vst.msk [vmem:[%s4976 + $0x158] sm:$0x1] %vm4980, %v4864
    %5060 = vst.msk [vmem:[%s4976 + $0x15c] sm:$0xf] %vm4977, %v4865
    %5061 = vst.msk [vmem:[%s4976 + $0x160] sm:$0xf] %vm4977, %v4866
    %5062 = vst.msk [vmem:[%s4976 + $0x164] sm:$0x1] %vm4980, %v4867
    %5063 = vst.msk [vmem:[%s4976 + $0x168] sm:$0xf] %vm4977, %v4868
    %5064 = vst.msk [vmem:[%s4976 + $0x16c] sm:$0xf] %vm4977, %v4869
    %5065 = vst.msk [vmem:[%s4976 + $0x170] sm:$0x1] %vm4980, %v4870
    %5066 = vst.msk [vmem:[%s4976 + $0x174] sm:$0xf] %vm4977, %v4871
    %5067 = vst.msk [vmem:[%s4976 + $0x178] sm:$0xf] %vm4977, %v4872
    %5068 = vst.msk [vmem:[%s4976 + $0x17c] sm:$0x1] %vm4980, %v4873
    %5069 = vst.msk [vmem:[%s4976 + $0x180] sm:$0xf] %vm4977, %v4874
    %5070 = vst.msk [vmem:[%s4976 + $0x184] sm:$0xf] %vm4977, %v4875
    %5071 = vst.msk [vmem:[%s4976 + $0x188] sm:$0x1] %vm4980, %v4876
    %5072 = vst.msk [vmem:[%s4976 + $0x18c] sm:$0xf] %vm4977, %v4877
    %5073 = vst.msk [vmem:[%s4976 + $0x190] sm:$0xf] %vm4977, %v4878
    %5074 = vst.msk [vmem:[%s4976 + $0x194] sm:$0x1] %vm4980, %v4879
    %5075 = vst.msk [vmem:[#allocation3] sm:$0xf] %vm4977, 0
    %5076 = vst.msk [vmem:[#allocation3 + $0x4] sm:$0xf] %vm4977, 0
    %5077 = vst.msk [vmem:[#allocation3 + $0x8] sm:$0x1] %vm4980, 0
    %5078 = vst.msk [vmem:[#allocation3 + $0xd8] sm:$0xf] %vm4977, 0
    %5079 = vst.msk [vmem:[#allocation3 + $0xdc] sm:$0xf] %vm4977, 0
    %5080 = vst.msk [vmem:[#allocation3 + $0xe0] sm:$0x1] %vm4980, 0
    %s5081 = scalar_lea.vmem [#allocation3], 204
    %5082 = vst.msk [vmem:[%s5081] sm:$0xf] %vm4977, 0
    %5083 = vst.msk [vmem:[%s5081 + $0x4] sm:$0xf] %vm4977, 0
    %5084 = vst.msk [vmem:[%s5081 + $0x8] sm:$0x1] %vm4980, 0
    %5085 = vst.msk [vmem:[%s5081 + $0xd8] sm:$0xf] %vm4977, 0
    %5086 = vst.msk [vmem:[%s5081 + $0xdc] sm:$0xf] %vm4977, 0
    %5087 = vst.msk [vmem:[%s5081 + $0xe0] sm:$0x1] %vm4980, 0
    %v5088 = vld [vmem:[#allocation3] sm:$0xf]
    %v5089 = vld [vmem:[#allocation3 + $0x4] sm:$0xf]
    %v5090 = vld [vmem:[#allocation3 + $0x8] sm:$0x1]
    %v5091 = vld [vmem:[#allocation3 + $0xc] sm:$0xf]
    %v5092 = vld [vmem:[#allocation3 + $0x10] sm:$0xf]
    %v5093 = vld [vmem:[#allocation3 + $0x14] sm:$0x1]
    %v5094 = vld [vmem:[#allocation3 + $0x18] sm:$0xf]
    %v5095 = vld [vmem:[#allocation3 + $0x1c] sm:$0xf]
    %v5096 = vld [vmem:[#allocation3 + $0x20] sm:$0x1]
    %v5097 = vld [vmem:[#allocation3 + $0x24] sm:$0xf]
    %v5098 = vld [vmem:[#allocation3 + $0x28] sm:$0xf]
    %v5099 = vld [vmem:[#allocation3 + $0x2c] sm:$0x1]
    %v5100 = vld [vmem:[#allocation3 + $0x30] sm:$0xf]
    %v5101 = vld [vmem:[#allocation3 + $0x34] sm:$0xf]
    %v5102 = vld [vmem:[#allocation3 + $0x38] sm:$0x1]
    %v5103 = vld [vmem:[#allocation3 + $0x3c] sm:$0xf]
    %v5104 = vld [vmem:[#allocation3 + $0x40] sm:$0xf]
    %v5105 = vld [vmem:[#allocation3 + $0x44] sm:$0x1]
    %v5106 = vld [vmem:[#allocation3 + $0x48] sm:$0xf]
    %v5107 = vld [vmem:[#allocation3 + $0x4c] sm:$0xf]
    %v5108 = vld [vmem:[#allocation3 + $0x50] sm:$0x1]
    %v5109 = vld [vmem:[#allocation3 + $0x54] sm:$0xf]
    %v5110 = vld [vmem:[#allocation3 + $0x58] sm:$0xf]
    %v5111 = vld [vmem:[#allocation3 + $0x5c] sm:$0x1]
    %v5112 = vld [vmem:[#allocation3 + $0x60] sm:$0xf]
    %v5113 = vld [vmem:[#allocation3 + $0x64] sm:$0xf]
    %v5114 = vld [vmem:[#allocation3 + $0x68] sm:$0x1]
    %v5115 = vld [vmem:[#allocation3 + $0x6c] sm:$0xf]
    %v5116 = vld [vmem:[#allocation3 + $0x70] sm:$0xf]
    %v5117 = vld [vmem:[#allocation3 + $0x74] sm:$0x1]
    %v5118 = vld [vmem:[#allocation3 + $0x78] sm:$0xf]
    %v5119 = vld [vmem:[#allocation3 + $0x7c] sm:$0xf]
    %v5120 = vld [vmem:[#allocation3 + $0x80] sm:$0x1]
    %v5121 = vld [vmem:[#allocation3 + $0x84] sm:$0xf]
    %v5122 = vld [vmem:[#allocation3 + $0x88] sm:$0xf]
    %v5123 = vld [vmem:[#allocation3 + $0x8c] sm:$0x1]
    %v5124 = vld [vmem:[#allocation3 + $0x90] sm:$0xf]
    %v5125 = vld [vmem:[#allocation3 + $0x94] sm:$0xf]
    %v5126 = vld [vmem:[#allocation3 + $0x98] sm:$0x1]
    %v5127 = vld [vmem:[#allocation3 + $0x9c] sm:$0xf]
    %v5128 = vld [vmem:[#allocation3 + $0xa0] sm:$0xf]
    %v5129 = vld [vmem:[#allocation3 + $0xa4] sm:$0x1]
    %v5130 = vld [vmem:[#allocation3 + $0xa8] sm:$0xf]
    %v5131 = vld [vmem:[#allocation3 + $0xac] sm:$0xf]
    %v5132 = vld [vmem:[#allocation3 + $0xb0] sm:$0x1]
    %v5133 = vld [vmem:[#allocation3 + $0xb4] sm:$0xf]
    %v5134 = vld [vmem:[#allocation3 + $0xb8] sm:$0xf]
    %v5135 = vld [vmem:[#allocation3 + $0xbc] sm:$0x1]
    %v5136 = vld [vmem:[#allocation3 + $0xc0] sm:$0xf]
    %v5137 = vld [vmem:[#allocation3 + $0xc4] sm:$0xf]
    %v5138 = vld [vmem:[#allocation3 + $0xc8] sm:$0x1]
    %v5139 = vld [vmem:[#allocation3 + $0xcc] sm:$0xf]
    %v5140 = vld [vmem:[#allocation3 + $0xd0] sm:$0xf]
    %v5141 = vld [vmem:[#allocation3 + $0xd4] sm:$0x1]
    %v5142 = vld [vmem:[#allocation3 + $0xd8] sm:$0xf]
    %v5143 = vld [vmem:[#allocation3 + $0xdc] sm:$0xf]
    %v5144 = vld [vmem:[#allocation3 + $0xe0] sm:$0x1]
    %v5145 = vld [vmem:[#allocation3 + $0xe4] sm:$0xf]
    %v5146 = vld [vmem:[#allocation3 + $0xe8] sm:$0xf]
    %v5147 = vld [vmem:[#allocation3 + $0xec] sm:$0x1]
    %v5148 = vld [vmem:[#allocation3 + $0xf0] sm:$0xf]
    %v5149 = vld [vmem:[#allocation3 + $0xf4] sm:$0xf]
    %v5150 = vld [vmem:[#allocation3 + $0xf8] sm:$0x1]
    %v5151 = vld [vmem:[#allocation3 + $0xfc] sm:$0xf]
    %v5152 = vld [vmem:[#allocation3 + $0x100] sm:$0xf]
    %v5153 = vld [vmem:[#allocation3 + $0x104] sm:$0x1]
    %v5154 = vld [vmem:[#allocation3 + $0x108] sm:$0xf]
    %v5155 = vld [vmem:[#allocation3 + $0x10c] sm:$0xf]
    %v5156 = vld [vmem:[#allocation3 + $0x110] sm:$0x1]
    %v5157 = vld [vmem:[#allocation3 + $0x114] sm:$0xf]
    %v5158 = vld [vmem:[#allocation3 + $0x118] sm:$0xf]
    %v5159 = vld [vmem:[#allocation3 + $0x11c] sm:$0x1]
    %v5160 = vld [vmem:[#allocation3 + $0x120] sm:$0xf]
    %v5161 = vld [vmem:[#allocation3 + $0x124] sm:$0xf]
    %v5162 = vld [vmem:[#allocation3 + $0x128] sm:$0x1]
    %v5163 = vld [vmem:[#allocation3 + $0x12c] sm:$0xf]
    %v5164 = vld [vmem:[#allocation3 + $0x130] sm:$0xf]
    %v5165 = vld [vmem:[#allocation3 + $0x134] sm:$0x1]
    %v5166 = vld [vmem:[#allocation3 + $0x138] sm:$0xf]
    %v5167 = vld [vmem:[#allocation3 + $0x13c] sm:$0xf]
    %v5168 = vld [vmem:[#allocation3 + $0x140] sm:$0x1]
    %v5169 = vld [vmem:[#allocation3 + $0x144] sm:$0xf]
    %v5170 = vld [vmem:[#allocation3 + $0x148] sm:$0xf]
    %v5171 = vld [vmem:[#allocation3 + $0x14c] sm:$0x1]
    %v5172 = vld [vmem:[#allocation3 + $0x150] sm:$0xf]
    %v5173 = vld [vmem:[#allocation3 + $0x154] sm:$0xf]
    %v5174 = vld [vmem:[#allocation3 + $0x158] sm:$0x1]
    %v5175 = vld [vmem:[#allocation3 + $0x15c] sm:$0xf]
    %v5176 = vld [vmem:[#allocation3 + $0x160] sm:$0xf]
    %v5177 = vld [vmem:[#allocation3 + $0x164] sm:$0x1]
    %v5178 = vld [vmem:[#allocation3 + $0x168] sm:$0xf]
    %v5179 = vld [vmem:[#allocation3 + $0x16c] sm:$0xf]
    %v5180 = vld [vmem:[#allocation3 + $0x170] sm:$0x1]
    %v5181 = vld [vmem:[#allocation3 + $0x174] sm:$0xf]
    %v5182 = vld [vmem:[#allocation3 + $0x178] sm:$0xf]
    %v5183 = vld [vmem:[#allocation3 + $0x17c] sm:$0x1]
    %v5184 = vld [vmem:[#allocation3 + $0x180] sm:$0xf]
    %v5185 = vld [vmem:[#allocation3 + $0x184] sm:$0xf]
    %v5186 = vld [vmem:[#allocation3 + $0x188] sm:$0x1]
    %v5187 = vld [vmem:[#allocation3 + $0x18c] sm:$0xf]
    %v5188 = vld [vmem:[#allocation3 + $0x190] sm:$0xf]
    %v5189 = vld [vmem:[#allocation3 + $0x194] sm:$0x1]
    %v5190 = vld [vmem:[#allocation3 + $0x198] sm:$0xf]
    %v5191 = vld [vmem:[#allocation3 + $0x19c] sm:$0xf]
    %v5192 = vld [vmem:[#allocation3 + $0x1a0] sm:$0x1]
    %v5193 = vld [vmem:[#allocation3 + $0x1a4] sm:$0xf]
    %v5194 = vld [vmem:[#allocation3 + $0x1a8] sm:$0xf]
    %v5195 = vld [vmem:[#allocation3 + $0x1ac] sm:$0x1]
    %v5197 = vshrl.u32 %v5088, 16
    %v5199 = vrot.slane %v5197, 4
    %v5200 = vshll.u32 %v5088, 16
    %v5202 = vrot.slane %v5200, 5
    %v5203 = vor.u32 %v5199, %v5202
    %v5204 = vrot.slane %v5203, 4
    %v5206 = vshll.u32 %v5089, 16
    %v5208 = vrot.slane %v5206, 5
    %v5209 = vsel %vm1175, %v5204, %v5208
    %v5210 = vshrl.u32 %v5089, 16
    %v5212 = vrot.slane %v5210, 4
    %v5213 = vor.u32 %v5212, %v5208
    %v5214 = vrot.slane %v5213, 4
    %v5216 = vshll.u32 %v5090, 16
    %v5218 = vrot.slane %v5216, 5
    %v5219 = vsel %vm1175, %v5214, %v5218
    %v5221 = vshrl.u32 %v5091, 16
    %v5223 = vrot.slane %v5221, 4
    %v5224 = vshll.u32 %v5091, 16
    %v5226 = vrot.slane %v5224, 5
    %v5227 = vor.u32 %v5223, %v5226
    %v5228 = vrot.slane %v5227, 4
    %v5230 = vshll.u32 %v5092, 16
    %v5232 = vrot.slane %v5230, 5
    %v5233 = vsel %vm1175, %v5228, %v5232
    %v5234 = vshrl.u32 %v5092, 16
    %v5236 = vrot.slane %v5234, 4
    %v5237 = vor.u32 %v5236, %v5232
    %v5238 = vrot.slane %v5237, 4
    %v5240 = vshll.u32 %v5093, 16
    %v5242 = vrot.slane %v5240, 5
    %v5243 = vsel %vm1175, %v5238, %v5242
    %v5245 = vshrl.u32 %v5094, 16
    %v5247 = vrot.slane %v5245, 4
    %v5248 = vshll.u32 %v5094, 16
    %v5250 = vrot.slane %v5248, 5
    %v5251 = vor.u32 %v5247, %v5250
    %v5252 = vrot.slane %v5251, 4
    %v5254 = vshll.u32 %v5095, 16
    %v5256 = vrot.slane %v5254, 5
    %v5257 = vsel %vm1175, %v5252, %v5256
    %v5258 = vshrl.u32 %v5095, 16
    %v5260 = vrot.slane %v5258, 4
    %v5261 = vor.u32 %v5260, %v5256
    %v5262 = vrot.slane %v5261, 4
    %v5264 = vshll.u32 %v5096, 16
    %v5266 = vrot.slane %v5264, 5
    %v5267 = vsel %vm1175, %v5262, %v5266
    %v5269 = vshrl.u32 %v5097, 16
    %v5271 = vrot.slane %v5269, 4
    %v5272 = vshll.u32 %v5097, 16
    %v5274 = vrot.slane %v5272, 5
    %v5275 = vor.u32 %v5271, %v5274
    %v5276 = vrot.slane %v5275, 4
    %v5278 = vshll.u32 %v5098, 16
    %v5280 = vrot.slane %v5278, 5
    %v5281 = vsel %vm1175, %v5276, %v5280
    %v5282 = vshrl.u32 %v5098, 16
    %v5284 = vrot.slane %v5282, 4
    %v5285 = vor.u32 %v5284, %v5280
    %v5286 = vrot.slane %v5285, 4
    %v5288 = vshll.u32 %v5099, 16
    %v5290 = vrot.slane %v5288, 5
    %v5291 = vsel %vm1175, %v5286, %v5290
    %v5293 = vshrl.u32 %v5100, 16
    %v5295 = vrot.slane %v5293, 4
    %v5296 = vshll.u32 %v5100, 16
    %v5298 = vrot.slane %v5296, 5
    %v5299 = vor.u32 %v5295, %v5298
    %v5300 = vrot.slane %v5299, 4
    %v5302 = vshll.u32 %v5101, 16
    %v5304 = vrot.slane %v5302, 5
    %v5305 = vsel %vm1175, %v5300, %v5304
    %v5306 = vshrl.u32 %v5101, 16
    %v5308 = vrot.slane %v5306, 4
    %v5309 = vor.u32 %v5308, %v5304
    %v5310 = vrot.slane %v5309, 4
    %v5312 = vshll.u32 %v5102, 16
    %v5314 = vrot.slane %v5312, 5
    %v5315 = vsel %vm1175, %v5310, %v5314
    %v5317 = vshrl.u32 %v5103, 16
    %v5319 = vrot.slane %v5317, 4
    %v5320 = vshll.u32 %v5103, 16
    %v5322 = vrot.slane %v5320, 5
    %v5323 = vor.u32 %v5319, %v5322
    %v5324 = vrot.slane %v5323, 4
    %v5326 = vshll.u32 %v5104, 16
    %v5328 = vrot.slane %v5326, 5
    %v5329 = vsel %vm1175, %v5324, %v5328
    %v5330 = vshrl.u32 %v5104, 16
    %v5332 = vrot.slane %v5330, 4
    %v5333 = vor.u32 %v5332, %v5328
    %v5334 = vrot.slane %v5333, 4
    %v5336 = vshll.u32 %v5105, 16
    %v5338 = vrot.slane %v5336, 5
    %v5339 = vsel %vm1175, %v5334, %v5338
    %v5341 = vshrl.u32 %v5106, 16
    %v5343 = vrot.slane %v5341, 4
    %v5344 = vshll.u32 %v5106, 16
    %v5346 = vrot.slane %v5344, 5
    %v5347 = vor.u32 %v5343, %v5346
    %v5348 = vrot.slane %v5347, 4
    %v5350 = vshll.u32 %v5107, 16
    %v5352 = vrot.slane %v5350, 5
    %v5353 = vsel %vm1175, %v5348, %v5352
    %v5354 = vshrl.u32 %v5107, 16
    %v5356 = vrot.slane %v5354, 4
    %v5357 = vor.u32 %v5356, %v5352
    %v5358 = vrot.slane %v5357, 4
    %v5360 = vshll.u32 %v5108, 16
    %v5362 = vrot.slane %v5360, 5
    %v5363 = vsel %vm1175, %v5358, %v5362
    %v5365 = vshrl.u32 %v5109, 16
    %v5367 = vrot.slane %v5365, 4
    %v5368 = vshll.u32 %v5109, 16
    %v5370 = vrot.slane %v5368, 5
    %v5371 = vor.u32 %v5367, %v5370
    %v5372 = vrot.slane %v5371, 4
    %v5374 = vshll.u32 %v5110, 16
    %v5376 = vrot.slane %v5374, 5
    %v5377 = vsel %vm1175, %v5372, %v5376
    %v5378 = vshrl.u32 %v5110, 16
    %v5380 = vrot.slane %v5378, 4
    %v5381 = vor.u32 %v5380, %v5376
    %v5382 = vrot.slane %v5381, 4
    %v5384 = vshll.u32 %v5111, 16
    %v5386 = vrot.slane %v5384, 5
    %v5387 = vsel %vm1175, %v5382, %v5386
    %v5389 = vshrl.u32 %v5112, 16
    %v5391 = vrot.slane %v5389, 4
    %v5392 = vshll.u32 %v5112, 16
    %v5394 = vrot.slane %v5392, 5
    %v5395 = vor.u32 %v5391, %v5394
    %v5396 = vrot.slane %v5395, 4
    %v5398 = vshll.u32 %v5113, 16
    %v5400 = vrot.slane %v5398, 5
    %v5401 = vsel %vm1175, %v5396, %v5400
    %v5402 = vshrl.u32 %v5113, 16
    %v5404 = vrot.slane %v5402, 4
    %v5405 = vor.u32 %v5404, %v5400
    %v5406 = vrot.slane %v5405, 4
    %v5408 = vshll.u32 %v5114, 16
    %v5410 = vrot.slane %v5408, 5
    %v5411 = vsel %vm1175, %v5406, %v5410
    %v5413 = vshrl.u32 %v5115, 16
    %v5415 = vrot.slane %v5413, 4
    %v5416 = vshll.u32 %v5115, 16
    %v5418 = vrot.slane %v5416, 5
    %v5419 = vor.u32 %v5415, %v5418
    %v5420 = vrot.slane %v5419, 4
    %v5422 = vshll.u32 %v5116, 16
    %v5424 = vrot.slane %v5422, 5
    %v5425 = vsel %vm1175, %v5420, %v5424
    %v5426 = vshrl.u32 %v5116, 16
    %v5428 = vrot.slane %v5426, 4
    %v5429 = vor.u32 %v5428, %v5424
    %v5430 = vrot.slane %v5429, 4
    %v5432 = vshll.u32 %v5117, 16
    %v5434 = vrot.slane %v5432, 5
    %v5435 = vsel %vm1175, %v5430, %v5434
    %v5437 = vshrl.u32 %v5118, 16
    %v5439 = vrot.slane %v5437, 4
    %v5440 = vshll.u32 %v5118, 16
    %v5442 = vrot.slane %v5440, 5
    %v5443 = vor.u32 %v5439, %v5442
    %v5444 = vrot.slane %v5443, 4
    %v5446 = vshll.u32 %v5119, 16
    %v5448 = vrot.slane %v5446, 5
    %v5449 = vsel %vm1175, %v5444, %v5448
    %v5450 = vshrl.u32 %v5119, 16
    %v5452 = vrot.slane %v5450, 4
    %v5453 = vor.u32 %v5452, %v5448
    %v5454 = vrot.slane %v5453, 4
    %v5456 = vshll.u32 %v5120, 16
    %v5458 = vrot.slane %v5456, 5
    %v5459 = vsel %vm1175, %v5454, %v5458
    %v5461 = vshrl.u32 %v5121, 16
    %v5463 = vrot.slane %v5461, 4
    %v5464 = vshll.u32 %v5121, 16
    %v5466 = vrot.slane %v5464, 5
    %v5467 = vor.u32 %v5463, %v5466
    %v5468 = vrot.slane %v5467, 4
    %v5470 = vshll.u32 %v5122, 16
    %v5472 = vrot.slane %v5470, 5
    %v5473 = vsel %vm1175, %v5468, %v5472
    %v5474 = vshrl.u32 %v5122, 16
    %v5476 = vrot.slane %v5474, 4
    %v5477 = vor.u32 %v5476, %v5472
    %v5478 = vrot.slane %v5477, 4
    %v5480 = vshll.u32 %v5123, 16
    %v5482 = vrot.slane %v5480, 5
    %v5483 = vsel %vm1175, %v5478, %v5482
    %v5485 = vshrl.u32 %v5124, 16
    %v5487 = vrot.slane %v5485, 4
    %v5488 = vshll.u32 %v5124, 16
    %v5490 = vrot.slane %v5488, 5
    %v5491 = vor.u32 %v5487, %v5490
    %v5492 = vrot.slane %v5491, 4
    %v5494 = vshll.u32 %v5125, 16
    %v5496 = vrot.slane %v5494, 5
    %v5497 = vsel %vm1175, %v5492, %v5496
    %v5498 = vshrl.u32 %v5125, 16
    %v5500 = vrot.slane %v5498, 4
    %v5501 = vor.u32 %v5500, %v5496
    %v5502 = vrot.slane %v5501, 4
    %v5504 = vshll.u32 %v5126, 16
    %v5506 = vrot.slane %v5504, 5
    %v5507 = vsel %vm1175, %v5502, %v5506
    %v5509 = vshrl.u32 %v5127, 16
    %v5511 = vrot.slane %v5509, 4
    %v5512 = vshll.u32 %v5127, 16
    %v5514 = vrot.slane %v5512, 5
    %v5515 = vor.u32 %v5511, %v5514
    %v5516 = vrot.slane %v5515, 4
    %v5518 = vshll.u32 %v5128, 16
    %v5520 = vrot.slane %v5518, 5
    %v5521 = vsel %vm1175, %v5516, %v5520
    %v5522 = vshrl.u32 %v5128, 16
    %v5524 = vrot.slane %v5522, 4
    %v5525 = vor.u32 %v5524, %v5520
    %v5526 = vrot.slane %v5525, 4
    %v5528 = vshll.u32 %v5129, 16
    %v5530 = vrot.slane %v5528, 5
    %v5531 = vsel %vm1175, %v5526, %v5530
    %v5533 = vshrl.u32 %v5130, 16
    %v5535 = vrot.slane %v5533, 4
    %v5536 = vshll.u32 %v5130, 16
    %v5538 = vrot.slane %v5536, 5
    %v5539 = vor.u32 %v5535, %v5538
    %v5540 = vrot.slane %v5539, 4
    %v5542 = vshll.u32 %v5131, 16
    %v5544 = vrot.slane %v5542, 5
    %v5545 = vsel %vm1175, %v5540, %v5544
    %v5546 = vshrl.u32 %v5131, 16
    %v5548 = vrot.slane %v5546, 4
    %v5549 = vor.u32 %v5548, %v5544
    %v5550 = vrot.slane %v5549, 4
    %v5552 = vshll.u32 %v5132, 16
    %v5554 = vrot.slane %v5552, 5
    %v5555 = vsel %vm1175, %v5550, %v5554
    %v5557 = vshrl.u32 %v5133, 16
    %v5559 = vrot.slane %v5557, 4
    %v5560 = vshll.u32 %v5133, 16
    %v5562 = vrot.slane %v5560, 5
    %v5563 = vor.u32 %v5559, %v5562
    %v5564 = vrot.slane %v5563, 4
    %v5566 = vshll.u32 %v5134, 16
    %v5568 = vrot.slane %v5566, 5
    %v5569 = vsel %vm1175, %v5564, %v5568
    %v5570 = vshrl.u32 %v5134, 16
    %v5572 = vrot.slane %v5570, 4
    %v5573 = vor.u32 %v5572, %v5568
    %v5574 = vrot.slane %v5573, 4
    %v5576 = vshll.u32 %v5135, 16
    %v5578 = vrot.slane %v5576, 5
    %v5579 = vsel %vm1175, %v5574, %v5578
    %v5581 = vshrl.u32 %v5142, 16
    %v5583 = vrot.slane %v5581, 4
    %v5584 = vshll.u32 %v5142, 16
    %v5586 = vrot.slane %v5584, 5
    %v5587 = vor.u32 %v5583, %v5586
    %v5588 = vrot.slane %v5587, 4
    %v5590 = vshll.u32 %v5143, 16
    %v5592 = vrot.slane %v5590, 5
    %v5593 = vsel %vm1175, %v5588, %v5592
    %v5594 = vshrl.u32 %v5143, 16
    %v5596 = vrot.slane %v5594, 4
    %v5597 = vor.u32 %v5596, %v5592
    %v5598 = vrot.slane %v5597, 4
    %v5600 = vshll.u32 %v5144, 16
    %v5602 = vrot.slane %v5600, 5
    %v5603 = vsel %vm1175, %v5598, %v5602
    %v5605 = vshrl.u32 %v5145, 16
    %v5607 = vrot.slane %v5605, 4
    %v5608 = vshll.u32 %v5145, 16
    %v5610 = vrot.slane %v5608, 5
    %v5611 = vor.u32 %v5607, %v5610
    %v5612 = vrot.slane %v5611, 4
    %v5614 = vshll.u32 %v5146, 16
    %v5616 = vrot.slane %v5614, 5
    %v5617 = vsel %vm1175, %v5612, %v5616
    %v5618 = vshrl.u32 %v5146, 16
    %v5620 = vrot.slane %v5618, 4
    %v5621 = vor.u32 %v5620, %v5616
    %v5622 = vrot.slane %v5621, 4
    %v5624 = vshll.u32 %v5147, 16
    %v5626 = vrot.slane %v5624, 5
    %v5627 = vsel %vm1175, %v5622, %v5626
    %v5629 = vshrl.u32 %v5148, 16
    %v5631 = vrot.slane %v5629, 4
    %v5632 = vshll.u32 %v5148, 16
    %v5634 = vrot.slane %v5632, 5
    %v5635 = vor.u32 %v5631, %v5634
    %v5636 = vrot.slane %v5635, 4
    %v5638 = vshll.u32 %v5149, 16
    %v5640 = vrot.slane %v5638, 5
    %v5641 = vsel %vm1175, %v5636, %v5640
    %v5642 = vshrl.u32 %v5149, 16
    %v5644 = vrot.slane %v5642, 4
    %v5645 = vor.u32 %v5644, %v5640
    %v5646 = vrot.slane %v5645, 4
    %v5648 = vshll.u32 %v5150, 16
    %v5650 = vrot.slane %v5648, 5
    %v5651 = vsel %vm1175, %v5646, %v5650
    %v5653 = vshrl.u32 %v5151, 16
    %v5655 = vrot.slane %v5653, 4
    %v5656 = vshll.u32 %v5151, 16
    %v5658 = vrot.slane %v5656, 5
    %v5659 = vor.u32 %v5655, %v5658
    %v5660 = vrot.slane %v5659, 4
    %v5662 = vshll.u32 %v5152, 16
    %v5664 = vrot.slane %v5662, 5
    %v5665 = vsel %vm1175, %v5660, %v5664
    %v5666 = vshrl.u32 %v5152, 16
    %v5668 = vrot.slane %v5666, 4
    %v5669 = vor.u32 %v5668, %v5664
    %v5670 = vrot.slane %v5669, 4
    %v5672 = vshll.u32 %v5153, 16
    %v5674 = vrot.slane %v5672, 5
    %v5675 = vsel %vm1175, %v5670, %v5674
    %v5677 = vshrl.u32 %v5154, 16
    %v5679 = vrot.slane %v5677, 4
    %v5680 = vshll.u32 %v5154, 16
    %v5682 = vrot.slane %v5680, 5
    %v5683 = vor.u32 %v5679, %v5682
    %v5684 = vrot.slane %v5683, 4
    %v5686 = vshll.u32 %v5155, 16
    %v5688 = vrot.slane %v5686, 5
    %v5689 = vsel %vm1175, %v5684, %v5688
    %v5690 = vshrl.u32 %v5155, 16
    %v5692 = vrot.slane %v5690, 4
    %v5693 = vor.u32 %v5692, %v5688
    %v5694 = vrot.slane %v5693, 4
    %v5696 = vshll.u32 %v5156, 16
    %v5698 = vrot.slane %v5696, 5
    %v5699 = vsel %vm1175, %v5694, %v5698
    %v5701 = vshrl.u32 %v5157, 16
    %v5703 = vrot.slane %v5701, 4
    %v5704 = vshll.u32 %v5157, 16
    %v5706 = vrot.slane %v5704, 5
    %v5707 = vor.u32 %v5703, %v5706
    %v5708 = vrot.slane %v5707, 4
    %v5710 = vshll.u32 %v5158, 16
    %v5712 = vrot.slane %v5710, 5
    %v5713 = vsel %vm1175, %v5708, %v5712
    %v5714 = vshrl.u32 %v5158, 16
    %v5716 = vrot.slane %v5714, 4
    %v5717 = vor.u32 %v5716, %v5712
    %v5718 = vrot.slane %v5717, 4
    %v5720 = vshll.u32 %v5159, 16
    %v5722 = vrot.slane %v5720, 5
    %v5723 = vsel %vm1175, %v5718, %v5722
    %v5725 = vshrl.u32 %v5160, 16
    %v5727 = vrot.slane %v5725, 4
    %v5728 = vshll.u32 %v5160, 16
    %v5730 = vrot.slane %v5728, 5
    %v5731 = vor.u32 %v5727, %v5730
    %v5732 = vrot.slane %v5731, 4
    %v5734 = vshll.u32 %v5161, 16
    %v5736 = vrot.slane %v5734, 5
    %v5737 = vsel %vm1175, %v5732, %v5736
    %v5738 = vshrl.u32 %v5161, 16
    %v5740 = vrot.slane %v5738, 4
    %v5741 = vor.u32 %v5740, %v5736
    %v5742 = vrot.slane %v5741, 4
    %v5744 = vshll.u32 %v5162, 16
    %v5746 = vrot.slane %v5744, 5
    %v5747 = vsel %vm1175, %v5742, %v5746
    %v5749 = vshrl.u32 %v5163, 16
    %v5751 = vrot.slane %v5749, 4
    %v5752 = vshll.u32 %v5163, 16
    %v5754 = vrot.slane %v5752, 5
    %v5755 = vor.u32 %v5751, %v5754
    %v5756 = vrot.slane %v5755, 4
    %v5758 = vshll.u32 %v5164, 16
    %v5760 = vrot.slane %v5758, 5
    %v5761 = vsel %vm1175, %v5756, %v5760
    %v5762 = vshrl.u32 %v5164, 16
    %v5764 = vrot.slane %v5762, 4
    %v5765 = vor.u32 %v5764, %v5760
    %v5766 = vrot.slane %v5765, 4
    %v5768 = vshll.u32 %v5165, 16
    %v5770 = vrot.slane %v5768, 5
    %v5771 = vsel %vm1175, %v5766, %v5770
    %v5773 = vshrl.u32 %v5166, 16
    %v5775 = vrot.slane %v5773, 4
    %v5776 = vshll.u32 %v5166, 16
    %v5778 = vrot.slane %v5776, 5
    %v5779 = vor.u32 %v5775, %v5778
    %v5780 = vrot.slane %v5779, 4
    %v5782 = vshll.u32 %v5167, 16
    %v5784 = vrot.slane %v5782, 5
    %v5785 = vsel %vm1175, %v5780, %v5784
    %v5786 = vshrl.u32 %v5167, 16
    %v5788 = vrot.slane %v5786, 4
    %v5789 = vor.u32 %v5788, %v5784
    %v5790 = vrot.slane %v5789, 4
    %v5792 = vshll.u32 %v5168, 16
    %v5794 = vrot.slane %v5792, 5
    %v5795 = vsel %vm1175, %v5790, %v5794
    %v5797 = vshrl.u32 %v5169, 16
    %v5799 = vrot.slane %v5797, 4
    %v5800 = vshll.u32 %v5169, 16
    %v5802 = vrot.slane %v5800, 5
    %v5803 = vor.u32 %v5799, %v5802
    %v5804 = vrot.slane %v5803, 4
    %v5806 = vshll.u32 %v5170, 16
    %v5808 = vrot.slane %v5806, 5
    %v5809 = vsel %vm1175, %v5804, %v5808
    %v5810 = vshrl.u32 %v5170, 16
    %v5812 = vrot.slane %v5810, 4
    %v5813 = vor.u32 %v5812, %v5808
    %v5814 = vrot.slane %v5813, 4
    %v5816 = vshll.u32 %v5171, 16
    %v5818 = vrot.slane %v5816, 5
    %v5819 = vsel %vm1175, %v5814, %v5818
    %v5821 = vshrl.u32 %v5172, 16
    %v5823 = vrot.slane %v5821, 4
    %v5824 = vshll.u32 %v5172, 16
    %v5826 = vrot.slane %v5824, 5
    %v5827 = vor.u32 %v5823, %v5826
    %v5828 = vrot.slane %v5827, 4
    %v5830 = vshll.u32 %v5173, 16
    %v5832 = vrot.slane %v5830, 5
    %v5833 = vsel %vm1175, %v5828, %v5832
    %v5834 = vshrl.u32 %v5173, 16
    %v5836 = vrot.slane %v5834, 4
    %v5837 = vor.u32 %v5836, %v5832
    %v5838 = vrot.slane %v5837, 4
    %v5840 = vshll.u32 %v5174, 16
    %v5842 = vrot.slane %v5840, 5
    %v5843 = vsel %vm1175, %v5838, %v5842
    %v5845 = vshrl.u32 %v5175, 16
    %v5847 = vrot.slane %v5845, 4
    %v5848 = vshll.u32 %v5175, 16
    %v5850 = vrot.slane %v5848, 5
    %v5851 = vor.u32 %v5847, %v5850
    %v5852 = vrot.slane %v5851, 4
    %v5854 = vshll.u32 %v5176, 16
    %v5856 = vrot.slane %v5854, 5
    %v5857 = vsel %vm1175, %v5852, %v5856
    %v5858 = vshrl.u32 %v5176, 16
    %v5860 = vrot.slane %v5858, 4
    %v5861 = vor.u32 %v5860, %v5856
    %v5862 = vrot.slane %v5861, 4
    %v5864 = vshll.u32 %v5177, 16
    %v5866 = vrot.slane %v5864, 5
    %v5867 = vsel %vm1175, %v5862, %v5866
    %v5869 = vshrl.u32 %v5178, 16
    %v5871 = vrot.slane %v5869, 4
    %v5872 = vshll.u32 %v5178, 16
    %v5874 = vrot.slane %v5872, 5
    %v5875 = vor.u32 %v5871, %v5874
    %v5876 = vrot.slane %v5875, 4
    %v5878 = vshll.u32 %v5179, 16
    %v5880 = vrot.slane %v5878, 5
    %v5881 = vsel %vm1175, %v5876, %v5880
    %v5882 = vshrl.u32 %v5179, 16
    %v5884 = vrot.slane %v5882, 4
    %v5885 = vor.u32 %v5884, %v5880
    %v5886 = vrot.slane %v5885, 4
    %v5888 = vshll.u32 %v5180, 16
    %v5890 = vrot.slane %v5888, 5
    %v5891 = vsel %vm1175, %v5886, %v5890
    %v5893 = vshrl.u32 %v5181, 16
    %v5895 = vrot.slane %v5893, 4
    %v5896 = vshll.u32 %v5181, 16
    %v5898 = vrot.slane %v5896, 5
    %v5899 = vor.u32 %v5895, %v5898
    %v5900 = vrot.slane %v5899, 4
    %v5902 = vshll.u32 %v5182, 16
    %v5904 = vrot.slane %v5902, 5
    %v5905 = vsel %vm1175, %v5900, %v5904
    %v5906 = vshrl.u32 %v5182, 16
    %v5908 = vrot.slane %v5906, 4
    %v5909 = vor.u32 %v5908, %v5904
    %v5910 = vrot.slane %v5909, 4
    %v5912 = vshll.u32 %v5183, 16
    %v5914 = vrot.slane %v5912, 5
    %v5915 = vsel %vm1175, %v5910, %v5914
    %v5917 = vshrl.u32 %v5184, 16
    %v5919 = vrot.slane %v5917, 4
    %v5920 = vshll.u32 %v5184, 16
    %v5922 = vrot.slane %v5920, 5
    %v5923 = vor.u32 %v5919, %v5922
    %v5924 = vrot.slane %v5923, 4
    %v5926 = vshll.u32 %v5185, 16
    %v5928 = vrot.slane %v5926, 5
    %v5929 = vsel %vm1175, %v5924, %v5928
    %v5930 = vshrl.u32 %v5185, 16
    %v5932 = vrot.slane %v5930, 4
    %v5933 = vor.u32 %v5932, %v5928
    %v5934 = vrot.slane %v5933, 4
    %v5936 = vshll.u32 %v5186, 16
    %v5938 = vrot.slane %v5936, 5
    %v5939 = vsel %vm1175, %v5934, %v5938
    %v5941 = vshrl.u32 %v5187, 16
    %v5943 = vrot.slane %v5941, 4
    %v5944 = vshll.u32 %v5187, 16
    %v5946 = vrot.slane %v5944, 5
    %v5947 = vor.u32 %v5943, %v5946
    %v5948 = vrot.slane %v5947, 4
    %v5950 = vshll.u32 %v5188, 16
    %v5952 = vrot.slane %v5950, 5
    %v5953 = vsel %vm1175, %v5948, %v5952
    %v5954 = vshrl.u32 %v5188, 16
    %v5956 = vrot.slane %v5954, 4
    %v5957 = vor.u32 %v5956, %v5952
    %v5958 = vrot.slane %v5957, 4
    %v5960 = vshll.u32 %v5189, 16
    %v5962 = vrot.slane %v5960, 5
    %v5963 = vsel %vm1175, %v5958, %v5962
    %v6060 = vrot.slane %v5088, 5
    %v6061 = vrot.slane %v6060, 4
    %v6062 = vrot.slane %v5089, 5
    %v6063 = vsel %vm2042, %v6061, %v6062
    %v6064 = vrot.slane %v6062, 4
    %v6065 = vrot.slane %v5090, 5
    %v6066 = vsel %vm2042, %v6064, %v6065
    %v6067 = vrot.slane %v5091, 5
    %v6068 = vrot.slane %v6067, 4
    %v6069 = vrot.slane %v5092, 5
    %v6070 = vsel %vm2042, %v6068, %v6069
    %v6071 = vrot.slane %v6069, 4
    %v6072 = vrot.slane %v5093, 5
    %v6073 = vsel %vm2042, %v6071, %v6072
    %v6074 = vrot.slane %v5094, 5
    %v6075 = vrot.slane %v6074, 4
    %v6076 = vrot.slane %v5095, 5
    %v6077 = vsel %vm2042, %v6075, %v6076
    %v6078 = vrot.slane %v6076, 4
    %v6079 = vrot.slane %v5096, 5
    %v6080 = vsel %vm2042, %v6078, %v6079
    %v6081 = vrot.slane %v5097, 5
    %v6082 = vrot.slane %v6081, 4
    %v6083 = vrot.slane %v5098, 5
    %v6084 = vsel %vm2042, %v6082, %v6083
    %v6085 = vrot.slane %v6083, 4
    %v6086 = vrot.slane %v5099, 5
    %v6087 = vsel %vm2042, %v6085, %v6086
    %v6088 = vrot.slane %v5100, 5
    %v6089 = vrot.slane %v6088, 4
    %v6090 = vrot.slane %v5101, 5
    %v6091 = vsel %vm2042, %v6089, %v6090
    %v6092 = vrot.slane %v6090, 4
    %v6093 = vrot.slane %v5102, 5
    %v6094 = vsel %vm2042, %v6092, %v6093
    %v6095 = vrot.slane %v5103, 5
    %v6096 = vrot.slane %v6095, 4
    %v6097 = vrot.slane %v5104, 5
    %v6098 = vsel %vm2042, %v6096, %v6097
    %v6099 = vrot.slane %v6097, 4
    %v6100 = vrot.slane %v5105, 5
    %v6101 = vsel %vm2042, %v6099, %v6100
    %v6102 = vrot.slane %v5106, 5
    %v6103 = vrot.slane %v6102, 4
    %v6104 = vrot.slane %v5107, 5
    %v6105 = vsel %vm2042, %v6103, %v6104
    %v6106 = vrot.slane %v6104, 4
    %v6107 = vrot.slane %v5108, 5
    %v6108 = vsel %vm2042, %v6106, %v6107
    %v6109 = vrot.slane %v5109, 5
    %v6110 = vrot.slane %v6109, 4
    %v6111 = vrot.slane %v5110, 5
    %v6112 = vsel %vm2042, %v6110, %v6111
    %v6113 = vrot.slane %v6111, 4
    %v6114 = vrot.slane %v5111, 5
    %v6115 = vsel %vm2042, %v6113, %v6114
    %v6116 = vrot.slane %v5112, 5
    %v6117 = vrot.slane %v6116, 4
    %v6118 = vrot.slane %v5113, 5
    %v6119 = vsel %vm2042, %v6117, %v6118
    %v6120 = vrot.slane %v6118, 4
    %v6121 = vrot.slane %v5114, 5
    %v6122 = vsel %vm2042, %v6120, %v6121
    %v6123 = vrot.slane %v5115, 5
    %v6124 = vrot.slane %v6123, 4
    %v6125 = vrot.slane %v5116, 5
    %v6126 = vsel %vm2042, %v6124, %v6125
    %v6127 = vrot.slane %v6125, 4
    %v6128 = vrot.slane %v5117, 5
    %v6129 = vsel %vm2042, %v6127, %v6128
    %v6130 = vrot.slane %v5118, 5
    %v6131 = vrot.slane %v6130, 4
    %v6132 = vrot.slane %v5119, 5
    %v6133 = vsel %vm2042, %v6131, %v6132
    %v6134 = vrot.slane %v6132, 4
    %v6135 = vrot.slane %v5120, 5
    %v6136 = vsel %vm2042, %v6134, %v6135
    %v6137 = vrot.slane %v5121, 5
    %v6138 = vrot.slane %v6137, 4
    %v6139 = vrot.slane %v5122, 5
    %v6140 = vsel %vm2042, %v6138, %v6139
    %v6141 = vrot.slane %v6139, 4
    %v6142 = vrot.slane %v5123, 5
    %v6143 = vsel %vm2042, %v6141, %v6142
    %v6144 = vrot.slane %v5124, 5
    %v6145 = vrot.slane %v6144, 4
    %v6146 = vrot.slane %v5125, 5
    %v6147 = vsel %vm2042, %v6145, %v6146
    %v6148 = vrot.slane %v6146, 4
    %v6149 = vrot.slane %v5126, 5
    %v6150 = vsel %vm2042, %v6148, %v6149
    %v6151 = vrot.slane %v5127, 5
    %v6152 = vrot.slane %v6151, 4
    %v6153 = vrot.slane %v5128, 5
    %v6154 = vsel %vm2042, %v6152, %v6153
    %v6155 = vrot.slane %v6153, 4
    %v6156 = vrot.slane %v5129, 5
    %v6157 = vsel %vm2042, %v6155, %v6156
    %v6158 = vrot.slane %v5130, 5
    %v6159 = vrot.slane %v6158, 4
    %v6160 = vrot.slane %v5131, 5
    %v6161 = vsel %vm2042, %v6159, %v6160
    %v6162 = vrot.slane %v6160, 4
    %v6163 = vrot.slane %v5132, 5
    %v6164 = vsel %vm2042, %v6162, %v6163
    %v6165 = vrot.slane %v5133, 5
    %v6166 = vrot.slane %v6165, 4
    %v6167 = vrot.slane %v5134, 5
    %v6168 = vsel %vm2042, %v6166, %v6167
    %v6169 = vrot.slane %v6167, 4
    %v6170 = vrot.slane %v5135, 5
    %v6171 = vsel %vm2042, %v6169, %v6170
    %v6172 = vrot.slane %v5142, 5
    %v6173 = vrot.slane %v6172, 4
    %v6174 = vrot.slane %v5143, 5
    %v6175 = vsel %vm2042, %v6173, %v6174
    %v6176 = vrot.slane %v6174, 4
    %v6177 = vrot.slane %v5144, 5
    %v6178 = vsel %vm2042, %v6176, %v6177
    %v6179 = vrot.slane %v5145, 5
    %v6180 = vrot.slane %v6179, 4
    %v6181 = vrot.slane %v5146, 5
    %v6182 = vsel %vm2042, %v6180, %v6181
    %v6183 = vrot.slane %v6181, 4
    %v6184 = vrot.slane %v5147, 5
    %v6185 = vsel %vm2042, %v6183, %v6184
    %v6186 = vrot.slane %v5148, 5
    %v6187 = vrot.slane %v6186, 4
    %v6188 = vrot.slane %v5149, 5
    %v6189 = vsel %vm2042, %v6187, %v6188
    %v6190 = vrot.slane %v6188, 4
    %v6191 = vrot.slane %v5150, 5
    %v6192 = vsel %vm2042, %v6190, %v6191
    %v6193 = vrot.slane %v5151, 5
    %v6194 = vrot.slane %v6193, 4
    %v6195 = vrot.slane %v5152, 5
    %v6196 = vsel %vm2042, %v6194, %v6195
    %v6197 = vrot.slane %v6195, 4
    %v6198 = vrot.slane %v5153, 5
    %v6199 = vsel %vm2042, %v6197, %v6198
    %v6200 = vrot.slane %v5154, 5
    %v6201 = vrot.slane %v6200, 4
    %v6202 = vrot.slane %v5155, 5
    %v6203 = vsel %vm2042, %v6201, %v6202
    %v6204 = vrot.slane %v6202, 4
    %v6205 = vrot.slane %v5156, 5
    %v6206 = vsel %vm2042, %v6204, %v6205
    %v6207 = vrot.slane %v5157, 5
    %v6208 = vrot.slane %v6207, 4
    %v6209 = vrot.slane %v5158, 5
    %v6210 = vsel %vm2042, %v6208, %v6209
    %v6211 = vrot.slane %v6209, 4
    %v6212 = vrot.slane %v5159, 5
    %v6213 = vsel %vm2042, %v6211, %v6212
    %v6214 = vrot.slane %v5160, 5
    %v6215 = vrot.slane %v6214, 4
    %v6216 = vrot.slane %v5161, 5
    %v6217 = vsel %vm2042, %v6215, %v6216
    %v6218 = vrot.slane %v6216, 4
    %v6219 = vrot.slane %v5162, 5
    %v6220 = vsel %vm2042, %v6218, %v6219
    %v6221 = vrot.slane %v5163, 5
    %v6222 = vrot.slane %v6221, 4
    %v6223 = vrot.slane %v5164, 5
    %v6224 = vsel %vm2042, %v6222, %v6223
    %v6225 = vrot.slane %v6223, 4
    %v6226 = vrot.slane %v5165, 5
    %v6227 = vsel %vm2042, %v6225, %v6226
    %v6228 = vrot.slane %v5166, 5
    %v6229 = vrot.slane %v6228, 4
    %v6230 = vrot.slane %v5167, 5
    %v6231 = vsel %vm2042, %v6229, %v6230
    %v6232 = vrot.slane %v6230, 4
    %v6233 = vrot.slane %v5168, 5
    %v6234 = vsel %vm2042, %v6232, %v6233
    %v6235 = vrot.slane %v5169, 5
    %v6236 = vrot.slane %v6235, 4
    %v6237 = vrot.slane %v5170, 5
    %v6238 = vsel %vm2042, %v6236, %v6237
    %v6239 = vrot.slane %v6237, 4
    %v6240 = vrot.slane %v5171, 5
    %v6241 = vsel %vm2042, %v6239, %v6240
    %v6242 = vrot.slane %v5172, 5
    %v6243 = vrot.slane %v6242, 4
    %v6244 = vrot.slane %v5173, 5
    %v6245 = vsel %vm2042, %v6243, %v6244
    %v6246 = vrot.slane %v6244, 4
    %v6247 = vrot.slane %v5174, 5
    %v6248 = vsel %vm2042, %v6246, %v6247
    %v6249 = vrot.slane %v5175, 5
    %v6250 = vrot.slane %v6249, 4
    %v6251 = vrot.slane %v5176, 5
    %v6252 = vsel %vm2042, %v6250, %v6251
    %v6253 = vrot.slane %v6251, 4
    %v6254 = vrot.slane %v5177, 5
    %v6255 = vsel %vm2042, %v6253, %v6254
    %v6256 = vrot.slane %v5178, 5
    %v6257 = vrot.slane %v6256, 4
    %v6258 = vrot.slane %v5179, 5
    %v6259 = vsel %vm2042, %v6257, %v6258
    %v6260 = vrot.slane %v6258, 4
    %v6261 = vrot.slane %v5180, 5
    %v6262 = vsel %vm2042, %v6260, %v6261
    %v6263 = vrot.slane %v5181, 5
    %v6264 = vrot.slane %v6263, 4
    %v6265 = vrot.slane %v5182, 5
    %v6266 = vsel %vm2042, %v6264, %v6265
    %v6267 = vrot.slane %v6265, 4
    %v6268 = vrot.slane %v5183, 5
    %v6269 = vsel %vm2042, %v6267, %v6268
    %v6270 = vrot.slane %v5184, 5
    %v6271 = vrot.slane %v6270, 4
    %v6272 = vrot.slane %v5185, 5
    %v6273 = vsel %vm2042, %v6271, %v6272
    %v6274 = vrot.slane %v6272, 4
    %v6275 = vrot.slane %v5186, 5
    %v6276 = vsel %vm2042, %v6274, %v6275
    %v6277 = vrot.slane %v5187, 5
    %v6278 = vrot.slane %v6277, 4
    %v6279 = vrot.slane %v5188, 5
    %v6280 = vsel %vm2042, %v6278, %v6279
    %v6281 = vrot.slane %v6279, 4
    %v6282 = vrot.slane %v5189, 5
    %v6283 = vsel %vm2042, %v6281, %v6282
    %v6285 = vshrl.u32 %v5136, 16
    %v6287 = vrot.slane %v6285, 4
    %v6288 = vshll.u32 %v5136, 16
    %v6290 = vrot.slane %v6288, 5
    %v6291 = vor.u32 %v6287, %v6290
    %v6292 = vrot.slane %v6291, 4
    %v6294 = vshll.u32 %v5137, 16
    %v6296 = vrot.slane %v6294, 5
    %v6297 = vsel %vm1175, %v6292, %v6296
    %v6298 = vshrl.u32 %v5137, 16
    %v6300 = vrot.slane %v6298, 4
    %v6301 = vor.u32 %v6300, %v6296
    %v6302 = vrot.slane %v6301, 4
    %v6304 = vshll.u32 %v5138, 16
    %v6306 = vrot.slane %v6304, 5
    %v6307 = vsel %vm1175, %v6302, %v6306
    %v6309 = vshrl.u32 %v5190, 16
    %v6311 = vrot.slane %v6309, 4
    %v6312 = vshll.u32 %v5190, 16
    %v6314 = vrot.slane %v6312, 5
    %v6315 = vor.u32 %v6311, %v6314
    %v6316 = vrot.slane %v6315, 4
    %v6318 = vshll.u32 %v5191, 16
    %v6320 = vrot.slane %v6318, 5
    %v6321 = vsel %vm1175, %v6316, %v6320
    %v6322 = vshrl.u32 %v5191, 16
    %v6324 = vrot.slane %v6322, 4
    %v6325 = vor.u32 %v6324, %v6320
    %v6326 = vrot.slane %v6325, 4
    %v6328 = vshll.u32 %v5192, 16
    %v6330 = vrot.slane %v6328, 5
    %v6331 = vsel %vm1175, %v6326, %v6330
    %v6338 = vrot.slane %v5136, 5
    %v6339 = vrot.slane %v6338, 4
    %v6340 = vrot.slane %v5137, 5
    %v6341 = vsel %vm2042, %v6339, %v6340
    %v6342 = vrot.slane %v6340, 4
    %v6343 = vrot.slane %v5138, 5
    %v6344 = vsel %vm2042, %v6342, %v6343
    %v6345 = vrot.slane %v5190, 5
    %v6346 = vrot.slane %v6345, 4
    %v6347 = vrot.slane %v5191, 5
    %v6348 = vsel %vm2042, %v6346, %v6347
    %v6349 = vrot.slane %v6347, 4
    %v6350 = vrot.slane %v5192, 5
    %v6351 = vsel %vm2042, %v6349, %v6350
    %v6353 = vshrl.u32 %v5139, 16
    %v6355 = vrot.slane %v6353, 4
    %v6356 = vshll.u32 %v5139, 16
    %v6358 = vrot.slane %v6356, 5
    %v6359 = vor.u32 %v6355, %v6358
    %v6360 = vrot.slane %v6359, 4
    %v6362 = vshll.u32 %v5140, 16
    %v6364 = vrot.slane %v6362, 5
    %v6365 = vsel %vm1175, %v6360, %v6364
    %v6366 = vshrl.u32 %v5140, 16
    %v6368 = vrot.slane %v6366, 4
    %v6369 = vor.u32 %v6368, %v6364
    %v6370 = vrot.slane %v6369, 4
    %v6372 = vshll.u32 %v5141, 16
    %v6374 = vrot.slane %v6372, 5
    %v6375 = vsel %vm1175, %v6370, %v6374
    %v6377 = vshrl.u32 %v5193, 16
    %v6379 = vrot.slane %v6377, 4
    %v6380 = vshll.u32 %v5193, 16
    %v6382 = vrot.slane %v6380, 5
    %v6383 = vor.u32 %v6379, %v6382
    %v6384 = vrot.slane %v6383, 4
    %v6386 = vshll.u32 %v5194, 16
    %v6388 = vrot.slane %v6386, 5
    %v6389 = vsel %vm1175, %v6384, %v6388
    %v6390 = vshrl.u32 %v5194, 16
    %v6392 = vrot.slane %v6390, 4
    %v6393 = vor.u32 %v6392, %v6388
    %v6394 = vrot.slane %v6393, 4
    %v6396 = vshll.u32 %v5195, 16
    %v6398 = vrot.slane %v6396, 5
    %v6399 = vsel %vm1175, %v6394, %v6398
    %v6406 = vrot.slane %v5139, 5
    %v6407 = vrot.slane %v6406, 4
    %v6408 = vrot.slane %v5140, 5
    %v6409 = vsel %vm2042, %v6407, %v6408
    %v6410 = vrot.slane %v6408, 4
    %v6411 = vrot.slane %v5141, 5
    %v6412 = vsel %vm2042, %v6410, %v6411
    %v6413 = vrot.slane %v5193, 5
    %v6414 = vrot.slane %v6413, 4
    %v6415 = vrot.slane %v5194, 5
    %v6416 = vsel %vm2042, %v6414, %v6415
    %v6417 = vrot.slane %v6415, 4
    %v6418 = vrot.slane %v5195, 5
    %v6419 = vsel %vm2042, %v6417, %v6418
    %v6420 = vunpack.c.l.b16 %v5088
    %v6421 = vunpack.c.l.b16 %v5089
    %v6422 = vunpack.c.l.b16 %v5091
    %v6423 = vunpack.c.l.b16 %v5092
    %v6424 = vunpack.c.l.b16 %v5094
    %v6425 = vunpack.c.l.b16 %v5095
    %v6426 = vunpack.c.l.b16 %v5097
    %v6427 = vunpack.c.l.b16 %v5098
    %v6428 = vunpack.c.l.b16 %v5100
    %v6429 = vunpack.c.l.b16 %v5101
    %v6430 = vunpack.c.l.b16 %v5103
    %v6431 = vunpack.c.l.b16 %v5104
    %v6432 = vunpack.c.l.b16 %v5106
    %v6433 = vunpack.c.l.b16 %v5107
    %v6434 = vunpack.c.l.b16 %v5109
    %v6435 = vunpack.c.l.b16 %v5110
    %v6436 = vunpack.c.l.b16 %v5112
    %v6437 = vunpack.c.l.b16 %v5113
    %v6438 = vunpack.c.l.b16 %v5115
    %v6439 = vunpack.c.l.b16 %v5116
    %v6440 = vunpack.c.l.b16 %v5118
    %v6441 = vunpack.c.l.b16 %v5119
    %v6442 = vunpack.c.l.b16 %v5121
    %v6443 = vunpack.c.l.b16 %v5122
    %v6444 = vunpack.c.l.b16 %v5124
    %v6445 = vunpack.c.l.b16 %v5125
    %v6446 = vunpack.c.l.b16 %v5127
    %v6447 = vunpack.c.l.b16 %v5128
    %v6448 = vunpack.c.l.b16 %v5130
    %v6449 = vunpack.c.l.b16 %v5131
    %v6450 = vunpack.c.l.b16 %v5133
    %v6451 = vunpack.c.l.b16 %v5134
    %v6452 = vunpack.c.l.b16 %v5142
    %v6453 = vunpack.c.l.b16 %v5143
    %v6454 = vunpack.c.l.b16 %v5145
    %v6455 = vunpack.c.l.b16 %v5146
    %v6456 = vunpack.c.l.b16 %v5148
    %v6457 = vunpack.c.l.b16 %v5149
    %v6458 = vunpack.c.l.b16 %v5151
    %v6459 = vunpack.c.l.b16 %v5152
    %v6460 = vunpack.c.l.b16 %v5154
    %v6461 = vunpack.c.l.b16 %v5155
    %v6462 = vunpack.c.l.b16 %v5157
    %v6463 = vunpack.c.l.b16 %v5158
    %v6464 = vunpack.c.l.b16 %v5160
    %v6465 = vunpack.c.l.b16 %v5161
    %v6466 = vunpack.c.l.b16 %v5163
    %v6467 = vunpack.c.l.b16 %v5164
    %v6468 = vunpack.c.l.b16 %v5166
    %v6469 = vunpack.c.l.b16 %v5167
    %v6470 = vunpack.c.l.b16 %v5169
    %v6471 = vunpack.c.l.b16 %v5170
    %v6472 = vunpack.c.l.b16 %v5172
    %v6473 = vunpack.c.l.b16 %v5173
    %v6474 = vunpack.c.l.b16 %v5175
    %v6475 = vunpack.c.l.b16 %v5176
    %v6476 = vunpack.c.l.b16 %v5178
    %v6477 = vunpack.c.l.b16 %v5179
    %v6478 = vunpack.c.l.b16 %v5181
    %v6479 = vunpack.c.l.b16 %v5182
    %v6480 = vunpack.c.l.b16 %v5184
    %v6481 = vunpack.c.l.b16 %v5185
    %v6482 = vunpack.c.l.b16 %v5187
    %v6483 = vunpack.c.l.b16 %v5188
    %v6484 = vpack.c.b16 %v6421, %v6420
    %v6485 = vpack.c.b16 %v6423, %v6422
    %v6486 = vpack.c.b16 %v6425, %v6424
    %v6487 = vpack.c.b16 %v6427, %v6426
    %v6488 = vpack.c.b16 %v6429, %v6428
    %v6489 = vpack.c.b16 %v6431, %v6430
    %v6490 = vpack.c.b16 %v6433, %v6432
    %v6491 = vpack.c.b16 %v6435, %v6434
    %v6492 = vpack.c.b16 %v6437, %v6436
    %v6493 = vpack.c.b16 %v6439, %v6438
    %v6494 = vpack.c.b16 %v6441, %v6440
    %v6495 = vpack.c.b16 %v6443, %v6442
    %v6496 = vpack.c.b16 %v6445, %v6444
    %v6497 = vpack.c.b16 %v6447, %v6446
    %v6498 = vpack.c.b16 %v6449, %v6448
    %v6499 = vpack.c.b16 %v6451, %v6450
    %v6500 = vpack.c.b16 %v6453, %v6452
    %v6501 = vpack.c.b16 %v6455, %v6454
    %v6502 = vpack.c.b16 %v6457, %v6456
    %v6503 = vpack.c.b16 %v6459, %v6458
    %v6504 = vpack.c.b16 %v6461, %v6460
    %v6505 = vpack.c.b16 %v6463, %v6462
    %v6506 = vpack.c.b16 %v6465, %v6464
    %v6507 = vpack.c.b16 %v6467, %v6466
    %v6508 = vpack.c.b16 %v6469, %v6468
    %v6509 = vpack.c.b16 %v6471, %v6470
    %v6510 = vpack.c.b16 %v6473, %v6472
    %v6511 = vpack.c.b16 %v6475, %v6474
    %v6512 = vpack.c.b16 %v6477, %v6476
    %v6513 = vpack.c.b16 %v6479, %v6478
    %v6514 = vpack.c.b16 %v6481, %v6480
    %v6515 = vpack.c.b16 %v6483, %v6482
    %v6516 = vunpack.c.l.b16 %v5209
    %v6517 = vunpack.c.l.b16 %v5219
    %v6518 = vunpack.c.l.b16 %v5233
    %v6519 = vunpack.c.l.b16 %v5243
    %v6520 = vunpack.c.l.b16 %v5257
    %v6521 = vunpack.c.l.b16 %v5267
    %v6522 = vunpack.c.l.b16 %v5281
    %v6523 = vunpack.c.l.b16 %v5291
    %v6524 = vunpack.c.l.b16 %v5305
    %v6525 = vunpack.c.l.b16 %v5315
    %v6526 = vunpack.c.l.b16 %v5329
    %v6527 = vunpack.c.l.b16 %v5339
    %v6528 = vunpack.c.l.b16 %v5353
    %v6529 = vunpack.c.l.b16 %v5363
    %v6530 = vunpack.c.l.b16 %v5377
    %v6531 = vunpack.c.l.b16 %v5387
    %v6532 = vunpack.c.l.b16 %v5401
    %v6533 = vunpack.c.l.b16 %v5411
    %v6534 = vunpack.c.l.b16 %v5425
    %v6535 = vunpack.c.l.b16 %v5435
    %v6536 = vunpack.c.l.b16 %v5449
    %v6537 = vunpack.c.l.b16 %v5459
    %v6538 = vunpack.c.l.b16 %v5473
    %v6539 = vunpack.c.l.b16 %v5483
    %v6540 = vunpack.c.l.b16 %v5497
    %v6541 = vunpack.c.l.b16 %v5507
    %v6542 = vunpack.c.l.b16 %v5521
    %v6543 = vunpack.c.l.b16 %v5531
    %v6544 = vunpack.c.l.b16 %v5545
    %v6545 = vunpack.c.l.b16 %v5555
    %v6546 = vunpack.c.l.b16 %v5569
    %v6547 = vunpack.c.l.b16 %v5579
    %v6548 = vunpack.c.l.b16 %v5593
    %v6549 = vunpack.c.l.b16 %v5603
    %v6550 = vunpack.c.l.b16 %v5617
    %v6551 = vunpack.c.l.b16 %v5627
    %v6552 = vunpack.c.l.b16 %v5641
    %v6553 = vunpack.c.l.b16 %v5651
    %v6554 = vunpack.c.l.b16 %v5665
    %v6555 = vunpack.c.l.b16 %v5675
    %v6556 = vunpack.c.l.b16 %v5689
    %v6557 = vunpack.c.l.b16 %v5699
    %v6558 = vunpack.c.l.b16 %v5713
    %v6559 = vunpack.c.l.b16 %v5723
    %v6560 = vunpack.c.l.b16 %v5737
    %v6561 = vunpack.c.l.b16 %v5747
    %v6562 = vunpack.c.l.b16 %v5761
    %v6563 = vunpack.c.l.b16 %v5771
    %v6564 = vunpack.c.l.b16 %v5785
    %v6565 = vunpack.c.l.b16 %v5795
    %v6566 = vunpack.c.l.b16 %v5809
    %v6567 = vunpack.c.l.b16 %v5819
    %v6568 = vunpack.c.l.b16 %v5833
    %v6569 = vunpack.c.l.b16 %v5843
    %v6570 = vunpack.c.l.b16 %v5857
    %v6571 = vunpack.c.l.b16 %v5867
    %v6572 = vunpack.c.l.b16 %v5881
    %v6573 = vunpack.c.l.b16 %v5891
    %v6574 = vunpack.c.l.b16 %v5905
    %v6575 = vunpack.c.l.b16 %v5915
    %v6576 = vunpack.c.l.b16 %v5929
    %v6577 = vunpack.c.l.b16 %v5939
    %v6578 = vunpack.c.l.b16 %v5953
    %v6579 = vunpack.c.l.b16 %v5963
    %v6580 = vpack.c.b16 %v6517, %v6516
    %v6581 = vpack.c.b16 %v6519, %v6518
    %v6582 = vpack.c.b16 %v6521, %v6520
    %v6583 = vpack.c.b16 %v6523, %v6522
    %v6584 = vpack.c.b16 %v6525, %v6524
    %v6585 = vpack.c.b16 %v6527, %v6526
    %v6586 = vpack.c.b16 %v6529, %v6528
    %v6587 = vpack.c.b16 %v6531, %v6530
    %v6588 = vpack.c.b16 %v6533, %v6532
    %v6589 = vpack.c.b16 %v6535, %v6534
    %v6590 = vpack.c.b16 %v6537, %v6536
    %v6591 = vpack.c.b16 %v6539, %v6538
    %v6592 = vpack.c.b16 %v6541, %v6540
    %v6593 = vpack.c.b16 %v6543, %v6542
    %v6594 = vpack.c.b16 %v6545, %v6544
    %v6595 = vpack.c.b16 %v6547, %v6546
    %v6596 = vpack.c.b16 %v6549, %v6548
    %v6597 = vpack.c.b16 %v6551, %v6550
    %v6598 = vpack.c.b16 %v6553, %v6552
    %v6599 = vpack.c.b16 %v6555, %v6554
    %v6600 = vpack.c.b16 %v6557, %v6556
    %v6601 = vpack.c.b16 %v6559, %v6558
    %v6602 = vpack.c.b16 %v6561, %v6560
    %v6603 = vpack.c.b16 %v6563, %v6562
    %v6604 = vpack.c.b16 %v6565, %v6564
    %v6605 = vpack.c.b16 %v6567, %v6566
    %v6606 = vpack.c.b16 %v6569, %v6568
    %v6607 = vpack.c.b16 %v6571, %v6570
    %v6608 = vpack.c.b16 %v6573, %v6572
    %v6609 = vpack.c.b16 %v6575, %v6574
    %v6610 = vpack.c.b16 %v6577, %v6576
    %v6611 = vpack.c.b16 %v6579, %v6578
    %6612 = vrot.lane.b32.xlu0 %v6580, 32
    %v6613 = vpop.permute.xlu0 %6612
    %6614 = vrot.lane.b32.xlu0 %v6581, 32
    %v6615 = vpop.permute.xlu0 %6614
    %6616 = vrot.lane.b32.xlu0 %v6582, 32
    %v6617 = vpop.permute.xlu0 %6616
    %6618 = vrot.lane.b32.xlu0 %v6583, 32
    %v6619 = vpop.permute.xlu0 %6618
    %6620 = vrot.lane.b32.xlu0 %v6584, 32
    %v6621 = vpop.permute.xlu0 %6620
    %6622 = vrot.lane.b32.xlu0 %v6585, 32
    %v6623 = vpop.permute.xlu0 %6622
    %6624 = vrot.lane.b32.xlu0 %v6586, 32
    %v6625 = vpop.permute.xlu0 %6624
    %6626 = vrot.lane.b32.xlu0 %v6587, 32
    %v6627 = vpop.permute.xlu0 %6626
    %6628 = vrot.lane.b32.xlu0 %v6588, 32
    %v6629 = vpop.permute.xlu0 %6628
    %6630 = vrot.lane.b32.xlu0 %v6589, 32
    %v6631 = vpop.permute.xlu0 %6630
    %6632 = vrot.lane.b32.xlu0 %v6590, 32
    %v6633 = vpop.permute.xlu0 %6632
    %6634 = vrot.lane.b32.xlu0 %v6591, 32
    %v6635 = vpop.permute.xlu0 %6634
    %6636 = vrot.lane.b32.xlu0 %v6592, 32
    %v6637 = vpop.permute.xlu0 %6636
    %6638 = vrot.lane.b32.xlu0 %v6593, 32
    %v6639 = vpop.permute.xlu0 %6638
    %6640 = vrot.lane.b32.xlu0 %v6594, 32
    %v6641 = vpop.permute.xlu0 %6640
    %6642 = vrot.lane.b32.xlu0 %v6595, 32
    %v6643 = vpop.permute.xlu0 %6642
    %6644 = vrot.lane.b32.xlu0 %v6596, 32
    %v6645 = vpop.permute.xlu0 %6644
    %6646 = vrot.lane.b32.xlu0 %v6597, 32
    %v6647 = vpop.permute.xlu0 %6646
    %6648 = vrot.lane.b32.xlu0 %v6598, 32
    %v6649 = vpop.permute.xlu0 %6648
    %6650 = vrot.lane.b32.xlu0 %v6599, 32
    %v6651 = vpop.permute.xlu0 %6650
    %6652 = vrot.lane.b32.xlu0 %v6600, 32
    %v6653 = vpop.permute.xlu0 %6652
    %6654 = vrot.lane.b32.xlu0 %v6601, 32
    %v6655 = vpop.permute.xlu0 %6654
    %6656 = vrot.lane.b32.xlu0 %v6602, 32
    %v6657 = vpop.permute.xlu0 %6656
    %6658 = vrot.lane.b32.xlu0 %v6603, 32
    %v6659 = vpop.permute.xlu0 %6658
    %6660 = vrot.lane.b32.xlu0 %v6604, 32
    %v6661 = vpop.permute.xlu0 %6660
    %6662 = vrot.lane.b32.xlu0 %v6605, 32
    %v6663 = vpop.permute.xlu0 %6662
    %6664 = vrot.lane.b32.xlu0 %v6606, 32
    %v6665 = vpop.permute.xlu0 %6664
    %6666 = vrot.lane.b32.xlu0 %v6607, 32
    %v6667 = vpop.permute.xlu0 %6666
    %6668 = vrot.lane.b32.xlu0 %v6608, 32
    %v6669 = vpop.permute.xlu0 %6668
    %6670 = vrot.lane.b32.xlu0 %v6609, 32
    %v6671 = vpop.permute.xlu0 %6670
    %6672 = vrot.lane.b32.xlu0 %v6610, 32
    %v6673 = vpop.permute.xlu0 %6672
    %6674 = vrot.lane.b32.xlu0 %v6611, 32
    %v6675 = vpop.permute.xlu0 %6674
    %v6676 = vunpack.c.l.b16 %v6063
    %v6677 = vunpack.c.l.b16 %v6066
    %v6678 = vunpack.c.l.b16 %v6070
    %v6679 = vunpack.c.l.b16 %v6073
    %v6680 = vunpack.c.l.b16 %v6077
    %v6681 = vunpack.c.l.b16 %v6080
    %v6682 = vunpack.c.l.b16 %v6084
    %v6683 = vunpack.c.l.b16 %v6087
    %v6684 = vunpack.c.l.b16 %v6091
    %v6685 = vunpack.c.l.b16 %v6094
    %v6686 = vunpack.c.l.b16 %v6098
    %v6687 = vunpack.c.l.b16 %v6101
    %v6688 = vunpack.c.l.b16 %v6105
    %v6689 = vunpack.c.l.b16 %v6108
    %v6690 = vunpack.c.l.b16 %v6112
    %v6691 = vunpack.c.l.b16 %v6115
    %v6692 = vunpack.c.l.b16 %v6119
    %v6693 = vunpack.c.l.b16 %v6122
    %v6694 = vunpack.c.l.b16 %v6126
    %v6695 = vunpack.c.l.b16 %v6129
    %v6696 = vunpack.c.l.b16 %v6133
    %v6697 = vunpack.c.l.b16 %v6136
    %v6698 = vunpack.c.l.b16 %v6140
    %v6699 = vunpack.c.l.b16 %v6143
    %v6700 = vunpack.c.l.b16 %v6147
    %v6701 = vunpack.c.l.b16 %v6150
    %v6702 = vunpack.c.l.b16 %v6154
    %v6703 = vunpack.c.l.b16 %v6157
    %v6704 = vunpack.c.l.b16 %v6161
    %v6705 = vunpack.c.l.b16 %v6164
    %v6706 = vunpack.c.l.b16 %v6168
    %v6707 = vunpack.c.l.b16 %v6171
    %v6708 = vunpack.c.l.b16 %v6175
    %v6709 = vunpack.c.l.b16 %v6178
    %v6710 = vunpack.c.l.b16 %v6182
    %v6711 = vunpack.c.l.b16 %v6185
    %v6712 = vunpack.c.l.b16 %v6189
    %v6713 = vunpack.c.l.b16 %v6192
    %v6714 = vunpack.c.l.b16 %v6196
    %v6715 = vunpack.c.l.b16 %v6199
    %v6716 = vunpack.c.l.b16 %v6203
    %v6717 = vunpack.c.l.b16 %v6206
    %v6718 = vunpack.c.l.b16 %v6210
    %v6719 = vunpack.c.l.b16 %v6213
    %v6720 = vunpack.c.l.b16 %v6217
    %v6721 = vunpack.c.l.b16 %v6220
    %v6722 = vunpack.c.l.b16 %v6224
    %v6723 = vunpack.c.l.b16 %v6227
    %v6724 = vunpack.c.l.b16 %v6231
    %v6725 = vunpack.c.l.b16 %v6234
    %v6726 = vunpack.c.l.b16 %v6238
    %v6727 = vunpack.c.l.b16 %v6241
    %v6728 = vunpack.c.l.b16 %v6245
    %v6729 = vunpack.c.l.b16 %v6248
    %v6730 = vunpack.c.l.b16 %v6252
    %v6731 = vunpack.c.l.b16 %v6255
    %v6732 = vunpack.c.l.b16 %v6259
    %v6733 = vunpack.c.l.b16 %v6262
    %v6734 = vunpack.c.l.b16 %v6266
    %v6735 = vunpack.c.l.b16 %v6269
    %v6736 = vunpack.c.l.b16 %v6273
    %v6737 = vunpack.c.l.b16 %v6276
    %v6738 = vunpack.c.l.b16 %v6280
    %v6739 = vunpack.c.l.b16 %v6283
    %v6740 = vpack.c.b16 %v6677, %v6676
    %v6741 = vpack.c.b16 %v6679, %v6678
    %v6742 = vpack.c.b16 %v6681, %v6680
    %v6743 = vpack.c.b16 %v6683, %v6682
    %v6744 = vpack.c.b16 %v6685, %v6684
    %v6745 = vpack.c.b16 %v6687, %v6686
    %v6746 = vpack.c.b16 %v6689, %v6688
    %v6747 = vpack.c.b16 %v6691, %v6690
    %v6748 = vpack.c.b16 %v6693, %v6692
    %v6749 = vpack.c.b16 %v6695, %v6694
    %v6750 = vpack.c.b16 %v6697, %v6696
    %v6751 = vpack.c.b16 %v6699, %v6698
    %v6752 = vpack.c.b16 %v6701, %v6700
    %v6753 = vpack.c.b16 %v6703, %v6702
    %v6754 = vpack.c.b16 %v6705, %v6704
    %v6755 = vpack.c.b16 %v6707, %v6706
    %v6756 = vpack.c.b16 %v6709, %v6708
    %v6757 = vpack.c.b16 %v6711, %v6710
    %v6758 = vpack.c.b16 %v6713, %v6712
    %v6759 = vpack.c.b16 %v6715, %v6714
    %v6760 = vpack.c.b16 %v6717, %v6716
    %v6761 = vpack.c.b16 %v6719, %v6718
    %v6762 = vpack.c.b16 %v6721, %v6720
    %v6763 = vpack.c.b16 %v6723, %v6722
    %v6764 = vpack.c.b16 %v6725, %v6724
    %v6765 = vpack.c.b16 %v6727, %v6726
    %v6766 = vpack.c.b16 %v6729, %v6728
    %v6767 = vpack.c.b16 %v6731, %v6730
    %v6768 = vpack.c.b16 %v6733, %v6732
    %v6769 = vpack.c.b16 %v6735, %v6734
    %v6770 = vpack.c.b16 %v6737, %v6736
    %v6771 = vpack.c.b16 %v6739, %v6738
    %6772 = vrot.lane.b32.xlu0 %v6740, 64
    %v6773 = vpop.permute.xlu0 %6772
    %6774 = vrot.lane.b32.xlu0 %v6741, 64
    %v6775 = vpop.permute.xlu0 %6774
    %6776 = vrot.lane.b32.xlu0 %v6742, 64
    %v6777 = vpop.permute.xlu0 %6776
    %6778 = vrot.lane.b32.xlu0 %v6743, 64
    %v6779 = vpop.permute.xlu0 %6778
    %6780 = vrot.lane.b32.xlu0 %v6744, 64
    %v6781 = vpop.permute.xlu0 %6780
    %6782 = vrot.lane.b32.xlu0 %v6745, 64
    %v6783 = vpop.permute.xlu0 %6782
    %6784 = vrot.lane.b32.xlu0 %v6746, 64
    %v6785 = vpop.permute.xlu0 %6784
    %6786 = vrot.lane.b32.xlu0 %v6747, 64
    %v6787 = vpop.permute.xlu0 %6786
    %6788 = vrot.lane.b32.xlu0 %v6748, 64
    %v6789 = vpop.permute.xlu0 %6788
    %6790 = vrot.lane.b32.xlu0 %v6749, 64
    %v6791 = vpop.permute.xlu0 %6790
    %6792 = vrot.lane.b32.xlu0 %v6750, 64
    %v6793 = vpop.permute.xlu0 %6792
    %6794 = vrot.lane.b32.xlu0 %v6751, 64
    %v6795 = vpop.permute.xlu0 %6794
    %6796 = vrot.lane.b32.xlu0 %v6752, 64
    %v6797 = vpop.permute.xlu0 %6796
    %6798 = vrot.lane.b32.xlu0 %v6753, 64
    %v6799 = vpop.permute.xlu0 %6798
    %6800 = vrot.lane.b32.xlu0 %v6754, 64
    %v6801 = vpop.permute.xlu0 %6800
    %6802 = vrot.lane.b32.xlu0 %v6755, 64
    %v6803 = vpop.permute.xlu0 %6802
    %6804 = vrot.lane.b32.xlu0 %v6756, 64
    %v6805 = vpop.permute.xlu0 %6804
    %6806 = vrot.lane.b32.xlu0 %v6757, 64
    %v6807 = vpop.permute.xlu0 %6806
    %6808 = vrot.lane.b32.xlu0 %v6758, 64
    %v6809 = vpop.permute.xlu0 %6808
    %6810 = vrot.lane.b32.xlu0 %v6759, 64
    %v6811 = vpop.permute.xlu0 %6810
    %6812 = vrot.lane.b32.xlu0 %v6760, 64
    %v6813 = vpop.permute.xlu0 %6812
    %6814 = vrot.lane.b32.xlu0 %v6761, 64
    %v6815 = vpop.permute.xlu0 %6814
    %6816 = vrot.lane.b32.xlu0 %v6762, 64
    %v6817 = vpop.permute.xlu0 %6816
    %6818 = vrot.lane.b32.xlu0 %v6763, 64
    %v6819 = vpop.permute.xlu0 %6818
    %6820 = vrot.lane.b32.xlu0 %v6764, 64
    %v6821 = vpop.permute.xlu0 %6820
    %6822 = vrot.lane.b32.xlu0 %v6765, 64
    %v6823 = vpop.permute.xlu0 %6822
    %6824 = vrot.lane.b32.xlu0 %v6766, 64
    %v6825 = vpop.permute.xlu0 %6824
    %6826 = vrot.lane.b32.xlu0 %v6767, 64
    %v6827 = vpop.permute.xlu0 %6826
    %6828 = vrot.lane.b32.xlu0 %v6768, 64
    %v6829 = vpop.permute.xlu0 %6828
    %6830 = vrot.lane.b32.xlu0 %v6769, 64
    %v6831 = vpop.permute.xlu0 %6830
    %6832 = vrot.lane.b32.xlu0 %v6770, 64
    %v6833 = vpop.permute.xlu0 %6832
    %6834 = vrot.lane.b32.xlu0 %v6771, 64
    %v6835 = vpop.permute.xlu0 %6834
    %v6836 = vunpack.c.l.b16 %v5136
    %v6837 = vunpack.c.l.b16 %v5137
    %v6838 = vunpack.c.l.b16 %v5190
    %v6839 = vunpack.c.l.b16 %v5191
    %v6840 = vpack.c.b16 %v6837, %v6836
    %v6841 = vpack.c.b16 %v6839, %v6838
    %6842 = vrot.lane.b32.xlu0 %v6485, 96
    %v6843 = vpop.permute.xlu0 %6842
    %6844 = vrot.lane.b32.xlu0 %v6486, 96
    %v6845 = vpop.permute.xlu0 %6844
    %6846 = vrot.lane.b32.xlu0 %v6487, 96
    %v6847 = vpop.permute.xlu0 %6846
    %6848 = vrot.lane.b32.xlu0 %v6488, 96
    %v6849 = vpop.permute.xlu0 %6848
    %6850 = vrot.lane.b32.xlu0 %v6489, 96
    %v6851 = vpop.permute.xlu0 %6850
    %6852 = vrot.lane.b32.xlu0 %v6490, 96
    %v6853 = vpop.permute.xlu0 %6852
    %6854 = vrot.lane.b32.xlu0 %v6491, 96
    %v6855 = vpop.permute.xlu0 %6854
    %6856 = vrot.lane.b32.xlu0 %v6492, 96
    %v6857 = vpop.permute.xlu0 %6856
    %6858 = vrot.lane.b32.xlu0 %v6493, 96
    %v6859 = vpop.permute.xlu0 %6858
    %6860 = vrot.lane.b32.xlu0 %v6494, 96
    %v6861 = vpop.permute.xlu0 %6860
    %6862 = vrot.lane.b32.xlu0 %v6495, 96
    %v6863 = vpop.permute.xlu0 %6862
    %6864 = vrot.lane.b32.xlu0 %v6496, 96
    %v6865 = vpop.permute.xlu0 %6864
    %6866 = vrot.lane.b32.xlu0 %v6497, 96
    %v6867 = vpop.permute.xlu0 %6866
    %6868 = vrot.lane.b32.xlu0 %v6498, 96
    %v6869 = vpop.permute.xlu0 %6868
    %6870 = vrot.lane.b32.xlu0 %v6499, 96
    %v6871 = vpop.permute.xlu0 %6870
    %6872 = vrot.lane.b32.xlu0 %v6840, 96
    %v6873 = vpop.permute.xlu0 %6872
    %6874 = vrot.lane.b32.xlu0 %v6501, 96
    %v6875 = vpop.permute.xlu0 %6874
    %6876 = vrot.lane.b32.xlu0 %v6502, 96
    %v6877 = vpop.permute.xlu0 %6876
    %6878 = vrot.lane.b32.xlu0 %v6503, 96
    %v6879 = vpop.permute.xlu0 %6878
    %6880 = vrot.lane.b32.xlu0 %v6504, 96
    %v6881 = vpop.permute.xlu0 %6880
    %6882 = vrot.lane.b32.xlu0 %v6505, 96
    %v6883 = vpop.permute.xlu0 %6882
    %6884 = vrot.lane.b32.xlu0 %v6506, 96
    %v6885 = vpop.permute.xlu0 %6884
    %6886 = vrot.lane.b32.xlu0 %v6507, 96
    %v6887 = vpop.permute.xlu0 %6886
    %6888 = vrot.lane.b32.xlu0 %v6508, 96
    %v6889 = vpop.permute.xlu0 %6888
    %6890 = vrot.lane.b32.xlu0 %v6509, 96
    %v6891 = vpop.permute.xlu0 %6890
    %6892 = vrot.lane.b32.xlu0 %v6510, 96
    %v6893 = vpop.permute.xlu0 %6892
    %6894 = vrot.lane.b32.xlu0 %v6511, 96
    %v6895 = vpop.permute.xlu0 %6894
    %6896 = vrot.lane.b32.xlu0 %v6512, 96
    %v6897 = vpop.permute.xlu0 %6896
    %6898 = vrot.lane.b32.xlu0 %v6513, 96
    %v6899 = vpop.permute.xlu0 %6898
    %6900 = vrot.lane.b32.xlu0 %v6514, 96
    %v6901 = vpop.permute.xlu0 %6900
    %6902 = vrot.lane.b32.xlu0 %v6515, 96
    %v6903 = vpop.permute.xlu0 %6902
    %6904 = vrot.lane.b32.xlu0 %v6841, 96
    %v6905 = vpop.permute.xlu0 %6904
    %v6906 = vunpack.c.l.b16 %v6297
    %v6907 = vunpack.c.l.b16 %v6307
    %v6908 = vunpack.c.l.b16 %v6321
    %v6909 = vunpack.c.l.b16 %v6331
    %v6910 = vpack.c.b16 %v6907, %v6906
    %v6911 = vpack.c.b16 %v6909, %v6908
    %v6912 = vunpack.c.l.b16 %v6341
    %v6913 = vunpack.c.l.b16 %v6344
    %v6914 = vunpack.c.l.b16 %v6348
    %v6915 = vunpack.c.l.b16 %v6351
    %v6916 = vpack.c.b16 %v6913, %v6912
    %v6917 = vpack.c.b16 %v6915, %v6914
    %6918 = vrot.lane.b32.xlu0 %v6741, 32
    %v6919 = vpop.permute.xlu0 %6918
    %6920 = vrot.lane.b32.xlu0 %v6742, 32
    %v6921 = vpop.permute.xlu0 %6920
    %6922 = vrot.lane.b32.xlu0 %v6743, 32
    %v6923 = vpop.permute.xlu0 %6922
    %6924 = vrot.lane.b32.xlu0 %v6744, 32
    %v6925 = vpop.permute.xlu0 %6924
    %6926 = vrot.lane.b32.xlu0 %v6745, 32
    %v6927 = vpop.permute.xlu0 %6926
    %6928 = vrot.lane.b32.xlu0 %v6746, 32
    %v6929 = vpop.permute.xlu0 %6928
    %6930 = vrot.lane.b32.xlu0 %v6747, 32
    %v6931 = vpop.permute.xlu0 %6930
    %6932 = vrot.lane.b32.xlu0 %v6748, 32
    %v6933 = vpop.permute.xlu0 %6932
    %6934 = vrot.lane.b32.xlu0 %v6749, 32
    %v6935 = vpop.permute.xlu0 %6934
    %6936 = vrot.lane.b32.xlu0 %v6750, 32
    %v6937 = vpop.permute.xlu0 %6936
    %6938 = vrot.lane.b32.xlu0 %v6751, 32
    %v6939 = vpop.permute.xlu0 %6938
    %6940 = vrot.lane.b32.xlu0 %v6752, 32
    %v6941 = vpop.permute.xlu0 %6940
    %6942 = vrot.lane.b32.xlu0 %v6753, 32
    %v6943 = vpop.permute.xlu0 %6942
    %6944 = vrot.lane.b32.xlu0 %v6754, 32
    %v6945 = vpop.permute.xlu0 %6944
    %6946 = vrot.lane.b32.xlu0 %v6755, 32
    %v6947 = vpop.permute.xlu0 %6946
    %6948 = vrot.lane.b32.xlu0 %v6916, 32
    %v6949 = vpop.permute.xlu0 %6948
    %6950 = vrot.lane.b32.xlu0 %v6757, 32
    %v6951 = vpop.permute.xlu0 %6950
    %6952 = vrot.lane.b32.xlu0 %v6758, 32
    %v6953 = vpop.permute.xlu0 %6952
    %6954 = vrot.lane.b32.xlu0 %v6759, 32
    %v6955 = vpop.permute.xlu0 %6954
    %6956 = vrot.lane.b32.xlu0 %v6760, 32
    %v6957 = vpop.permute.xlu0 %6956
    %6958 = vrot.lane.b32.xlu0 %v6761, 32
    %v6959 = vpop.permute.xlu0 %6958
    %6960 = vrot.lane.b32.xlu0 %v6762, 32
    %v6961 = vpop.permute.xlu0 %6960
    %6962 = vrot.lane.b32.xlu0 %v6763, 32
    %v6963 = vpop.permute.xlu0 %6962
    %6964 = vrot.lane.b32.xlu0 %v6764, 32
    %v6965 = vpop.permute.xlu0 %6964
    %6966 = vrot.lane.b32.xlu0 %v6765, 32
    %v6967 = vpop.permute.xlu0 %6966
    %6968 = vrot.lane.b32.xlu0 %v6766, 32
    %v6969 = vpop.permute.xlu0 %6968
    %6970 = vrot.lane.b32.xlu0 %v6767, 32
    %v6971 = vpop.permute.xlu0 %6970
    %6972 = vrot.lane.b32.xlu0 %v6768, 32
    %v6973 = vpop.permute.xlu0 %6972
    %6974 = vrot.lane.b32.xlu0 %v6769, 32
    %v6975 = vpop.permute.xlu0 %6974
    %6976 = vrot.lane.b32.xlu0 %v6770, 32
    %v6977 = vpop.permute.xlu0 %6976
    %6978 = vrot.lane.b32.xlu0 %v6771, 32
    %v6979 = vpop.permute.xlu0 %6978
    %6980 = vrot.lane.b32.xlu0 %v6917, 32
    %v6981 = vpop.permute.xlu0 %6980
    %v6982 = vunpack.c.l.b16 %v5139
    %v6983 = vunpack.c.l.b16 %v5140
    %v6984 = vunpack.c.l.b16 %v5193
    %v6985 = vunpack.c.l.b16 %v5194
    %v6986 = vpack.c.b16 %v6983, %v6982
    %v6987 = vpack.c.b16 %v6985, %v6984
    %6988 = vrot.lane.b32.xlu0 %v6486, 64
    %v6989 = vpop.permute.xlu0 %6988
    %6990 = vrot.lane.b32.xlu0 %v6487, 64
    %v6991 = vpop.permute.xlu0 %6990
    %6992 = vrot.lane.b32.xlu0 %v6488, 64
    %v6993 = vpop.permute.xlu0 %6992
    %6994 = vrot.lane.b32.xlu0 %v6489, 64
    %v6995 = vpop.permute.xlu0 %6994
    %6996 = vrot.lane.b32.xlu0 %v6490, 64
    %v6997 = vpop.permute.xlu0 %6996
    %6998 = vrot.lane.b32.xlu0 %v6491, 64
    %v6999 = vpop.permute.xlu0 %6998
    %7000 = vrot.lane.b32.xlu0 %v6492, 64
    %v7001 = vpop.permute.xlu0 %7000
    %7002 = vrot.lane.b32.xlu0 %v6493, 64
    %v7003 = vpop.permute.xlu0 %7002
    %7004 = vrot.lane.b32.xlu0 %v6494, 64
    %v7005 = vpop.permute.xlu0 %7004
    %7006 = vrot.lane.b32.xlu0 %v6495, 64
    %v7007 = vpop.permute.xlu0 %7006
    %7008 = vrot.lane.b32.xlu0 %v6496, 64
    %v7009 = vpop.permute.xlu0 %7008
    %7010 = vrot.lane.b32.xlu0 %v6497, 64
    %v7011 = vpop.permute.xlu0 %7010
    %7012 = vrot.lane.b32.xlu0 %v6498, 64
    %v7013 = vpop.permute.xlu0 %7012
    %7014 = vrot.lane.b32.xlu0 %v6499, 64
    %v7015 = vpop.permute.xlu0 %7014
    %7016 = vrot.lane.b32.xlu0 %v6840, 64
    %v7017 = vpop.permute.xlu0 %7016
    %7018 = vrot.lane.b32.xlu0 %v6986, 64
    %v7019 = vpop.permute.xlu0 %7018
    %7020 = vrot.lane.b32.xlu0 %v6502, 64
    %v7021 = vpop.permute.xlu0 %7020
    %7022 = vrot.lane.b32.xlu0 %v6503, 64
    %v7023 = vpop.permute.xlu0 %7022
    %7024 = vrot.lane.b32.xlu0 %v6504, 64
    %v7025 = vpop.permute.xlu0 %7024
    %7026 = vrot.lane.b32.xlu0 %v6505, 64
    %v7027 = vpop.permute.xlu0 %7026
    %7028 = vrot.lane.b32.xlu0 %v6506, 64
    %v7029 = vpop.permute.xlu0 %7028
    %7030 = vrot.lane.b32.xlu0 %v6507, 64
    %v7031 = vpop.permute.xlu0 %7030
    %7032 = vrot.lane.b32.xlu0 %v6508, 64
    %v7033 = vpop.permute.xlu0 %7032
    %7034 = vrot.lane.b32.xlu0 %v6509, 64
    %v7035 = vpop.permute.xlu0 %7034
    %7036 = vrot.lane.b32.xlu0 %v6510, 64
    %v7037 = vpop.permute.xlu0 %7036
    %7038 = vrot.lane.b32.xlu0 %v6511, 64
    %v7039 = vpop.permute.xlu0 %7038
    %7040 = vrot.lane.b32.xlu0 %v6512, 64
    %v7041 = vpop.permute.xlu0 %7040
    %7042 = vrot.lane.b32.xlu0 %v6513, 64
    %v7043 = vpop.permute.xlu0 %7042
    %7044 = vrot.lane.b32.xlu0 %v6514, 64
    %v7045 = vpop.permute.xlu0 %7044
    %7046 = vrot.lane.b32.xlu0 %v6515, 64
    %v7047 = vpop.permute.xlu0 %7046
    %7048 = vrot.lane.b32.xlu0 %v6841, 64
    %v7049 = vpop.permute.xlu0 %7048
    %7050 = vrot.lane.b32.xlu0 %v6987, 64
    %v7051 = vpop.permute.xlu0 %7050
    %v7052 = vunpack.c.l.b16 %v6365
    %v7053 = vunpack.c.l.b16 %v6375
    %v7054 = vunpack.c.l.b16 %v6389
    %v7055 = vunpack.c.l.b16 %v6399
    %v7056 = vpack.c.b16 %v7053, %v7052
    %v7057 = vpack.c.b16 %v7055, %v7054
    %7058 = vrot.lane.b32.xlu0 %v6582, 96
    %v7059 = vpop.permute.xlu0 %7058
    %7060 = vrot.lane.b32.xlu0 %v6583, 96
    %v7061 = vpop.permute.xlu0 %7060
    %7062 = vrot.lane.b32.xlu0 %v6584, 96
    %v7063 = vpop.permute.xlu0 %7062
    %7064 = vrot.lane.b32.xlu0 %v6585, 96
    %v7065 = vpop.permute.xlu0 %7064
    %7066 = vrot.lane.b32.xlu0 %v6586, 96
    %v7067 = vpop.permute.xlu0 %7066
    %7068 = vrot.lane.b32.xlu0 %v6587, 96
    %v7069 = vpop.permute.xlu0 %7068
    %7070 = vrot.lane.b32.xlu0 %v6588, 96
    %v7071 = vpop.permute.xlu0 %7070
    %7072 = vrot.lane.b32.xlu0 %v6589, 96
    %v7073 = vpop.permute.xlu0 %7072
    %7074 = vrot.lane.b32.xlu0 %v6590, 96
    %v7075 = vpop.permute.xlu0 %7074
    %7076 = vrot.lane.b32.xlu0 %v6591, 96
    %v7077 = vpop.permute.xlu0 %7076
    %7078 = vrot.lane.b32.xlu0 %v6592, 96
    %v7079 = vpop.permute.xlu0 %7078
    %7080 = vrot.lane.b32.xlu0 %v6593, 96
    %v7081 = vpop.permute.xlu0 %7080
    %7082 = vrot.lane.b32.xlu0 %v6594, 96
    %v7083 = vpop.permute.xlu0 %7082
    %7084 = vrot.lane.b32.xlu0 %v6595, 96
    %v7085 = vpop.permute.xlu0 %7084
    %7086 = vrot.lane.b32.xlu0 %v6910, 96
    %v7087 = vpop.permute.xlu0 %7086
    %7088 = vrot.lane.b32.xlu0 %v7056, 96
    %v7089 = vpop.permute.xlu0 %7088
    %7090 = vrot.lane.b32.xlu0 %v6598, 96
    %v7091 = vpop.permute.xlu0 %7090
    %7092 = vrot.lane.b32.xlu0 %v6599, 96
    %v7093 = vpop.permute.xlu0 %7092
    %7094 = vrot.lane.b32.xlu0 %v6600, 96
    %v7095 = vpop.permute.xlu0 %7094
    %7096 = vrot.lane.b32.xlu0 %v6601, 96
    %v7097 = vpop.permute.xlu0 %7096
    %7098 = vrot.lane.b32.xlu0 %v6602, 96
    %v7099 = vpop.permute.xlu0 %7098
    %7100 = vrot.lane.b32.xlu0 %v6603, 96
    %v7101 = vpop.permute.xlu0 %7100
    %7102 = vrot.lane.b32.xlu0 %v6604, 96
    %v7103 = vpop.permute.xlu0 %7102
    %7104 = vrot.lane.b32.xlu0 %v6605, 96
    %v7105 = vpop.permute.xlu0 %7104
    %7106 = vrot.lane.b32.xlu0 %v6606, 96
    %v7107 = vpop.permute.xlu0 %7106
    %7108 = vrot.lane.b32.xlu0 %v6607, 96
    %v7109 = vpop.permute.xlu0 %7108
    %7110 = vrot.lane.b32.xlu0 %v6608, 96
    %v7111 = vpop.permute.xlu0 %7110
    %7112 = vrot.lane.b32.xlu0 %v6609, 96
    %v7113 = vpop.permute.xlu0 %7112
    %7114 = vrot.lane.b32.xlu0 %v6610, 96
    %v7115 = vpop.permute.xlu0 %7114
    %7116 = vrot.lane.b32.xlu0 %v6611, 96
    %v7117 = vpop.permute.xlu0 %7116
    %7118 = vrot.lane.b32.xlu0 %v6911, 96
    %v7119 = vpop.permute.xlu0 %7118
    %7120 = vrot.lane.b32.xlu0 %v7057, 96
    %v7121 = vpop.permute.xlu0 %7120
    %v7122 = vunpack.c.l.b16 %v6409
    %v7123 = vunpack.c.l.b16 %v6412
    %v7124 = vunpack.c.l.b16 %v6416
    %v7125 = vunpack.c.l.b16 %v6419
    %v7126 = vpack.c.b16 %v7123, %v7122
    %v7127 = vpack.c.b16 %v7125, %v7124
    %v7130 = vsel %vm3726, %v6484, %v6613
    %v7133 = vsel %vm3726, %v6485, %v6615
    %v7136 = vsel %vm3726, %v6486, %v6617
    %v7139 = vsel %vm3726, %v6487, %v6619
    %v7142 = vsel %vm3726, %v6488, %v6621
    %v7145 = vsel %vm3726, %v6489, %v6623
    %v7148 = vsel %vm3726, %v6490, %v6625
    %v7151 = vsel %vm3726, %v6491, %v6627
    %v7154 = vsel %vm3726, %v6492, %v6629
    %v7157 = vsel %vm3726, %v6493, %v6631
    %v7160 = vsel %vm3726, %v6494, %v6633
    %v7163 = vsel %vm3726, %v6495, %v6635
    %v7166 = vsel %vm3726, %v6496, %v6637
    %v7169 = vsel %vm3726, %v6497, %v6639
    %v7172 = vsel %vm3726, %v6498, %v6641
    %v7175 = vsel %vm3726, %v6499, %v6643
    %v7178 = vsel %vm3726, %v6500, %v6645
    %v7181 = vsel %vm3726, %v6501, %v6647
    %v7184 = vsel %vm3726, %v6502, %v6649
    %v7187 = vsel %vm3726, %v6503, %v6651
    %v7190 = vsel %vm3726, %v6504, %v6653
    %v7193 = vsel %vm3726, %v6505, %v6655
    %v7196 = vsel %vm3726, %v6506, %v6657
    %v7199 = vsel %vm3726, %v6507, %v6659
    %v7202 = vsel %vm3726, %v6508, %v6661
    %v7205 = vsel %vm3726, %v6509, %v6663
    %v7208 = vsel %vm3726, %v6510, %v6665
    %v7211 = vsel %vm3726, %v6511, %v6667
    %v7214 = vsel %vm3726, %v6512, %v6669
    %v7217 = vsel %vm3726, %v6513, %v6671
    %v7220 = vsel %vm3726, %v6514, %v6673
    %v7223 = vsel %vm3726, %v6515, %v6675
    %vm7224 = vcmask 523264
    %v7226 = vsel %vm7224, %v7130, %v6773
    %v7228 = vsel %vm7224, %v7133, %v6775
    %v7230 = vsel %vm7224, %v7136, %v6777
    %v7232 = vsel %vm7224, %v7139, %v6779
    %v7234 = vsel %vm7224, %v7142, %v6781
    %v7236 = vsel %vm7224, %v7145, %v6783
    %v7238 = vsel %vm7224, %v7148, %v6785
    %v7240 = vsel %vm7224, %v7151, %v6787
    %v7242 = vsel %vm7224, %v7154, %v6789
    %v7244 = vsel %vm7224, %v7157, %v6791
    %v7246 = vsel %vm7224, %v7160, %v6793
    %v7248 = vsel %vm7224, %v7163, %v6795
    %v7250 = vsel %vm7224, %v7166, %v6797
    %v7252 = vsel %vm7224, %v7169, %v6799
    %v7254 = vsel %vm7224, %v7172, %v6801
    %v7256 = vsel %vm7224, %v7175, %v6803
    %v7258 = vsel %vm7224, %v7178, %v6805
    %v7260 = vsel %vm7224, %v7181, %v6807
    %v7262 = vsel %vm7224, %v7184, %v6809
    %v7264 = vsel %vm7224, %v7187, %v6811
    %v7266 = vsel %vm7224, %v7190, %v6813
    %v7268 = vsel %vm7224, %v7193, %v6815
    %v7270 = vsel %vm7224, %v7196, %v6817
    %v7272 = vsel %vm7224, %v7199, %v6819
    %v7274 = vsel %vm7224, %v7202, %v6821
    %v7276 = vsel %vm7224, %v7205, %v6823
    %v7278 = vsel %vm7224, %v7208, %v6825
    %v7280 = vsel %vm7224, %v7211, %v6827
    %v7282 = vsel %vm7224, %v7214, %v6829
    %v7284 = vsel %vm7224, %v7217, %v6831
    %v7286 = vsel %vm7224, %v7220, %v6833
    %v7288 = vsel %vm7224, %v7223, %v6835
    %vm7289 = vcmask 785408
    %v7291 = vsel %vm7289, %v7226, %v6843
    %v7294 = vsel %vm7289, %v7228, %v6845
    %v7297 = vsel %vm7289, %v7230, %v6847
    %v7300 = vsel %vm7289, %v7232, %v6849
    %v7303 = vsel %vm7289, %v7234, %v6851
    %v7306 = vsel %vm7289, %v7236, %v6853
    %v7309 = vsel %vm7289, %v7238, %v6855
    %v7312 = vsel %vm7289, %v7240, %v6857
    %v7315 = vsel %vm7289, %v7242, %v6859
    %v7318 = vsel %vm7289, %v7244, %v6861
    %v7321 = vsel %vm7289, %v7246, %v6863
    %v7324 = vsel %vm7289, %v7248, %v6865
    %v7327 = vsel %vm7289, %v7250, %v6867
    %v7330 = vsel %vm7289, %v7252, %v6869
    %v7333 = vsel %vm7289, %v7254, %v6871
    %v7336 = vsel %vm7289, %v7256, %v6873
    %v7339 = vsel %vm7289, %v7258, %v6875
    %v7342 = vsel %vm7289, %v7260, %v6877
    %v7345 = vsel %vm7289, %v7262, %v6879
    %v7348 = vsel %vm7289, %v7264, %v6881
    %v7351 = vsel %vm7289, %v7266, %v6883
    %v7354 = vsel %vm7289, %v7268, %v6885
    %v7357 = vsel %vm7289, %v7270, %v6887
    %v7360 = vsel %vm7289, %v7272, %v6889
    %v7363 = vsel %vm7289, %v7274, %v6891
    %v7366 = vsel %vm7289, %v7276, %v6893
    %v7369 = vsel %vm7289, %v7278, %v6895
    %v7372 = vsel %vm7289, %v7280, %v6897
    %v7375 = vsel %vm7289, %v7282, %v6899
    %v7378 = vsel %vm7289, %v7284, %v6901
    %v7381 = vsel %vm7289, %v7286, %v6903
    %v7384 = vsel %vm7289, %v7288, %v6905
    %v7388 = vsel %vm3726, %v6581, %v6919
    %v7391 = vsel %vm3726, %v6582, %v6921
    %v7394 = vsel %vm3726, %v6583, %v6923
    %v7397 = vsel %vm3726, %v6584, %v6925
    %v7400 = vsel %vm3726, %v6585, %v6927
    %v7403 = vsel %vm3726, %v6586, %v6929
    %v7406 = vsel %vm3726, %v6587, %v6931
    %v7409 = vsel %vm3726, %v6588, %v6933
    %v7412 = vsel %vm3726, %v6589, %v6935
    %v7415 = vsel %vm3726, %v6590, %v6937
    %v7418 = vsel %vm3726, %v6591, %v6939
    %v7421 = vsel %vm3726, %v6592, %v6941
    %v7424 = vsel %vm3726, %v6593, %v6943
    %v7427 = vsel %vm3726, %v6594, %v6945
    %v7430 = vsel %vm3726, %v6595, %v6947
    %v7433 = vsel %vm3726, %v6910, %v6949
    %v7436 = vsel %vm3726, %v6597, %v6951
    %v7439 = vsel %vm3726, %v6598, %v6953
    %v7442 = vsel %vm3726, %v6599, %v6955
    %v7445 = vsel %vm3726, %v6600, %v6957
    %v7448 = vsel %vm3726, %v6601, %v6959
    %v7451 = vsel %vm3726, %v6602, %v6961
    %v7454 = vsel %vm3726, %v6603, %v6963
    %v7457 = vsel %vm3726, %v6604, %v6965
    %v7460 = vsel %vm3726, %v6605, %v6967
    %v7463 = vsel %vm3726, %v6606, %v6969
    %v7466 = vsel %vm3726, %v6607, %v6971
    %v7469 = vsel %vm3726, %v6608, %v6973
    %v7472 = vsel %vm3726, %v6609, %v6975
    %v7475 = vsel %vm3726, %v6610, %v6977
    %v7478 = vsel %vm3726, %v6611, %v6979
    %v7481 = vsel %vm3726, %v6911, %v6981
    %v7483 = vsel %vm7224, %v7388, %v6989
    %v7485 = vsel %vm7224, %v7391, %v6991
    %v7487 = vsel %vm7224, %v7394, %v6993
    %v7489 = vsel %vm7224, %v7397, %v6995
    %v7491 = vsel %vm7224, %v7400, %v6997
    %v7493 = vsel %vm7224, %v7403, %v6999
    %v7495 = vsel %vm7224, %v7406, %v7001
    %v7497 = vsel %vm7224, %v7409, %v7003
    %v7499 = vsel %vm7224, %v7412, %v7005
    %v7501 = vsel %vm7224, %v7415, %v7007
    %v7503 = vsel %vm7224, %v7418, %v7009
    %v7505 = vsel %vm7224, %v7421, %v7011
    %v7507 = vsel %vm7224, %v7424, %v7013
    %v7509 = vsel %vm7224, %v7427, %v7015
    %v7511 = vsel %vm7224, %v7430, %v7017
    %v7513 = vsel %vm7224, %v7433, %v7019
    %v7515 = vsel %vm7224, %v7436, %v7021
    %v7517 = vsel %vm7224, %v7439, %v7023
    %v7519 = vsel %vm7224, %v7442, %v7025
    %v7521 = vsel %vm7224, %v7445, %v7027
    %v7523 = vsel %vm7224, %v7448, %v7029
    %v7525 = vsel %vm7224, %v7451, %v7031
    %v7527 = vsel %vm7224, %v7454, %v7033
    %v7529 = vsel %vm7224, %v7457, %v7035
    %v7531 = vsel %vm7224, %v7460, %v7037
    %v7533 = vsel %vm7224, %v7463, %v7039
    %v7535 = vsel %vm7224, %v7466, %v7041
    %v7537 = vsel %vm7224, %v7469, %v7043
    %v7539 = vsel %vm7224, %v7472, %v7045
    %v7541 = vsel %vm7224, %v7475, %v7047
    %v7543 = vsel %vm7224, %v7478, %v7049
    %v7545 = vsel %vm7224, %v7481, %v7051
    %v7547 = vsel %vm7289, %v7483, %v7059
    %v7550 = vsel %vm7289, %v7485, %v7061
    %v7553 = vsel %vm7289, %v7487, %v7063
    %v7556 = vsel %vm7289, %v7489, %v7065
    %v7559 = vsel %vm7289, %v7491, %v7067
    %v7562 = vsel %vm7289, %v7493, %v7069
    %v7565 = vsel %vm7289, %v7495, %v7071
    %v7568 = vsel %vm7289, %v7497, %v7073
    %v7571 = vsel %vm7289, %v7499, %v7075
    %v7574 = vsel %vm7289, %v7501, %v7077
    %v7577 = vsel %vm7289, %v7503, %v7079
    %v7580 = vsel %vm7289, %v7505, %v7081
    %v7583 = vsel %vm7289, %v7507, %v7083
    %v7586 = vsel %vm7289, %v7509, %v7085
    %v7589 = vsel %vm7289, %v7511, %v7087
    %v7592 = vsel %vm7289, %v7513, %v7089
    %v7595 = vsel %vm7289, %v7515, %v7091
    %v7598 = vsel %vm7289, %v7517, %v7093
    %v7601 = vsel %vm7289, %v7519, %v7095
    %v7604 = vsel %vm7289, %v7521, %v7097
    %v7607 = vsel %vm7289, %v7523, %v7099
    %v7610 = vsel %vm7289, %v7525, %v7101
    %v7613 = vsel %vm7289, %v7527, %v7103
    %v7616 = vsel %vm7289, %v7529, %v7105
    %v7619 = vsel %vm7289, %v7531, %v7107
    %v7622 = vsel %vm7289, %v7533, %v7109
    %v7625 = vsel %vm7289, %v7535, %v7111
    %v7628 = vsel %vm7289, %v7537, %v7113
    %v7631 = vsel %vm7289, %v7539, %v7115
    %v7634 = vsel %vm7289, %v7541, %v7117
    %v7637 = vsel %vm7289, %v7543, %v7119
    %v7640 = vsel %vm7289, %v7545, %v7121
    %v7642 = vld [vmem:[%s3] sm:$0xf]
    %v7643 = vld [vmem:[%s3 + $0x4] sm:$0xf]
    %v7644 = vld [vmem:[%s3 + $0x8] sm:$0xf]
    %v7645 = vld [vmem:[%s3 + $0xc] sm:$0xf]
    %v7646 = vld [vmem:[%s3 + $0x10] sm:$0xf]
    %v7647 = vld [vmem:[%s3 + $0x14] sm:$0xf]
    %v7648 = vld [vmem:[%s3 + $0x18] sm:$0xf]
    %v7649 = vld [vmem:[%s3 + $0x1c] sm:$0xf]
    %v7650 = vld [vmem:[%s3 + $0x20] sm:$0xf]
    %v7651 = vld [vmem:[%s3 + $0x24] sm:$0xf]
    %v7652 = vld [vmem:[%s3 + $0x28] sm:$0xf]
    %v7653 = vld [vmem:[%s3 + $0x2c] sm:$0xf]
    %v7654 = vld [vmem:[%s3 + $0x30] sm:$0xf]
    %v7655 = vld [vmem:[%s3 + $0x34] sm:$0xf]
    %v7656 = vld [vmem:[%s3 + $0x38] sm:$0xf]
    %v7657 = vld [vmem:[%s3 + $0x3c] sm:$0xf]
    %v7658 = vld [vmem:[%s3 + $0x40] sm:$0xf]
    %v7659 = vld [vmem:[%s3 + $0x44] sm:$0xf]
    %v7660 = vld [vmem:[%s3 + $0x48] sm:$0xf]
    %v7661 = vld [vmem:[%s3 + $0x4c] sm:$0xf]
    %v7662 = vld [vmem:[%s3 + $0x50] sm:$0xf]
    %v7663 = vld [vmem:[%s3 + $0x54] sm:$0xf]
    %v7664 = vld [vmem:[%s3 + $0x58] sm:$0xf]
    %v7665 = vld [vmem:[%s3 + $0x5c] sm:$0xf]
    %v7666 = vld [vmem:[%s3 + $0x60] sm:$0xf]
    %v7667 = vld [vmem:[%s3 + $0x64] sm:$0xf]
    %v7668 = vld [vmem:[%s3 + $0x68] sm:$0xf]
    %v7669 = vld [vmem:[%s3 + $0x6c] sm:$0xf]
    %v7670 = vld [vmem:[%s3 + $0x70] sm:$0xf]
    %v7671 = vld [vmem:[%s3 + $0x74] sm:$0xf]
    %v7672 = vld [vmem:[%s3 + $0x78] sm:$0xf]
    %v7673 = vld [vmem:[%s3 + $0x7c] sm:$0xf]
    %v7674 = vld [vmem:[%s3 + $0x80] sm:$0xf]
    %v7675 = vld [vmem:[%s3 + $0x84] sm:$0xf]
    %v7676 = vld [vmem:[%s3 + $0x88] sm:$0xf]
    %v7677 = vld [vmem:[%s3 + $0x8c] sm:$0xf]
    %v7678 = vld [vmem:[%s4] sm:$0x1]
    %v7680 = vlaneseq
    %v7681 = vshrl.u32 %v7680, 7
    %v7682 = vsub.s32 0, %v7681
    %v7683 = vrot.slane %v7678, %v7682
    %v7721 = vunpack.c.l.b16 %v7642
    %v7722 = vunpack.c.l.b16 %v7643
    %v7723 = vunpack.c.l.b16 %v7644
    %v7724 = vunpack.c.l.b16 %v7645
    %v7725 = vunpack.c.l.b16 %v7646
    %v7726 = vunpack.c.l.b16 %v7647
    %v7727 = vunpack.c.l.b16 %v7648
    %v7728 = vunpack.c.l.b16 %v7649
    %v7729 = vunpack.c.l.b16 %v7650
    %v7730 = vunpack.c.l.b16 %v7651
    %v7731 = vunpack.c.l.b16 %v7652
    %v7732 = vunpack.c.l.b16 %v7653
    %v7733 = vunpack.c.l.b16 %v7654
    %v7734 = vunpack.c.l.b16 %v7655
    %v7735 = vunpack.c.l.b16 %v7656
    %v7736 = vunpack.c.l.b16 %v7657
    %v7737 = vunpack.c.l.b16 %v7658
    %v7738 = vunpack.c.l.b16 %v7659
    %v7739 = vunpack.c.l.b16 %v7660
    %v7740 = vunpack.c.l.b16 %v7661
    %v7741 = vunpack.c.l.b16 %v7662
    %v7742 = vunpack.c.l.b16 %v7663
    %v7743 = vunpack.c.l.b16 %v7664
    %v7744 = vunpack.c.l.b16 %v7665
    %v7745 = vunpack.c.l.b16 %v7666
    %v7746 = vunpack.c.l.b16 %v7667
    %v7747 = vunpack.c.l.b16 %v7668
    %v7748 = vunpack.c.l.b16 %v7669
    %v7749 = vunpack.c.l.b16 %v7670
    %v7750 = vunpack.c.l.b16 %v7671
    %v7751 = vunpack.c.l.b16 %v7672
    %v7752 = vunpack.c.l.b16 %v7673
    %v7753 = vunpack.c.l.b16 %v7674
    %v7754 = vunpack.c.l.b16 %v7675
    %v7755 = vunpack.c.l.b16 %v7676
    %v7756 = vunpack.c.l.b16 %v7677
    %v7757 = vpack.c.b16 %v7722, %v7721
    %v7758 = vpack.c.b16 %v7724, %v7723
    %v7759 = vpack.c.b16 %v7726, %v7725
    %v7760 = vpack.c.b16 %v7728, %v7727
    %v7761 = vpack.c.b16 %v7730, %v7729
    %v7762 = vpack.c.b16 %v7732, %v7731
    %v7763 = vpack.c.b16 %v7734, %v7733
    %v7764 = vpack.c.b16 %v7736, %v7735
    %v7765 = vpack.c.b16 %v7738, %v7737
    %v7766 = vpack.c.b16 %v7740, %v7739
    %v7767 = vpack.c.b16 %v7742, %v7741
    %v7768 = vpack.c.b16 %v7744, %v7743
    %v7769 = vpack.c.b16 %v7746, %v7745
    %v7770 = vpack.c.b16 %v7748, %v7747
    %v7771 = vpack.c.b16 %v7750, %v7749
    %v7772 = vpack.c.b16 %v7752, %v7751
    %v7773 = vpack.c.b16 %v7754, %v7753
    %v7774 = vpack.c.b16 %v7756, %v7755
    %v7794 = vsel %vm3726, %v6742, 0
    %v7797 = vsel %vm3726, %v6743, 0
    %v7800 = vsel %vm3726, %v6744, 0
    %v7803 = vsel %vm3726, %v6745, 0
    %v7806 = vsel %vm3726, %v6746, 0
    %v7809 = vsel %vm3726, %v6747, 0
    %v7812 = vsel %vm3726, %v6748, 0
    %v7815 = vsel %vm3726, %v6749, 0
    %v7818 = vsel %vm3726, %v6750, 0
    %v7821 = vsel %vm3726, %v6751, 0
    %v7824 = vsel %vm3726, %v6752, 0
    %v7827 = vsel %vm3726, %v6753, 0
    %v7830 = vsel %vm3726, %v6754, 0
    %v7833 = vsel %vm3726, %v6755, 0
    %v7836 = vsel %vm3726, %v6916, 0
    %v7839 = vsel %vm3726, %v7126, 0
    %v7842 = vsel %vm3726, %v6758, 0
    %v7845 = vsel %vm3726, %v6759, 0
    %v7848 = vsel %vm3726, %v6760, 0
    %v7851 = vsel %vm3726, %v6761, 0
    %v7854 = vsel %vm3726, %v6762, 0
    %v7857 = vsel %vm3726, %v6763, 0
    %v7860 = vsel %vm3726, %v6764, 0
    %v7863 = vsel %vm3726, %v6765, 0
    %v7866 = vsel %vm3726, %v6766, 0
    %v7869 = vsel %vm3726, %v6767, 0
    %v7872 = vsel %vm3726, %v6768, 0
    %v7875 = vsel %vm3726, %v6769, 0
    %v7878 = vsel %vm3726, %v6770, 0
    %v7881 = vsel %vm3726, %v6771, 0
    %v7884 = vsel %vm3726, %v6917, 0
    %v7887 = vsel %vm3726, %v7127, 0
    %7889 = vmatprep.subr.bf16.mxu0 0
    %7890 = vmatpush1.bf16.msra.mxu0 %v7757
    %7891 = vmatprep.subr.bf16.mxu0 0
    %7892 = vmatpush1.bf16.msra.mxu0 %v7758
    %7893 = vmatprep.subr.bf16.mxu0 0
    %7894 = vmatpush1.bf16.msra.mxu0 %v7759
    %7895 = vmatprep.subr.bf16.mxu0 0
    %7896 = vmatpush1.bf16.msra.mxu0 %v7760
    %7897 = vmatprep.subr.bf16.mxu0 0
    %7898 = vmatpush1.bf16.msra.mxu0 %v7761
    %7899 = vmatprep.subr.bf16.mxu0 0
    %7900 = vmatpush1.bf16.msra.mxu0 %v7762
    %7901 = vmatprep.subr.bf16.mxu0 0
    %7902 = vmatpush1.bf16.msra.mxu0 %v7763
    %7903 = vmatprep.subr.bf16.mxu0 0
    %7904 = vmatpush1.bf16.msra.mxu0 %v7764
    %7905 = vmatprep.subr.bf16.mxu0 0
    %7906 = vmatpush1.bf16.msra.mxu0 %v7765
    %7907 = vmatprep.subr.bf16.mxu0 0
    %7908 = vmatpush1.bf16.msra.mxu0 %v7766
    %7909 = vmatprep.subr.bf16.mxu0 0
    %7910 = vmatpush1.bf16.msra.mxu0 %v7767
    %7911 = vmatprep.subr.bf16.mxu0 0
    %7912 = vmatpush1.bf16.msra.mxu0 %v7768
    %7913 = vmatprep.subr.bf16.mxu0 0
    %7914 = vmatpush1.bf16.msra.mxu0 %v7769
    %7915 = vmatprep.subr.bf16.mxu0 0
    %7916 = vmatpush1.bf16.msra.mxu0 %v7770
    %7917 = vmatprep.subr.bf16.mxu0 0
    %7918 = vmatpush1.bf16.msra.mxu0 %v7771
    %7919 = vmatprep.subr.bf16.mxu0 0
    %7920 = vmatpush1.bf16.msra.mxu0 %v7772
    %7921 = vmatprep.mubr.bf16.mxu0 %v7547
    %7922 = vmatmul.mubr.bf16.gmra.mrb[0].mxu0 %v7291
    %v7923 = vpop.f32.mrb[0].mxu0
    %v7924 = vadd.f32 %v7683, %v7923
    %v7925 = vpop.f32.mrb[0].mxu0
    %v7926 = vpop.f32.mrb[0].mxu0
    %v7927 = vadd.f32 %v7683, %v7926
    %v7928 = vpop.f32.mrb[0].mxu0
    %7929 = vmatprep.mubr.bf16.mxu0 %v7550
    %7930 = vmatmul.mubr.bf16.gmra.mrb[0].mxu0 %v7294
    %v7931 = vpop.f32.mrb[0].mxu0
    %v7932 = vadd.f32 %v7683, %v7931
    %v7933 = vpop.f32.mrb[0].mxu0
    %v7934 = vpop.f32.mrb[0].mxu0
    %v7935 = vadd.f32 %v7683, %v7934
    %v7936 = vpop.f32.mrb[0].mxu0
    %7937 = vmatprep.mubr.bf16.mxu0 %v7553
    %7938 = vmatmul.mubr.bf16.gmra.mrb[0].mxu0 %v7297
    %v7939 = vpop.f32.mrb[0].mxu0
    %v7940 = vadd.f32 %v7683, %v7939
    %v7941 = vpop.f32.mrb[0].mxu0
    %v7942 = vpop.f32.mrb[0].mxu0
    %v7943 = vadd.f32 %v7683, %v7942
    %v7944 = vpop.f32.mrb[0].mxu0
    %7945 = vmatprep.mubr.bf16.mxu0 %v7556
    %7946 = vmatmul.mubr.bf16.gmra.mrb[0].mxu0 %v7300
    %v7947 = vpop.f32.mrb[0].mxu0
    %v7948 = vadd.f32 %v7683, %v7947
    %v7949 = vpop.f32.mrb[0].mxu0
    %v7950 = vpop.f32.mrb[0].mxu0
    %v7951 = vadd.f32 %v7683, %v7950
    %v7952 = vpop.f32.mrb[0].mxu0
    %7953 = vmatprep.mubr.bf16.mxu0 %v7559
    %7954 = vmatmul.mubr.bf16.gmra.mrb[0].mxu0 %v7303
    %v7955 = vpop.f32.mrb[0].mxu0
    %v7956 = vadd.f32 %v7683, %v7955
    %v7957 = vpop.f32.mrb[0].mxu0
    %v7958 = vpop.f32.mrb[0].mxu0
    %v7959 = vadd.f32 %v7683, %v7958
    %v7960 = vpop.f32.mrb[0].mxu0
    %7961 = vmatprep.mubr.bf16.mxu0 %v7562
    %7962 = vmatmul.mubr.bf16.gmra.mrb[0].mxu0 %v7306
    %v7963 = vpop.f32.mrb[0].mxu0
    %v7964 = vadd.f32 %v7683, %v7963
    %v7965 = vpop.f32.mrb[0].mxu0
    %v7966 = vpop.f32.mrb[0].mxu0
    %v7967 = vadd.f32 %v7683, %v7966
    %v7968 = vpop.f32.mrb[0].mxu0
    %7969 = vmatprep.mubr.bf16.mxu0 %v7565
    %7970 = vmatmul.mubr.bf16.gmra.mrb[0].mxu0 %v7309
    %v7971 = vpop.f32.mrb[0].mxu0
    %v7972 = vadd.f32 %v7683, %v7971
    %v7973 = vpop.f32.mrb[0].mxu0
    %v7974 = vpop.f32.mrb[0].mxu0
    %v7975 = vadd.f32 %v7683, %v7974
    %v7976 = vpop.f32.mrb[0].mxu0
    %7977 = vmatprep.mubr.bf16.mxu0 %v7568
    %7978 = vmatmul.mubr.bf16.gmra.mrb[0].mxu0 %v7312
    %v7979 = vpop.f32.mrb[0].mxu0
    %v7980 = vadd.f32 %v7683, %v7979
    %v7981 = vpop.f32.mrb[0].mxu0
    %v7982 = vpop.f32.mrb[0].mxu0
    %v7983 = vadd.f32 %v7683, %v7982
    %v7984 = vpop.f32.mrb[0].mxu0
    %7985 = vmatprep.mubr.bf16.mxu0 %v7571
    %7986 = vmatmul.mubr.bf16.gmra.mrb[0].mxu0 %v7315
    %v7987 = vpop.f32.mrb[0].mxu0
    %v7988 = vadd.f32 %v7683, %v7987
    %v7989 = vpop.f32.mrb[0].mxu0
    %v7990 = vpop.f32.mrb[0].mxu0
    %v7991 = vadd.f32 %v7683, %v7990
    %v7992 = vpop.f32.mrb[0].mxu0
    %7993 = vmatprep.mubr.bf16.mxu0 %v7574
    %7994 = vmatmul.mubr.bf16.gmra.mrb[0].mxu0 %v7318
    %v7995 = vpop.f32.mrb[0].mxu0
    %v7996 = vadd.f32 %v7683, %v7995
    %v7997 = vpop.f32.mrb[0].mxu0
    %v7998 = vpop.f32.mrb[0].mxu0
    %v7999 = vadd.f32 %v7683, %v7998
    %v8000 = vpop.f32.mrb[0].mxu0
    %8001 = vmatprep.mubr.bf16.mxu0 %v7577
    %8002 = vmatmul.mubr.bf16.gmra.mrb[0].mxu0 %v7321
    %v8003 = vpop.f32.mrb[0].mxu0
    %v8004 = vadd.f32 %v7683, %v8003
    %v8005 = vpop.f32.mrb[0].mxu0
    %v8006 = vpop.f32.mrb[0].mxu0
    %v8007 = vadd.f32 %v7683, %v8006
    %v8008 = vpop.f32.mrb[0].mxu0
    %8009 = vmatprep.mubr.bf16.mxu0 %v7580
    %8010 = vmatmul.mubr.bf16.gmra.mrb[0].mxu0 %v7324
    %v8011 = vpop.f32.mrb[0].mxu0
    %v8012 = vadd.f32 %v7683, %v8011
    %v8013 = vpop.f32.mrb[0].mxu0
    %v8014 = vpop.f32.mrb[0].mxu0
    %v8015 = vadd.f32 %v7683, %v8014
    %v8016 = vpop.f32.mrb[0].mxu0
    %8017 = vmatprep.mubr.bf16.mxu0 %v7583
    %8018 = vmatmul.mubr.bf16.gmra.mrb[0].mxu0 %v7327
    %v8019 = vpop.f32.mrb[0].mxu0
    %v8020 = vadd.f32 %v7683, %v8019
    %v8021 = vpop.f32.mrb[0].mxu0
    %v8022 = vpop.f32.mrb[0].mxu0
    %v8023 = vadd.f32 %v7683, %v8022
    %v8024 = vpop.f32.mrb[0].mxu0
    %8025 = vmatprep.mubr.bf16.mxu0 %v7586
    %8026 = vmatmul.mubr.bf16.gmra.mrb[0].mxu0 %v7330
    %v8027 = vpop.f32.mrb[0].mxu0
    %v8028 = vadd.f32 %v7683, %v8027
    %v8029 = vpop.f32.mrb[0].mxu0
    %v8030 = vpop.f32.mrb[0].mxu0
    %v8031 = vadd.f32 %v7683, %v8030
    %v8032 = vpop.f32.mrb[0].mxu0
    %8033 = vmatprep.mubr.bf16.mxu0 %v7589
    %8034 = vmatmul.mubr.bf16.gmra.mrb[0].mxu0 %v7333
    %v8035 = vpop.f32.mrb[0].mxu0
    %v8036 = vadd.f32 %v7683, %v8035
    %v8037 = vpop.f32.mrb[0].mxu0
    %v8038 = vpop.f32.mrb[0].mxu0
    %v8039 = vadd.f32 %v7683, %v8038
    %v8040 = vpop.f32.mrb[0].mxu0
    %8041 = vmatprep.mubr.bf16.mxu0 %v7592
    %8042 = vmatmul.mubr.bf16.gmra.mrb[0].mxu0 %v7336
    %v8043 = vpop.f32.mrb[0].mxu0
    %v8044 = vadd.f32 %v7683, %v8043
    %v8045 = vpop.f32.mrb[0].mxu0
    %v8046 = vpop.f32.mrb[0].mxu0
    %v8047 = vadd.f32 %v7683, %v8046
    %v8048 = vpop.f32.mrb[0].mxu0
    %8049 = vmatprep.mubr.bf16.mxu0 %v7595
    %8050 = vmatmul.mubr.bf16.gmra.mrb[0].mxu0 %v7339
    %v8051 = vpop.f32.mrb[0].mxu0
    %v8052 = vadd.f32 %v7683, %v8051
    %v8053 = vpop.f32.mrb[0].mxu0
    %v8054 = vpop.f32.mrb[0].mxu0
    %v8055 = vadd.f32 %v7683, %v8054
    %v8056 = vpop.f32.mrb[0].mxu0
    %8057 = vmatprep.mubr.bf16.mxu0 %v7598
    %8058 = vmatmul.mubr.bf16.gmra.mrb[0].mxu0 %v7342
    %v8059 = vpop.f32.mrb[0].mxu0
    %v8060 = vadd.f32 %v7683, %v8059
    %v8061 = vpop.f32.mrb[0].mxu0
    %v8062 = vpop.f32.mrb[0].mxu0
    %v8063 = vadd.f32 %v7683, %v8062
    %v8064 = vpop.f32.mrb[0].mxu0
    %8065 = vmatprep.mubr.bf16.mxu0 %v7601
    %8066 = vmatmul.mubr.bf16.gmra.mrb[0].mxu0 %v7345
    %v8067 = vpop.f32.mrb[0].mxu0
    %v8068 = vadd.f32 %v7683, %v8067
    %v8069 = vpop.f32.mrb[0].mxu0
    %v8070 = vpop.f32.mrb[0].mxu0
    %v8071 = vadd.f32 %v7683, %v8070
    %v8072 = vpop.f32.mrb[0].mxu0
    %8073 = vmatprep.mubr.bf16.mxu0 %v7604
    %8074 = vmatmul.mubr.bf16.gmra.mrb[0].mxu0 %v7348
    %v8075 = vpop.f32.mrb[0].mxu0
    %v8076 = vadd.f32 %v7683, %v8075
    %v8077 = vpop.f32.mrb[0].mxu0
    %v8078 = vpop.f32.mrb[0].mxu0
    %v8079 = vadd.f32 %v7683, %v8078
    %v8080 = vpop.f32.mrb[0].mxu0
    %8081 = vmatprep.mubr.bf16.mxu0 %v7607
    %8082 = vmatmul.mubr.bf16.gmra.mrb[0].mxu0 %v7351
    %v8083 = vpop.f32.mrb[0].mxu0
    %v8084 = vadd.f32 %v7683, %v8083
    %v8085 = vpop.f32.mrb[0].mxu0
    %v8086 = vpop.f32.mrb[0].mxu0
    %v8087 = vadd.f32 %v7683, %v8086
    %v8088 = vpop.f32.mrb[0].mxu0
    %8089 = vmatprep.mubr.bf16.mxu0 %v7610
    %8090 = vmatmul.mubr.bf16.gmra.mrb[0].mxu0 %v7354
    %v8091 = vpop.f32.mrb[0].mxu0
    %v8092 = vadd.f32 %v7683, %v8091
    %v8093 = vpop.f32.mrb[0].mxu0
    %v8094 = vpop.f32.mrb[0].mxu0
    %v8095 = vadd.f32 %v7683, %v8094
    %v8096 = vpop.f32.mrb[0].mxu0
    %8097 = vmatprep.mubr.bf16.mxu0 %v7613
    %8098 = vmatmul.mubr.bf16.gmra.mrb[0].mxu0 %v7357
    %v8099 = vpop.f32.mrb[0].mxu0
    %v8100 = vadd.f32 %v7683, %v8099
    %v8101 = vpop.f32.mrb[0].mxu0
    %v8102 = vpop.f32.mrb[0].mxu0
    %v8103 = vadd.f32 %v7683, %v8102
    %v8104 = vpop.f32.mrb[0].mxu0
    %8105 = vmatprep.mubr.bf16.mxu0 %v7616
    %8106 = vmatmul.mubr.bf16.gmra.mrb[0].mxu0 %v7360
    %v8107 = vpop.f32.mrb[0].mxu0
    %v8108 = vadd.f32 %v7683, %v8107
    %v8109 = vpop.f32.mrb[0].mxu0
    %v8110 = vpop.f32.mrb[0].mxu0
    %v8111 = vadd.f32 %v7683, %v8110
    %v8112 = vpop.f32.mrb[0].mxu0
    %8113 = vmatprep.mubr.bf16.mxu0 %v7619
    %8114 = vmatmul.mubr.bf16.gmra.mrb[0].mxu0 %v7363
    %v8115 = vpop.f32.mrb[0].mxu0
    %v8116 = vadd.f32 %v7683, %v8115
    %v8117 = vpop.f32.mrb[0].mxu0
    %v8118 = vpop.f32.mrb[0].mxu0
    %v8119 = vadd.f32 %v7683, %v8118
    %v8120 = vpop.f32.mrb[0].mxu0
    %8121 = vmatprep.mubr.bf16.mxu0 %v7622
    %8122 = vmatmul.mubr.bf16.gmra.mrb[0].mxu0 %v7366
    %v8123 = vpop.f32.mrb[0].mxu0
    %v8124 = vadd.f32 %v7683, %v8123
    %v8125 = vpop.f32.mrb[0].mxu0
    %v8126 = vpop.f32.mrb[0].mxu0
    %v8127 = vadd.f32 %v7683, %v8126
    %v8128 = vpop.f32.mrb[0].mxu0
    %8129 = vmatprep.mubr.bf16.mxu0 %v7625
    %8130 = vmatmul.mubr.bf16.gmra.mrb[0].mxu0 %v7369
    %v8131 = vpop.f32.mrb[0].mxu0
    %v8132 = vadd.f32 %v7683, %v8131
    %v8133 = vpop.f32.mrb[0].mxu0
    %v8134 = vpop.f32.mrb[0].mxu0
    %v8135 = vadd.f32 %v7683, %v8134
    %v8136 = vpop.f32.mrb[0].mxu0
    %8137 = vmatprep.mubr.bf16.mxu0 %v7628
    %8138 = vmatmul.mubr.bf16.gmra.mrb[0].mxu0 %v7372
    %v8139 = vpop.f32.mrb[0].mxu0
    %v8140 = vadd.f32 %v7683, %v8139
    %v8141 = vpop.f32.mrb[0].mxu0
    %v8142 = vpop.f32.mrb[0].mxu0
    %v8143 = vadd.f32 %v7683, %v8142
    %v8144 = vpop.f32.mrb[0].mxu0
    %8145 = vmatprep.mubr.bf16.mxu0 %v7631
    %8146 = vmatmul.mubr.bf16.gmra.mrb[0].mxu0 %v7375
    %v8147 = vpop.f32.mrb[0].mxu0
    %v8148 = vadd.f32 %v7683, %v8147
    %v8149 = vpop.f32.mrb[0].mxu0
    %v8150 = vpop.f32.mrb[0].mxu0
    %v8151 = vadd.f32 %v7683, %v8150
    %v8152 = vpop.f32.mrb[0].mxu0
    %8153 = vmatprep.mubr.bf16.mxu0 %v7634
    %8154 = vmatmul.mubr.bf16.gmra.mrb[0].mxu0 %v7378
    %v8155 = vpop.f32.mrb[0].mxu0
    %v8156 = vadd.f32 %v7683, %v8155
    %v8157 = vpop.f32.mrb[0].mxu0
    %v8158 = vpop.f32.mrb[0].mxu0
    %v8159 = vadd.f32 %v7683, %v8158
    %v8160 = vpop.f32.mrb[0].mxu0
    %8161 = vmatprep.mubr.bf16.mxu0 %v7637
    %8162 = vmatmul.mubr.bf16.gmra.mrb[0].mxu0 %v7381
    %v8163 = vpop.f32.mrb[0].mxu0
    %v8164 = vadd.f32 %v7683, %v8163
    %v8165 = vpop.f32.mrb[0].mxu0
    %v8166 = vpop.f32.mrb[0].mxu0
    %v8167 = vadd.f32 %v7683, %v8166
    %v8168 = vpop.f32.mrb[0].mxu0
    %8169 = vmatprep.mubr.bf16.mxu0 %v7640
    %8170 = vmatmul.mubr.bf16.gmra.mrb[0].mxu0 %v7384
    %v8171 = vpop.f32.mrb[0].mxu0
    %v8172 = vadd.f32 %v7683, %v8171
    %v8173 = vpop.f32.mrb[0].mxu0
    %v8174 = vpop.f32.mrb[0].mxu0
    %v8175 = vadd.f32 %v7683, %v8174
    %v8176 = vpop.f32.mrb[0].mxu0
    %8177 = vdwg.mxu0
    %8178 = vmatprep.subr.bf16.mxu0 0
    %8179 = vmatpush1.bf16.msra.mxu0 %v7773
    %8180 = vmatprep.subr.bf16.mxu0 0
    %8181 = vmatpush1.bf16.msra.mxu0 %v7774
    %8182 = vmatprep.subr.bf16.mxu0 0
    %8183 = vmatpush1.bf16.msra.mxu0 0
    %8184 = vmatprep.subr.bf16.mxu0 0
    %8185 = vmatpush1.bf16.msra.mxu0 0
    %8186 = vmatprep.subr.bf16.mxu0 0
    %8187 = vmatpush1.bf16.msra.mxu0 0
    %8188 = vmatprep.subr.bf16.mxu0 0
    %8189 = vmatpush1.bf16.msra.mxu0 0
    %8190 = vmatprep.subr.bf16.mxu0 0
    %8191 = vmatpush1.bf16.msra.mxu0 0
    %8192 = vmatprep.subr.bf16.mxu0 0
    %8193 = vmatpush1.bf16.msra.mxu0 0
    %8194 = vmatprep.subr.bf16.mxu0 0
    %8195 = vmatpush1.bf16.msra.mxu0 0
    %8196 = vmatprep.subr.bf16.mxu0 0
    %8197 = vmatpush1.bf16.msra.mxu0 0
    %8198 = vmatprep.subr.bf16.mxu0 0
    %8199 = vmatpush1.bf16.msra.mxu0 0
    %8200 = vmatprep.subr.bf16.mxu0 0
    %8201 = vmatpush1.bf16.msra.mxu0 0
    %8202 = vmatprep.subr.bf16.mxu0 0
    %8203 = vmatpush1.bf16.msra.mxu0 0
    %8204 = vmatprep.subr.bf16.mxu0 0
    %8205 = vmatpush1.bf16.msra.mxu0 0
    %8206 = vmatprep.subr.bf16.mxu0 0
    %8207 = vmatpush1.bf16.msra.mxu0 0
    %8208 = vmatprep.subr.bf16.mxu0 0
    %8209 = vmatpush1.bf16.msra.mxu0 0
    %8210 = vmatprep.mubr.bf16.mxu0 0
    %8211 = vmatmul.mubr.bf16.gmra.mrb[0].mxu0 %v7794
    %v8212 = vpop.f32.mrb[0].mxu0
    %v8213 = vadd.f32 %v7924, %v8212
    %v8214 = vpop.f32.mrb[0].mxu0
    %v8215 = vpop.f32.mrb[0].mxu0
    %v8216 = vadd.f32 %v7927, %v8215
    %v8217 = vpop.f32.mrb[0].mxu0
    %8218 = vmatprep.mubr.bf16.mxu0 0
    %8219 = vmatmul.mubr.bf16.gmra.mrb[0].mxu0 %v7797
    %v8220 = vpop.f32.mrb[0].mxu0
    %v8221 = vadd.f32 %v7932, %v8220
    %v8222 = vpop.f32.mrb[0].mxu0
    %v8223 = vpop.f32.mrb[0].mxu0
    %v8224 = vadd.f32 %v7935, %v8223
    %v8225 = vpop.f32.mrb[0].mxu0
    %8226 = vmatprep.mubr.bf16.mxu0 0
    %8227 = vmatmul.mubr.bf16.gmra.mrb[0].mxu0 %v7800
    %v8228 = vpop.f32.mrb[0].mxu0
    %v8229 = vadd.f32 %v7940, %v8228
    %v8230 = vpop.f32.mrb[0].mxu0
    %v8231 = vpop.f32.mrb[0].mxu0
    %v8232 = vadd.f32 %v7943, %v8231
    %v8233 = vpop.f32.mrb[0].mxu0
    %8234 = vmatprep.mubr.bf16.mxu0 0
    %8235 = vmatmul.mubr.bf16.gmra.mrb[0].mxu0 %v7803
    %v8236 = vpop.f32.mrb[0].mxu0
    %v8237 = vadd.f32 %v7948, %v8236
    %v8238 = vpop.f32.mrb[0].mxu0
    %v8239 = vpop.f32.mrb[0].mxu0
    %v8240 = vadd.f32 %v7951, %v8239
    %v8241 = vpop.f32.mrb[0].mxu0
    %8242 = vmatprep.mubr.bf16.mxu0 0
    %8243 = vmatmul.mubr.bf16.gmra.mrb[0].mxu0 %v7806
    %v8244 = vpop.f32.mrb[0].mxu0
    %v8245 = vadd.f32 %v7956, %v8244
    %v8246 = vpop.f32.mrb[0].mxu0
    %v8247 = vpop.f32.mrb[0].mxu0
    %v8248 = vadd.f32 %v7959, %v8247
    %v8249 = vpop.f32.mrb[0].mxu0
    %8250 = vmatprep.mubr.bf16.mxu0 0
    %8251 = vmatmul.mubr.bf16.gmra.mrb[0].mxu0 %v7809
    %v8252 = vpop.f32.mrb[0].mxu0
    %v8253 = vadd.f32 %v7964, %v8252
    %v8254 = vpop.f32.mrb[0].mxu0
    %v8255 = vpop.f32.mrb[0].mxu0
    %v8256 = vadd.f32 %v7967, %v8255
    %v8257 = vpop.f32.mrb[0].mxu0
    %8258 = vmatprep.mubr.bf16.mxu0 0
    %8259 = vmatmul.mubr.bf16.gmra.mrb[0].mxu0 %v7812
    %v8260 = vpop.f32.mrb[0].mxu0
    %v8261 = vadd.f32 %v7972, %v8260
    %v8262 = vpop.f32.mrb[0].mxu0
    %v8263 = vpop.f32.mrb[0].mxu0
    %v8264 = vadd.f32 %v7975, %v8263
    %v8265 = vpop.f32.mrb[0].mxu0
    %8266 = vmatprep.mubr.bf16.mxu0 0
    %8267 = vmatmul.mubr.bf16.gmra.mrb[0].mxu0 %v7815
    %v8268 = vpop.f32.mrb[0].mxu0
    %v8269 = vadd.f32 %v7980, %v8268
    %v8270 = vpop.f32.mrb[0].mxu0
    %v8271 = vpop.f32.mrb[0].mxu0
    %v8272 = vadd.f32 %v7983, %v8271
    %v8273 = vpop.f32.mrb[0].mxu0
    %8274 = vmatprep.mubr.bf16.mxu0 0
    %8275 = vmatmul.mubr.bf16.gmra.mrb[0].mxu0 %v7818
    %v8276 = vpop.f32.mrb[0].mxu0
    %v8277 = vadd.f32 %v7988, %v8276
    %v8278 = vpop.f32.mrb[0].mxu0
    %v8279 = vpop.f32.mrb[0].mxu0
    %v8280 = vadd.f32 %v7991, %v8279
    %v8281 = vpop.f32.mrb[0].mxu0
    %8282 = vmatprep.mubr.bf16.mxu0 0
    %8283 = vmatmul.mubr.bf16.gmra.mrb[0].mxu0 %v7821
    %v8284 = vpop.f32.mrb[0].mxu0
    %v8285 = vadd.f32 %v7996, %v8284
    %v8286 = vpop.f32.mrb[0].mxu0
    %v8287 = vpop.f32.mrb[0].mxu0
    %v8288 = vadd.f32 %v7999, %v8287
    %v8289 = vpop.f32.mrb[0].mxu0
    %8290 = vmatprep.mubr.bf16.mxu0 0
    %8291 = vmatmul.mubr.bf16.gmra.mrb[0].mxu0 %v7824
    %v8292 = vpop.f32.mrb[0].mxu0
    %v8293 = vadd.f32 %v8004, %v8292
    %v8294 = vpop.f32.mrb[0].mxu0
    %v8295 = vpop.f32.mrb[0].mxu0
    %v8296 = vadd.f32 %v8007, %v8295
    %v8297 = vpop.f32.mrb[0].mxu0
    %8298 = vmatprep.mubr.bf16.mxu0 0
    %8299 = vmatmul.mubr.bf16.gmra.mrb[0].mxu0 %v7827
    %v8300 = vpop.f32.mrb[0].mxu0
    %v8301 = vadd.f32 %v8012, %v8300
    %v8302 = vpop.f32.mrb[0].mxu0
    %v8303 = vpop.f32.mrb[0].mxu0
    %v8304 = vadd.f32 %v8015, %v8303
    %v8305 = vpop.f32.mrb[0].mxu0
    %8306 = vmatprep.mubr.bf16.mxu0 0
    %8307 = vmatmul.mubr.bf16.gmra.mrb[0].mxu0 %v7830
    %v8308 = vpop.f32.mrb[0].mxu0
    %v8309 = vadd.f32 %v8020, %v8308
    %v8310 = vpop.f32.mrb[0].mxu0
    %v8311 = vpop.f32.mrb[0].mxu0
    %v8312 = vadd.f32 %v8023, %v8311
    %v8313 = vpop.f32.mrb[0].mxu0
    %8314 = vmatprep.mubr.bf16.mxu0 0
    %8315 = vmatmul.mubr.bf16.gmra.mrb[0].mxu0 %v7833
    %v8316 = vpop.f32.mrb[0].mxu0
    %v8317 = vadd.f32 %v8028, %v8316
    %v8318 = vpop.f32.mrb[0].mxu0
    %v8319 = vpop.f32.mrb[0].mxu0
    %v8320 = vadd.f32 %v8031, %v8319
    %v8321 = vpop.f32.mrb[0].mxu0
    %8322 = vmatprep.mubr.bf16.mxu0 0
    %8323 = vmatmul.mubr.bf16.gmra.mrb[0].mxu0 %v7836
    %v8324 = vpop.f32.mrb[0].mxu0
    %v8325 = vadd.f32 %v8036, %v8324
    %v8326 = vpop.f32.mrb[0].mxu0
    %v8327 = vpop.f32.mrb[0].mxu0
    %v8328 = vadd.f32 %v8039, %v8327
    %v8329 = vpop.f32.mrb[0].mxu0
    %8330 = vmatprep.mubr.bf16.mxu0 0
    %8331 = vmatmul.mubr.bf16.gmra.mrb[0].mxu0 %v7839
    %v8332 = vpop.f32.mrb[0].mxu0
    %v8333 = vadd.f32 %v8044, %v8332
    %v8334 = vpop.f32.mrb[0].mxu0
    %v8335 = vpop.f32.mrb[0].mxu0
    %v8336 = vadd.f32 %v8047, %v8335
    %v8337 = vpop.f32.mrb[0].mxu0
    %8338 = vmatprep.mubr.bf16.mxu0 0
    %8339 = vmatmul.mubr.bf16.gmra.mrb[0].mxu0 %v7842
    %v8340 = vpop.f32.mrb[0].mxu0
    %v8341 = vadd.f32 %v8052, %v8340
    %v8342 = vpop.f32.mrb[0].mxu0
    %v8343 = vpop.f32.mrb[0].mxu0
    %v8344 = vadd.f32 %v8055, %v8343
    %v8345 = vpop.f32.mrb[0].mxu0
    %8346 = vmatprep.mubr.bf16.mxu0 0
    %8347 = vmatmul.mubr.bf16.gmra.mrb[0].mxu0 %v7845
    %v8348 = vpop.f32.mrb[0].mxu0
    %v8349 = vadd.f32 %v8060, %v8348
    %v8350 = vpop.f32.mrb[0].mxu0
    %v8351 = vpop.f32.mrb[0].mxu0
    %v8352 = vadd.f32 %v8063, %v8351
    %v8353 = vpop.f32.mrb[0].mxu0
    %8354 = vmatprep.mubr.bf16.mxu0 0
    %8355 = vmatmul.mubr.bf16.gmra.mrb[0].mxu0 %v7848
    %v8356 = vpop.f32.mrb[0].mxu0
    %v8357 = vadd.f32 %v8068, %v8356
    %v8358 = vpop.f32.mrb[0].mxu0
    %v8359 = vpop.f32.mrb[0].mxu0
    %v8360 = vadd.f32 %v8071, %v8359
    %v8361 = vpop.f32.mrb[0].mxu0
    %8362 = vmatprep.mubr.bf16.mxu0 0
    %8363 = vmatmul.mubr.bf16.gmra.mrb[0].mxu0 %v7851
    %v8364 = vpop.f32.mrb[0].mxu0
    %v8365 = vadd.f32 %v8076, %v8364
    %v8366 = vpop.f32.mrb[0].mxu0
    %v8367 = vpop.f32.mrb[0].mxu0
    %v8368 = vadd.f32 %v8079, %v8367
    %v8369 = vpop.f32.mrb[0].mxu0
    %8370 = vmatprep.mubr.bf16.mxu0 0
    %8371 = vmatmul.mubr.bf16.gmra.mrb[0].mxu0 %v7854
    %v8372 = vpop.f32.mrb[0].mxu0
    %v8373 = vadd.f32 %v8084, %v8372
    %v8374 = vpop.f32.mrb[0].mxu0
    %v8375 = vpop.f32.mrb[0].mxu0
    %v8376 = vadd.f32 %v8087, %v8375
    %v8377 = vpop.f32.mrb[0].mxu0
    %8378 = vmatprep.mubr.bf16.mxu0 0
    %8379 = vmatmul.mubr.bf16.gmra.mrb[0].mxu0 %v7857
    %v8380 = vpop.f32.mrb[0].mxu0
    %v8381 = vadd.f32 %v8092, %v8380
    %v8382 = vpop.f32.mrb[0].mxu0
    %v8383 = vpop.f32.mrb[0].mxu0
    %v8384 = vadd.f32 %v8095, %v8383
    %v8385 = vpop.f32.mrb[0].mxu0
    %8386 = vmatprep.mubr.bf16.mxu0 0
    %8387 = vmatmul.mubr.bf16.gmra.mrb[0].mxu0 %v7860
    %v8388 = vpop.f32.mrb[0].mxu0
    %v8389 = vadd.f32 %v8100, %v8388
    %v8390 = vpop.f32.mrb[0].mxu0
    %v8391 = vpop.f32.mrb[0].mxu0
    %v8392 = vadd.f32 %v8103, %v8391
    %v8393 = vpop.f32.mrb[0].mxu0
    %8394 = vmatprep.mubr.bf16.mxu0 0
    %8395 = vmatmul.mubr.bf16.gmra.mrb[0].mxu0 %v7863
    %v8396 = vpop.f32.mrb[0].mxu0
    %v8397 = vadd.f32 %v8108, %v8396
    %v8398 = vpop.f32.mrb[0].mxu0
    %v8399 = vpop.f32.mrb[0].mxu0
    %v8400 = vadd.f32 %v8111, %v8399
    %v8401 = vpop.f32.mrb[0].mxu0
    %8402 = vmatprep.mubr.bf16.mxu0 0
    %8403 = vmatmul.mubr.bf16.gmra.mrb[0].mxu0 %v7866
    %v8404 = vpop.f32.mrb[0].mxu0
    %v8405 = vadd.f32 %v8116, %v8404
    %v8406 = vpop.f32.mrb[0].mxu0
    %v8407 = vpop.f32.mrb[0].mxu0
    %v8408 = vadd.f32 %v8119, %v8407
    %v8409 = vpop.f32.mrb[0].mxu0
    %8410 = vmatprep.mubr.bf16.mxu0 0
    %8411 = vmatmul.mubr.bf16.gmra.mrb[0].mxu0 %v7869
    %v8412 = vpop.f32.mrb[0].mxu0
    %v8413 = vadd.f32 %v8124, %v8412
    %v8414 = vpop.f32.mrb[0].mxu0
    %v8415 = vpop.f32.mrb[0].mxu0
    %v8416 = vadd.f32 %v8127, %v8415
    %v8417 = vpop.f32.mrb[0].mxu0
    %8418 = vmatprep.mubr.bf16.mxu0 0
    %8419 = vmatmul.mubr.bf16.gmra.mrb[0].mxu0 %v7872
    %v8420 = vpop.f32.mrb[0].mxu0
    %v8421 = vadd.f32 %v8132, %v8420
    %v8422 = vpop.f32.mrb[0].mxu0
    %v8423 = vpop.f32.mrb[0].mxu0
    %v8424 = vadd.f32 %v8135, %v8423
    %v8425 = vpop.f32.mrb[0].mxu0
    %8426 = vmatprep.mubr.bf16.mxu0 0
    %8427 = vmatmul.mubr.bf16.gmra.mrb[0].mxu0 %v7875
    %v8428 = vpop.f32.mrb[0].mxu0
    %v8429 = vadd.f32 %v8140, %v8428
    %v8430 = vpop.f32.mrb[0].mxu0
    %v8431 = vpop.f32.mrb[0].mxu0
    %v8432 = vadd.f32 %v8143, %v8431
    %v8433 = vpop.f32.mrb[0].mxu0
    %8434 = vmatprep.mubr.bf16.mxu0 0
    %8435 = vmatmul.mubr.bf16.gmra.mrb[0].mxu0 %v7878
    %v8436 = vpop.f32.mrb[0].mxu0
    %v8437 = vadd.f32 %v8148, %v8436
    %v8438 = vpop.f32.mrb[0].mxu0
    %v8439 = vpop.f32.mrb[0].mxu0
    %v8440 = vadd.f32 %v8151, %v8439
    %v8441 = vpop.f32.mrb[0].mxu0
    %8442 = vmatprep.mubr.bf16.mxu0 0
    %8443 = vmatmul.mubr.bf16.gmra.mrb[0].mxu0 %v7881
    %v8444 = vpop.f32.mrb[0].mxu0
    %v8445 = vadd.f32 %v8156, %v8444
    %v8446 = vpop.f32.mrb[0].mxu0
    %v8447 = vpop.f32.mrb[0].mxu0
    %v8448 = vadd.f32 %v8159, %v8447
    %v8449 = vpop.f32.mrb[0].mxu0
    %8450 = vmatprep.mubr.bf16.mxu0 0
    %8451 = vmatmul.mubr.bf16.gmra.mrb[0].mxu0 %v7884
    %v8452 = vpop.f32.mrb[0].mxu0
    %v8453 = vadd.f32 %v8164, %v8452
    %v8454 = vpop.f32.mrb[0].mxu0
    %v8455 = vpop.f32.mrb[0].mxu0
    %v8456 = vadd.f32 %v8167, %v8455
    %v8457 = vpop.f32.mrb[0].mxu0
    %8458 = vmatprep.mubr.bf16.mxu0 0
    %8459 = vmatmul.mubr.bf16.gmra.mrb[0].mxu0 %v7887
    %v8460 = vpop.f32.mrb[0].mxu0
    %v8461 = vadd.f32 %v8172, %v8460
    %v8462 = vpop.f32.mrb[0].mxu0
    %v8463 = vpop.f32.mrb[0].mxu0
    %v8464 = vadd.f32 %v8175, %v8463
    %v8465 = vpop.f32.mrb[0].mxu0
    %8466 = vdwg.mxu0
    %v8467 = vmax.f32 %v8213, 0.0
    %v8468 = vmax.f32 %v8216, 0.0
    %v8469 = vmax.f32 %v8221, 0.0
    %v8470 = vmax.f32 %v8224, 0.0
    %v8471 = vmax.f32 %v8229, 0.0
    %v8472 = vmax.f32 %v8232, 0.0
    %v8473 = vmax.f32 %v8237, 0.0
    %v8474 = vmax.f32 %v8240, 0.0
    %v8475 = vmax.f32 %v8245, 0.0
    %v8476 = vmax.f32 %v8248, 0.0
    %v8477 = vmax.f32 %v8253, 0.0
    %v8478 = vmax.f32 %v8256, 0.0
    %v8479 = vmax.f32 %v8261, 0.0
    %v8480 = vmax.f32 %v8264, 0.0
    %v8481 = vmax.f32 %v8269, 0.0
    %v8482 = vmax.f32 %v8272, 0.0
    %v8483 = vmax.f32 %v8277, 0.0
    %v8484 = vmax.f32 %v8280, 0.0
    %v8485 = vmax.f32 %v8285, 0.0
    %v8486 = vmax.f32 %v8288, 0.0
    %v8487 = vmax.f32 %v8293, 0.0
    %v8488 = vmax.f32 %v8296, 0.0
    %v8489 = vmax.f32 %v8301, 0.0
    %v8490 = vmax.f32 %v8304, 0.0
    %v8491 = vmax.f32 %v8309, 0.0
    %v8492 = vmax.f32 %v8312, 0.0
    %v8493 = vmax.f32 %v8317, 0.0
    %v8494 = vmax.f32 %v8320, 0.0
    %v8495 = vmax.f32 %v8325, 0.0
    %v8496 = vmax.f32 %v8328, 0.0
    %v8497 = vmax.f32 %v8333, 0.0
    %v8498 = vmax.f32 %v8336, 0.0
    %v8499 = vmax.f32 %v8341, 0.0
    %v8500 = vmax.f32 %v8344, 0.0
    %v8501 = vmax.f32 %v8349, 0.0
    %v8502 = vmax.f32 %v8352, 0.0
    %v8503 = vmax.f32 %v8357, 0.0
    %v8504 = vmax.f32 %v8360, 0.0
    %v8505 = vmax.f32 %v8365, 0.0
    %v8506 = vmax.f32 %v8368, 0.0
    %v8507 = vmax.f32 %v8373, 0.0
    %v8508 = vmax.f32 %v8376, 0.0
    %v8509 = vmax.f32 %v8381, 0.0
    %v8510 = vmax.f32 %v8384, 0.0
    %v8511 = vmax.f32 %v8389, 0.0
    %v8512 = vmax.f32 %v8392, 0.0
    %v8513 = vmax.f32 %v8397, 0.0
    %v8514 = vmax.f32 %v8400, 0.0
    %v8515 = vmax.f32 %v8405, 0.0
    %v8516 = vmax.f32 %v8408, 0.0
    %v8517 = vmax.f32 %v8413, 0.0
    %v8518 = vmax.f32 %v8416, 0.0
    %v8519 = vmax.f32 %v8421, 0.0
    %v8520 = vmax.f32 %v8424, 0.0
    %v8521 = vmax.f32 %v8429, 0.0
    %v8522 = vmax.f32 %v8432, 0.0
    %v8523 = vmax.f32 %v8437, 0.0
    %v8524 = vmax.f32 %v8440, 0.0
    %v8525 = vmax.f32 %v8445, 0.0
    %v8526 = vmax.f32 %v8448, 0.0
    %v8527 = vmax.f32 %v8453, 0.0
    %v8528 = vmax.f32 %v8456, 0.0
    %v8529 = vmax.f32 %v8461, 0.0
    %v8530 = vmax.f32 %v8464, 0.0
    %v8531 = vsel %vm7224, %v8467, 0.0
    %v8532 = vsel %vm7224, %v8468, 0.0
    %v8533 = vadd.f32 %v8531, %v8532
    %v8534 = vsel %vm7224, %v8469, 0.0
    %v8535 = vadd.f32 %v8533, %v8534
    %v8536 = vsel %vm7224, %v8470, 0.0
    %v8537 = vadd.f32 %v8535, %v8536
    %v8538 = vsel %vm7224, %v8471, 0.0
    %v8539 = vadd.f32 %v8537, %v8538
    %v8540 = vsel %vm7224, %v8472, 0.0
    %v8541 = vadd.f32 %v8539, %v8540
    %v8542 = vsel %vm7224, %v8473, 0.0
    %v8543 = vadd.f32 %v8541, %v8542
    %v8544 = vsel %vm7224, %v8474, 0.0
    %v8545 = vadd.f32 %v8543, %v8544
    %v8546 = vsel %vm7224, %v8475, 0.0
    %v8547 = vadd.f32 %v8545, %v8546
    %v8548 = vsel %vm7224, %v8476, 0.0
    %v8549 = vadd.f32 %v8547, %v8548
    %v8550 = vsel %vm7224, %v8477, 0.0
    %v8551 = vadd.f32 %v8549, %v8550
    %v8552 = vsel %vm7224, %v8478, 0.0
    %v8553 = vadd.f32 %v8551, %v8552
    %v8554 = vsel %vm7224, %v8479, 0.0
    %v8555 = vadd.f32 %v8553, %v8554
    %v8556 = vsel %vm7224, %v8480, 0.0
    %v8557 = vadd.f32 %v8555, %v8556
    %v8558 = vsel %vm7224, %v8481, 0.0
    %v8559 = vadd.f32 %v8557, %v8558
    %v8560 = vsel %vm7224, %v8482, 0.0
    %v8561 = vadd.f32 %v8559, %v8560
    %v8562 = vsel %vm7224, %v8483, 0.0
    %v8563 = vadd.f32 %v8561, %v8562
    %v8564 = vsel %vm7224, %v8484, 0.0
    %v8565 = vadd.f32 %v8563, %v8564
    %v8566 = vsel %vm7224, %v8485, 0.0
    %v8567 = vadd.f32 %v8565, %v8566
    %v8568 = vsel %vm7224, %v8486, 0.0
    %v8569 = vadd.f32 %v8567, %v8568
    %v8570 = vsel %vm7224, %v8487, 0.0
    %v8571 = vadd.f32 %v8569, %v8570
    %v8572 = vsel %vm7224, %v8488, 0.0
    %v8573 = vadd.f32 %v8571, %v8572
    %v8574 = vsel %vm7224, %v8489, 0.0
    %v8575 = vadd.f32 %v8573, %v8574
    %v8576 = vsel %vm7224, %v8490, 0.0
    %v8577 = vadd.f32 %v8575, %v8576
    %v8578 = vsel %vm7224, %v8491, 0.0
    %v8579 = vadd.f32 %v8577, %v8578
    %v8580 = vsel %vm7224, %v8492, 0.0
    %v8581 = vadd.f32 %v8579, %v8580
    %v8582 = vsel %vm7224, %v8493, 0.0
    %v8583 = vadd.f32 %v8581, %v8582
    %v8584 = vsel %vm7224, %v8494, 0.0
    %v8585 = vadd.f32 %v8583, %v8584
    %v8586 = vsel %vm7224, %v8495, 0.0
    %v8587 = vadd.f32 %v8585, %v8586
    %v8588 = vsel %vm7224, %v8496, 0.0
    %v8589 = vadd.f32 %v8587, %v8588
    %v8590 = vsel %vm7224, %v8497, 0.0
    %v8591 = vadd.f32 %v8589, %v8590
    %v8592 = vsel %vm7224, %v8498, 0.0
    %v8593 = vadd.f32 %v8591, %v8592
    %v8594 = vrot.slane %v8593, 4
    %v8595 = vadd.f32 %v8593, %v8594
    %v8596 = vrot.slane %v8595, 2
    %v8597 = vadd.f32 %v8595, %v8596
    %v8598 = vrot.slane %v8597, 1
    %v8599 = vadd.f32 %v8597, %v8598
    %v8600 = vsel %vm7224, %v8499, 0.0
    %v8601 = vsel %vm7224, %v8500, 0.0
    %v8602 = vadd.f32 %v8600, %v8601
    %v8603 = vsel %vm7224, %v8501, 0.0
    %v8604 = vadd.f32 %v8602, %v8603
    %v8605 = vsel %vm7224, %v8502, 0.0
    %v8606 = vadd.f32 %v8604, %v8605
    %v8607 = vsel %vm7224, %v8503, 0.0
    %v8608 = vadd.f32 %v8606, %v8607
    %v8609 = vsel %vm7224, %v8504, 0.0
    %v8610 = vadd.f32 %v8608, %v8609
    %v8611 = vsel %vm7224, %v8505, 0.0
    %v8612 = vadd.f32 %v8610, %v8611
    %v8613 = vsel %vm7224, %v8506, 0.0
    %v8614 = vadd.f32 %v8612, %v8613
    %v8615 = vsel %vm7224, %v8507, 0.0
    %v8616 = vadd.f32 %v8614, %v8615
    %v8617 = vsel %vm7224, %v8508, 0.0
    %v8618 = vadd.f32 %v8616, %v8617
    %v8619 = vsel %vm7224, %v8509, 0.0
    %v8620 = vadd.f32 %v8618, %v8619
    %v8621 = vsel %vm7224, %v8510, 0.0
    %v8622 = vadd.f32 %v8620, %v8621
    %v8623 = vsel %vm7224, %v8511, 0.0
    %v8624 = vadd.f32 %v8622, %v8623
    %v8625 = vsel %vm7224, %v8512, 0.0
    %v8626 = vadd.f32 %v8624, %v8625
    %v8627 = vsel %vm7224, %v8513, 0.0
    %v8628 = vadd.f32 %v8626, %v8627
    %v8629 = vsel %vm7224, %v8514, 0.0
    %v8630 = vadd.f32 %v8628, %v8629
    %v8631 = vsel %vm7224, %v8515, 0.0
    %v8632 = vadd.f32 %v8630, %v8631
    %v8633 = vsel %vm7224, %v8516, 0.0
    %v8634 = vadd.f32 %v8632, %v8633
    %v8635 = vsel %vm7224, %v8517, 0.0
    %v8636 = vadd.f32 %v8634, %v8635
    %v8637 = vsel %vm7224, %v8518, 0.0
    %v8638 = vadd.f32 %v8636, %v8637
    %v8639 = vsel %vm7224, %v8519, 0.0
    %v8640 = vadd.f32 %v8638, %v8639
    %v8641 = vsel %vm7224, %v8520, 0.0
    %v8642 = vadd.f32 %v8640, %v8641
    %v8643 = vsel %vm7224, %v8521, 0.0
    %v8644 = vadd.f32 %v8642, %v8643
    %v8645 = vsel %vm7224, %v8522, 0.0
    %v8646 = vadd.f32 %v8644, %v8645
    %v8647 = vsel %vm7224, %v8523, 0.0
    %v8648 = vadd.f32 %v8646, %v8647
    %v8649 = vsel %vm7224, %v8524, 0.0
    %v8650 = vadd.f32 %v8648, %v8649
    %v8651 = vsel %vm7224, %v8525, 0.0
    %v8652 = vadd.f32 %v8650, %v8651
    %v8653 = vsel %vm7224, %v8526, 0.0
    %v8654 = vadd.f32 %v8652, %v8653
    %v8655 = vsel %vm7224, %v8527, 0.0
    %v8656 = vadd.f32 %v8654, %v8655
    %v8657 = vsel %vm7224, %v8528, 0.0
    %v8658 = vadd.f32 %v8656, %v8657
    %v8659 = vsel %vm7224, %v8529, 0.0
    %v8660 = vadd.f32 %v8658, %v8659
    %v8661 = vsel %vm7224, %v8530, 0.0
    %v8662 = vadd.f32 %v8660, %v8661
    %v8663 = vrot.slane %v8662, 4
    %v8664 = vadd.f32 %v8662, %v8663
    %v8665 = vrot.slane %v8664, 2
    %v8666 = vadd.f32 %v8664, %v8665
    %v8667 = vrot.slane %v8666, 1
    %v8668 = vadd.f32 %v8666, %v8667
    %v8669 = vmul.f32 %v8599, 0.00390625
    %v8670 = vmul.f32 %v8668, 0.00390625
    %vm8673 = vcmask 1041409
    %v8674 = vsel %vm8673, %v8670, %v8669
    %vm8676 = vcmask 517120
    %8677 = vst.msk [vmem:[#allocation4] sm:$0x3] %vm8676, %v8674
    // Predicated region
    $region22: #{feature_extractor.1} parent=1 // pred_check
      _
    $region23: #{feature_extractor.1} parent=1 // pred_check_branch
      %8679 = sbr.rel (0) target = $region25
    $region24: #{feature_extractor.1} parent=1 // pred_region
      %s8681 = ssub.s32 32, 32
      %8682 = vsyncadd [#allocation5], %s8681
      %s8684 = sshll.u32 [#allocation4], 4
      %s8685 = int_to_ptr.vmem [resolvable:$true] %s8684
      %8687 = dma.vmem_to_hbm [thread:$0]  %s8685, 32, %s5, [#allocation5]
    $region25: #{feature_extractor.1} parent=1 // pred_fallthru
      _
    // Predicated region
    $region26: #{feature_extractor.1} parent=1 // pred_check
      _
    $region27: #{feature_extractor.1} parent=1 // pred_check_branch
      %8689 = sbr.rel (0) target = $region29
    $region28: #{feature_extractor.1} parent=1 // pred_region
      %8690 = dma.done [#allocation5], 32
    $region29: #{feature_extractor.1} parent=1 // pred_fallthru
      _
    %8691 = vsyncpa [#allocation5], 1

</llo_original>
